<compile_context>
chip_gen: v7x
topology: tpu7x:2x2x1
jax: 0.10.0
libtpu: 0.0.40
codegen_flags: <defaults>
</compile_context>

<pallas_src>
import jax
import jax.numpy as jnp
from jax.experimental import pallas as pl
from jax.experimental.pallas import tpu as pltpu

# ----------------------------- small synthetic config -----------------------
BATCH          = 2
N_MEL          = 8
SPK_DIM        = 16           # WN_config['speaker_embed_dim'] > 0 (multispeaker path)
MAX_SPEAKERS   = 512
COND_HIDDEN    = 256          # hard-coded `hidden_dim = 256` in __init__
N_FLOWS        = 4
N_GROUP        = 8
N_EARLY_EVERY  = 2
N_EARLY_SIZE   = 2
WN_N_LAYERS    = 2
WN_N_CHANNELS  = 32
WN_KERNEL_SIZE = 3
N_FRAMES       = 8            # mel frames
AUDIO_LEN      = 128          # samples, divisible by N_GROUP
DTYPE          = jnp.float32

PADROWS = 8                   # sublane-aligned border for shifted-window reads


# ----------------------------- Pallas kernels -------------------------------
def _make_cond_kernel(Tf, n_mel, hidden):
    """Fused conditioning path: conv(K3,replicate) -> conv(K3,replicate) ->
    conv(1x1) -> residual add with the original spect.  Input is already
    replicate-padded by 1 along time for the first conv."""
    K = 3

    def kernel(x_ref, w1_ref, b1_ref, w2_ref, b2_ref, w3_ref, b3_ref,
               o_ref, h_pad):
        # conv1: input ref is (Tf+2, Cin), replicate-padded outside.
        taps = [x_ref[pl.ds(k, Tf), :].astype(jnp.float32) for k in range(K)]
        h1 = b1_ref[...].astype(jnp.float32)
        for k in range(K):
            h1 = h1 + jnp.dot(taps[k], w1_ref[k].astype(jnp.float32),
                              preferred_element_type=jnp.float32)

        # stage h1 in a zero-bordered scratch so conv2 can read shifted windows
        h_pad[...] = jnp.zeros_like(h_pad)
        h_pad[pl.ds(PADROWS, Tf), :] = h1

        # conv2 with replicate pad 1 = zero-pad conv + boundary corrections.
        w2_taps = [w2_ref[k].astype(jnp.float32) for k in range(K)]
        h2 = b2_ref[...].astype(jnp.float32)
        for k in range(K):
            h2 = h2 + jnp.dot(h_pad[pl.ds(PADROWS - 1 + k, Tf), :], w2_taps[k],
                              preferred_element_type=jnp.float32)
        first_row = h_pad[pl.ds(PADROWS, 1), :]                 # h1[0]
        last_row = h_pad[pl.ds(PADROWS + Tf - 1, 1), :]         # h1[Tf-1]
        corr0 = jnp.broadcast_to(
            jnp.dot(first_row, w2_taps[0], preferred_element_type=jnp.float32),
            (Tf, hidden))
        corrL = jnp.broadcast_to(
            jnp.dot(last_row, w2_taps[2], preferred_element_type=jnp.float32),
            (Tf, hidden))
        row = jax.lax.broadcasted_iota(jnp.int32, (Tf, hidden), 0)
        h2 = h2 + jnp.where(row == 0, corr0, 0.0) + jnp.where(row == Tf - 1, corrL, 0.0)

        # conv3 (1x1) + residual with the original (unpadded) spect lanes.
        h3 = jnp.dot(h2, w3_ref[...].astype(jnp.float32),
                     preferred_element_type=jnp.float32) + b3_ref[...]
        spect = taps[1][:, :n_mel]                              # rows 1..Tf of padded input
        o_ref[...] = (spect + h3).astype(o_ref.dtype)

    return kernel


def _make_flow_kernel(L, K, C, n_half, Tg, dils):
    """One whole flow: 1x1 invertible conv, WN (start/gated/res-skip/end) and
    the affine coupling + log_s reduction, all in VMEM."""
    n_in = 12 + 4 * L

    def kernel(*refs):
        (aud_ref, cond_ref, wa_ref, wb_ref,
         sw_ref, sb_ref, cw_ref, cb_ref) = refs[:8]
        layer_refs = refs[8:8 + 4 * L]
        ewt_ref, ews_ref, ebt_ref, ebs_ref = refs[8 + 4 * L:n_in]
        xa_ref, zb_ref, ls_ref = refs[n_in:n_in + 3]
        h_pad = refs[n_in + 3]

        # invertible 1x1 conv, already split into the xa / xb halves.
        aud = aud_ref[...].astype(jnp.float32)
        xa = jnp.dot(aud, wa_ref[...].astype(jnp.float32),
                     preferred_element_type=jnp.float32)
        xb = jnp.dot(aud, wb_ref[...].astype(jnp.float32),
                     preferred_element_type=jnp.float32)

        # WN cond 1x1 conv for all layers at once (sliced per layer below).
        cond_all = (jnp.dot(cond_ref[...].astype(jnp.float32),
                            cw_ref[...].astype(jnp.float32),
                            preferred_element_type=jnp.float32)
                    + cb_ref[...])

        # WN start 1x1 conv; stage h in zero-bordered scratch for shifted reads.
        h = (jnp.dot(xa, sw_ref[...].astype(jnp.float32),
                     preferred_element_type=jnp.float32) + sb_ref[...])
        h_pad[...] = jnp.zeros_like(h_pad)
        h_pad[pl.ds(PADROWS, Tg), :] = h

        skip = jnp.zeros((Tg, C), jnp.float32)
        for i in range(L):
            in_w, in_b, rs_w, rs_b = layer_refs[4 * i:4 * i + 4]
            d = dils[i]
            p = d * (K - 1) // 2
            acc = jnp.zeros((Tg, 2 * C), jnp.float32)
            for k in range(K):                                  # static tap loop
                acc = acc + jnp.dot(h_pad[pl.ds(PADROWS - p + k * d, Tg), :],
                                    in_w[k].astype(jnp.float32),
                                    preferred_element_type=jnp.float32)
            pre = acc + in_b[...] + cond_all[:, 2 * C * i:2 * C * (i + 1)]
            gated = jnp.tanh(pre[:, :C]) * jax.nn.sigmoid(pre[:, C:])
            rs = (jnp.dot(gated, rs_w[...].astype(jnp.float32),
                          preferred_element_type=jnp.float32) + rs_b[...])
            if i < L - 1:
                h = h + rs[:, :C]
                h_pad[pl.ds(PADROWS, Tg), :] = h
                skip = skip + rs[:, C:]
            else:
                skip = skip + rs

        # WN end conv (split into t / log_s columns) + affine coupling.
        t = (jnp.dot(skip, ewt_ref[...].astype(jnp.float32),
                     preferred_element_type=jnp.float32) + ebt_ref[...])
        log_s = (jnp.dot(skip, ews_ref[...].astype(jnp.float32),
                         preferred_element_type=jnp.float32) + ebs_ref[...])
        zb = xb * jnp.exp(log_s) + t

        xa_ref[...] = xa.astype(xa_ref.dtype)
        zb_ref[...] = zb.astype(zb_ref.dtype)
        ls_ref[...] = jnp.sum(jnp.sum(log_s, axis=1, keepdims=True),
                              axis=0, keepdims=True)

    return kernel


# ----------------------------- Pallas wrappers -------------------------------
def cond_network(prep, spect_cl, spk):
    """Fused conditioning path; returns spect + cond_layers(cat(spect, spk))."""
    B, Tf, _ = spect_cl.shape
    cin0 = N_MEL + SPK_DIM
    spk_rep = jnp.broadcast_to(spk[:, None, :], (B, Tf, SPK_DIM))
    cond_in = jnp.concatenate([spect_cl, spk_rep], axis=-1)
    cond_in = jnp.pad(cond_in, ((0, 0), (1, 1), (0, 0)), mode="edge")  # replicate pad

    cp = prep["cond"]
    kernel = _make_cond_kernel(Tf, N_MEL, COND_HIDDEN)
    return pl.pallas_call(
        kernel,
        out_shape=jax.ShapeDtypeStruct((B, Tf, N_MEL), spect_cl.dtype),
        grid=(B,),
        in_specs=[
            pl.BlockSpec((None, Tf + 2, cin0), lambda b: (b, 0, 0)),
            pl.BlockSpec((3, cin0, COND_HIDDEN), lambda b: (0, 0, 0)),
            pl.BlockSpec((1, COND_HIDDEN), lambda b: (0, 0)),
            pl.BlockSpec((3, COND_HIDDEN, COND_HIDDEN), lambda b: (0, 0, 0)),
            pl.BlockSpec((1, COND_HIDDEN), lambda b: (0, 0)),
            pl.BlockSpec((COND_HIDDEN, N_MEL), lambda b: (0, 0)),
            pl.BlockSpec((1, N_MEL), lambda b: (0, 0)),
        ],
        out_specs=pl.BlockSpec((None, Tf, N_MEL), lambda b: (b, 0, 0)),
        scratch_shapes=[pltpu.VMEM((Tf + 2 * PADROWS, COND_HIDDEN), jnp.float32)],
        compiler_params=pltpu.CompilerParams(dimension_semantics=("parallel",)),
    )(cond_in, cp["w1"], cp["b1"], cp["w2"], cp["b2"], cp["w3"], cp["b3"])


def flow_step(fp, audio_g, cond_up):
    """One fused flow.  Returns (xa, zb, log_s.sum((T,C)) per batch)."""
    B, Tg, n_ch = audio_g.shape
    n_half = n_ch // 2
    L, K, C = WN_N_LAYERS, WN_KERNEL_SIZE, WN_N_CHANNELS
    dils = tuple(2 ** i for i in range(L))
    kernel = _make_flow_kernel(L, K, C, n_half, Tg, dils)

    in_specs = [
        pl.BlockSpec((None, Tg, n_ch), lambda b: (b, 0, 0)),   # audio
        pl.BlockSpec((None, Tg, N_MEL), lambda b: (b, 0, 0)),  # upsampled cond
        pl.BlockSpec((n_ch, n_half), lambda b: (0, 0)),        # Wa (1x1, first half)
        pl.BlockSpec((n_ch, n_half), lambda b: (0, 0)),        # Wb (1x1, second half)
        pl.BlockSpec((n_half, C), lambda b: (0, 0)),           # start_w
        pl.BlockSpec((1, C), lambda b: (0, 0)),                # start_b
        pl.BlockSpec((N_MEL, 2 * C * L), lambda b: (0, 0)),    # cond_w
        pl.BlockSpec((1, 2 * C * L), lambda b: (0, 0)),        # cond_b
    ]
    args = [audio_g, cond_up, fp["wa"], fp["wb"], fp["start_w"], fp["start_b"],
            fp["cond_w"], fp["cond_b"]]
    for i in range(L):
        rs_out = fp["rs_w"][i].shape[1]
        in_specs += [
            pl.BlockSpec((K, C, 2 * C), lambda b: (0, 0, 0)),  # in_w
            pl.BlockSpec((1, 2 * C), lambda b: (0, 0)),        # in_b
            pl.BlockSpec((C, rs_out), lambda b: (0, 0)),       # rs_w
            pl.BlockSpec((1, rs_out), lambda b: (0, 0)),       # rs_b
        ]
        args += [fp["in_w"][i], fp["in_b"][i], fp["rs_w"][i], fp["rs_b"][i]]
    in_specs += [
        pl.BlockSpec((C, n_half), lambda b: (0, 0)),           # end_w (t half)
        pl.BlockSpec((C, n_half), lambda b: (0, 0)),           # end_w (log_s half)
        pl.BlockSpec((1, n_half), lambda b: (0, 0)),           # end_b (t half)
        pl.BlockSpec((1, n_half), lambda b: (0, 0)),           # end_b (log_s half)
    ]
    args += [fp["end_w_t"], fp["end_w_s"], fp["end_b_t"], fp["end_b_s"]]

    xa, zb, lsum = pl.pallas_call(
        kernel,
        out_shape=(
            jax.ShapeDtypeStruct((B, Tg, n_half), audio_g.dtype),
            jax.ShapeDtypeStruct((B, Tg, n_half), audio_g.dtype),
            jax.ShapeDtypeStruct((B, 1, 1), jnp.float32),
        ),
        grid=(B,),
        in_specs=in_specs,
        out_specs=(
            pl.BlockSpec((None, Tg, n_half), lambda b: (b, 0, 0)),
            pl.BlockSpec((None, Tg, n_half), lambda b: (b, 0, 0)),
            pl.BlockSpec((None, 1, 1), lambda b: (b, 0, 0)),
        ),
        scratch_shapes=[pltpu.VMEM((Tg + 2 * PADROWS, C), jnp.float32)],
        compiler_params=pltpu.CompilerParams(dimension_semantics=("parallel",)),
    )(*args)
    return xa, zb, lsum[:, 0, 0]


# ----------------------------- plain-JAX glue --------------------------------
def upsample_linear_align_corners(x, out_size):
    """F.interpolate(x, size=out_size, mode='linear', align_corners=True), channel-last."""
    T_in = x.shape[1]
    if out_size == 1:
        pos = jnp.zeros((1,), jnp.float32)
    else:
        pos = jnp.arange(out_size, dtype=jnp.float32) * ((T_in - 1) / (out_size - 1))
    lo = jnp.clip(jnp.floor(pos).astype(jnp.int32), 0, T_in - 1)
    hi = jnp.minimum(lo + 1, T_in - 1)
    w = (pos - lo.astype(jnp.float32))[None, :, None]
    return x[:, lo, :] * (1.0 - w) + x[:, hi, :] * w


def _flow_channels():
    chans, n_rem = [], N_GROUP
    for k in range(N_FLOWS):
        if k % N_EARLY_EVERY == 0 and k > 0:
            n_rem -= N_EARLY_SIZE
        chans.append(n_rem)
    return chans


def init_params(key):
    # Deterministic synthetic init.  weight_norm at PyTorch init time has
    # g = ||v||, i.e. weight == v, so storing the weight directly is faithful.
    def nrm(k, shape, scale):
        return (scale * jax.random.normal(k, shape)).astype(DTYPE)

    keys = iter(jax.random.split(key, 256))
    params = {"speaker_embed": nrm(next(keys), (MAX_SPEAKERS, SPK_DIM), 0.1)}

    c_in = N_MEL + SPK_DIM
    params["cond"] = [
        dict(w=nrm(next(keys), (3, c_in, COND_HIDDEN), 0.05),
             b=nrm(next(keys), (COND_HIDDEN,), 0.05)),
        dict(w=nrm(next(keys), (3, COND_HIDDEN, COND_HIDDEN), 0.05),
             b=nrm(next(keys), (COND_HIDDEN,), 0.05)),
        dict(w=nrm(next(keys), (1, COND_HIDDEN, N_MEL), 0.05),
             b=nrm(next(keys), (N_MEL,), 0.05)),
    ]

    convinv, wns = [], []
    for n_ch in _flow_channels():
        n_half = n_ch // 2
        A = jax.random.normal(next(keys), (n_ch, n_ch), dtype=jnp.float32)
        Q, _ = jnp.linalg.qr(A)
        sgn = jnp.sign(jnp.linalg.det(Q))
        Q = Q.at[:, 0].multiply(jnp.where(sgn == 0, 1.0, sgn))   # det > 0
        convinv.append(Q.astype(DTYPE))

        C = WN_N_CHANNELS
        # NOTE: the real WN zero-inits `end`; use small non-zero values so the
        # coupling path exercises non-trivial log_s / t.
        wn = dict(
            start_w=nrm(next(keys), (1, n_half, C), 0.1),
            start_b=nrm(next(keys), (C,), 0.1),
            cond_w=nrm(next(keys), (1, N_MEL, 2 * C * WN_N_LAYERS), 0.1),
            cond_b=nrm(next(keys), (2 * C * WN_N_LAYERS,), 0.1),
            in_w=[], in_b=[], rs_w=[], rs_b=[],
            end_w=nrm(next(keys), (1, C, 2 * n_half), 0.02),
            end_b=nrm(next(keys), (2 * n_half,), 0.02),
        )
        for i in range(WN_N_LAYERS):
            wn["in_w"].append(nrm(next(keys), (WN_KERNEL_SIZE, C, 2 * C), 0.1))
            wn["in_b"].append(nrm(next(keys), (2 * C,), 0.1))
            rs_out = 2 * C if i < WN_N_LAYERS - 1 else C
            wn["rs_w"].append(nrm(next(keys), (1, C, rs_out), 0.1))
            wn["rs_b"].append(nrm(next(keys), (rs_out,), 0.1))
        wns.append(wn)
    params["convinv"] = convinv
    params["WN"] = wns
    return params


def prepare_params(params):
    """One-time parameter prep: pre-transpose/split 1x1 weights, precompute
    slogdet(W), reshape biases, split the WN end conv into t / log_s halves."""
    prep = {"speaker_embed": params["speaker_embed"]}
    c = params["cond"]
    prep["cond"] = dict(
        w1=c[0]["w"], b1=c[0]["b"].reshape(1, -1),
        w2=c[1]["w"], b2=c[1]["b"].reshape(1, -1),
        w3=c[2]["w"][0], b3=c[2]["b"].reshape(1, -1),
    )
    flows = []
    for Wk, wn in zip(params["convinv"], params["WN"]):
        n_ch = Wk.shape[0]
        n_half = n_ch // 2
        W_T = jnp.transpose(Wk)
        end_w = wn["end_w"][0]
        flows.append(dict(
            wa=W_T[:, :n_half], wb=W_T[:, n_half:],
            logabsdet=jnp.linalg.slogdet(Wk.astype(jnp.float32))[1],
            start_w=wn["start_w"][0], start_b=wn["start_b"].reshape(1, -1),
            cond_w=wn["cond_w"][0], cond_b=wn["cond_b"].reshape(1, -1),
            in_w=list(wn["in_w"]),
            in_b=[b.reshape(1, -1) for b in wn["in_b"]],
            rs_w=[w[0] for w in wn["rs_w"]],
            rs_b=[b.reshape(1, -1) for b in wn["rs_b"]],
            end_w_t=end_w[:, :n_half], end_w_s=end_w[:, n_half:],
            end_b_t=wn["end_b"][:n_half].reshape(1, -1),
            end_b_s=wn["end_b"][n_half:].reshape(1, -1),
        ))
    prep["flows"] = flows
    return prep


@jax.jit
def waveglow_forward(prep, spect, audio, speaker_ids):
    """spect: (B, n_mel, frames) [PyTorch NCW];  audio: (B, T_samples)."""
    B, _, Tf = spect.shape
    spect_cl = jnp.transpose(spect, (0, 2, 1))                     # (B, Tf, n_mel)

    spk = prep["speaker_embed"][speaker_ids]                       # (B, spk_dim)
    spect_cl = cond_network(prep, spect_cl, spk)                   # fused cond path + residual

    T_groups = audio.shape[1] // N_GROUP
    audio_g = audio.reshape(B, T_groups, N_GROUP)                  # channel-last grouped audio
    spect_up = upsample_linear_align_corners(spect_cl, T_groups)   # (B, Tg, n_mel)

    output_audio = []
    logdet = None
    for k in range(N_FLOWS):
        if k % N_EARLY_EVERY == 0 and k > 0:
            output_audio.append(audio_g[..., :N_EARLY_SIZE])
            audio_g = audio_g[..., N_EARLY_SIZE:]
        fp = prep["flows"][k]
        xa, zb, lsum = flow_step(fp, audio_g, spect_up)            # one fused Pallas call
        audio_g = jnp.concatenate([xa, zb], axis=-1)

        log_det_W = T_groups * fp["logabsdet"]                     # precomputed slogdet
        ld = log_det_W + lsum
        logdet = ld if logdet is None else logdet + ld

    output_audio.append(audio_g)
    out = jnp.concatenate(output_audio, axis=-1)                   # (B, Tg, n_group)
    return out.reshape(B, -1), logdet


if __name__ == "__main__":
    key = jax.random.PRNGKey(0)
    kp, ks, ka = jax.random.split(key, 3)
    params = init_params(kp)
    prep = prepare_params(params)

    spect = jax.random.normal(ks, (BATCH, N_MEL, N_FRAMES), dtype=DTYPE)
    audio = jax.random.normal(ka, (BATCH, AUDIO_LEN), dtype=DTYPE)
    speaker_ids = jnp.array([3, 7], dtype=jnp.int32)

    out_audio, logdet = waveglow_forward(prep, spect, audio, speaker_ids)
    jax.block_until_ready((out_audio, logdet))

    assert out_audio.shape == (BATCH, AUDIO_LEN), out_audio.shape
    assert logdet.shape == (BATCH,), logdet.shape
    assert bool(jnp.all(jnp.isfinite(out_audio))) and bool(jnp.all(jnp.isfinite(logdet)))
    print("KERNEL_OK")
</pallas_src>

<mosaic_0001>
module attributes {stable_mosaic.version = 11 : i64} {
  func.func @kernel(%arg0: i32, %arg1: memref<1x10x24xf32, #tpu.memory_space<vmem>>, %arg2: memref<3x24x256xf32, #tpu.memory_space<vmem>>, %arg3: memref<1x256xf32, #tpu.memory_space<vmem>>, %arg4: memref<3x256x256xf32, #tpu.memory_space<vmem>>, %arg5: memref<1x256xf32, #tpu.memory_space<vmem>>, %arg6: memref<256x8xf32, #tpu.memory_space<vmem>>, %arg7: memref<1x8xf32, #tpu.memory_space<vmem>>, %arg8: memref<1x8x8xf32, #tpu.memory_space<vmem>>, %arg9: memref<24x256xf32, #tpu.memory_space<vmem>>) attributes {dimension_semantics = [#tpu.dimension_semantics<parallel>], iteration_bounds = array<i64: 2>, scalar_prefetch = 0 : i64, scratch_operands = 1 : i64, tpu.core_type = #tpu.core_type<tc>, window_params = [{transform_indices = @transform_0, window_bounds = array<i64: 1, 10, 24>}, {pipeline_mode = #tpu.pipeline_mode<synchronous>, transform_indices = @transform_1, window_bounds = array<i64: 3, 24, 256>}, {pipeline_mode = #tpu.pipeline_mode<synchronous>, transform_indices = @transform_2, window_bounds = array<i64: 1, 256>}, {pipeline_mode = #tpu.pipeline_mode<synchronous>, transform_indices = @transform_3, window_bounds = array<i64: 3, 256, 256>}, {pipeline_mode = #tpu.pipeline_mode<synchronous>, transform_indices = @transform_4, window_bounds = array<i64: 1, 256>}, {pipeline_mode = #tpu.pipeline_mode<synchronous>, transform_indices = @transform_5, window_bounds = array<i64: 256, 8>}, {pipeline_mode = #tpu.pipeline_mode<synchronous>, transform_indices = @transform_6, window_bounds = array<i64: 1, 8>}, {transform_indices = @transform_7, window_bounds = array<i64: 1, 8, 8>}]} {
    %c0 = arith.constant 0 : index
    %c0_0 = arith.constant 0 : index
    %c0_1 = arith.constant 0 : index
    %0 = vector.load %arg1[%c0, %c0_0, %c0_1] : memref<1x10x24xf32, #tpu.memory_space<vmem>>, vector<1x8x24xf32>
    %1 = vector.shape_cast %0 : vector<1x8x24xf32> to vector<8x24xf32>
    %c0_2 = arith.constant 0 : index
    %c1 = arith.constant 1 : index
    %c0_3 = arith.constant 0 : index
    %2 = vector.load %arg1[%c0_2, %c1, %c0_3] : memref<1x10x24xf32, #tpu.memory_space<vmem>>, vector<1x8x24xf32>
    %3 = vector.shape_cast %2 : vector<1x8x24xf32> to vector<8x24xf32>
    %c0_4 = arith.constant 0 : index
    %c2 = arith.constant 2 : index
    %c0_5 = arith.constant 0 : index
    %4 = vector.load %arg1[%c0_4, %c2, %c0_5] : memref<1x10x24xf32, #tpu.memory_space<vmem>>, vector<1x8x24xf32>
    %5 = vector.shape_cast %4 : vector<1x8x24xf32> to vector<8x24xf32>
    %c0_6 = arith.constant 0 : index
    %c0_7 = arith.constant 0 : index
    %6 = vector.load %arg3[%c0_6, %c0_7] : memref<1x256xf32, #tpu.memory_space<vmem>>, vector<1x256xf32>
    %c0_8 = arith.constant 0 : index
    %c0_9 = arith.constant 0 : index
    %c0_10 = arith.constant 0 : index
    %7 = vector.load %arg2[%c0_8, %c0_9, %c0_10] : memref<3x24x256xf32, #tpu.memory_space<vmem>>, vector<1x24x256xf32>
    %8 = vector.shape_cast %7 : vector<1x24x256xf32> to vector<24x256xf32>
    %cst = arith.constant dense<0.000000e+00> : vector<8x256xf32>
    %9 = tpu.matmul %1, %8, %cst {dimension_numbers = #tpu.dot_dimension_numbers<[1], [0], [0], [1], [0, 0, 1, 1], [], []>} : vector<8x24xf32>, vector<24x256xf32>, vector<8x256xf32> -> vector<8x256xf32>
    %10 = vector.broadcast %6 : vector<1x256xf32> to vector<8x256xf32>
    %11 = arith.addf %10, %9 : vector<8x256xf32>
    %c1_11 = arith.constant 1 : index
    %c0_12 = arith.constant 0 : index
    %c0_13 = arith.constant 0 : index
    %12 = vector.load %arg2[%c1_11, %c0_12, %c0_13] : memref<3x24x256xf32, #tpu.memory_space<vmem>>, vector<1x24x256xf32>
    %13 = vector.shape_cast %12 : vector<1x24x256xf32> to vector<24x256xf32>
    %cst_14 = arith.constant dense<0.000000e+00> : vector<8x256xf32>
    %14 = tpu.matmul %3, %13, %cst_14 {dimension_numbers = #tpu.dot_dimension_numbers<[1], [0], [0], [1], [0, 0, 1, 1], [], []>} : vector<8x24xf32>, vector<24x256xf32>, vector<8x256xf32> -> vector<8x256xf32>
    %15 = arith.addf %11, %14 : vector<8x256xf32>
    %c2_15 = arith.constant 2 : index
    %c0_16 = arith.constant 0 : index
    %c0_17 = arith.constant 0 : index
    %16 = vector.load %arg2[%c2_15, %c0_16, %c0_17] : memref<3x24x256xf32, #tpu.memory_space<vmem>>, vector<1x24x256xf32>
    %17 = vector.shape_cast %16 : vector<1x24x256xf32> to vector<24x256xf32>
    %cst_18 = arith.constant dense<0.000000e+00> : vector<8x256xf32>
    %18 = tpu.matmul %5, %17, %cst_18 {dimension_numbers = #tpu.dot_dimension_numbers<[1], [0], [0], [1], [0, 0, 1, 1], [], []>} : vector<8x24xf32>, vector<24x256xf32>, vector<8x256xf32> -> vector<8x256xf32>
    %19 = arith.addf %15, %18 : vector<8x256xf32>
    %cst_19 = arith.constant 0.000000e+00 : f32
    %20 = vector.broadcast %cst_19 : f32 to vector<24x256xf32>
    %c0_20 = arith.constant 0 : index
    %c0_21 = arith.constant 0 : index
    %21 = vector.load %arg9[%c0_20, %c0_21] : memref<24x256xf32, #tpu.memory_space<vmem>>, vector<24x256xf32>
    tpu.vector_store %arg9[%c0_20, %c0_21], %20 {strides = array<i32>} : memref<24x256xf32, #tpu.memory_space<vmem>>, vector<24x256xf32>,
    %c8 = arith.constant 8 : index
    %c0_22 = arith.constant 0 : index
    %22 = vector.load %arg9[%c8, %c0_22] : memref<24x256xf32, #tpu.memory_space<vmem>>, vector<8x256xf32>
    tpu.vector_store %arg9[%c8, %c0_22], %19 {strides = array<i32>} : memref<24x256xf32, #tpu.memory_space<vmem>>, vector<8x256xf32>,
    %c0_23 = arith.constant 0 : index
    %c0_24 = arith.constant 0 : index
    %c0_25 = arith.constant 0 : index
    %23 = vector.load %arg4[%c0_23, %c0_24, %c0_25] : memref<3x256x256xf32, #tpu.memory_space<vmem>>, vector<1x256x256xf32>
    %24 = vector.shape_cast %23 : vector<1x256x256xf32> to vector<256x256xf32>
    %c1_26 = arith.constant 1 : index
    %c0_27 = arith.constant 0 : index
    %c0_28 = arith.constant 0 : index
    %25 = vector.load %arg4[%c1_26, %c0_27, %c0_28] : memref<3x256x256xf32, #tpu.memory_space<vmem>>, vector<1x256x256xf32>
    %26 = vector.shape_cast %25 : vector<1x256x256xf32> to vector<256x256xf32>
    %c2_29 = arith.constant 2 : index
    %c0_30 = arith.constant 0 : index
    %c0_31 = arith.constant 0 : index
    %27 = vector.load %arg4[%c2_29, %c0_30, %c0_31] : memref<3x256x256xf32, #tpu.memory_space<vmem>>, vector<1x256x256xf32>
    %28 = vector.shape_cast %27 : vector<1x256x256xf32> to vector<256x256xf32>
    %c0_32 = arith.constant 0 : index
    %c0_33 = arith.constant 0 : index
    %29 = vector.load %arg5[%c0_32, %c0_33] : memref<1x256xf32, #tpu.memory_space<vmem>>, vector<1x256xf32>
    %c7 = arith.constant 7 : index
    %c0_34 = arith.constant 0 : index
    %30 = vector.load %arg9[%c7, %c0_34] : memref<24x256xf32, #tpu.memory_space<vmem>>, vector<8x256xf32>
    %cst_35 = arith.constant dense<0.000000e+00> : vector<8x256xf32>
    %31 = tpu.matmul %30, %24, %cst_35 {dimension_numbers = #tpu.dot_dimension_numbers<[1], [0], [0], [1], [0, 0, 1, 1], [], []>} : vector<8x256xf32>, vector<256x256xf32>, vector<8x256xf32> -> vector<8x256xf32>
    %32 = vector.broadcast %29 : vector<1x256xf32> to vector<8x256xf32>
    %33 = arith.addf %32, %31 : vector<8x256xf32>
    %c8_36 = arith.constant 8 : index
    %c0_37 = arith.constant 0 : index
    %34 = vector.load %arg9[%c8_36, %c0_37] : memref<24x256xf32, #tpu.memory_space<vmem>>, vector<8x256xf32>
    %cst_38 = arith.constant dense<0.000000e+00> : vector<8x256xf32>
    %35 = tpu.matmul %34, %26, %cst_38 {dimension_numbers = #tpu.dot_dimension_numbers<[1], [0], [0], [1], [0, 0, 1, 1], [], []>} : vector<8x256xf32>, vector<256x256xf32>, vector<8x256xf32> -> vector<8x256xf32>
    %36 = arith.addf %33, %35 : vector<8x256xf32>
    %c9 = arith.constant 9 : index
    %c0_39 = arith.constant 0 : index
    %37 = vector.load %arg9[%c9, %c0_39] : memref<24x256xf32, #tpu.memory_space<vmem>>, vector<8x256xf32>
    %cst_40 = arith.constant dense<0.000000e+00> : vector<8x256xf32>
    %38 = tpu.matmul %37, %28, %cst_40 {dimension_numbers = #tpu.dot_dimension_numbers<[1], [0], [0], [1], [0, 0, 1, 1], [], []>} : vector<8x256xf32>, vector<256x256xf32>, vector<8x256xf32> -> vector<8x256xf32>
    %39 = arith.addf %36, %38 : vector<8x256xf32>
    %c8_41 = arith.constant 8 : index
    %c0_42 = arith.constant 0 : index
    %40 = vector.load %arg9[%c8_41, %c0_42] : memref<24x256xf32, #tpu.memory_space<vmem>>, vector<1x256xf32>
    %c15 = arith.constant 15 : index
    %c0_43 = arith.constant 0 : index
    %41 = vector.load %arg9[%c15, %c0_43] : memref<24x256xf32, #tpu.memory_space<vmem>>, vector<1x256xf32>
    %cst_44 = arith.constant dense<0.000000e+00> : vector<1x256xf32>
    %42 = tpu.matmul %40, %24, %cst_44 {dimension_numbers = #tpu.dot_dimension_numbers<[1], [0], [0], [1], [0, 0, 1, 1], [], []>} : vector<1x256xf32>, vector<256x256xf32>, vector<1x256xf32> -> vector<1x256xf32>
    %43 = vector.shape_cast %42 : vector<1x256xf32> to vector<1x256xf32>
    %44 = vector.broadcast %43 : vector<1x256xf32> to vector<8x256xf32>
    %cst_45 = arith.constant dense<0.000000e+00> : vector<1x256xf32>
    %45 = tpu.matmul %41, %28, %cst_45 {dimension_numbers = #tpu.dot_dimension_numbers<[1], [0], [0], [1], [0, 0, 1, 1], [], []>} : vector<1x256xf32>, vector<256x256xf32>, vector<1x256xf32> -> vector<1x256xf32>
    %46 = vector.shape_cast %45 : vector<1x256xf32> to vector<1x256xf32>
    %47 = vector.broadcast %46 : vector<1x256xf32> to vector<8x256xf32>
    %48 = tpu.iota {dimensions = array<i32: 0>} : vector<8x256xi32>
    %c0_i32 = arith.constant 0 : i32
    %49 = vector.broadcast %c0_i32 : i32 to vector<8x256xi32>
    %50 = arith.cmpi eq, %48, %49 : vector<8x256xi32>
    %cst_46 = arith.constant 0.000000e+00 : f32
    %51 = vector.broadcast %cst_46 : f32 to vector<8x256xf32>
    %52 = arith.select %50, %44, %51 : vector<8x256xi1>, vector<8x256xf32>
    %53 = arith.addf %39, %52 : vector<8x256xf32>
    %c7_i32 = arith.constant 7 : i32
    %54 = vector.broadcast %c7_i32 : i32 to vector<8x256xi32>
    %55 = arith.cmpi eq, %48, %54 : vector<8x256xi32>
    %cst_47 = arith.constant 0.000000e+00 : f32
    %56 = vector.broadcast %cst_47 : f32 to vector<8x256xf32>
    %57 = arith.select %55, %47, %56 : vector<8x256xi1>, vector<8x256xf32>
    %58 = arith.addf %53, %57 : vector<8x256xf32>
    %c0_48 = arith.constant 0 : index
    %c0_49 = arith.constant 0 : index
    %59 = vector.load %arg6[%c0_48, %c0_49] : memref<256x8xf32, #tpu.memory_space<vmem>>, vector<256x8xf32>
    %cst_50 = arith.constant dense<0.000000e+00> : vector<8x8xf32>
    %60 = tpu.matmul %58, %59, %cst_50 {dimension_numbers = #tpu.dot_dimension_numbers<[1], [0], [0], [1], [0, 0, 1, 1], [], []>} : vector<8x256xf32>, vector<256x8xf32>, vector<8x8xf32> -> vector<8x8xf32>
    %c0_51 = arith.constant 0 : index
    %c0_52 = arith.constant 0 : index
    %61 = vector.load %arg7[%c0_51, %c0_52] : memref<1x8xf32, #tpu.memory_space<vmem>>, vector<1x8xf32>
    %62 = vector.broadcast %61 : vector<1x8xf32> to vector<8x8xf32>
    %63 = arith.addf %60, %62 : vector<8x8xf32>
    %64 = vector.extract_strided_slice %3 {offsets = [0, 0], sizes = [8, 8], strides = [1, 1]} : vector<8x24xf32> to vector<8x8xf32>
    %65 = arith.addf %64, %63 : vector<8x8xf32>
    %c0_53 = arith.constant 0 : index
    %c0_54 = arith.constant 0 : index
    %c0_55 = arith.constant 0 : index
    %66 = vector.load %arg8[%c0_53, %c0_54, %c0_55] : memref<1x8x8xf32, #tpu.memory_space<vmem>>, vector<1x8x8xf32>
    %67 = vector.shape_cast %66 : vector<1x8x8xf32> to vector<8x8xf32>
    %68 = vector.shape_cast %65 : vector<8x8xf32> to vector<1x8x8xf32>
    tpu.vector_store %arg8[%c0_53, %c0_54, %c0_55], %68 {strides = array<i32>} : memref<1x8x8xf32, #tpu.memory_space<vmem>>, vector<1x8x8xf32>,
    return
  }
  func.func @transform_0(%arg0: i32) -> (i32, i32, i32) {
    %c0_i32 = arith.constant 0 : i32
    %c0_i32_0 = arith.constant 0 : i32
    %c0_i32_1 = arith.constant 0 : i32
    return %arg0, %c0_i32, %c0_i32_0 : i32, i32, i32
  }
  func.func @transform_1(%arg0: i32) -> (i32, i32, i32) {
    %c0_i32 = arith.constant 0 : i32
    %c0_i32_0 = arith.constant 0 : i32
    %c0_i32_1 = arith.constant 0 : i32
    %c0_i32_2 = arith.constant 0 : i32
    return %c0_i32, %c0_i32_0, %c0_i32_1 : i32, i32, i32
  }
  func.func @transform_2(%arg0: i32) -> (i32, i32) {
    %c0_i32 = arith.constant 0 : i32
    %c0_i32_0 = arith.constant 0 : i32
    %c0_i32_1 = arith.constant 0 : i32
    return %c0_i32, %c0_i32_0 : i32, i32
  }
  func.func @transform_3(%arg0: i32) -> (i32, i32, i32) {
    %c0_i32 = arith.constant 0 : i32
    %c0_i32_0 = arith.constant 0 : i32
    %c0_i32_1 = arith.constant 0 : i32
    %c0_i32_2 = arith.constant 0 : i32
    return %c0_i32, %c0_i32_0, %c0_i32_1 : i32, i32, i32
  }
  func.func @transform_4(%arg0: i32) -> (i32, i32) {
    %c0_i32 = arith.constant 0 : i32
    %c0_i32_0 = arith.constant 0 : i32
    %c0_i32_1 = arith.constant 0 : i32
    return %c0_i32, %c0_i32_0 : i32, i32
  }
  func.func @transform_5(%arg0: i32) -> (i32, i32) {
    %c0_i32 = arith.constant 0 : i32
    %c0_i32_0 = arith.constant 0 : i32
    %c0_i32_1 = arith.constant 0 : i32
    return %c0_i32, %c0_i32_0 : i32, i32
  }
  func.func @transform_6(%arg0: i32) -> (i32, i32) {
    %c0_i32 = arith.constant 0 : i32
    %c0_i32_0 = arith.constant 0 : i32
    %c0_i32_1 = arith.constant 0 : i32
    return %c0_i32, %c0_i32_0 : i32, i32
  }
  func.func @transform_7(%arg0: i32) -> (i32, i32, i32) {
    %c0_i32 = arith.constant 0 : i32
    %c0_i32_0 = arith.constant 0 : i32
    %c0_i32_1 = arith.constant 0 : i32
    return %arg0, %c0_i32, %c0_i32_0 : i32, i32, i32
  }
}

module attributes {stable_mosaic.version = 11 : i64} {
  func.func @kernel(%arg0: i32, %arg1: memref<1x16x8xf32, #tpu.memory_space<vmem>>, %arg2: memref<1x16x8xf32, #tpu.memory_space<vmem>>, %arg3: memref<8x4xf32, #tpu.memory_space<vmem>>, %arg4: memref<8x4xf32, #tpu.memory_space<vmem>>, %arg5: memref<4x32xf32, #tpu.memory_space<vmem>>, %arg6: memref<1x32xf32, #tpu.memory_space<vmem>>, %arg7: memref<8x128xf32, #tpu.memory_space<vmem>>, %arg8: memref<1x128xf32, #tpu.memory_space<vmem>>, %arg9: memref<3x32x64xf32, #tpu.memory_space<vmem>>, %arg10: memref<1x64xf32, #tpu.memory_space<vmem>>, %arg11: memref<32x64xf32, #tpu.memory_space<vmem>>, %arg12: memref<1x64xf32, #tpu.memory_space<vmem>>, %arg13: memref<3x32x64xf32, #tpu.memory_space<vmem>>, %arg14: memref<1x64xf32, #tpu.memory_space<vmem>>, %arg15: memref<32x32xf32, #tpu.memory_space<vmem>>, %arg16: memref<1x32xf32, #tpu.memory_space<vmem>>, %arg17: memref<32x4xf32, #tpu.memory_space<vmem>>, %arg18: memref<32x4xf32, #tpu.memory_space<vmem>>, %arg19: memref<1x4xf32, #tpu.memory_space<vmem>>, %arg20: memref<1x4xf32, #tpu.memory_space<vmem>>, %arg21: memref<1x16x4xf32, #tpu.memory_space<vmem>>, %arg22: memref<1x16x4xf32, #tpu.memory_space<vmem>>, %arg23: memref<1x1x1xf32, #tpu.memory_space<vmem>>, %arg24: memref<32x32xf32, #tpu.memory_space<vmem>>) attributes {dimension_semantics = [#tpu.dimension_semantics<parallel>], iteration_bounds = array<i64: 2>, scalar_prefetch = 0 : i64, scratch_operands = 1 : i64, tpu.core_type = #tpu.core_type<tc>, window_params = [{transform_indices = @transform_0, window_bounds = array<i64: 1, 16, 8>}, {transform_indices = @transform_1, window_bounds = array<i64: 1, 16, 8>}, {pipeline_mode = #tpu.pipeline_mode<synchronous>, transform_indices = @transform_2, window_bounds = array<i64: 8, 4>}, {pipeline_mode = #tpu.pipeline_mode<synchronous>, transform_indices = @transform_3, window_bounds = array<i64: 8, 4>}, {pipeline_mode = #tpu.pipeline_mode<synchronous>, transform_indices = @transform_4, window_bounds = array<i64: 4, 32>}, {pipeline_mode = #tpu.pipeline_mode<synchronous>, transform_indices = @transform_5, window_bounds = array<i64: 1, 32>}, {pipeline_mode = #tpu.pipeline_mode<synchronous>, transform_indices = @transform_6, window_bounds = array<i64: 8, 128>}, {pipeline_mode = #tpu.pipeline_mode<synchronous>, transform_indices = @transform_7, window_bounds = array<i64: 1, 128>}, {pipeline_mode = #tpu.pipeline_mode<synchronous>, transform_indices = @transform_8, window_bounds = array<i64: 3, 32, 64>}, {pipeline_mode = #tpu.pipeline_mode<synchronous>, transform_indices = @transform_9, window_bounds = array<i64: 1, 64>}, {pipeline_mode = #tpu.pipeline_mode<synchronous>, transform_indices = @transform_10, window_bounds = array<i64: 32, 64>}, {pipeline_mode = #tpu.pipeline_mode<synchronous>, transform_indices = @transform_11, window_bounds = array<i64: 1, 64>}, {pipeline_mode = #tpu.pipeline_mode<synchronous>, transform_indices = @transform_12, window_bounds = array<i64: 3, 32, 64>}, {pipeline_mode = #tpu.pipeline_mode<synchronous>, transform_indices = @transform_13, window_bounds = array<i64: 1, 64>}, {pipeline_mode = #tpu.pipeline_mode<synchronous>, transform_indices = @transform_14, window_bounds = array<i64: 32, 32>}, {pipeline_mode = #tpu.pipeline_mode<synchronous>, transform_indices = @transform_15, window_bounds = array<i64: 1, 32>}, {pipeline_mode = #tpu.pipeline_mode<synchronous>, transform_indices = @transform_16, window_bounds = array<i64: 32, 4>}, {pipeline_mode = #tpu.pipeline_mode<synchronous>, transform_indices = @transform_17, window_bounds = array<i64: 32, 4>}, {pipeline_mode = #tpu.pipeline_mode<synchronous>, transform_indices = @transform_18, window_bounds = array<i64: 1, 4>}, {pipeline_mode = #tpu.pipeline_mode<synchronous>, transform_indices = @transform_19, window_bounds = array<i64: 1, 4>}, {transform_indices = @transform_20, window_bounds = array<i64: 1, 16, 4>}, {transform_indices = @transform_21, window_bounds = array<i64: 1, 16, 4>}, {transform_indices = @transform_22, window_bounds = array<i64: 1, 1, 1>}]} {
    %c0 = arith.constant 0 : index
    %c0_0 = arith.constant 0 : index
    %c0_1 = arith.constant 0 : index
    %0 = vector.load %arg1[%c0, %c0_0, %c0_1] : memref<1x16x8xf32, #tpu.memory_space<vmem>>, vector<1x16x8xf32>
    %1 = vector.shape_cast %0 : vector<1x16x8xf32> to vector<16x8xf32>
    %c0_2 = arith.constant 0 : index
    %c0_3 = arith.constant 0 : index
    %2 = vector.load %arg3[%c0_2, %c0_3] : memref<8x4xf32, #tpu.memory_space<vmem>>, vector<8x4xf32>
    %cst = arith.constant dense<0.000000e+00> : vector<16x4xf32>
    %3 = tpu.matmul %1, %2, %cst {dimension_numbers = #tpu.dot_dimension_numbers<[1], [0], [0], [1], [0, 0, 1, 1], [], []>} : vector<16x8xf32>, vector<8x4xf32>, vector<16x4xf32> -> vector<16x4xf32>
    %c0_4 = arith.constant 0 : index
    %c0_5 = arith.constant 0 : index
    %4 = vector.load %arg4[%c0_4, %c0_5] : memref<8x4xf32, #tpu.memory_space<vmem>>, vector<8x4xf32>
    %cst_6 = arith.constant dense<0.000000e+00> : vector<16x4xf32>
    %5 = tpu.matmul %1, %4, %cst_6 {dimension_numbers = #tpu.dot_dimension_numbers<[1], [0], [0], [1], [0, 0, 1, 1], [], []>} : vector<16x8xf32>, vector<8x4xf32>, vector<16x4xf32> -> vector<16x4xf32>
    %c0_7 = arith.constant 0 : index
    %c0_8 = arith.constant 0 : index
    %c0_9 = arith.constant 0 : index
    %6 = vector.load %arg2[%c0_7, %c0_8, %c0_9] : memref<1x16x8xf32, #tpu.memory_space<vmem>>, vector<1x16x8xf32>
    %7 = vector.shape_cast %6 : vector<1x16x8xf32> to vector<16x8xf32>
    %c0_10 = arith.constant 0 : index
    %c0_11 = arith.constant 0 : index
    %8 = vector.load %arg7[%c0_10, %c0_11] : memref<8x128xf32, #tpu.memory_space<vmem>>, vector<8x128xf32>
    %cst_12 = arith.constant dense<0.000000e+00> : vector<16x128xf32>
    %9 = tpu.matmul %7, %8, %cst_12 {dimension_numbers = #tpu.dot_dimension_numbers<[1], [0], [0], [1], [0, 0, 1, 1], [], []>} : vector<16x8xf32>, vector<8x128xf32>, vector<16x128xf32> -> vector<16x128xf32>
    %c0_13 = arith.constant 0 : index
    %c0_14 = arith.constant 0 : index
    %10 = vector.load %arg8[%c0_13, %c0_14] : memref<1x128xf32, #tpu.memory_space<vmem>>, vector<1x128xf32>
    %11 = vector.broadcast %10 : vector<1x128xf32> to vector<16x128xf32>
    %12 = arith.addf %9, %11 : vector<16x128xf32>
    %c0_15 = arith.constant 0 : index
    %c0_16 = arith.constant 0 : index
    %13 = vector.load %arg5[%c0_15, %c0_16] : memref<4x32xf32, #tpu.memory_space<vmem>>, vector<4x32xf32>
    %cst_17 = arith.constant dense<0.000000e+00> : vector<16x32xf32>
    %14 = tpu.matmul %3, %13, %cst_17 {dimension_numbers = #tpu.dot_dimension_numbers<[1], [0], [0], [1], [0, 0, 1, 1], [], []>} : vector<16x4xf32>, vector<4x32xf32>, vector<16x32xf32> -> vector<16x32xf32>
    %c0_18 = arith.constant 0 : index
    %c0_19 = arith.constant 0 : index
    %15 = vector.load %arg6[%c0_18, %c0_19] : memref<1x32xf32, #tpu.memory_space<vmem>>, vector<1x32xf32>
    %16 = vector.broadcast %15 : vector<1x32xf32> to vector<16x32xf32>
    %17 = arith.addf %14, %16 : vector<16x32xf32>
    %cst_20 = arith.constant 0.000000e+00 : f32
    %18 = vector.broadcast %cst_20 : f32 to vector<32x32xf32>
    %c0_21 = arith.constant 0 : index
    %c0_22 = arith.constant 0 : index
    %19 = vector.load %arg24[%c0_21, %c0_22] : memref<32x32xf32, #tpu.memory_space<vmem>>, vector<32x32xf32>
    tpu.vector_store %arg24[%c0_21, %c0_22], %18 {strides = array<i32>} : memref<32x32xf32, #tpu.memory_space<vmem>>, vector<32x32xf32>,
    %c8 = arith.constant 8 : index
    %c0_23 = arith.constant 0 : index
    %20 = vector.load %arg24[%c8, %c0_23] : memref<32x32xf32, #tpu.memory_space<vmem>>, vector<16x32xf32>
    tpu.vector_store %arg24[%c8, %c0_23], %17 {strides = array<i32>} : memref<32x32xf32, #tpu.memory_space<vmem>>, vector<16x32xf32>,
    %cst_24 = arith.constant 0.000000e+00 : f32
    %21 = vector.broadcast %cst_24 : f32 to vector<16x32xf32>
    %cst_25 = arith.constant 0.000000e+00 : f32
    %22 = vector.broadcast %cst_25 : f32 to vector<16x64xf32>
    %c7 = arith.constant 7 : index
    %c0_26 = arith.constant 0 : index
    %23 = vector.load %arg24[%c7, %c0_26] : memref<32x32xf32, #tpu.memory_space<vmem>>, vector<16x32xf32>
    %c0_27 = arith.constant 0 : index
    %c0_28 = arith.constant 0 : index
    %c0_29 = arith.constant 0 : index
    %24 = vector.load %arg9[%c0_27, %c0_28, %c0_29] : memref<3x32x64xf32, #tpu.memory_space<vmem>>, vector<1x32x64xf32>
    %25 = vector.shape_cast %24 : vector<1x32x64xf32> to vector<32x64xf32>
    %cst_30 = arith.constant dense<0.000000e+00> : vector<16x64xf32>
    %26 = tpu.matmul %23, %25, %cst_30 {dimension_numbers = #tpu.dot_dimension_numbers<[1], [0], [0], [1], [0, 0, 1, 1], [], []>} : vector<16x32xf32>, vector<32x64xf32>, vector<16x64xf32> -> vector<16x64xf32>
    %27 = arith.addf %22, %26 : vector<16x64xf32>
    %c8_31 = arith.constant 8 : index
    %c0_32 = arith.constant 0 : index
    %28 = vector.load %arg24[%c8_31, %c0_32] : memref<32x32xf32, #tpu.memory_space<vmem>>, vector<16x32xf32>
    %c1 = arith.constant 1 : index
    %c0_33 = arith.constant 0 : index
    %c0_34 = arith.constant 0 : index
    %29 = vector.load %arg9[%c1, %c0_33, %c0_34] : memref<3x32x64xf32, #tpu.memory_space<vmem>>, vector<1x32x64xf32>
    %30 = vector.shape_cast %29 : vector<1x32x64xf32> to vector<32x64xf32>
    %cst_35 = arith.constant dense<0.000000e+00> : vector<16x64xf32>
    %31 = tpu.matmul %28, %30, %cst_35 {dimension_numbers = #tpu.dot_dimension_numbers<[1], [0], [0], [1], [0, 0, 1, 1], [], []>} : vector<16x32xf32>, vector<32x64xf32>, vector<16x64xf32> -> vector<16x64xf32>
    %32 = arith.addf %27, %31 : vector<16x64xf32>
    %c9 = arith.constant 9 : index
    %c0_36 = arith.constant 0 : index
    %33 = vector.load %arg24[%c9, %c0_36] : memref<32x32xf32, #tpu.memory_space<vmem>>, vector<16x32xf32>
    %c2 = arith.constant 2 : index
    %c0_37 = arith.constant 0 : index
    %c0_38 = arith.constant 0 : index
    %34 = vector.load %arg9[%c2, %c0_37, %c0_38] : memref<3x32x64xf32, #tpu.memory_space<vmem>>, vector<1x32x64xf32>
    %35 = vector.shape_cast %34 : vector<1x32x64xf32> to vector<32x64xf32>
    %cst_39 = arith.constant dense<0.000000e+00> : vector<16x64xf32>
    %36 = tpu.matmul %33, %35, %cst_39 {dimension_numbers = #tpu.dot_dimension_numbers<[1], [0], [0], [1], [0, 0, 1, 1], [], []>} : vector<16x32xf32>, vector<32x64xf32>, vector<16x64xf32> -> vector<16x64xf32>
    %37 = arith.addf %32, %36 : vector<16x64xf32>
    %c0_40 = arith.constant 0 : index
    %c0_41 = arith.constant 0 : index
    %38 = vector.load %arg10[%c0_40, %c0_41] : memref<1x64xf32, #tpu.memory_space<vmem>>, vector<1x64xf32>
    %39 = vector.broadcast %38 : vector<1x64xf32> to vector<16x64xf32>
    %40 = arith.addf %37, %39 : vector<16x64xf32>
    %41 = vector.extract_strided_slice %12 {offsets = [0, 0], sizes = [16, 64], strides = [1, 1]} : vector<16x128xf32> to vector<16x64xf32>
    %42 = arith.addf %40, %41 : vector<16x64xf32>
    %43 = vector.extract_strided_slice %42 {offsets = [0, 0], sizes = [16, 32], strides = [1, 1]} : vector<16x64xf32> to vector<16x32xf32>
    %44 = math.tanh %43 : vector<16x32xf32>
    %45 = vector.extract_strided_slice %42 {offsets = [0, 32], sizes = [16, 32], strides = [1, 1]} : vector<16x64xf32> to vector<16x32xf32>
    %46 = arith.negf %45 : vector<16x32xf32>
    %47 = math.exp %46 : vector<16x32xf32>
    %cst_42 = arith.constant 1.000000e+00 : f32
    %48 = vector.broadcast %cst_42 : f32 to vector<16x32xf32>
    %49 = arith.addf %48, %47 : vector<16x32xf32>
    %50 = arith.divf %48, %49 : vector<16x32xf32>
    %51 = arith.mulf %44, %50 : vector<16x32xf32>
    %c0_43 = arith.constant 0 : index
    %c0_44 = arith.constant 0 : index
    %52 = vector.load %arg11[%c0_43, %c0_44] : memref<32x64xf32, #tpu.memory_space<vmem>>, vector<32x64xf32>
    %cst_45 = arith.constant dense<0.000000e+00> : vector<16x64xf32>
    %53 = tpu.matmul %51, %52, %cst_45 {dimension_numbers = #tpu.dot_dimension_numbers<[1], [0], [0], [1], [0, 0, 1, 1], [], []>} : vector<16x32xf32>, vector<32x64xf32>, vector<16x64xf32> -> vector<16x64xf32>
    %c0_46 = arith.constant 0 : index
    %c0_47 = arith.constant 0 : index
    %54 = vector.load %arg12[%c0_46, %c0_47] : memref<1x64xf32, #tpu.memory_space<vmem>>, vector<1x64xf32>
    %55 = vector.broadcast %54 : vector<1x64xf32> to vector<16x64xf32>
    %56 = arith.addf %53, %55 : vector<16x64xf32>
    %57 = vector.extract_strided_slice %56 {offsets = [0, 0], sizes = [16, 32], strides = [1, 1]} : vector<16x64xf32> to vector<16x32xf32>
    %58 = arith.addf %17, %57 : vector<16x32xf32>
    %c8_48 = arith.constant 8 : index
    %c0_49 = arith.constant 0 : index
    %59 = vector.load %arg24[%c8_48, %c0_49] : memref<32x32xf32, #tpu.memory_space<vmem>>, vector<16x32xf32>
    tpu.vector_store %arg24[%c8_48, %c0_49], %58 {strides = array<i32>} : memref<32x32xf32, #tpu.memory_space<vmem>>, vector<16x32xf32>,
    %60 = vector.extract_strided_slice %56 {offsets = [0, 32], sizes = [16, 32], strides = [1, 1]} : vector<16x64xf32> to vector<16x32xf32>
    %61 = arith.addf %21, %60 : vector<16x32xf32>
    %cst_50 = arith.constant 0.000000e+00 : f32
    %62 = vector.broadcast %cst_50 : f32 to vector<16x64xf32>
    %c6 = arith.constant 6 : index
    %c0_51 = arith.constant 0 : index
    %63 = vector.load %arg24[%c6, %c0_51] : memref<32x32xf32, #tpu.memory_space<vmem>>, vector<16x32xf32>
    %c0_52 = arith.constant 0 : index
    %c0_53 = arith.constant 0 : index
    %c0_54 = arith.constant 0 : index
    %64 = vector.load %arg13[%c0_52, %c0_53, %c0_54] : memref<3x32x64xf32, #tpu.memory_space<vmem>>, vector<1x32x64xf32>
    %65 = vector.shape_cast %64 : vector<1x32x64xf32> to vector<32x64xf32>
    %cst_55 = arith.constant dense<0.000000e+00> : vector<16x64xf32>
    %66 = tpu.matmul %63, %65, %cst_55 {dimension_numbers = #tpu.dot_dimension_numbers<[1], [0], [0], [1], [0, 0, 1, 1], [], []>} : vector<16x32xf32>, vector<32x64xf32>, vector<16x64xf32> -> vector<16x64xf32>
    %67 = arith.addf %62, %66 : vector<16x64xf32>
    %c8_56 = arith.constant 8 : index
    %c0_57 = arith.constant 0 : index
    %68 = vector.load %arg24[%c8_56, %c0_57] : memref<32x32xf32, #tpu.memory_space<vmem>>, vector<16x32xf32>
    %c1_58 = arith.constant 1 : index
    %c0_59 = arith.constant 0 : index
    %c0_60 = arith.constant 0 : index
    %69 = vector.load %arg13[%c1_58, %c0_59, %c0_60] : memref<3x32x64xf32, #tpu.memory_space<vmem>>, vector<1x32x64xf32>
    %70 = vector.shape_cast %69 : vector<1x32x64xf32> to vector<32x64xf32>
    %cst_61 = arith.constant dense<0.000000e+00> : vector<16x64xf32>
    %71 = tpu.matmul %68, %70, %cst_61 {dimension_numbers = #tpu.dot_dimension_numbers<[1], [0], [0], [1], [0, 0, 1, 1], [], []>} : vector<16x32xf32>, vector<32x64xf32>, vector<16x64xf32> -> vector<16x64xf32>
    %72 = arith.addf %67, %71 : vector<16x64xf32>
    %c10 = arith.constant 10 : index
    %c0_62 = arith.constant 0 : index
    %73 = vector.load %arg24[%c10, %c0_62] : memref<32x32xf32, #tpu.memory_space<vmem>>, vector<16x32xf32>
    %c2_63 = arith.constant 2 : index
    %c0_64 = arith.constant 0 : index
    %c0_65 = arith.constant 0 : index
    %74 = vector.load %arg13[%c2_63, %c0_64, %c0_65] : memref<3x32x64xf32, #tpu.memory_space<vmem>>, vector<1x32x64xf32>
    %75 = vector.shape_cast %74 : vector<1x32x64xf32> to vector<32x64xf32>
    %cst_66 = arith.constant dense<0.000000e+00> : vector<16x64xf32>
    %76 = tpu.matmul %73, %75, %cst_66 {dimension_numbers = #tpu.dot_dimension_numbers<[1], [0], [0], [1], [0, 0, 1, 1], [], []>} : vector<16x32xf32>, vector<32x64xf32>, vector<16x64xf32> -> vector<16x64xf32>
    %77 = arith.addf %72, %76 : vector<16x64xf32>
    %c0_67 = arith.constant 0 : index
    %c0_68 = arith.constant 0 : index
    %78 = vector.load %arg14[%c0_67, %c0_68] : memref<1x64xf32, #tpu.memory_space<vmem>>, vector<1x64xf32>
    %79 = vector.broadcast %78 : vector<1x64xf32> to vector<16x64xf32>
    %80 = arith.addf %77, %79 : vector<16x64xf32>
    %81 = vector.extract_strided_slice %12 {offsets = [0, 64], sizes = [16, 64], strides = [1, 1]} : vector<16x128xf32> to vector<16x64xf32>
    %82 = arith.addf %80, %81 : vector<16x64xf32>
    %83 = vector.extract_strided_slice %82 {offsets = [0, 0], sizes = [16, 32], strides = [1, 1]} : vector<16x64xf32> to vector<16x32xf32>
    %84 = math.tanh %83 : vector<16x32xf32>
    %85 = vector.extract_strided_slice %82 {offsets = [0, 32], sizes = [16, 32], strides = [1, 1]} : vector<16x64xf32> to vector<16x32xf32>
    %86 = arith.negf %85 : vector<16x32xf32>
    %87 = math.exp %86 : vector<16x32xf32>
    %cst_69 = arith.constant 1.000000e+00 : f32
    %88 = vector.broadcast %cst_69 : f32 to vector<16x32xf32>
    %89 = arith.addf %88, %87 : vector<16x32xf32>
    %90 = arith.divf %88, %89 : vector<16x32xf32>
    %91 = arith.mulf %84, %90 : vector<16x32xf32>
    %c0_70 = arith.constant 0 : index
    %c0_71 = arith.constant 0 : index
    %92 = vector.load %arg15[%c0_70, %c0_71] : memref<32x32xf32, #tpu.memory_space<vmem>>, vector<32x32xf32>
    %cst_72 = arith.constant dense<0.000000e+00> : vector<16x32xf32>
    %93 = tpu.matmul %91, %92, %cst_72 {dimension_numbers = #tpu.dot_dimension_numbers<[1], [0], [0], [1], [0, 0, 1, 1], [], []>} : vector<16x32xf32>, vector<32x32xf32>, vector<16x32xf32> -> vector<16x32xf32>
    %c0_73 = arith.constant 0 : index
    %c0_74 = arith.constant 0 : index
    %94 = vector.load %arg16[%c0_73, %c0_74] : memref<1x32xf32, #tpu.memory_space<vmem>>, vector<1x32xf32>
    %95 = vector.broadcast %94 : vector<1x32xf32> to vector<16x32xf32>
    %96 = arith.addf %93, %95 : vector<16x32xf32>
    %97 = arith.addf %61, %96 : vector<16x32xf32>
    %c0_75 = arith.constant 0 : index
    %c0_76 = arith.constant 0 : index
    %98 = vector.load %arg17[%c0_75, %c0_76] : memref<32x4xf32, #tpu.memory_space<vmem>>, vector<32x4xf32>
    %cst_77 = arith.constant dense<0.000000e+00> : vector<16x4xf32>
    %99 = tpu.matmul %97, %98, %cst_77 {dimension_numbers = #tpu.dot_dimension_numbers<[1], [0], [0], [1], [0, 0, 1, 1], [], []>} : vector<16x32xf32>, vector<32x4xf32>, vector<16x4xf32> -> vector<16x4xf32>
    %c0_78 = arith.constant 0 : index
    %c0_79 = arith.constant 0 : index
    %100 = vector.load %arg19[%c0_78, %c0_79] : memref<1x4xf32, #tpu.memory_space<vmem>>, vector<1x4xf32>
    %101 = vector.broadcast %100 : vector<1x4xf32> to vector<16x4xf32>
    %102 = arith.addf %99, %101 : vector<16x4xf32>
    %c0_80 = arith.constant 0 : index
    %c0_81 = arith.constant 0 : index
    %103 = vector.load %arg18[%c0_80, %c0_81] : memref<32x4xf32, #tpu.memory_space<vmem>>, vector<32x4xf32>
    %cst_82 = arith.constant dense<0.000000e+00> : vector<16x4xf32>
    %104 = tpu.matmul %97, %103, %cst_82 {dimension_numbers = #tpu.dot_dimension_numbers<[1], [0], [0], [1], [0, 0, 1, 1], [], []>} : vector<16x32xf32>, vector<32x4xf32>, vector<16x4xf32> -> vector<16x4xf32>
    %c0_83 = arith.constant 0 : index
    %c0_84 = arith.constant 0 : index
    %105 = vector.load %arg20[%c0_83, %c0_84] : memref<1x4xf32, #tpu.memory_space<vmem>>, vector<1x4xf32>
    %106 = vector.broadcast %105 : vector<1x4xf32> to vector<16x4xf32>
    %107 = arith.addf %104, %106 : vector<16x4xf32>
    %108 = math.exp %107 : vector<16x4xf32>
    %109 = arith.mulf %5, %108 : vector<16x4xf32>
    %110 = arith.addf %109, %102 : vector<16x4xf32>
    %c0_85 = arith.constant 0 : index
    %c0_86 = arith.constant 0 : index
    %c0_87 = arith.constant 0 : index
    %111 = vector.load %arg21[%c0_85, %c0_86, %c0_87] : memref<1x16x4xf32, #tpu.memory_space<vmem>>, vector<1x16x4xf32>
    %112 = vector.shape_cast %111 : vector<1x16x4xf32> to vector<16x4xf32>
    %113 = vector.shape_cast %3 : vector<16x4xf32> to vector<1x16x4xf32>
    tpu.vector_store %arg21[%c0_85, %c0_86, %c0_87], %113 {strides = array<i32>} : memref<1x16x4xf32, #tpu.memory_space<vmem>>, vector<1x16x4xf32>,
    %c0_88 = arith.constant 0 : index
    %c0_89 = arith.constant 0 : index
    %c0_90 = arith.constant 0 : index
    %114 = vector.load %arg22[%c0_88, %c0_89, %c0_90] : memref<1x16x4xf32, #tpu.memory_space<vmem>>, vector<1x16x4xf32>
    %115 = vector.shape_cast %114 : vector<1x16x4xf32> to vector<16x4xf32>
    %116 = vector.shape_cast %110 : vector<16x4xf32> to vector<1x16x4xf32>
    tpu.vector_store %arg22[%c0_88, %c0_89, %c0_90], %116 {strides = array<i32>} : memref<1x16x4xf32, #tpu.memory_space<vmem>>, vector<1x16x4xf32>,
    %cst_91 = arith.constant dense<0.000000e+00> : vector<16xf32>
    %117 = vector.multi_reduction <add>, %107, %cst_91 [1] : vector<16x4xf32> to vector<16xf32>
    %118 = vector.shape_cast %117 : vector<16xf32> to vector<16x1xf32>
    %cst_92 = arith.constant dense<0.000000e+00> : vector<1xf32>
    %119 = vector.multi_reduction <add>, %118, %cst_92 [0] : vector<16x1xf32> to vector<1xf32>
    %120 = vector.shape_cast %119 : vector<1xf32> to vector<1x1xf32>
    %c0_93 = arith.constant 0 : index
    %c0_94 = arith.constant 0 : index
    %c0_95 = arith.constant 0 : index
    %121 = vector.load %arg23[%c0_93, %c0_94, %c0_95] : memref<1x1x1xf32, #tpu.memory_space<vmem>>, vector<1x1x1xf32>
    %122 = vector.shape_cast %121 : vector<1x1x1xf32> to vector<1x1xf32>
    %123 = vector.shape_cast %120 : vector<1x1xf32> to vector<1x1x1xf32>
    tpu.vector_store %arg23[%c0_93, %c0_94, %c0_95], %123 {strides = array<i32>} : memref<1x1x1xf32, #tpu.memory_space<vmem>>, vector<1x1x1xf32>,
    return
  }
  func.func @transform_0(%arg0: i32) -> (i32, i32, i32) {
    %c0_i32 = arith.constant 0 : i32
    %c0_i32_0 = arith.constant 0 : i32
    %c0_i32_1 = arith.constant 0 : i32
    return %arg0, %c0_i32, %c0_i32_0 : i32, i32, i32
  }
  func.func @transform_1(%arg0: i32) -> (i32, i32, i32) {
    %c0_i32 = arith.constant 0 : i32
    %c0_i32_0 = arith.constant 0 : i32
    %c0_i32_1 = arith.constant 0 : i32
    return %arg0, %c0_i32, %c0_i32_0 : i32, i32, i32
  }
  func.func @transform_2(%arg0: i32) -> (i32, i32) {
    %c0_i32 = arith.constant 0 : i32
    %c0_i32_0 = arith.constant 0 : i32
    %c0_i32_1 = arith.constant 0 : i32
    return %c0_i32, %c0_i32_0 : i32, i32
  }
  func.func @transform_3(%arg0: i32) -> (i32, i32) {
    %c0_i32 = arith.constant 0 : i32
    %c0_i32_0 = arith.constant 0 : i32
    %c0_i32_1 = arith.constant 0 : i32
    return %c0_i32, %c0_i32_0 : i32, i32
  }
  func.func @transform_4(%arg0: i32) -> (i32, i32) {
    %c0_i32 = arith.constant 0 : i32
    %c0_i32_0 = arith.constant 0 : i32
    %c0_i32_1 = arith.constant 0 : i32
    return %c0_i32, %c0_i32_0 : i32, i32
  }
  func.func @transform_5(%arg0: i32) -> (i32, i32) {
    %c0_i32 = arith.constant 0 : i32
    %c0_i32_0 = arith.constant 0 : i32
    %c0_i32_1 = arith.constant 0 : i32
    return %c0_i32, %c0_i32_0 : i32, i32
  }
  func.func @transform_6(%arg0: i32) -> (i32, i32) {
    %c0_i32 = arith.constant 0 : i32
    %c0_i32_0 = arith.constant 0 : i32
    %c0_i32_1 = arith.constant 0 : i32
    return %c0_i32, %c0_i32_0 : i32, i32
  }
  func.func @transform_7(%arg0: i32) -> (i32, i32) {
    %c0_i32 = arith.constant 0 : i32
    %c0_i32_0 = arith.constant 0 : i32
    %c0_i32_1 = arith.constant 0 : i32
    return %c0_i32, %c0_i32_0 : i32, i32
  }
  func.func @transform_8(%arg0: i32) -> (i32, i32, i32) {
    %c0_i32 = arith.constant 0 : i32
    %c0_i32_0 = arith.constant 0 : i32
    %c0_i32_1 = arith.constant 0 : i32
    %c0_i32_2 = arith.constant 0 : i32
    return %c0_i32, %c0_i32_0, %c0_i32_1 : i32, i32, i32
  }
  func.func @transform_9(%arg0: i32) -> (i32, i32) {
    %c0_i32 = arith.constant 0 : i32
    %c0_i32_0 = arith.constant 0 : i32
    %c0_i32_1 = arith.constant 0 : i32
    return %c0_i32, %c0_i32_0 : i32, i32
  }
  func.func @transform_10(%arg0: i32) -> (i32, i32) {
    %c0_i32 = arith.constant 0 : i32
    %c0_i32_0 = arith.constant 0 : i32
    %c0_i32_1 = arith.constant 0 : i32
    return %c0_i32, %c0_i32_0 : i32, i32
  }
  func.func @transform_11(%arg0: i32) -> (i32, i32) {
    %c0_i32 = arith.constant 0 : i32
    %c0_i32_0 = arith.constant 0 : i32
    %c0_i32_1 = arith.constant 0 : i32
    return %c0_i32, %c0_i32_0 : i32, i32
  }
  func.func @transform_12(%arg0: i32) -> (i32, i32, i32) {
    %c0_i32 = arith.constant 0 : i32
    %c0_i32_0 = arith.constant 0 : i32
    %c0_i32_1 = arith.constant 0 : i32
    %c0_i32_2 = arith.constant 0 : i32
    return %c0_i32, %c0_i32_0, %c0_i32_1 : i32, i32, i32
  }
  func.func @transform_13(%arg0: i32) -> (i32, i32) {
    %c0_i32 = arith.constant 0 : i32
    %c0_i32_0 = arith.constant 0 : i32
    %c0_i32_1 = arith.constant 0 : i32
    return %c0_i32, %c0_i32_0 : i32, i32
  }
  func.func @transform_14(%arg0: i32) -> (i32, i32) {
    %c0_i32 = arith.constant 0 : i32
    %c0_i32_0 = arith.constant 0 : i32
    %c0_i32_1 = arith.constant 0 : i32
    return %c0_i32, %c0_i32_0 : i32, i32
  }
  func.func @transform_15(%arg0: i32) -> (i32, i32) {
    %c0_i32 = arith.constant 0 : i32
    %c0_i32_0 = arith.constant 0 : i32
    %c0_i32_1 = arith.constant 0 : i32
    return %c0_i32, %c0_i32_0 : i32, i32
  }
  func.func @transform_16(%arg0: i32) -> (i32, i32) {
    %c0_i32 = arith.constant 0 : i32
    %c0_i32_0 = arith.constant 0 : i32
    %c0_i32_1 = arith.constant 0 : i32
    return %c0_i32, %c0_i32_0 : i32, i32
  }
  func.func @transform_17(%arg0: i32) -> (i32, i32) {
    %c0_i32 = arith.constant 0 : i32
    %c0_i32_0 = arith.constant 0 : i32
    %c0_i32_1 = arith.constant 0 : i32
    return %c0_i32, %c0_i32_0 : i32, i32
  }
  func.func @transform_18(%arg0: i32) -> (i32, i32) {
    %c0_i32 = arith.constant 0 : i32
    %c0_i32_0 = arith.constant 0 : i32
    %c0_i32_1 = arith.constant 0 : i32
    return %c0_i32, %c0_i32_0 : i32, i32
  }
  func.func @transform_19(%arg0: i32) -> (i32, i32) {
    %c0_i32 = arith.constant 0 : i32
    %c0_i32_0 = arith.constant 0 : i32
    %c0_i32_1 = arith.constant 0 : i32
    return %c0_i32, %c0_i32_0 : i32, i32
  }
  func.func @transform_20(%arg0: i32) -> (i32, i32, i32) {
    %c0_i32 = arith.constant 0 : i32
    %c0_i32_0 = arith.constant 0 : i32
    %c0_i32_1 = arith.constant 0 : i32
    return %arg0, %c0_i32, %c0_i32_0 : i32, i32, i32
  }
  func.func @transform_21(%arg0: i32) -> (i32, i32, i32) {
    %c0_i32 = arith.constant 0 : i32
    %c0_i32_0 = arith.constant 0 : i32
    %c0_i32_1 = arith.constant 0 : i32
    return %arg0, %c0_i32, %c0_i32_0 : i32, i32, i32
  }
  func.func @transform_22(%arg0: i32) -> (i32, i32, i32) {
    %c0_i32 = arith.constant 0 : i32
    %c0_i32_0 = arith.constant 0 : i32
    %c0_i32_1 = arith.constant 0 : i32
    return %arg0, %c0_i32, %c0_i32_0 : i32, i32, i32
  }
}

module attributes {stable_mosaic.version = 11 : i64} {
  func.func @kernel(%arg0: i32, %arg1: memref<1x16x8xf32, #tpu.memory_space<vmem>>, %arg2: memref<1x16x8xf32, #tpu.memory_space<vmem>>, %arg3: memref<8x4xf32, #tpu.memory_space<vmem>>, %arg4: memref<8x4xf32, #tpu.memory_space<vmem>>, %arg5: memref<4x32xf32, #tpu.memory_space<vmem>>, %arg6: memref<1x32xf32, #tpu.memory_space<vmem>>, %arg7: memref<8x128xf32, #tpu.memory_space<vmem>>, %arg8: memref<1x128xf32, #tpu.memory_space<vmem>>, %arg9: memref<3x32x64xf32, #tpu.memory_space<vmem>>, %arg10: memref<1x64xf32, #tpu.memory_space<vmem>>, %arg11: memref<32x64xf32, #tpu.memory_space<vmem>>, %arg12: memref<1x64xf32, #tpu.memory_space<vmem>>, %arg13: memref<3x32x64xf32, #tpu.memory_space<vmem>>, %arg14: memref<1x64xf32, #tpu.memory_space<vmem>>, %arg15: memref<32x32xf32, #tpu.memory_space<vmem>>, %arg16: memref<1x32xf32, #tpu.memory_space<vmem>>, %arg17: memref<32x4xf32, #tpu.memory_space<vmem>>, %arg18: memref<32x4xf32, #tpu.memory_space<vmem>>, %arg19: memref<1x4xf32, #tpu.memory_space<vmem>>, %arg20: memref<1x4xf32, #tpu.memory_space<vmem>>, %arg21: memref<1x16x4xf32, #tpu.memory_space<vmem>>, %arg22: memref<1x16x4xf32, #tpu.memory_space<vmem>>, %arg23: memref<1x1x1xf32, #tpu.memory_space<vmem>>, %arg24: memref<32x32xf32, #tpu.memory_space<vmem>>) attributes {dimension_semantics = [#tpu.dimension_semantics<parallel>], iteration_bounds = array<i64: 2>, scalar_prefetch = 0 : i64, scratch_operands = 1 : i64, tpu.core_type = #tpu.core_type<tc>, window_params = [{transform_indices = @transform_0, window_bounds = array<i64: 1, 16, 8>}, {transform_indices = @transform_1, window_bounds = array<i64: 1, 16, 8>}, {pipeline_mode = #tpu.pipeline_mode<synchronous>, transform_indices = @transform_2, window_bounds = array<i64: 8, 4>}, {pipeline_mode = #tpu.pipeline_mode<synchronous>, transform_indices = @transform_3, window_bounds = array<i64: 8, 4>}, {pipeline_mode = #tpu.pipeline_mode<synchronous>, transform_indices = @transform_4, window_bounds = array<i64: 4, 32>}, {pipeline_mode = #tpu.pipeline_mode<synchronous>, transform_indices = @transform_5, window_bounds = array<i64: 1, 32>}, {pipeline_mode = #tpu.pipeline_mode<synchronous>, transform_indices = @transform_6, window_bounds = array<i64: 8, 128>}, {pipeline_mode = #tpu.pipeline_mode<synchronous>, transform_indices = @transform_7, window_bounds = array<i64: 1, 128>}, {pipeline_mode = #tpu.pipeline_mode<synchronous>, transform_indices = @transform_8, window_bounds = array<i64: 3, 32, 64>}, {pipeline_mode = #tpu.pipeline_mode<synchronous>, transform_indices = @transform_9, window_bounds = array<i64: 1, 64>}, {pipeline_mode = #tpu.pipeline_mode<synchronous>, transform_indices = @transform_10, window_bounds = array<i64: 32, 64>}, {pipeline_mode = #tpu.pipeline_mode<synchronous>, transform_indices = @transform_11, window_bounds = array<i64: 1, 64>}, {pipeline_mode = #tpu.pipeline_mode<synchronous>, transform_indices = @transform_12, window_bounds = array<i64: 3, 32, 64>}, {pipeline_mode = #tpu.pipeline_mode<synchronous>, transform_indices = @transform_13, window_bounds = array<i64: 1, 64>}, {pipeline_mode = #tpu.pipeline_mode<synchronous>, transform_indices = @transform_14, window_bounds = array<i64: 32, 32>}, {pipeline_mode = #tpu.pipeline_mode<synchronous>, transform_indices = @transform_15, window_bounds = array<i64: 1, 32>}, {pipeline_mode = #tpu.pipeline_mode<synchronous>, transform_indices = @transform_16, window_bounds = array<i64: 32, 4>}, {pipeline_mode = #tpu.pipeline_mode<synchronous>, transform_indices = @transform_17, window_bounds = array<i64: 32, 4>}, {pipeline_mode = #tpu.pipeline_mode<synchronous>, transform_indices = @transform_18, window_bounds = array<i64: 1, 4>}, {pipeline_mode = #tpu.pipeline_mode<synchronous>, transform_indices = @transform_19, window_bounds = array<i64: 1, 4>}, {transform_indices = @transform_20, window_bounds = array<i64: 1, 16, 4>}, {transform_indices = @transform_21, window_bounds = array<i64: 1, 16, 4>}, {transform_indices = @transform_22, window_bounds = array<i64: 1, 1, 1>}]} {
    %c0 = arith.constant 0 : index
    %c0_0 = arith.constant 0 : index
    %c0_1 = arith.constant 0 : index
    %0 = vector.load %arg1[%c0, %c0_0, %c0_1] : memref<1x16x8xf32, #tpu.memory_space<vmem>>, vector<1x16x8xf32>
    %1 = vector.shape_cast %0 : vector<1x16x8xf32> to vector<16x8xf32>
    %c0_2 = arith.constant 0 : index
    %c0_3 = arith.constant 0 : index
    %2 = vector.load %arg3[%c0_2, %c0_3] : memref<8x4xf32, #tpu.memory_space<vmem>>, vector<8x4xf32>
    %cst = arith.constant dense<0.000000e+00> : vector<16x4xf32>
    %3 = tpu.matmul %1, %2, %cst {dimension_numbers = #tpu.dot_dimension_numbers<[1], [0], [0], [1], [0, 0, 1, 1], [], []>} : vector<16x8xf32>, vector<8x4xf32>, vector<16x4xf32> -> vector<16x4xf32>
    %c0_4 = arith.constant 0 : index
    %c0_5 = arith.constant 0 : index
    %4 = vector.load %arg4[%c0_4, %c0_5] : memref<8x4xf32, #tpu.memory_space<vmem>>, vector<8x4xf32>
    %cst_6 = arith.constant dense<0.000000e+00> : vector<16x4xf32>
    %5 = tpu.matmul %1, %4, %cst_6 {dimension_numbers = #tpu.dot_dimension_numbers<[1], [0], [0], [1], [0, 0, 1, 1], [], []>} : vector<16x8xf32>, vector<8x4xf32>, vector<16x4xf32> -> vector<16x4xf32>
    %c0_7 = arith.constant 0 : index
    %c0_8 = arith.constant 0 : index
    %c0_9 = arith.constant 0 : index
    %6 = vector.load %arg2[%c0_7, %c0_8, %c0_9] : memref<1x16x8xf32, #tpu.memory_space<vmem>>, vector<1x16x8xf32>
    %7 = vector.shape_cast %6 : vector<1x16x8xf32> to vector<16x8xf32>
    %c0_10 = arith.constant 0 : index
    %c0_11 = arith.constant 0 : index
    %8 = vector.load %arg7[%c0_10, %c0_11] : memref<8x128xf32, #tpu.memory_space<vmem>>, vector<8x128xf32>
    %cst_12 = arith.constant dense<0.000000e+00> : vector<16x128xf32>
    %9 = tpu.matmul %7, %8, %cst_12 {dimension_numbers = #tpu.dot_dimension_numbers<[1], [0], [0], [1], [0, 0, 1, 1], [], []>} : vector<16x8xf32>, vector<8x128xf32>, vector<16x128xf32> -> vector<16x128xf32>
    %c0_13 = arith.constant 0 : index
    %c0_14 = arith.constant 0 : index
    %10 = vector.load %arg8[%c0_13, %c0_14] : memref<1x128xf32, #tpu.memory_space<vmem>>, vector<1x128xf32>
    %11 = vector.broadcast %10 : vector<1x128xf32> to vector<16x128xf32>
    %12 = arith.addf %9, %11 : vector<16x128xf32>
    %c0_15 = arith.constant 0 : index
    %c0_16 = arith.constant 0 : index
    %13 = vector.load %arg5[%c0_15, %c0_16] : memref<4x32xf32, #tpu.memory_space<vmem>>, vector<4x32xf32>
    %cst_17 = arith.constant dense<0.000000e+00> : vector<16x32xf32>
    %14 = tpu.matmul %3, %13, %cst_17 {dimension_numbers = #tpu.dot_dimension_numbers<[1], [0], [0], [1], [0, 0, 1, 1], [], []>} : vector<16x4xf32>, vector<4x32xf32>, vector<16x32xf32> -> vector<16x32xf32>
    %c0_18 = arith.constant 0 : index
    %c0_19 = arith.constant 0 : index
    %15 = vector.load %arg6[%c0_18, %c0_19] : memref<1x32xf32, #tpu.memory_space<vmem>>, vector<1x32xf32>
    %16 = vector.broadcast %15 : vector<1x32xf32> to vector<16x32xf32>
    %17 = arith.addf %14, %16 : vector<16x32xf32>
    %cst_20 = arith.constant 0.000000e+00 : f32
    %18 = vector.broadcast %cst_20 : f32 to vector<32x32xf32>
    %c0_21 = arith.constant 0 : index
    %c0_22 = arith.constant 0 : index
    %19 = vector.load %arg24[%c0_21, %c0_22] : memref<32x32xf32, #tpu.memory_space<vmem>>, vector<32x32xf32>
    tpu.vector_store %arg24[%c0_21, %c0_22], %18 {strides = array<i32>} : memref<32x32xf32, #tpu.memory_space<vmem>>, vector<32x32xf32>,
    %c8 = arith.constant 8 : index
    %c0_23 = arith.constant 0 : index
    %20 = vector.load %arg24[%c8, %c0_23] : memref<32x32xf32, #tpu.memory_space<vmem>>, vector<16x32xf32>
    tpu.vector_store %arg24[%c8, %c0_23], %17 {strides = array<i32>} : memref<32x32xf32, #tpu.memory_space<vmem>>, vector<16x32xf32>,
    %cst_24 = arith.constant 0.000000e+00 : f32
    %21 = vector.broadcast %cst_24 : f32 to vector<16x32xf32>
    %cst_25 = arith.constant 0.000000e+00 : f32
    %22 = vector.broadcast %cst_25 : f32 to vector<16x64xf32>
    %c7 = arith.constant 7 : index
    %c0_26 = arith.constant 0 : index
    %23 = vector.load %arg24[%c7, %c0_26] : memref<32x32xf32, #tpu.memory_space<vmem>>, vector<16x32xf32>
    %c0_27 = arith.constant 0 : index
    %c0_28 = arith.constant 0 : index
    %c0_29 = arith.constant 0 : index
    %24 = vector.load %arg9[%c0_27, %c0_28, %c0_29] : memref<3x32x64xf32, #tpu.memory_space<vmem>>, vector<1x32x64xf32>
    %25 = vector.shape_cast %24 : vector<1x32x64xf32> to vector<32x64xf32>
    %cst_30 = arith.constant dense<0.000000e+00> : vector<16x64xf32>
    %26 = tpu.matmul %23, %25, %cst_30 {dimension_numbers = #tpu.dot_dimension_numbers<[1], [0], [0], [1], [0, 0, 1, 1], [], []>} : vector<16x32xf32>, vector<32x64xf32>, vector<16x64xf32> -> vector<16x64xf32>
    %27 = arith.addf %22, %26 : vector<16x64xf32>
    %c8_31 = arith.constant 8 : index
    %c0_32 = arith.constant 0 : index
    %28 = vector.load %arg24[%c8_31, %c0_32] : memref<32x32xf32, #tpu.memory_space<vmem>>, vector<16x32xf32>
    %c1 = arith.constant 1 : index
    %c0_33 = arith.constant 0 : index
    %c0_34 = arith.constant 0 : index
    %29 = vector.load %arg9[%c1, %c0_33, %c0_34] : memref<3x32x64xf32, #tpu.memory_space<vmem>>, vector<1x32x64xf32>
    %30 = vector.shape_cast %29 : vector<1x32x64xf32> to vector<32x64xf32>
    %cst_35 = arith.constant dense<0.000000e+00> : vector<16x64xf32>
    %31 = tpu.matmul %28, %30, %cst_35 {dimension_numbers = #tpu.dot_dimension_numbers<[1], [0], [0], [1], [0, 0, 1, 1], [], []>} : vector<16x32xf32>, vector<32x64xf32>, vector<16x64xf32> -> vector<16x64xf32>
    %32 = arith.addf %27, %31 : vector<16x64xf32>
    %c9 = arith.constant 9 : index
    %c0_36 = arith.constant 0 : index
    %33 = vector.load %arg24[%c9, %c0_36] : memref<32x32xf32, #tpu.memory_space<vmem>>, vector<16x32xf32>
    %c2 = arith.constant 2 : index
    %c0_37 = arith.constant 0 : index
    %c0_38 = arith.constant 0 : index
    %34 = vector.load %arg9[%c2, %c0_37, %c0_38] : memref<3x32x64xf32, #tpu.memory_space<vmem>>, vector<1x32x64xf32>
    %35 = vector.shape_cast %34 : vector<1x32x64xf32> to vector<32x64xf32>
    %cst_39 = arith.constant dense<0.000000e+00> : vector<16x64xf32>
    %36 = tpu.matmul %33, %35, %cst_39 {dimension_numbers = #tpu.dot_dimension_numbers<[1], [0], [0], [1], [0, 0, 1, 1], [], []>} : vector<16x32xf32>, vector<32x64xf32>, vector<16x64xf32> -> vector<16x64xf32>
    %37 = arith.addf %32, %36 : vector<16x64xf32>
    %c0_40 = arith.constant 0 : index
    %c0_41 = arith.constant 0 : index
    %38 = vector.load %arg10[%c0_40, %c0_41] : memref<1x64xf32, #tpu.memory_space<vmem>>, vector<1x64xf32>
    %39 = vector.broadcast %38 : vector<1x64xf32> to vector<16x64xf32>
    %40 = arith.addf %37, %39 : vector<16x64xf32>
    %41 = vector.extract_strided_slice %12 {offsets = [0, 0], sizes = [16, 64], strides = [1, 1]} : vector<16x128xf32> to vector<16x64xf32>
    %42 = arith.addf %40, %41 : vector<16x64xf32>
    %43 = vector.extract_strided_slice %42 {offsets = [0, 0], sizes = [16, 32], strides = [1, 1]} : vector<16x64xf32> to vector<16x32xf32>
    %44 = math.tanh %43 : vector<16x32xf32>
    %45 = vector.extract_strided_slice %42 {offsets = [0, 32], sizes = [16, 32], strides = [1, 1]} : vector<16x64xf32> to vector<16x32xf32>
    %46 = arith.negf %45 : vector<16x32xf32>
    %47 = math.exp %46 : vector<16x32xf32>
    %cst_42 = arith.constant 1.000000e+00 : f32
    %48 = vector.broadcast %cst_42 : f32 to vector<16x32xf32>
    %49 = arith.addf %48, %47 : vector<16x32xf32>
    %50 = arith.divf %48, %49 : vector<16x32xf32>
    %51 = arith.mulf %44, %50 : vector<16x32xf32>
    %c0_43 = arith.constant 0 : index
    %c0_44 = arith.constant 0 : index
    %52 = vector.load %arg11[%c0_43, %c0_44] : memref<32x64xf32, #tpu.memory_space<vmem>>, vector<32x64xf32>
    %cst_45 = arith.constant dense<0.000000e+00> : vector<16x64xf32>
    %53 = tpu.matmul %51, %52, %cst_45 {dimension_numbers = #tpu.dot_dimension_numbers<[1], [0], [0], [1], [0, 0, 1, 1], [], []>} : vector<16x32xf32>, vector<32x64xf32>, vector<16x64xf32> -> vector<16x64xf32>
    %c0_46 = arith.constant 0 : index
    %c0_47 = arith.constant 0 : index
    %54 = vector.load %arg12[%c0_46, %c0_47] : memref<1x64xf32, #tpu.memory_space<vmem>>, vector<1x64xf32>
    %55 = vector.broadcast %54 : vector<1x64xf32> to vector<16x64xf32>
    %56 = arith.addf %53, %55 : vector<16x64xf32>
    %57 = vector.extract_strided_slice %56 {offsets = [0, 0], sizes = [16, 32], strides = [1, 1]} : vector<16x64xf32> to vector<16x32xf32>
    %58 = arith.addf %17, %57 : vector<16x32xf32>
    %c8_48 = arith.constant 8 : index
    %c0_49 = arith.constant 0 : index
    %59 = vector.load %arg24[%c8_48, %c0_49] : memref<32x32xf32, #tpu.memory_space<vmem>>, vector<16x32xf32>
    tpu.vector_store %arg24[%c8_48, %c0_49], %58 {strides = array<i32>} : memref<32x32xf32, #tpu.memory_space<vmem>>, vector<16x32xf32>,
    %60 = vector.extract_strided_slice %56 {offsets = [0, 32], sizes = [16, 32], strides = [1, 1]} : vector<16x64xf32> to vector<16x32xf32>
    %61 = arith.addf %21, %60 : vector<16x32xf32>
    %cst_50 = arith.constant 0.000000e+00 : f32
    %62 = vector.broadcast %cst_50 : f32 to vector<16x64xf32>
    %c6 = arith.constant 6 : index
    %c0_51 = arith.constant 0 : index
    %63 = vector.load %arg24[%c6, %c0_51] : memref<32x32xf32, #tpu.memory_space<vmem>>, vector<16x32xf32>
    %c0_52 = arith.constant 0 : index
    %c0_53 = arith.constant 0 : index
    %c0_54 = arith.constant 0 : index
    %64 = vector.load %arg13[%c0_52, %c0_53, %c0_54] : memref<3x32x64xf32, #tpu.memory_space<vmem>>, vector<1x32x64xf32>
    %65 = vector.shape_cast %64 : vector<1x32x64xf32> to vector<32x64xf32>
    %cst_55 = arith.constant dense<0.000000e+00> : vector<16x64xf32>
    %66 = tpu.matmul %63, %65, %cst_55 {dimension_numbers = #tpu.dot_dimension_numbers<[1], [0], [0], [1], [0, 0, 1, 1], [], []>} : vector<16x32xf32>, vector<32x64xf32>, vector<16x64xf32> -> vector<16x64xf32>
    %67 = arith.addf %62, %66 : vector<16x64xf32>
    %c8_56 = arith.constant 8 : index
    %c0_57 = arith.constant 0 : index
    %68 = vector.load %arg24[%c8_56, %c0_57] : memref<32x32xf32, #tpu.memory_space<vmem>>, vector<16x32xf32>
    %c1_58 = arith.constant 1 : index
    %c0_59 = arith.constant 0 : index
    %c0_60 = arith.constant 0 : index
    %69 = vector.load %arg13[%c1_58, %c0_59, %c0_60] : memref<3x32x64xf32, #tpu.memory_space<vmem>>, vector<1x32x64xf32>
    %70 = vector.shape_cast %69 : vector<1x32x64xf32> to vector<32x64xf32>
    %cst_61 = arith.constant dense<0.000000e+00> : vector<16x64xf32>
    %71 = tpu.matmul %68, %70, %cst_61 {dimension_numbers = #tpu.dot_dimension_numbers<[1], [0], [0], [1], [0, 0, 1, 1], [], []>} : vector<16x32xf32>, vector<32x64xf32>, vector<16x64xf32> -> vector<16x64xf32>
    %72 = arith.addf %67, %71 : vector<16x64xf32>
    %c10 = arith.constant 10 : index
    %c0_62 = arith.constant 0 : index
    %73 = vector.load %arg24[%c10, %c0_62] : memref<32x32xf32, #tpu.memory_space<vmem>>, vector<16x32xf32>
    %c2_63 = arith.constant 2 : index
    %c0_64 = arith.constant 0 : index
    %c0_65 = arith.constant 0 : index
    %74 = vector.load %arg13[%c2_63, %c0_64, %c0_65] : memref<3x32x64xf32, #tpu.memory_space<vmem>>, vector<1x32x64xf32>
    %75 = vector.shape_cast %74 : vector<1x32x64xf32> to vector<32x64xf32>
    %cst_66 = arith.constant dense<0.000000e+00> : vector<16x64xf32>
    %76 = tpu.matmul %73, %75, %cst_66 {dimension_numbers = #tpu.dot_dimension_numbers<[1], [0], [0], [1], [0, 0, 1, 1], [], []>} : vector<16x32xf32>, vector<32x64xf32>, vector<16x64xf32> -> vector<16x64xf32>
    %77 = arith.addf %72, %76 : vector<16x64xf32>
    %c0_67 = arith.constant 0 : index
    %c0_68 = arith.constant 0 : index
    %78 = vector.load %arg14[%c0_67, %c0_68] : memref<1x64xf32, #tpu.memory_space<vmem>>, vector<1x64xf32>
    %79 = vector.broadcast %78 : vector<1x64xf32> to vector<16x64xf32>
    %80 = arith.addf %77, %79 : vector<16x64xf32>
    %81 = vector.extract_strided_slice %12 {offsets = [0, 64], sizes = [16, 64], strides = [1, 1]} : vector<16x128xf32> to vector<16x64xf32>
    %82 = arith.addf %80, %81 : vector<16x64xf32>
    %83 = vector.extract_strided_slice %82 {offsets = [0, 0], sizes = [16, 32], strides = [1, 1]} : vector<16x64xf32> to vector<16x32xf32>
    %84 = math.tanh %83 : vector<16x32xf32>
    %85 = vector.extract_strided_slice %82 {offsets = [0, 32], sizes = [16, 32], strides = [1, 1]} : vector<16x64xf32> to vector<16x32xf32>
    %86 = arith.negf %85 : vector<16x32xf32>
    %87 = math.exp %86 : vector<16x32xf32>
    %cst_69 = arith.constant 1.000000e+00 : f32
    %88 = vector.broadcast %cst_69 : f32 to vector<16x32xf32>
    %89 = arith.addf %88, %87 : vector<16x32xf32>
    %90 = arith.divf %88, %89 : vector<16x32xf32>
    %91 = arith.mulf %84, %90 : vector<16x32xf32>
    %c0_70 = arith.constant 0 : index
    %c0_71 = arith.constant 0 : index
    %92 = vector.load %arg15[%c0_70, %c0_71] : memref<32x32xf32, #tpu.memory_space<vmem>>, vector<32x32xf32>
    %cst_72 = arith.constant dense<0.000000e+00> : vector<16x32xf32>
    %93 = tpu.matmul %91, %92, %cst_72 {dimension_numbers = #tpu.dot_dimension_numbers<[1], [0], [0], [1], [0, 0, 1, 1], [], []>} : vector<16x32xf32>, vector<32x32xf32>, vector<16x32xf32> -> vector<16x32xf32>
    %c0_73 = arith.constant 0 : index
    %c0_74 = arith.constant 0 : index
    %94 = vector.load %arg16[%c0_73, %c0_74] : memref<1x32xf32, #tpu.memory_space<vmem>>, vector<1x32xf32>
    %95 = vector.broadcast %94 : vector<1x32xf32> to vector<16x32xf32>
    %96 = arith.addf %93, %95 : vector<16x32xf32>
    %97 = arith.addf %61, %96 : vector<16x32xf32>
    %c0_75 = arith.constant 0 : index
    %c0_76 = arith.constant 0 : index
    %98 = vector.load %arg17[%c0_75, %c0_76] : memref<32x4xf32, #tpu.memory_space<vmem>>, vector<32x4xf32>
    %cst_77 = arith.constant dense<0.000000e+00> : vector<16x4xf32>
    %99 = tpu.matmul %97, %98, %cst_77 {dimension_numbers = #tpu.dot_dimension_numbers<[1], [0], [0], [1], [0, 0, 1, 1], [], []>} : vector<16x32xf32>, vector<32x4xf32>, vector<16x4xf32> -> vector<16x4xf32>
    %c0_78 = arith.constant 0 : index
    %c0_79 = arith.constant 0 : index
    %100 = vector.load %arg19[%c0_78, %c0_79] : memref<1x4xf32, #tpu.memory_space<vmem>>, vector<1x4xf32>
    %101 = vector.broadcast %100 : vector<1x4xf32> to vector<16x4xf32>
    %102 = arith.addf %99, %101 : vector<16x4xf32>
    %c0_80 = arith.constant 0 : index
    %c0_81 = arith.constant 0 : index
    %103 = vector.load %arg18[%c0_80, %c0_81] : memref<32x4xf32, #tpu.memory_space<vmem>>, vector<32x4xf32>
    %cst_82 = arith.constant dense<0.000000e+00> : vector<16x4xf32>
    %104 = tpu.matmul %97, %103, %cst_82 {dimension_numbers = #tpu.dot_dimension_numbers<[1], [0], [0], [1], [0, 0, 1, 1], [], []>} : vector<16x32xf32>, vector<32x4xf32>, vector<16x4xf32> -> vector<16x4xf32>
    %c0_83 = arith.constant 0 : index
    %c0_84 = arith.constant 0 : index
    %105 = vector.load %arg20[%c0_83, %c0_84] : memref<1x4xf32, #tpu.memory_space<vmem>>, vector<1x4xf32>
    %106 = vector.broadcast %105 : vector<1x4xf32> to vector<16x4xf32>
    %107 = arith.addf %104, %106 : vector<16x4xf32>
    %108 = math.exp %107 : vector<16x4xf32>
    %109 = arith.mulf %5, %108 : vector<16x4xf32>
    %110 = arith.addf %109, %102 : vector<16x4xf32>
    %c0_85 = arith.constant 0 : index
    %c0_86 = arith.constant 0 : index
    %c0_87 = arith.constant 0 : index
    %111 = vector.load %arg21[%c0_85, %c0_86, %c0_87] : memref<1x16x4xf32, #tpu.memory_space<vmem>>, vector<1x16x4xf32>
    %112 = vector.shape_cast %111 : vector<1x16x4xf32> to vector<16x4xf32>
    %113 = vector.shape_cast %3 : vector<16x4xf32> to vector<1x16x4xf32>
    tpu.vector_store %arg21[%c0_85, %c0_86, %c0_87], %113 {strides = array<i32>} : memref<1x16x4xf32, #tpu.memory_space<vmem>>, vector<1x16x4xf32>,
    %c0_88 = arith.constant 0 : index
    %c0_89 = arith.constant 0 : index
    %c0_90 = arith.constant 0 : index
    %114 = vector.load %arg22[%c0_88, %c0_89, %c0_90] : memref<1x16x4xf32, #tpu.memory_space<vmem>>, vector<1x16x4xf32>
    %115 = vector.shape_cast %114 : vector<1x16x4xf32> to vector<16x4xf32>
    %116 = vector.shape_cast %110 : vector<16x4xf32> to vector<1x16x4xf32>
    tpu.vector_store %arg22[%c0_88, %c0_89, %c0_90], %116 {strides = array<i32>} : memref<1x16x4xf32, #tpu.memory_space<vmem>>, vector<1x16x4xf32>,
    %cst_91 = arith.constant dense<0.000000e+00> : vector<16xf32>
    %117 = vector.multi_reduction <add>, %107, %cst_91 [1] : vector<16x4xf32> to vector<16xf32>
    %118 = vector.shape_cast %117 : vector<16xf32> to vector<16x1xf32>
    %cst_92 = arith.constant dense<0.000000e+00> : vector<1xf32>
    %119 = vector.multi_reduction <add>, %118, %cst_92 [0] : vector<16x1xf32> to vector<1xf32>
    %120 = vector.shape_cast %119 : vector<1xf32> to vector<1x1xf32>
    %c0_93 = arith.constant 0 : index
    %c0_94 = arith.constant 0 : index
    %c0_95 = arith.constant 0 : index
    %121 = vector.load %arg23[%c0_93, %c0_94, %c0_95] : memref<1x1x1xf32, #tpu.memory_space<vmem>>, vector<1x1x1xf32>
    %122 = vector.shape_cast %121 : vector<1x1x1xf32> to vector<1x1xf32>
    %123 = vector.shape_cast %120 : vector<1x1xf32> to vector<1x1x1xf32>
    tpu.vector_store %arg23[%c0_93, %c0_94, %c0_95], %123 {strides = array<i32>} : memref<1x1x1xf32, #tpu.memory_space<vmem>>, vector<1x1x1xf32>,
    return
  }
  func.func @transform_0(%arg0: i32) -> (i32, i32, i32) {
    %c0_i32 = arith.constant 0 : i32
    %c0_i32_0 = arith.constant 0 : i32
    %c0_i32_1 = arith.constant 0 : i32
    return %arg0, %c0_i32, %c0_i32_0 : i32, i32, i32
  }
  func.func @transform_1(%arg0: i32) -> (i32, i32, i32) {
    %c0_i32 = arith.constant 0 : i32
    %c0_i32_0 = arith.constant 0 : i32
    %c0_i32_1 = arith.constant 0 : i32
    return %arg0, %c0_i32, %c0_i32_0 : i32, i32, i32
  }
  func.func @transform_2(%arg0: i32) -> (i32, i32) {
    %c0_i32 = arith.constant 0 : i32
    %c0_i32_0 = arith.constant 0 : i32
    %c0_i32_1 = arith.constant 0 : i32
    return %c0_i32, %c0_i32_0 : i32, i32
  }
  func.func @transform_3(%arg0: i32) -> (i32, i32) {
    %c0_i32 = arith.constant 0 : i32
    %c0_i32_0 = arith.constant 0 : i32
    %c0_i32_1 = arith.constant 0 : i32
    return %c0_i32, %c0_i32_0 : i32, i32
  }
  func.func @transform_4(%arg0: i32) -> (i32, i32) {
    %c0_i32 = arith.constant 0 : i32
    %c0_i32_0 = arith.constant 0 : i32
    %c0_i32_1 = arith.constant 0 : i32
    return %c0_i32, %c0_i32_0 : i32, i32
  }
  func.func @transform_5(%arg0: i32) -> (i32, i32) {
    %c0_i32 = arith.constant 0 : i32
    %c0_i32_0 = arith.constant 0 : i32
    %c0_i32_1 = arith.constant 0 : i32
    return %c0_i32, %c0_i32_0 : i32, i32
  }
  func.func @transform_6(%arg0: i32) -> (i32, i32) {
    %c0_i32 = arith.constant 0 : i32
    %c0_i32_0 = arith.constant 0 : i32
    %c0_i32_1 = arith.constant 0 : i32
    return %c0_i32, %c0_i32_0 : i32, i32
  }
  func.func @transform_7(%arg0: i32) -> (i32, i32) {
    %c0_i32 = arith.constant 0 : i32
    %c0_i32_0 = arith.constant 0 : i32
    %c0_i32_1 = arith.constant 0 : i32
    return %c0_i32, %c0_i32_0 : i32, i32
  }
  func.func @transform_8(%arg0: i32) -> (i32, i32, i32) {
    %c0_i32 = arith.constant 0 : i32
    %c0_i32_0 = arith.constant 0 : i32
    %c0_i32_1 = arith.constant 0 : i32
    %c0_i32_2 = arith.constant 0 : i32
    return %c0_i32, %c0_i32_0, %c0_i32_1 : i32, i32, i32
  }
  func.func @transform_9(%arg0: i32) -> (i32, i32) {
    %c0_i32 = arith.constant 0 : i32
    %c0_i32_0 = arith.constant 0 : i32
    %c0_i32_1 = arith.constant 0 : i32
    return %c0_i32, %c0_i32_0 : i32, i32
  }
  func.func @transform_10(%arg0: i32) -> (i32, i32) {
    %c0_i32 = arith.constant 0 : i32
    %c0_i32_0 = arith.constant 0 : i32
    %c0_i32_1 = arith.constant 0 : i32
    return %c0_i32, %c0_i32_0 : i32, i32
  }
  func.func @transform_11(%arg0: i32) -> (i32, i32) {
    %c0_i32 = arith.constant 0 : i32
    %c0_i32_0 = arith.constant 0 : i32
    %c0_i32_1 = arith.constant 0 : i32
    return %c0_i32, %c0_i32_0 : i32, i32
  }
  func.func @transform_12(%arg0: i32) -> (i32, i32, i32) {
    %c0_i32 = arith.constant 0 : i32
    %c0_i32_0 = arith.constant 0 : i32
    %c0_i32_1 = arith.constant 0 : i32
    %c0_i32_2 = arith.constant 0 : i32
    return %c0_i32, %c0_i32_0, %c0_i32_1 : i32, i32, i32
  }
  func.func @transform_13(%arg0: i32) -> (i32, i32) {
    %c0_i32 = arith.constant 0 : i32
    %c0_i32_0 = arith.constant 0 : i32
    %c0_i32_1 = arith.constant 0 : i32
    return %c0_i32, %c0_i32_0 : i32, i32
  }
  func.func @transform_14(%arg0: i32) -> (i32, i32) {
    %c0_i32 = arith.constant 0 : i32
    %c0_i32_0 = arith.constant 0 : i32
    %c0_i32_1 = arith.constant 0 : i32
    return %c0_i32, %c0_i32_0 : i32, i32
  }
  func.func @transform_15(%arg0: i32) -> (i32, i32) {
    %c0_i32 = arith.constant 0 : i32
    %c0_i32_0 = arith.constant 0 : i32
    %c0_i32_1 = arith.constant 0 : i32
    return %c0_i32, %c0_i32_0 : i32, i32
  }
  func.func @transform_16(%arg0: i32) -> (i32, i32) {
    %c0_i32 = arith.constant 0 : i32
    %c0_i32_0 = arith.constant 0 : i32
    %c0_i32_1 = arith.constant 0 : i32
    return %c0_i32, %c0_i32_0 : i32, i32
  }
  func.func @transform_17(%arg0: i32) -> (i32, i32) {
    %c0_i32 = arith.constant 0 : i32
    %c0_i32_0 = arith.constant 0 : i32
    %c0_i32_1 = arith.constant 0 : i32
    return %c0_i32, %c0_i32_0 : i32, i32
  }
  func.func @transform_18(%arg0: i32) -> (i32, i32) {
    %c0_i32 = arith.constant 0 : i32
    %c0_i32_0 = arith.constant 0 : i32
    %c0_i32_1 = arith.constant 0 : i32
    return %c0_i32, %c0_i32_0 : i32, i32
  }
  func.func @transform_19(%arg0: i32) -> (i32, i32) {
    %c0_i32 = arith.constant 0 : i32
    %c0_i32_0 = arith.constant 0 : i32
    %c0_i32_1 = arith.constant 0 : i32
    return %c0_i32, %c0_i32_0 : i32, i32
  }
  func.func @transform_20(%arg0: i32) -> (i32, i32, i32) {
    %c0_i32 = arith.constant 0 : i32
    %c0_i32_0 = arith.constant 0 : i32
    %c0_i32_1 = arith.constant 0 : i32
    return %arg0, %c0_i32, %c0_i32_0 : i32, i32, i32
  }
  func.func @transform_21(%arg0: i32) -> (i32, i32, i32) {
    %c0_i32 = arith.constant 0 : i32
    %c0_i32_0 = arith.constant 0 : i32
    %c0_i32_1 = arith.constant 0 : i32
    return %arg0, %c0_i32, %c0_i32_0 : i32, i32, i32
  }
  func.func @transform_22(%arg0: i32) -> (i32, i32, i32) {
    %c0_i32 = arith.constant 0 : i32
    %c0_i32_0 = arith.constant 0 : i32
    %c0_i32_1 = arith.constant 0 : i32
    return %arg0, %c0_i32, %c0_i32_0 : i32, i32, i32
  }
}

module attributes {stable_mosaic.version = 11 : i64} {
  func.func @kernel(%arg0: i32, %arg1: memref<1x16x6xf32, #tpu.memory_space<vmem>>, %arg2: memref<1x16x8xf32, #tpu.memory_space<vmem>>, %arg3: memref<6x3xf32, #tpu.memory_space<vmem>>, %arg4: memref<6x3xf32, #tpu.memory_space<vmem>>, %arg5: memref<3x32xf32, #tpu.memory_space<vmem>>, %arg6: memref<1x32xf32, #tpu.memory_space<vmem>>, %arg7: memref<8x128xf32, #tpu.memory_space<vmem>>, %arg8: memref<1x128xf32, #tpu.memory_space<vmem>>, %arg9: memref<3x32x64xf32, #tpu.memory_space<vmem>>, %arg10: memref<1x64xf32, #tpu.memory_space<vmem>>, %arg11: memref<32x64xf32, #tpu.memory_space<vmem>>, %arg12: memref<1x64xf32, #tpu.memory_space<vmem>>, %arg13: memref<3x32x64xf32, #tpu.memory_space<vmem>>, %arg14: memref<1x64xf32, #tpu.memory_space<vmem>>, %arg15: memref<32x32xf32, #tpu.memory_space<vmem>>, %arg16: memref<1x32xf32, #tpu.memory_space<vmem>>, %arg17: memref<32x3xf32, #tpu.memory_space<vmem>>, %arg18: memref<32x3xf32, #tpu.memory_space<vmem>>, %arg19: memref<1x3xf32, #tpu.memory_space<vmem>>, %arg20: memref<1x3xf32, #tpu.memory_space<vmem>>, %arg21: memref<1x16x3xf32, #tpu.memory_space<vmem>>, %arg22: memref<1x16x3xf32, #tpu.memory_space<vmem>>, %arg23: memref<1x1x1xf32, #tpu.memory_space<vmem>>, %arg24: memref<32x32xf32, #tpu.memory_space<vmem>>) attributes {dimension_semantics = [#tpu.dimension_semantics<parallel>], iteration_bounds = array<i64: 2>, scalar_prefetch = 0 : i64, scratch_operands = 1 : i64, tpu.core_type = #tpu.core_type<tc>, window_params = [{transform_indices = @transform_0, window_bounds = array<i64: 1, 16, 6>}, {transform_indices = @transform_1, window_bounds = array<i64: 1, 16, 8>}, {pipeline_mode = #tpu.pipeline_mode<synchronous>, transform_indices = @transform_2, window_bounds = array<i64: 6, 3>}, {pipeline_mode = #tpu.pipeline_mode<synchronous>, transform_indices = @transform_3, window_bounds = array<i64: 6, 3>}, {pipeline_mode = #tpu.pipeline_mode<synchronous>, transform_indices = @transform_4, window_bounds = array<i64: 3, 32>}, {pipeline_mode = #tpu.pipeline_mode<synchronous>, transform_indices = @transform_5, window_bounds = array<i64: 1, 32>}, {pipeline_mode = #tpu.pipeline_mode<synchronous>, transform_indices = @transform_6, window_bounds = array<i64: 8, 128>}, {pipeline_mode = #tpu.pipeline_mode<synchronous>, transform_indices = @transform_7, window_bounds = array<i64: 1, 128>}, {pipeline_mode = #tpu.pipeline_mode<synchronous>, transform_indices = @transform_8, window_bounds = array<i64: 3, 32, 64>}, {pipeline_mode = #tpu.pipeline_mode<synchronous>, transform_indices = @transform_9, window_bounds = array<i64: 1, 64>}, {pipeline_mode = #tpu.pipeline_mode<synchronous>, transform_indices = @transform_10, window_bounds = array<i64: 32, 64>}, {pipeline_mode = #tpu.pipeline_mode<synchronous>, transform_indices = @transform_11, window_bounds = array<i64: 1, 64>}, {pipeline_mode = #tpu.pipeline_mode<synchronous>, transform_indices = @transform_12, window_bounds = array<i64: 3, 32, 64>}, {pipeline_mode = #tpu.pipeline_mode<synchronous>, transform_indices = @transform_13, window_bounds = array<i64: 1, 64>}, {pipeline_mode = #tpu.pipeline_mode<synchronous>, transform_indices = @transform_14, window_bounds = array<i64: 32, 32>}, {pipeline_mode = #tpu.pipeline_mode<synchronous>, transform_indices = @transform_15, window_bounds = array<i64: 1, 32>}, {pipeline_mode = #tpu.pipeline_mode<synchronous>, transform_indices = @transform_16, window_bounds = array<i64: 32, 3>}, {pipeline_mode = #tpu.pipeline_mode<synchronous>, transform_indices = @transform_17, window_bounds = array<i64: 32, 3>}, {pipeline_mode = #tpu.pipeline_mode<synchronous>, transform_indices = @transform_18, window_bounds = array<i64: 1, 3>}, {pipeline_mode = #tpu.pipeline_mode<synchronous>, transform_indices = @transform_19, window_bounds = array<i64: 1, 3>}, {transform_indices = @transform_20, window_bounds = array<i64: 1, 16, 3>}, {transform_indices = @transform_21, window_bounds = array<i64: 1, 16, 3>}, {transform_indices = @transform_22, window_bounds = array<i64: 1, 1, 1>}]} {
    %c0 = arith.constant 0 : index
    %c0_0 = arith.constant 0 : index
    %c0_1 = arith.constant 0 : index
    %0 = vector.load %arg1[%c0, %c0_0, %c0_1] : memref<1x16x6xf32, #tpu.memory_space<vmem>>, vector<1x16x6xf32>
    %1 = vector.shape_cast %0 : vector<1x16x6xf32> to vector<16x6xf32>
    %c0_2 = arith.constant 0 : index
    %c0_3 = arith.constant 0 : index
    %2 = vector.load %arg3[%c0_2, %c0_3] : memref<6x3xf32, #tpu.memory_space<vmem>>, vector<6x3xf32>
    %cst = arith.constant dense<0.000000e+00> : vector<16x3xf32>
    %3 = tpu.matmul %1, %2, %cst {dimension_numbers = #tpu.dot_dimension_numbers<[1], [0], [0], [1], [0, 0, 1, 1], [], []>} : vector<16x6xf32>, vector<6x3xf32>, vector<16x3xf32> -> vector<16x3xf32>
    %c0_4 = arith.constant 0 : index
    %c0_5 = arith.constant 0 : index
    %4 = vector.load %arg4[%c0_4, %c0_5] : memref<6x3xf32, #tpu.memory_space<vmem>>, vector<6x3xf32>
    %cst_6 = arith.constant dense<0.000000e+00> : vector<16x3xf32>
    %5 = tpu.matmul %1, %4, %cst_6 {dimension_numbers = #tpu.dot_dimension_numbers<[1], [0], [0], [1], [0, 0, 1, 1], [], []>} : vector<16x6xf32>, vector<6x3xf32>, vector<16x3xf32> -> vector<16x3xf32>
    %c0_7 = arith.constant 0 : index
    %c0_8 = arith.constant 0 : index
    %c0_9 = arith.constant 0 : index
    %6 = vector.load %arg2[%c0_7, %c0_8, %c0_9] : memref<1x16x8xf32, #tpu.memory_space<vmem>>, vector<1x16x8xf32>
    %7 = vector.shape_cast %6 : vector<1x16x8xf32> to vector<16x8xf32>
    %c0_10 = arith.constant 0 : index
    %c0_11 = arith.constant 0 : index
    %8 = vector.load %arg7[%c0_10, %c0_11] : memref<8x128xf32, #tpu.memory_space<vmem>>, vector<8x128xf32>
    %cst_12 = arith.constant dense<0.000000e+00> : vector<16x128xf32>
    %9 = tpu.matmul %7, %8, %cst_12 {dimension_numbers = #tpu.dot_dimension_numbers<[1], [0], [0], [1], [0, 0, 1, 1], [], []>} : vector<16x8xf32>, vector<8x128xf32>, vector<16x128xf32> -> vector<16x128xf32>
    %c0_13 = arith.constant 0 : index
    %c0_14 = arith.constant 0 : index
    %10 = vector.load %arg8[%c0_13, %c0_14] : memref<1x128xf32, #tpu.memory_space<vmem>>, vector<1x128xf32>
    %11 = vector.broadcast %10 : vector<1x128xf32> to vector<16x128xf32>
    %12 = arith.addf %9, %11 : vector<16x128xf32>
    %c0_15 = arith.constant 0 : index
    %c0_16 = arith.constant 0 : index
    %13 = vector.load %arg5[%c0_15, %c0_16] : memref<3x32xf32, #tpu.memory_space<vmem>>, vector<3x32xf32>
    %cst_17 = arith.constant dense<0.000000e+00> : vector<16x32xf32>
    %14 = tpu.matmul %3, %13, %cst_17 {dimension_numbers = #tpu.dot_dimension_numbers<[1], [0], [0], [1], [0, 0, 1, 1], [], []>} : vector<16x3xf32>, vector<3x32xf32>, vector<16x32xf32> -> vector<16x32xf32>
    %c0_18 = arith.constant 0 : index
    %c0_19 = arith.constant 0 : index
    %15 = vector.load %arg6[%c0_18, %c0_19] : memref<1x32xf32, #tpu.memory_space<vmem>>, vector<1x32xf32>
    %16 = vector.broadcast %15 : vector<1x32xf32> to vector<16x32xf32>
    %17 = arith.addf %14, %16 : vector<16x32xf32>
    %cst_20 = arith.constant 0.000000e+00 : f32
    %18 = vector.broadcast %cst_20 : f32 to vector<32x32xf32>
    %c0_21 = arith.constant 0 : index
    %c0_22 = arith.constant 0 : index
    %19 = vector.load %arg24[%c0_21, %c0_22] : memref<32x32xf32, #tpu.memory_space<vmem>>, vector<32x32xf32>
    tpu.vector_store %arg24[%c0_21, %c0_22], %18 {strides = array<i32>} : memref<32x32xf32, #tpu.memory_space<vmem>>, vector<32x32xf32>,
    %c8 = arith.constant 8 : index
    %c0_23 = arith.constant 0 : index
    %20 = vector.load %arg24[%c8, %c0_23] : memref<32x32xf32, #tpu.memory_space<vmem>>, vector<16x32xf32>
    tpu.vector_store %arg24[%c8, %c0_23], %17 {strides = array<i32>} : memref<32x32xf32, #tpu.memory_space<vmem>>, vector<16x32xf32>,
    %cst_24 = arith.constant 0.000000e+00 : f32
    %21 = vector.broadcast %cst_24 : f32 to vector<16x32xf32>
    %cst_25 = arith.constant 0.000000e+00 : f32
    %22 = vector.broadcast %cst_25 : f32 to vector<16x64xf32>
    %c7 = arith.constant 7 : index
    %c0_26 = arith.constant 0 : index
    %23 = vector.load %arg24[%c7, %c0_26] : memref<32x32xf32, #tpu.memory_space<vmem>>, vector<16x32xf32>
    %c0_27 = arith.constant 0 : index
    %c0_28 = arith.constant 0 : index
    %c0_29 = arith.constant 0 : index
    %24 = vector.load %arg9[%c0_27, %c0_28, %c0_29] : memref<3x32x64xf32, #tpu.memory_space<vmem>>, vector<1x32x64xf32>
    %25 = vector.shape_cast %24 : vector<1x32x64xf32> to vector<32x64xf32>
    %cst_30 = arith.constant dense<0.000000e+00> : vector<16x64xf32>
    %26 = tpu.matmul %23, %25, %cst_30 {dimension_numbers = #tpu.dot_dimension_numbers<[1], [0], [0], [1], [0, 0, 1, 1], [], []>} : vector<16x32xf32>, vector<32x64xf32>, vector<16x64xf32> -> vector<16x64xf32>
    %27 = arith.addf %22, %26 : vector<16x64xf32>
    %c8_31 = arith.constant 8 : index
    %c0_32 = arith.constant 0 : index
    %28 = vector.load %arg24[%c8_31, %c0_32] : memref<32x32xf32, #tpu.memory_space<vmem>>, vector<16x32xf32>
    %c1 = arith.constant 1 : index
    %c0_33 = arith.constant 0 : index
    %c0_34 = arith.constant 0 : index
    %29 = vector.load %arg9[%c1, %c0_33, %c0_34] : memref<3x32x64xf32, #tpu.memory_space<vmem>>, vector<1x32x64xf32>
    %30 = vector.shape_cast %29 : vector<1x32x64xf32> to vector<32x64xf32>
    %cst_35 = arith.constant dense<0.000000e+00> : vector<16x64xf32>
    %31 = tpu.matmul %28, %30, %cst_35 {dimension_numbers = #tpu.dot_dimension_numbers<[1], [0], [0], [1], [0, 0, 1, 1], [], []>} : vector<16x32xf32>, vector<32x64xf32>, vector<16x64xf32> -> vector<16x64xf32>
    %32 = arith.addf %27, %31 : vector<16x64xf32>
    %c9 = arith.constant 9 : index
    %c0_36 = arith.constant 0 : index
    %33 = vector.load %arg24[%c9, %c0_36] : memref<32x32xf32, #tpu.memory_space<vmem>>, vector<16x32xf32>
    %c2 = arith.constant 2 : index
    %c0_37 = arith.constant 0 : index
    %c0_38 = arith.constant 0 : index
    %34 = vector.load %arg9[%c2, %c0_37, %c0_38] : memref<3x32x64xf32, #tpu.memory_space<vmem>>, vector<1x32x64xf32>
    %35 = vector.shape_cast %34 : vector<1x32x64xf32> to vector<32x64xf32>
    %cst_39 = arith.constant dense<0.000000e+00> : vector<16x64xf32>
    %36 = tpu.matmul %33, %35, %cst_39 {dimension_numbers = #tpu.dot_dimension_numbers<[1], [0], [0], [1], [0, 0, 1, 1], [], []>} : vector<16x32xf32>, vector<32x64xf32>, vector<16x64xf32> -> vector<16x64xf32>
    %37 = arith.addf %32, %36 : vector<16x64xf32>
    %c0_40 = arith.constant 0 : index
    %c0_41 = arith.constant 0 : index
    %38 = vector.load %arg10[%c0_40, %c0_41] : memref<1x64xf32, #tpu.memory_space<vmem>>, vector<1x64xf32>
    %39 = vector.broadcast %38 : vector<1x64xf32> to vector<16x64xf32>
    %40 = arith.addf %37, %39 : vector<16x64xf32>
    %41 = vector.extract_strided_slice %12 {offsets = [0, 0], sizes = [16, 64], strides = [1, 1]} : vector<16x128xf32> to vector<16x64xf32>
    %42 = arith.addf %40, %41 : vector<16x64xf32>
    %43 = vector.extract_strided_slice %42 {offsets = [0, 0], sizes = [16, 32], strides = [1, 1]} : vector<16x64xf32> to vector<16x32xf32>
    %44 = math.tanh %43 : vector<16x32xf32>
    %45 = vector.extract_strided_slice %42 {offsets = [0, 32], sizes = [16, 32], strides = [1, 1]} : vector<16x64xf32> to vector<16x32xf32>
    %46 = arith.negf %45 : vector<16x32xf32>
    %47 = math.exp %46 : vector<16x32xf32>
    %cst_42 = arith.constant 1.000000e+00 : f32
    %48 = vector.broadcast %cst_42 : f32 to vector<16x32xf32>
    %49 = arith.addf %48, %47 : vector<16x32xf32>
    %50 = arith.divf %48, %49 : vector<16x32xf32>
    %51 = arith.mulf %44, %50 : vector<16x32xf32>
    %c0_43 = arith.constant 0 : index
    %c0_44 = arith.constant 0 : index
    %52 = vector.load %arg11[%c0_43, %c0_44] : memref<32x64xf32, #tpu.memory_space<vmem>>, vector<32x64xf32>
    %cst_45 = arith.constant dense<0.000000e+00> : vector<16x64xf32>
    %53 = tpu.matmul %51, %52, %cst_45 {dimension_numbers = #tpu.dot_dimension_numbers<[1], [0], [0], [1], [0, 0, 1, 1], [], []>} : vector<16x32xf32>, vector<32x64xf32>, vector<16x64xf32> -> vector<16x64xf32>
    %c0_46 = arith.constant 0 : index
    %c0_47 = arith.constant 0 : index
    %54 = vector.load %arg12[%c0_46, %c0_47] : memref<1x64xf32, #tpu.memory_space<vmem>>, vector<1x64xf32>
    %55 = vector.broadcast %54 : vector<1x64xf32> to vector<16x64xf32>
    %56 = arith.addf %53, %55 : vector<16x64xf32>
    %57 = vector.extract_strided_slice %56 {offsets = [0, 0], sizes = [16, 32], strides = [1, 1]} : vector<16x64xf32> to vector<16x32xf32>
    %58 = arith.addf %17, %57 : vector<16x32xf32>
    %c8_48 = arith.constant 8 : index
    %c0_49 = arith.constant 0 : index
    %59 = vector.load %arg24[%c8_48, %c0_49] : memref<32x32xf32, #tpu.memory_space<vmem>>, vector<16x32xf32>
    tpu.vector_store %arg24[%c8_48, %c0_49], %58 {strides = array<i32>} : memref<32x32xf32, #tpu.memory_space<vmem>>, vector<16x32xf32>,
    %60 = vector.extract_strided_slice %56 {offsets = [0, 32], sizes = [16, 32], strides = [1, 1]} : vector<16x64xf32> to vector<16x32xf32>
    %61 = arith.addf %21, %60 : vector<16x32xf32>
    %cst_50 = arith.constant 0.000000e+00 : f32
    %62 = vector.broadcast %cst_50 : f32 to vector<16x64xf32>
    %c6 = arith.constant 6 : index
    %c0_51 = arith.constant 0 : index
    %63 = vector.load %arg24[%c6, %c0_51] : memref<32x32xf32, #tpu.memory_space<vmem>>, vector<16x32xf32>
    %c0_52 = arith.constant 0 : index
    %c0_53 = arith.constant 0 : index
    %c0_54 = arith.constant 0 : index
    %64 = vector.load %arg13[%c0_52, %c0_53, %c0_54] : memref<3x32x64xf32, #tpu.memory_space<vmem>>, vector<1x32x64xf32>
    %65 = vector.shape_cast %64 : vector<1x32x64xf32> to vector<32x64xf32>
    %cst_55 = arith.constant dense<0.000000e+00> : vector<16x64xf32>
    %66 = tpu.matmul %63, %65, %cst_55 {dimension_numbers = #tpu.dot_dimension_numbers<[1], [0], [0], [1], [0, 0, 1, 1], [], []>} : vector<16x32xf32>, vector<32x64xf32>, vector<16x64xf32> -> vector<16x64xf32>
    %67 = arith.addf %62, %66 : vector<16x64xf32>
    %c8_56 = arith.constant 8 : index
    %c0_57 = arith.constant 0 : index
    %68 = vector.load %arg24[%c8_56, %c0_57] : memref<32x32xf32, #tpu.memory_space<vmem>>, vector<16x32xf32>
    %c1_58 = arith.constant 1 : index
    %c0_59 = arith.constant 0 : index
    %c0_60 = arith.constant 0 : index
    %69 = vector.load %arg13[%c1_58, %c0_59, %c0_60] : memref<3x32x64xf32, #tpu.memory_space<vmem>>, vector<1x32x64xf32>
    %70 = vector.shape_cast %69 : vector<1x32x64xf32> to vector<32x64xf32>
    %cst_61 = arith.constant dense<0.000000e+00> : vector<16x64xf32>
    %71 = tpu.matmul %68, %70, %cst_61 {dimension_numbers = #tpu.dot_dimension_numbers<[1], [0], [0], [1], [0, 0, 1, 1], [], []>} : vector<16x32xf32>, vector<32x64xf32>, vector<16x64xf32> -> vector<16x64xf32>
    %72 = arith.addf %67, %71 : vector<16x64xf32>
    %c10 = arith.constant 10 : index
    %c0_62 = arith.constant 0 : index
    %73 = vector.load %arg24[%c10, %c0_62] : memref<32x32xf32, #tpu.memory_space<vmem>>, vector<16x32xf32>
    %c2_63 = arith.constant 2 : index
    %c0_64 = arith.constant 0 : index
    %c0_65 = arith.constant 0 : index
    %74 = vector.load %arg13[%c2_63, %c0_64, %c0_65] : memref<3x32x64xf32, #tpu.memory_space<vmem>>, vector<1x32x64xf32>
    %75 = vector.shape_cast %74 : vector<1x32x64xf32> to vector<32x64xf32>
    %cst_66 = arith.constant dense<0.000000e+00> : vector<16x64xf32>
    %76 = tpu.matmul %73, %75, %cst_66 {dimension_numbers = #tpu.dot_dimension_numbers<[1], [0], [0], [1], [0, 0, 1, 1], [], []>} : vector<16x32xf32>, vector<32x64xf32>, vector<16x64xf32> -> vector<16x64xf32>
    %77 = arith.addf %72, %76 : vector<16x64xf32>
    %c0_67 = arith.constant 0 : index
    %c0_68 = arith.constant 0 : index
    %78 = vector.load %arg14[%c0_67, %c0_68] : memref<1x64xf32, #tpu.memory_space<vmem>>, vector<1x64xf32>
    %79 = vector.broadcast %78 : vector<1x64xf32> to vector<16x64xf32>
    %80 = arith.addf %77, %79 : vector<16x64xf32>
    %81 = vector.extract_strided_slice %12 {offsets = [0, 64], sizes = [16, 64], strides = [1, 1]} : vector<16x128xf32> to vector<16x64xf32>
    %82 = arith.addf %80, %81 : vector<16x64xf32>
    %83 = vector.extract_strided_slice %82 {offsets = [0, 0], sizes = [16, 32], strides = [1, 1]} : vector<16x64xf32> to vector<16x32xf32>
    %84 = math.tanh %83 : vector<16x32xf32>
    %85 = vector.extract_strided_slice %82 {offsets = [0, 32], sizes = [16, 32], strides = [1, 1]} : vector<16x64xf32> to vector<16x32xf32>
    %86 = arith.negf %85 : vector<16x32xf32>
    %87 = math.exp %86 : vector<16x32xf32>
    %cst_69 = arith.constant 1.000000e+00 : f32
    %88 = vector.broadcast %cst_69 : f32 to vector<16x32xf32>
    %89 = arith.addf %88, %87 : vector<16x32xf32>
    %90 = arith.divf %88, %89 : vector<16x32xf32>
    %91 = arith.mulf %84, %90 : vector<16x32xf32>
    %c0_70 = arith.constant 0 : index
    %c0_71 = arith.constant 0 : index
    %92 = vector.load %arg15[%c0_70, %c0_71] : memref<32x32xf32, #tpu.memory_space<vmem>>, vector<32x32xf32>
    %cst_72 = arith.constant dense<0.000000e+00> : vector<16x32xf32>
    %93 = tpu.matmul %91, %92, %cst_72 {dimension_numbers = #tpu.dot_dimension_numbers<[1], [0], [0], [1], [0, 0, 1, 1], [], []>} : vector<16x32xf32>, vector<32x32xf32>, vector<16x32xf32> -> vector<16x32xf32>
    %c0_73 = arith.constant 0 : index
    %c0_74 = arith.constant 0 : index
    %94 = vector.load %arg16[%c0_73, %c0_74] : memref<1x32xf32, #tpu.memory_space<vmem>>, vector<1x32xf32>
    %95 = vector.broadcast %94 : vector<1x32xf32> to vector<16x32xf32>
    %96 = arith.addf %93, %95 : vector<16x32xf32>
    %97 = arith.addf %61, %96 : vector<16x32xf32>
    %c0_75 = arith.constant 0 : index
    %c0_76 = arith.constant 0 : index
    %98 = vector.load %arg17[%c0_75, %c0_76] : memref<32x3xf32, #tpu.memory_space<vmem>>, vector<32x3xf32>
    %cst_77 = arith.constant dense<0.000000e+00> : vector<16x3xf32>
    %99 = tpu.matmul %97, %98, %cst_77 {dimension_numbers = #tpu.dot_dimension_numbers<[1], [0], [0], [1], [0, 0, 1, 1], [], []>} : vector<16x32xf32>, vector<32x3xf32>, vector<16x3xf32> -> vector<16x3xf32>
    %c0_78 = arith.constant 0 : index
    %c0_79 = arith.constant 0 : index
    %100 = vector.load %arg19[%c0_78, %c0_79] : memref<1x3xf32, #tpu.memory_space<vmem>>, vector<1x3xf32>
    %101 = vector.broadcast %100 : vector<1x3xf32> to vector<16x3xf32>
    %102 = arith.addf %99, %101 : vector<16x3xf32>
    %c0_80 = arith.constant 0 : index
    %c0_81 = arith.constant 0 : index
    %103 = vector.load %arg18[%c0_80, %c0_81] : memref<32x3xf32, #tpu.memory_space<vmem>>, vector<32x3xf32>
    %cst_82 = arith.constant dense<0.000000e+00> : vector<16x3xf32>
    %104 = tpu.matmul %97, %103, %cst_82 {dimension_numbers = #tpu.dot_dimension_numbers<[1], [0], [0], [1], [0, 0, 1, 1], [], []>} : vector<16x32xf32>, vector<32x3xf32>, vector<16x3xf32> -> vector<16x3xf32>
    %c0_83 = arith.constant 0 : index
    %c0_84 = arith.constant 0 : index
    %105 = vector.load %arg20[%c0_83, %c0_84] : memref<1x3xf32, #tpu.memory_space<vmem>>, vector<1x3xf32>
    %106 = vector.broadcast %105 : vector<1x3xf32> to vector<16x3xf32>
    %107 = arith.addf %104, %106 : vector<16x3xf32>
    %108 = math.exp %107 : vector<16x3xf32>
    %109 = arith.mulf %5, %108 : vector<16x3xf32>
    %110 = arith.addf %109, %102 : vector<16x3xf32>
    %c0_85 = arith.constant 0 : index
    %c0_86 = arith.constant 0 : index
    %c0_87 = arith.constant 0 : index
    %111 = vector.load %arg21[%c0_85, %c0_86, %c0_87] : memref<1x16x3xf32, #tpu.memory_space<vmem>>, vector<1x16x3xf32>
    %112 = vector.shape_cast %111 : vector<1x16x3xf32> to vector<16x3xf32>
    %113 = vector.shape_cast %3 : vector<16x3xf32> to vector<1x16x3xf32>
    tpu.vector_store %arg21[%c0_85, %c0_86, %c0_87], %113 {strides = array<i32>} : memref<1x16x3xf32, #tpu.memory_space<vmem>>, vector<1x16x3xf32>,
    %c0_88 = arith.constant 0 : index
    %c0_89 = arith.constant 0 : index
    %c0_90 = arith.constant 0 : index
    %114 = vector.load %arg22[%c0_88, %c0_89, %c0_90] : memref<1x16x3xf32, #tpu.memory_space<vmem>>, vector<1x16x3xf32>
    %115 = vector.shape_cast %114 : vector<1x16x3xf32> to vector<16x3xf32>
    %116 = vector.shape_cast %110 : vector<16x3xf32> to vector<1x16x3xf32>
    tpu.vector_store %arg22[%c0_88, %c0_89, %c0_90], %116 {strides = array<i32>} : memref<1x16x3xf32, #tpu.memory_space<vmem>>, vector<1x16x3xf32>,
    %cst_91 = arith.constant dense<0.000000e+00> : vector<16xf32>
    %117 = vector.multi_reduction <add>, %107, %cst_91 [1] : vector<16x3xf32> to vector<16xf32>
    %118 = vector.shape_cast %117 : vector<16xf32> to vector<16x1xf32>
    %cst_92 = arith.constant dense<0.000000e+00> : vector<1xf32>
    %119 = vector.multi_reduction <add>, %118, %cst_92 [0] : vector<16x1xf32> to vector<1xf32>
    %120 = vector.shape_cast %119 : vector<1xf32> to vector<1x1xf32>
    %c0_93 = arith.constant 0 : index
    %c0_94 = arith.constant 0 : index
    %c0_95 = arith.constant 0 : index
    %121 = vector.load %arg23[%c0_93, %c0_94, %c0_95] : memref<1x1x1xf32, #tpu.memory_space<vmem>>, vector<1x1x1xf32>
    %122 = vector.shape_cast %121 : vector<1x1x1xf32> to vector<1x1xf32>
    %123 = vector.shape_cast %120 : vector<1x1xf32> to vector<1x1x1xf32>
    tpu.vector_store %arg23[%c0_93, %c0_94, %c0_95], %123 {strides = array<i32>} : memref<1x1x1xf32, #tpu.memory_space<vmem>>, vector<1x1x1xf32>,
    return
  }
  func.func @transform_0(%arg0: i32) -> (i32, i32, i32) {
    %c0_i32 = arith.constant 0 : i32
    %c0_i32_0 = arith.constant 0 : i32
    %c0_i32_1 = arith.constant 0 : i32
    return %arg0, %c0_i32, %c0_i32_0 : i32, i32, i32
  }
  func.func @transform_1(%arg0: i32) -> (i32, i32, i32) {
    %c0_i32 = arith.constant 0 : i32
    %c0_i32_0 = arith.constant 0 : i32
    %c0_i32_1 = arith.constant 0 : i32
    return %arg0, %c0_i32, %c0_i32_0 : i32, i32, i32
  }
  func.func @transform_2(%arg0: i32) -> (i32, i32) {
    %c0_i32 = arith.constant 0 : i32
    %c0_i32_0 = arith.constant 0 : i32
    %c0_i32_1 = arith.constant 0 : i32
    return %c0_i32, %c0_i32_0 : i32, i32
  }
  func.func @transform_3(%arg0: i32) -> (i32, i32) {
    %c0_i32 = arith.constant 0 : i32
    %c0_i32_0 = arith.constant 0 : i32
    %c0_i32_1 = arith.constant 0 : i32
    return %c0_i32, %c0_i32_0 : i32, i32
  }
  func.func @transform_4(%arg0: i32) -> (i32, i32) {
    %c0_i32 = arith.constant 0 : i32
    %c0_i32_0 = arith.constant 0 : i32
    %c0_i32_1 = arith.constant 0 : i32
    return %c0_i32, %c0_i32_0 : i32, i32
  }
  func.func @transform_5(%arg0: i32) -> (i32, i32) {
    %c0_i32 = arith.constant 0 : i32
    %c0_i32_0 = arith.constant 0 : i32
    %c0_i32_1 = arith.constant 0 : i32
    return %c0_i32, %c0_i32_0 : i32, i32
  }
  func.func @transform_6(%arg0: i32) -> (i32, i32) {
    %c0_i32 = arith.constant 0 : i32
    %c0_i32_0 = arith.constant 0 : i32
    %c0_i32_1 = arith.constant 0 : i32
    return %c0_i32, %c0_i32_0 : i32, i32
  }
  func.func @transform_7(%arg0: i32) -> (i32, i32) {
    %c0_i32 = arith.constant 0 : i32
    %c0_i32_0 = arith.constant 0 : i32
    %c0_i32_1 = arith.constant 0 : i32
    return %c0_i32, %c0_i32_0 : i32, i32
  }
  func.func @transform_8(%arg0: i32) -> (i32, i32, i32) {
    %c0_i32 = arith.constant 0 : i32
    %c0_i32_0 = arith.constant 0 : i32
    %c0_i32_1 = arith.constant 0 : i32
    %c0_i32_2 = arith.constant 0 : i32
    return %c0_i32, %c0_i32_0, %c0_i32_1 : i32, i32, i32
  }
  func.func @transform_9(%arg0: i32) -> (i32, i32) {
    %c0_i32 = arith.constant 0 : i32
    %c0_i32_0 = arith.constant 0 : i32
    %c0_i32_1 = arith.constant 0 : i32
    return %c0_i32, %c0_i32_0 : i32, i32
  }
  func.func @transform_10(%arg0: i32) -> (i32, i32) {
    %c0_i32 = arith.constant 0 : i32
    %c0_i32_0 = arith.constant 0 : i32
    %c0_i32_1 = arith.constant 0 : i32
    return %c0_i32, %c0_i32_0 : i32, i32
  }
  func.func @transform_11(%arg0: i32) -> (i32, i32) {
    %c0_i32 = arith.constant 0 : i32
    %c0_i32_0 = arith.constant 0 : i32
    %c0_i32_1 = arith.constant 0 : i32
    return %c0_i32, %c0_i32_0 : i32, i32
  }
  func.func @transform_12(%arg0: i32) -> (i32, i32, i32) {
    %c0_i32 = arith.constant 0 : i32
    %c0_i32_0 = arith.constant 0 : i32
    %c0_i32_1 = arith.constant 0 : i32
    %c0_i32_2 = arith.constant 0 : i32
    return %c0_i32, %c0_i32_0, %c0_i32_1 : i32, i32, i32
  }
  func.func @transform_13(%arg0: i32) -> (i32, i32) {
    %c0_i32 = arith.constant 0 : i32
    %c0_i32_0 = arith.constant 0 : i32
    %c0_i32_1 = arith.constant 0 : i32
    return %c0_i32, %c0_i32_0 : i32, i32
  }
  func.func @transform_14(%arg0: i32) -> (i32, i32) {
    %c0_i32 = arith.constant 0 : i32
    %c0_i32_0 = arith.constant 0 : i32
    %c0_i32_1 = arith.constant 0 : i32
    return %c0_i32, %c0_i32_0 : i32, i32
  }
  func.func @transform_15(%arg0: i32) -> (i32, i32) {
    %c0_i32 = arith.constant 0 : i32
    %c0_i32_0 = arith.constant 0 : i32
    %c0_i32_1 = arith.constant 0 : i32
    return %c0_i32, %c0_i32_0 : i32, i32
  }
  func.func @transform_16(%arg0: i32) -> (i32, i32) {
    %c0_i32 = arith.constant 0 : i32
    %c0_i32_0 = arith.constant 0 : i32
    %c0_i32_1 = arith.constant 0 : i32
    return %c0_i32, %c0_i32_0 : i32, i32
  }
  func.func @transform_17(%arg0: i32) -> (i32, i32) {
    %c0_i32 = arith.constant 0 : i32
    %c0_i32_0 = arith.constant 0 : i32
    %c0_i32_1 = arith.constant 0 : i32
    return %c0_i32, %c0_i32_0 : i32, i32
  }
  func.func @transform_18(%arg0: i32) -> (i32, i32) {
    %c0_i32 = arith.constant 0 : i32
    %c0_i32_0 = arith.constant 0 : i32
    %c0_i32_1 = arith.constant 0 : i32
    return %c0_i32, %c0_i32_0 : i32, i32
  }
  func.func @transform_19(%arg0: i32) -> (i32, i32) {
    %c0_i32 = arith.constant 0 : i32
    %c0_i32_0 = arith.constant 0 : i32
    %c0_i32_1 = arith.constant 0 : i32
    return %c0_i32, %c0_i32_0 : i32, i32
  }
  func.func @transform_20(%arg0: i32) -> (i32, i32, i32) {
    %c0_i32 = arith.constant 0 : i32
    %c0_i32_0 = arith.constant 0 : i32
    %c0_i32_1 = arith.constant 0 : i32
    return %arg0, %c0_i32, %c0_i32_0 : i32, i32, i32
  }
  func.func @transform_21(%arg0: i32) -> (i32, i32, i32) {
    %c0_i32 = arith.constant 0 : i32
    %c0_i32_0 = arith.constant 0 : i32
    %c0_i32_1 = arith.constant 0 : i32
    return %arg0, %c0_i32, %c0_i32_0 : i32, i32, i32
  }
  func.func @transform_22(%arg0: i32) -> (i32, i32, i32) {
    %c0_i32 = arith.constant 0 : i32
    %c0_i32_0 = arith.constant 0 : i32
    %c0_i32_1 = arith.constant 0 : i32
    return %arg0, %c0_i32, %c0_i32_0 : i32, i32, i32
  }
}

</mosaic_0001>

<llo_original>
// kernel: waveglow_forward.5
$region0: #{waveglow_forward.5}
  #allocation0 [shape = 'u32[]', space=smem, size = 0x4, offset = 0x4, fixed_abs, tag = 'smem constant byte address 0x4 - core index']
  #allocation1 [shape = 'u32[144,128]{1,0:T(1,128)}', space=vmem, size = 0x12000, scoped, tag = 'internal scratch']
  #allocation2 [shape = 'f32[24,256]{1,0:T(8,128)}', space=vmem, size = 0x6000, scoped, tag = 'scratch operand']
  %s0 = inlined_call_operand.vmem [shape: f32[2,10,24], index: 0, kind: input, shape index: {}]
  %s1 = inlined_call_operand.vmem [shape: f32[3,24,256], index: 1, kind: input, shape index: {}]
  %s2 = inlined_call_operand.vmem [shape: f32[1,256], index: 2, kind: input, shape index: {}]
  %s3 = inlined_call_operand.hbm [shape: f32[3,256,256], index: 3, kind: input, shape index: {}]
  %s4 = inlined_call_operand.vmem [shape: f32[1,256], index: 4, kind: input, shape index: {}]
  %s5 = inlined_call_operand.vmem [shape: f32[256,8], index: 5, kind: input, shape index: {}]
  %s6 = inlined_call_operand.vmem [shape: f32[1,8], index: 6, kind: input, shape index: {}]
  %s7 = inlined_call_operand.vmem [shape: f32[2,8,8], index: 7, kind: output, shape index: {}]
  %s8 = sld [smem:[#allocation0]]
  $region65: #{waveglow_forward.5} parent=0
    _
  %s10 = ssub.s32 1, %s8
  %s11 = scalar_select 0, %s10, %s8
  $region1: #{waveglow_forward.5} parent=0
    #allocation3 [shape = 'u8[786432]{0}', space=vmem, size = 0xc0000, scoped, tag = 'input window, operand 3, single buffered']
    #allocation4 [shape = 's32[2]{0}', space=sflag, size = 0x8, scoped, tag = 'scoped memory for waveglow_forward.5']
    %12 = vsyncpa [#allocation4], 0
    loop: start=0, step=1, limit=4
    $region2: #{waveglow_forward.5} parent=1 // loop_pre_header
      _
    $region3: #{waveglow_forward.5} parent=1 // loop_header
      %s14 = sphi 0, %s18
      %p15 = scmp.ge.s32.totalorder %s14, 4
      %s24 = sphi 0, %s26
      %s27 = sphi 0, %s24
      %s28 = sphi 0, %s27
      %s44 = sphi 0, %s28
      %s48 = sphi 0, %s48
      %s50 = sphi 0, %s48
      %s51 = sphi 0, %s50
      %s65 = sphi 0, %s51
      %s69 = sphi 0, %s69
      %s71 = sphi 0, %s69
      %s72 = sphi 0, %s71
      %s86 = sphi 0, %s72
      %s90 = sphi 0, %s90
      %s92 = sphi 0, %s90
      %s93 = sphi 0, %s92
      %s107 = sphi 0, %s93
      %s111 = sphi 0, %s111
      %s113 = sphi 0, %s111
      %s114 = sphi 0, %s113
      %s128 = sphi 0, %s114
      %s132 = sphi 0, %s132
      %s134 = sphi 0, %s132
      %s135 = sphi 0, %s134
      %s149 = sphi 0, %s135
      %s153 = sphi 0, %s153
      %s155 = sphi 0, %s153
      %s156 = sphi 0, %s155
      %s170 = sphi 0, %s156
      %s176 = sphi 0, %s178
      %s179 = sphi 0, %s176
      %s180 = sphi 0, %s179
      %s196 = sphi 0, %s180
    $region4: #{waveglow_forward.5} parent=1 // loop_header_branch
      %17 = sbr.rel (%p15) target = $region8
    $region5: #{waveglow_forward.5} parent=1 // loop_body
      %s19 = ssub.s32 %s14, 1
      %s20 = ssub.s32 %s14, 2
      %s21 = sadd.s32 %s14, 1
      %s22 = ssub.s32 %s14, %s21
      %p23 = scmp.eq.s32.totalorder %s22, 0
      %s25 = sadd.s32 %s24, 1
      %s26 = scalar_select %p23, %s24, %s25
      %p29 = pneg %p23
      %p30 = scmp.eq.s32.totalorder %s14, 1
      %p31 = por %p29, %p30
      %p32 = scmp.ne.s32.totalorder %s24, %s27
      %p33 = scmp.eq.s32.totalorder %s14, 0
      %p34 = por %p32, %p33
      %p35 = scmp.ne.s32.totalorder %s24, %s27
      %p36 = scmp.eq.s32.totalorder %s19, 1
      %p37 = por %p35, %p36
      %p38 = scmp.ne.s32.totalorder %s27, %s28
      %p39 = scmp.eq.s32.totalorder %s19, 0
      %p40 = por %p38, %p39
      %p41 = scmp.ne.s32.totalorder %s27, %s28
      %p42 = scmp.eq.s32.totalorder %s20, 1
      %p43 = por %p41, %p42
      %p45 = scmp.ne.s32.totalorder %s28, %s44
      %p46 = scmp.eq.s32.totalorder %s20, 0
      %p47 = por %p45, %p46
      %s49 = sadd.s32 %s48, 1
      %p52 = scmp.eq.s32.totalorder %s14, 1
      %p53 = scmp.ne.s32.totalorder %s48, %s50
      %p54 = scmp.eq.s32.totalorder %s14, 0
      %p55 = por %p53, %p54
      %p56 = scmp.ne.s32.totalorder %s48, %s50
      %p57 = scmp.eq.s32.totalorder %s19, 1
      %p58 = por %p56, %p57
      %p59 = scmp.ne.s32.totalorder %s50, %s51
      %p60 = scmp.eq.s32.totalorder %s19, 0
      %p61 = por %p59, %p60
      %p62 = scmp.ne.s32.totalorder %s50, %s51
      %p63 = scmp.eq.s32.totalorder %s20, 1
      %p64 = por %p62, %p63
      %p66 = scmp.ne.s32.totalorder %s51, %s65
      %p67 = scmp.eq.s32.totalorder %s20, 0
      %p68 = por %p66, %p67
      %s70 = sadd.s32 %s69, 1
      %p73 = scmp.eq.s32.totalorder %s14, 1
      %p74 = scmp.ne.s32.totalorder %s69, %s71
      %p75 = scmp.eq.s32.totalorder %s14, 0
      %p76 = por %p74, %p75
      %p77 = scmp.ne.s32.totalorder %s69, %s71
      %p78 = scmp.eq.s32.totalorder %s19, 1
      %p79 = por %p77, %p78
      %p80 = scmp.ne.s32.totalorder %s71, %s72
      %p81 = scmp.eq.s32.totalorder %s19, 0
      %p82 = por %p80, %p81
      %p83 = scmp.ne.s32.totalorder %s71, %s72
      %p84 = scmp.eq.s32.totalorder %s20, 1
      %p85 = por %p83, %p84
      %p87 = scmp.ne.s32.totalorder %s72, %s86
      %p88 = scmp.eq.s32.totalorder %s20, 0
      %p89 = por %p87, %p88
      %s91 = sadd.s32 %s90, 1
      %p94 = scmp.eq.s32.totalorder %s14, 1
      %p95 = scmp.ne.s32.totalorder %s90, %s92
      %p96 = scmp.eq.s32.totalorder %s14, 0
      %p97 = por %p95, %p96
      %p98 = scmp.ne.s32.totalorder %s90, %s92
      %p99 = scmp.eq.s32.totalorder %s19, 1
      %p100 = por %p98, %p99
      %p101 = scmp.ne.s32.totalorder %s92, %s93
      %p102 = scmp.eq.s32.totalorder %s19, 0
      %p103 = por %p101, %p102
      %p104 = scmp.ne.s32.totalorder %s92, %s93
      %p105 = scmp.eq.s32.totalorder %s20, 1
      %p106 = por %p104, %p105
      %p108 = scmp.ne.s32.totalorder %s93, %s107
      %p109 = scmp.eq.s32.totalorder %s20, 0
      %p110 = por %p108, %p109
      %s112 = sadd.s32 %s111, 1
      %p115 = scmp.eq.s32.totalorder %s14, 1
      %p116 = scmp.ne.s32.totalorder %s111, %s113
      %p117 = scmp.eq.s32.totalorder %s14, 0
      %p118 = por %p116, %p117
      %p119 = scmp.ne.s32.totalorder %s111, %s113
      %p120 = scmp.eq.s32.totalorder %s19, 1
      %p121 = por %p119, %p120
      %p122 = scmp.ne.s32.totalorder %s113, %s114
      %p123 = scmp.eq.s32.totalorder %s19, 0
      %p124 = por %p122, %p123
      %p125 = scmp.ne.s32.totalorder %s113, %s114
      %p126 = scmp.eq.s32.totalorder %s20, 1
      %p127 = por %p125, %p126
      %p129 = scmp.ne.s32.totalorder %s114, %s128
      %p130 = scmp.eq.s32.totalorder %s20, 0
      %p131 = por %p129, %p130
      %s133 = sadd.s32 %s132, 1
      %p136 = scmp.eq.s32.totalorder %s14, 1
      %p137 = scmp.ne.s32.totalorder %s132, %s134
      %p138 = scmp.eq.s32.totalorder %s14, 0
      %p139 = por %p137, %p138
      %p140 = scmp.ne.s32.totalorder %s132, %s134
      %p141 = scmp.eq.s32.totalorder %s19, 1
      %p142 = por %p140, %p141
      %p143 = scmp.ne.s32.totalorder %s134, %s135
      %p144 = scmp.eq.s32.totalorder %s19, 0
      %p145 = por %p143, %p144
      %p146 = scmp.ne.s32.totalorder %s134, %s135
      %p147 = scmp.eq.s32.totalorder %s20, 1
      %p148 = por %p146, %p147
      %p150 = scmp.ne.s32.totalorder %s135, %s149
      %p151 = scmp.eq.s32.totalorder %s20, 0
      %p152 = por %p150, %p151
      %s154 = sadd.s32 %s153, 1
      %p157 = scmp.eq.s32.totalorder %s14, 1
      %p158 = scmp.ne.s32.totalorder %s153, %s155
      %p159 = scmp.eq.s32.totalorder %s14, 0
      %p160 = por %p158, %p159
      %p161 = scmp.ne.s32.totalorder %s153, %s155
      %p162 = scmp.eq.s32.totalorder %s19, 1
      %p163 = por %p161, %p162
      %p164 = scmp.ne.s32.totalorder %s155, %s156
      %p165 = scmp.eq.s32.totalorder %s19, 0
      %p166 = por %p164, %p165
      %p167 = scmp.ne.s32.totalorder %s155, %s156
      %p168 = scmp.eq.s32.totalorder %s20, 1
      %p169 = por %p167, %p168
      %p171 = scmp.ne.s32.totalorder %s156, %s170
      %p172 = scmp.eq.s32.totalorder %s20, 0
      %p173 = por %p171, %p172
      %s174 = ssub.s32 %s14, %s21
      %p175 = scmp.eq.s32.totalorder %s174, 0
      %s177 = sadd.s32 %s176, 1
      %s178 = scalar_select %p175, %s176, %s177
      %p181 = pneg %p175
      %p182 = scmp.eq.s32.totalorder %s14, 1
      %p183 = por %p181, %p182
      %p184 = scmp.ne.s32.totalorder %s176, %s179
      %p185 = scmp.eq.s32.totalorder %s14, 0
      %p186 = por %p184, %p185
      %p187 = scmp.ne.s32.totalorder %s176, %s179
      %p188 = scmp.eq.s32.totalorder %s19, 1
      %p189 = por %p187, %p188
      %p190 = scmp.ne.s32.totalorder %s179, %s180
      %p191 = scmp.eq.s32.totalorder %s19, 0
      %p192 = por %p190, %p191
      %p193 = scmp.ne.s32.totalorder %s179, %s180
      %p194 = scmp.eq.s32.totalorder %s20, 1
      %p195 = por %p193, %p194
      %p197 = scmp.ne.s32.totalorder %s180, %s196
      %p198 = scmp.eq.s32.totalorder %s20, 0
      %p199 = por %p197, %p198
      %p200 = scmp.le.s32.totalorder 1, %s14
      %p201 = scmp.lt.s32.totalorder %s14, 3
      %p202 = pnand %p200, %p201
      %p203 = pneg %p202
      // Predicated region
      $region9: #{waveglow_forward.5} parent=5 // pred_check
        _
      $region10: #{waveglow_forward.5} parent=5 // pred_check_branch
        %205 = sbr.rel (%p202) target = $region12
      $region11: #{waveglow_forward.5} parent=5 // pred_region
        %s206 = ssub.s32 %s14, 1
        // Predicated region
        $region13: #{waveglow_forward.5} parent=11 // pred_check
          %p207 = pneg %p61
        $region14: #{waveglow_forward.5} parent=11 // pred_check_branch
          %209 = sbr.rel (%p207) target = $region16
        $region15: #{waveglow_forward.5} parent=11 // pred_region
          _
        $region16: #{waveglow_forward.5} parent=11 // pred_fallthru
          _
        // Predicated region
        $region17: #{waveglow_forward.5} parent=11 // pred_check
          %p210 = pneg %p82
        $region18: #{waveglow_forward.5} parent=11 // pred_check_branch
          %212 = sbr.rel (%p210) target = $region20
        $region19: #{waveglow_forward.5} parent=11 // pred_region
          _
        $region20: #{waveglow_forward.5} parent=11 // pred_fallthru
          _
        // Predicated region
        $region21: #{waveglow_forward.5} parent=11 // pred_check
          %p213 = pneg %p103
        $region22: #{waveglow_forward.5} parent=11 // pred_check_branch
          %215 = sbr.rel (%p213) target = $region24
        $region23: #{waveglow_forward.5} parent=11 // pred_region
          %s217 = ssub.s32 24576, 24576
          %218 = vsyncadd [#allocation4], %s217
          %s219 = sshll.u32 [#allocation3], 4
          %s220 = int_to_ptr.vmem [resolvable:$true] %s219
          %225 = dma.hbm_to_vmem [thread:$0]  %s3, 24576, %s220, [#allocation4], 256, 256, 16
        $region24: #{waveglow_forward.5} parent=11 // pred_fallthru
          _
        // Predicated region
        $region25: #{waveglow_forward.5} parent=11 // pred_check
          %p226 = pneg %p124
        $region26: #{waveglow_forward.5} parent=11 // pred_check_branch
          %228 = sbr.rel (%p226) target = $region28
        $region27: #{waveglow_forward.5} parent=11 // pred_region
          _
        $region28: #{waveglow_forward.5} parent=11 // pred_fallthru
          _
        // Predicated region
        $region29: #{waveglow_forward.5} parent=11 // pred_check
          %p229 = pneg %p145
        $region30: #{waveglow_forward.5} parent=11 // pred_check_branch
          %231 = sbr.rel (%p229) target = $region32
        $region31: #{waveglow_forward.5} parent=11 // pred_region
          _
        $region32: #{waveglow_forward.5} parent=11 // pred_fallthru
          _
        // Predicated region
        $region33: #{waveglow_forward.5} parent=11 // pred_check
          %p232 = pneg %p166
        $region34: #{waveglow_forward.5} parent=11 // pred_check_branch
          %234 = sbr.rel (%p232) target = $region36
        $region35: #{waveglow_forward.5} parent=11 // pred_region
          _
        $region36: #{waveglow_forward.5} parent=11 // pred_fallthru
          _
      $region12: #{waveglow_forward.5} parent=5 // pred_fallthru
        _
      %p235 = scmp.lt.s32.totalorder %s14, 2
      // Predicated region
      $region37: #{waveglow_forward.5} parent=5 // pred_check
        %p236 = pneg %p235
      $region38: #{waveglow_forward.5} parent=5 // pred_check_branch
        %238 = sbr.rel (%p236) target = $region40
      $region39: #{waveglow_forward.5} parent=5 // pred_region
        // Predicated region
        $region41: #{waveglow_forward.5} parent=39 // pred_check
          %p239 = pneg %p34
        $region42: #{waveglow_forward.5} parent=39 // pred_check_branch
          %241 = sbr.rel (%p239) target = $region44
        $region43: #{waveglow_forward.5} parent=39 // pred_region
          %p242 = scmp.lt.s32.totalorder %s14, 1
          %s243 = scalar_select %p242, %s14, 1
          %s244 = smul.addr %s243, 2
          %s245 = smul.addr %s244, 8
          %s246 = scalar_lea.vmem %s0, %s245
        $region44: #{waveglow_forward.5} parent=39 // pred_fallthru
          _
      $region40: #{waveglow_forward.5} parent=5 // pred_fallthru
        _
      %p247 = scmp.le.s32.totalorder 1, %s14
      %p248 = scmp.lt.s32.totalorder %s14, 3
      %p249 = pnand %p247, %p248
      %p250 = pneg %p249
      // Predicated region
      $region45: #{waveglow_forward.5} parent=5 // pred_check
        _
      $region46: #{waveglow_forward.5} parent=5 // pred_check_branch
        %252 = sbr.rel (%p249) target = $region48
      $region47: #{waveglow_forward.5} parent=5 // pred_region
        %s253 = ssub.s32 %s14, 1
        // Predicated region
        $region49: #{waveglow_forward.5} parent=47 // pred_check
          %p254 = pneg %p103
        $region50: #{waveglow_forward.5} parent=47 // pred_check_branch
          %256 = sbr.rel (%p254) target = $region52
        $region51: #{waveglow_forward.5} parent=47 // pred_region
          %257 = dma.done [#allocation4], 24576
        $region52: #{waveglow_forward.5} parent=47 // pred_fallthru
          _
        %p258 = scmp.lt.s32.totalorder %s19, 1
        %s259 = scalar_select %p258, %s19, 1
        %s260 = smul.addr %s259, 2
        %s261 = smul.addr %s260, 8
        %s262 = scalar_lea.vmem %s0, %s261
        %p263 = pneg %p40
        %p264 = pneg %p37
        %p265 = pneg %p61
        %p266 = pneg %p58
        %p267 = pneg %p82
        %p268 = pneg %p79
        %p269 = pneg %p103
        %p270 = pneg %p100
        %p271 = pneg %p124
        %p272 = pneg %p121
        %p273 = pneg %p145
        %p274 = pneg %p142
        %p275 = pneg %p166
        %p276 = pneg %p163
        %p277 = pneg %p192
        %p278 = pneg %p189
        %p279 = scmp.lt.s32.totalorder %s19, 1
        %s280 = scalar_select %p279, %s19, 1
        %s281 = smul.addr %s280, 8
        %s282 = scalar_lea.vmem %s7, %s281
        %p283 = scmp.lt.s32.totalorder %s19, 1
        %s284 = scalar_select %p283, %s19, 1
        %s285 = smul.addr %s284, 2
        %s286 = smul.addr %s285, 8
        %s287 = scalar_lea.vmem %s0, %s286
        %p288 = scmp.lt.s32.totalorder %s19, 1
        %s289 = scalar_select %p288, %s19, 1
        %s290 = smul.addr %s289, 8
        %s291 = scalar_lea.vmem %s7, %s290
        %v292 = vld [vmem:[%s287] sm:$0xff]
        %v293 = vld [vmem:[%s287 + $0x1] sm:$0xff]
        %v294 = vld [vmem:[%s287 + $0x2] sm:$0xff]
        %v295 = vld [vmem:[%s2] sm:$0x3]
        %v296 = vld [vmem:[%s1] sm:$0xff]
        %v297 = vld [vmem:[%s1 + $0x8] sm:$0xff]
        %v298 = vld [vmem:[%s1 + $0x10] sm:$0xff]
        %v299 = vld [vmem:[%s1 + $0x18] sm:$0xff]
        %v300 = vld [vmem:[%s1 + $0x20] sm:$0xff]
        %v301 = vld [vmem:[%s1 + $0x28] sm:$0xff]
        %vm302 = vcmask 195584
        %v304 = vsel %vm302, %v292, 0
        %306 = vmatprep.subr.mxu0 %v297
        %307 = vmatpush1.msra.mxu0 %v296
        %308 = vmatprep.subr.mxu0 %v299
        %309 = vmatpush1.msra.mxu0 %v298
        %310 = vmatprep.subr.mxu0 %v301
        %311 = vmatpush1.msra.mxu0 %v300
        %312 = vmatprep.subr.mxu0 0.0
        %313 = vmatpush1.msra.mxu0 0.0
        %314 = vmatprep.subr.mxu0 0.0
        %315 = vmatpush1.msra.mxu0 0.0
        %316 = vmatprep.subr.mxu0 0.0
        %317 = vmatpush1.msra.mxu0 0.0
        %318 = vmatprep.subr.mxu0 0.0
        %319 = vmatpush1.msra.mxu0 0.0
        %320 = vmatprep.subr.mxu0 0.0
        %321 = vmatpush1.msra.mxu0 0.0
        %322 = vmatprep.subr.mxu0 0.0
        %323 = vmatpush1.msra.mxu0 0.0
        %324 = vmatprep.subr.mxu0 0.0
        %325 = vmatpush1.msra.mxu0 0.0
        %326 = vmatprep.subr.mxu0 0.0
        %327 = vmatpush1.msra.mxu0 0.0
        %328 = vmatprep.subr.mxu0 0.0
        %329 = vmatpush1.msra.mxu0 0.0
        %330 = vmatprep.subr.mxu0 0.0
        %331 = vmatpush1.msra.mxu0 0.0
        %332 = vmatprep.subr.mxu0 0.0
        %333 = vmatpush1.msra.mxu0 0.0
        %334 = vmatprep.subr.mxu0 0.0
        %335 = vmatpush1.msra.mxu0 0.0
        %336 = vmatprep.subr.mxu0 0.0
        %337 = vmatpush1.msra.mxu0 0.0
        %338 = vmatprep.subr.mxu0 0.0
        %339 = vmatpush1.msra.mxu0 0.0
        %340 = vmatprep.subr.mxu0 0.0
        %341 = vmatpush1.msra.mxu0 0.0
        %342 = vmatprep.subr.mxu0 0.0
        %343 = vmatpush1.msra.mxu0 0.0
        %344 = vmatprep.subr.mxu0 0.0
        %345 = vmatpush1.msra.mxu0 0.0
        %346 = vmatprep.subr.mxu0 0.0
        %347 = vmatpush1.msra.mxu0 0.0
        %348 = vmatprep.subr.mxu0 0.0
        %349 = vmatpush1.msra.mxu0 0.0
        %350 = vmatprep.subr.mxu0 0.0
        %351 = vmatpush1.msra.mxu0 0.0
        %352 = vmatprep.subr.mxu0 0.0
        %353 = vmatpush1.msra.mxu0 0.0
        %354 = vmatprep.subr.mxu0 0.0
        %355 = vmatpush1.msra.mxu0 0.0
        %356 = vmatprep.subr.mxu0 0.0
        %357 = vmatpush1.msra.mxu0 0.0
        %358 = vmatprep.subr.mxu0 0.0
        %359 = vmatpush1.msra.mxu0 0.0
        %360 = vmatprep.subr.mxu0 0.0
        %361 = vmatpush1.msra.mxu0 0.0
        %362 = vmatprep.subr.mxu0 0.0
        %363 = vmatpush1.msra.mxu0 0.0
        %364 = vmatprep.subr.mxu0 0.0
        %365 = vmatpush1.msra.mxu0 0.0
        %366 = vmatprep.subr.mxu0 0.0
        %367 = vmatpush1.msra.mxu0 0.0
        %368 = vmatprep.subr.mxu0 0.0
        %369 = vmatpush1.msra.mxu0 0.0
        %370 = vmatprep.mubr.f32.mxu0 0.0
        %371 = vmatmul.mubr.f32.gmra.mrb[0].mxu0 %v304
        %v372 = vpop.f32.mrb[0].mxu0
        %v373 = vadd.f32 0.0, %v372
        %v374 = vpop.f32.mrb[0].mxu0
        %v375 = vadd.f32 0.0, %v374
        %376 = vdwg.mxu0
        %v378 = vlaneseq
        %v379 = vshrl.u32 %v378, 7
        %v380 = vsub.s32 0, %v379
        %v381 = vrot.slane %v295, %v380
        %v382 = vlaneseq
        %v383 = vshrl.u32 %v382, 7
        %v384 = vsub.s32 1, %v383
        %v385 = vrot.slane %v295, %v384
        %v388 = vadd.f32 %v381, %v373
        %v389 = vadd.f32 %v385, %v375
        %s390 = scalar_lea.vmem %s1, 48
        %v391 = vld [vmem:[%s390] sm:$0xff]
        %v392 = vld [vmem:[%s390 + $0x8] sm:$0xff]
        %v393 = vld [vmem:[%s390 + $0x10] sm:$0xff]
        %v394 = vld [vmem:[%s390 + $0x18] sm:$0xff]
        %v395 = vld [vmem:[%s390 + $0x20] sm:$0xff]
        %v396 = vld [vmem:[%s390 + $0x28] sm:$0xff]
        %v398 = vsel %vm302, %v293, 0
        %400 = vmatprep.subr.mxu0 %v392
        %401 = vmatpush1.msra.mxu0 %v391
        %402 = vmatprep.subr.mxu0 %v394
        %403 = vmatpush1.msra.mxu0 %v393
        %404 = vmatprep.subr.mxu0 %v396
        %405 = vmatpush1.msra.mxu0 %v395
        %406 = vmatprep.subr.mxu0 0.0
        %407 = vmatpush1.msra.mxu0 0.0
        %408 = vmatprep.subr.mxu0 0.0
        %409 = vmatpush1.msra.mxu0 0.0
        %410 = vmatprep.subr.mxu0 0.0
        %411 = vmatpush1.msra.mxu0 0.0
        %412 = vmatprep.subr.mxu0 0.0
        %413 = vmatpush1.msra.mxu0 0.0
        %414 = vmatprep.subr.mxu0 0.0
        %415 = vmatpush1.msra.mxu0 0.0
        %416 = vmatprep.subr.mxu0 0.0
        %417 = vmatpush1.msra.mxu0 0.0
        %418 = vmatprep.subr.mxu0 0.0
        %419 = vmatpush1.msra.mxu0 0.0
        %420 = vmatprep.subr.mxu0 0.0
        %421 = vmatpush1.msra.mxu0 0.0
        %422 = vmatprep.subr.mxu0 0.0
        %423 = vmatpush1.msra.mxu0 0.0
        %424 = vmatprep.subr.mxu0 0.0
        %425 = vmatpush1.msra.mxu0 0.0
        %426 = vmatprep.subr.mxu0 0.0
        %427 = vmatpush1.msra.mxu0 0.0
        %428 = vmatprep.subr.mxu0 0.0
        %429 = vmatpush1.msra.mxu0 0.0
        %430 = vmatprep.subr.mxu0 0.0
        %431 = vmatpush1.msra.mxu0 0.0
        %432 = vmatprep.subr.mxu0 0.0
        %433 = vmatpush1.msra.mxu0 0.0
        %434 = vmatprep.subr.mxu0 0.0
        %435 = vmatpush1.msra.mxu0 0.0
        %436 = vmatprep.subr.mxu0 0.0
        %437 = vmatpush1.msra.mxu0 0.0
        %438 = vmatprep.subr.mxu0 0.0
        %439 = vmatpush1.msra.mxu0 0.0
        %440 = vmatprep.subr.mxu0 0.0
        %441 = vmatpush1.msra.mxu0 0.0
        %442 = vmatprep.subr.mxu0 0.0
        %443 = vmatpush1.msra.mxu0 0.0
        %444 = vmatprep.subr.mxu0 0.0
        %445 = vmatpush1.msra.mxu0 0.0
        %446 = vmatprep.subr.mxu0 0.0
        %447 = vmatpush1.msra.mxu0 0.0
        %448 = vmatprep.subr.mxu0 0.0
        %449 = vmatpush1.msra.mxu0 0.0
        %450 = vmatprep.subr.mxu0 0.0
        %451 = vmatpush1.msra.mxu0 0.0
        %452 = vmatprep.subr.mxu0 0.0
        %453 = vmatpush1.msra.mxu0 0.0
        %454 = vmatprep.subr.mxu0 0.0
        %455 = vmatpush1.msra.mxu0 0.0
        %456 = vmatprep.subr.mxu0 0.0
        %457 = vmatpush1.msra.mxu0 0.0
        %458 = vmatprep.subr.mxu0 0.0
        %459 = vmatpush1.msra.mxu0 0.0
        %460 = vmatprep.subr.mxu0 0.0
        %461 = vmatpush1.msra.mxu0 0.0
        %462 = vmatprep.subr.mxu0 0.0
        %463 = vmatpush1.msra.mxu0 0.0
        %464 = vmatprep.mubr.f32.mxu0 0.0
        %465 = vmatmul.mubr.f32.gmra.mrb[0].mxu0 %v398
        %v466 = vpop.f32.mrb[0].mxu0
        %v467 = vadd.f32 0.0, %v466
        %v468 = vpop.f32.mrb[0].mxu0
        %v469 = vadd.f32 0.0, %v468
        %470 = vdwg.mxu0
        %v471 = vadd.f32 %v388, %v467
        %v472 = vadd.f32 %v389, %v469
        %s473 = scalar_lea.vmem %s1, 96
        %v474 = vld [vmem:[%s473] sm:$0xff]
        %v475 = vld [vmem:[%s473 + $0x8] sm:$0xff]
        %v476 = vld [vmem:[%s473 + $0x10] sm:$0xff]
        %v477 = vld [vmem:[%s473 + $0x18] sm:$0xff]
        %v478 = vld [vmem:[%s473 + $0x20] sm:$0xff]
        %v479 = vld [vmem:[%s473 + $0x28] sm:$0xff]
        %v481 = vsel %vm302, %v294, 0
        %483 = vmatprep.subr.mxu0 %v475
        %484 = vmatpush1.msra.mxu0 %v474
        %485 = vmatprep.subr.mxu0 %v477
        %486 = vmatpush1.msra.mxu0 %v476
        %487 = vmatprep.subr.mxu0 %v479
        %488 = vmatpush1.msra.mxu0 %v478
        %489 = vmatprep.subr.mxu0 0.0
        %490 = vmatpush1.msra.mxu0 0.0
        %491 = vmatprep.subr.mxu0 0.0
        %492 = vmatpush1.msra.mxu0 0.0
        %493 = vmatprep.subr.mxu0 0.0
        %494 = vmatpush1.msra.mxu0 0.0
        %495 = vmatprep.subr.mxu0 0.0
        %496 = vmatpush1.msra.mxu0 0.0
        %497 = vmatprep.subr.mxu0 0.0
        %498 = vmatpush1.msra.mxu0 0.0
        %499 = vmatprep.subr.mxu0 0.0
        %500 = vmatpush1.msra.mxu0 0.0
        %501 = vmatprep.subr.mxu0 0.0
        %502 = vmatpush1.msra.mxu0 0.0
        %503 = vmatprep.subr.mxu0 0.0
        %504 = vmatpush1.msra.mxu0 0.0
        %505 = vmatprep.subr.mxu0 0.0
        %506 = vmatpush1.msra.mxu0 0.0
        %507 = vmatprep.subr.mxu0 0.0
        %508 = vmatpush1.msra.mxu0 0.0
        %509 = vmatprep.subr.mxu0 0.0
        %510 = vmatpush1.msra.mxu0 0.0
        %511 = vmatprep.subr.mxu0 0.0
        %512 = vmatpush1.msra.mxu0 0.0
        %513 = vmatprep.subr.mxu0 0.0
        %514 = vmatpush1.msra.mxu0 0.0
        %515 = vmatprep.subr.mxu0 0.0
        %516 = vmatpush1.msra.mxu0 0.0
        %517 = vmatprep.subr.mxu0 0.0
        %518 = vmatpush1.msra.mxu0 0.0
        %519 = vmatprep.subr.mxu0 0.0
        %520 = vmatpush1.msra.mxu0 0.0
        %521 = vmatprep.subr.mxu0 0.0
        %522 = vmatpush1.msra.mxu0 0.0
        %523 = vmatprep.subr.mxu0 0.0
        %524 = vmatpush1.msra.mxu0 0.0
        %525 = vmatprep.subr.mxu0 0.0
        %526 = vmatpush1.msra.mxu0 0.0
        %527 = vmatprep.subr.mxu0 0.0
        %528 = vmatpush1.msra.mxu0 0.0
        %529 = vmatprep.subr.mxu0 0.0
        %530 = vmatpush1.msra.mxu0 0.0
        %531 = vmatprep.subr.mxu0 0.0
        %532 = vmatpush1.msra.mxu0 0.0
        %533 = vmatprep.subr.mxu0 0.0
        %534 = vmatpush1.msra.mxu0 0.0
        %535 = vmatprep.subr.mxu0 0.0
        %536 = vmatpush1.msra.mxu0 0.0
        %537 = vmatprep.subr.mxu0 0.0
        %538 = vmatpush1.msra.mxu0 0.0
        %539 = vmatprep.subr.mxu0 0.0
        %540 = vmatpush1.msra.mxu0 0.0
        %541 = vmatprep.subr.mxu0 0.0
        %542 = vmatpush1.msra.mxu0 0.0
        %543 = vmatprep.subr.mxu0 0.0
        %544 = vmatpush1.msra.mxu0 0.0
        %545 = vmatprep.subr.mxu0 0.0
        %546 = vmatpush1.msra.mxu0 0.0
        %547 = vmatprep.mubr.f32.mxu0 0.0
        %548 = vmatmul.mubr.f32.gmra.mrb[0].mxu0 %v481
        %v549 = vpop.f32.mrb[0].mxu0
        %v550 = vadd.f32 0.0, %v549
        %v551 = vpop.f32.mrb[0].mxu0
        %v552 = vadd.f32 0.0, %v551
        %553 = vdwg.mxu0
        %v554 = vadd.f32 %v471, %v550
        %v555 = vadd.f32 %v472, %v552
        %556 = vst [vmem:[#allocation2] sm:$0xff] 0.0
        %557 = vst [vmem:[#allocation2 + $0x8] sm:$0xff] 0.0
        %558 = vst [vmem:[#allocation2 + $0x10] sm:$0xff] 0.0
        %559 = vst [vmem:[#allocation2 + $0x18] sm:$0xff] 0.0
        %560 = vst [vmem:[#allocation2 + $0x20] sm:$0xff] 0.0
        %561 = vst [vmem:[#allocation2 + $0x28] sm:$0xff] 0.0
        %562 = vst [vmem:[#allocation2 + $0x10] sm:$0xff] %v554
        %563 = vst [vmem:[#allocation2 + $0x18] sm:$0xff] %v555
        %v564 = vld [vmem:[#allocation3] sm:$0xff]
        %v565 = vld [vmem:[#allocation3 + $0x8] sm:$0xff]
        %v566 = vld [vmem:[#allocation3 + $0x10] sm:$0xff]
        %v567 = vld [vmem:[#allocation3 + $0x18] sm:$0xff]
        %v568 = vld [vmem:[#allocation3 + $0x20] sm:$0xff]
        %v569 = vld [vmem:[#allocation3 + $0x28] sm:$0xff]
        %v570 = vld [vmem:[#allocation3 + $0x30] sm:$0xff]
        %v571 = vld [vmem:[#allocation3 + $0x38] sm:$0xff]
        %v572 = vld [vmem:[#allocation3 + $0x40] sm:$0xff]
        %v573 = vld [vmem:[#allocation3 + $0x48] sm:$0xff]
        %v574 = vld [vmem:[#allocation3 + $0x50] sm:$0xff]
        %v575 = vld [vmem:[#allocation3 + $0x58] sm:$0xff]
        %v576 = vld [vmem:[#allocation3 + $0x60] sm:$0xff]
        %v577 = vld [vmem:[#allocation3 + $0x68] sm:$0xff]
        %v578 = vld [vmem:[#allocation3 + $0x70] sm:$0xff]
        %v579 = vld [vmem:[#allocation3 + $0x78] sm:$0xff]
        %v580 = vld [vmem:[#allocation3 + $0x80] sm:$0xff]
        %v581 = vld [vmem:[#allocation3 + $0x88] sm:$0xff]
        %v582 = vld [vmem:[#allocation3 + $0x90] sm:$0xff]
        %v583 = vld [vmem:[#allocation3 + $0x98] sm:$0xff]
        %v584 = vld [vmem:[#allocation3 + $0xa0] sm:$0xff]
        %v585 = vld [vmem:[#allocation3 + $0xa8] sm:$0xff]
        %v586 = vld [vmem:[#allocation3 + $0xb0] sm:$0xff]
        %v587 = vld [vmem:[#allocation3 + $0xb8] sm:$0xff]
        %v588 = vld [vmem:[#allocation3 + $0xc0] sm:$0xff]
        %v589 = vld [vmem:[#allocation3 + $0xc8] sm:$0xff]
        %v590 = vld [vmem:[#allocation3 + $0xd0] sm:$0xff]
        %v591 = vld [vmem:[#allocation3 + $0xd8] sm:$0xff]
        %v592 = vld [vmem:[#allocation3 + $0xe0] sm:$0xff]
        %v593 = vld [vmem:[#allocation3 + $0xe8] sm:$0xff]
        %v594 = vld [vmem:[#allocation3 + $0xf0] sm:$0xff]
        %v595 = vld [vmem:[#allocation3 + $0xf8] sm:$0xff]
        %v596 = vld [vmem:[#allocation3 + $0x100] sm:$0xff]
        %v597 = vld [vmem:[#allocation3 + $0x108] sm:$0xff]
        %v598 = vld [vmem:[#allocation3 + $0x110] sm:$0xff]
        %v599 = vld [vmem:[#allocation3 + $0x118] sm:$0xff]
        %v600 = vld [vmem:[#allocation3 + $0x120] sm:$0xff]
        %v601 = vld [vmem:[#allocation3 + $0x128] sm:$0xff]
        %v602 = vld [vmem:[#allocation3 + $0x130] sm:$0xff]
        %v603 = vld [vmem:[#allocation3 + $0x138] sm:$0xff]
        %v604 = vld [vmem:[#allocation3 + $0x140] sm:$0xff]
        %v605 = vld [vmem:[#allocation3 + $0x148] sm:$0xff]
        %v606 = vld [vmem:[#allocation3 + $0x150] sm:$0xff]
        %v607 = vld [vmem:[#allocation3 + $0x158] sm:$0xff]
        %v608 = vld [vmem:[#allocation3 + $0x160] sm:$0xff]
        %v609 = vld [vmem:[#allocation3 + $0x168] sm:$0xff]
        %v610 = vld [vmem:[#allocation3 + $0x170] sm:$0xff]
        %v611 = vld [vmem:[#allocation3 + $0x178] sm:$0xff]
        %v612 = vld [vmem:[#allocation3 + $0x180] sm:$0xff]
        %v613 = vld [vmem:[#allocation3 + $0x188] sm:$0xff]
        %v614 = vld [vmem:[#allocation3 + $0x190] sm:$0xff]
        %v615 = vld [vmem:[#allocation3 + $0x198] sm:$0xff]
        %v616 = vld [vmem:[#allocation3 + $0x1a0] sm:$0xff]
        %v617 = vld [vmem:[#allocation3 + $0x1a8] sm:$0xff]
        %v618 = vld [vmem:[#allocation3 + $0x1b0] sm:$0xff]
        %v619 = vld [vmem:[#allocation3 + $0x1b8] sm:$0xff]
        %v620 = vld [vmem:[#allocation3 + $0x1c0] sm:$0xff]
        %v621 = vld [vmem:[#allocation3 + $0x1c8] sm:$0xff]
        %v622 = vld [vmem:[#allocation3 + $0x1d0] sm:$0xff]
        %v623 = vld [vmem:[#allocation3 + $0x1d8] sm:$0xff]
        %v624 = vld [vmem:[#allocation3 + $0x1e0] sm:$0xff]
        %v625 = vld [vmem:[#allocation3 + $0x1e8] sm:$0xff]
        %v626 = vld [vmem:[#allocation3 + $0x1f0] sm:$0xff]
        %v627 = vld [vmem:[#allocation3 + $0x1f8] sm:$0xff]
        %s628 = scalar_lea.vmem [#allocation3], 512
        %v629 = vld [vmem:[%s628] sm:$0xff]
        %v630 = vld [vmem:[%s628 + $0x8] sm:$0xff]
        %v631 = vld [vmem:[%s628 + $0x10] sm:$0xff]
        %v632 = vld [vmem:[%s628 + $0x18] sm:$0xff]
        %v633 = vld [vmem:[%s628 + $0x20] sm:$0xff]
        %v634 = vld [vmem:[%s628 + $0x28] sm:$0xff]
        %v635 = vld [vmem:[%s628 + $0x30] sm:$0xff]
        %v636 = vld [vmem:[%s628 + $0x38] sm:$0xff]
        %v637 = vld [vmem:[%s628 + $0x40] sm:$0xff]
        %v638 = vld [vmem:[%s628 + $0x48] sm:$0xff]
        %v639 = vld [vmem:[%s628 + $0x50] sm:$0xff]
        %v640 = vld [vmem:[%s628 + $0x58] sm:$0xff]
        %v641 = vld [vmem:[%s628 + $0x60] sm:$0xff]
        %v642 = vld [vmem:[%s628 + $0x68] sm:$0xff]
        %v643 = vld [vmem:[%s628 + $0x70] sm:$0xff]
        %v644 = vld [vmem:[%s628 + $0x78] sm:$0xff]
        %v645 = vld [vmem:[%s628 + $0x80] sm:$0xff]
        %v646 = vld [vmem:[%s628 + $0x88] sm:$0xff]
        %v647 = vld [vmem:[%s628 + $0x90] sm:$0xff]
        %v648 = vld [vmem:[%s628 + $0x98] sm:$0xff]
        %v649 = vld [vmem:[%s628 + $0xa0] sm:$0xff]
        %v650 = vld [vmem:[%s628 + $0xa8] sm:$0xff]
        %v651 = vld [vmem:[%s628 + $0xb0] sm:$0xff]
        %v652 = vld [vmem:[%s628 + $0xb8] sm:$0xff]
        %v653 = vld [vmem:[%s628 + $0xc0] sm:$0xff]
        %v654 = vld [vmem:[%s628 + $0xc8] sm:$0xff]
        %v655 = vld [vmem:[%s628 + $0xd0] sm:$0xff]
        %v656 = vld [vmem:[%s628 + $0xd8] sm:$0xff]
        %v657 = vld [vmem:[%s628 + $0xe0] sm:$0xff]
        %v658 = vld [vmem:[%s628 + $0xe8] sm:$0xff]
        %v659 = vld [vmem:[%s628 + $0xf0] sm:$0xff]
        %v660 = vld [vmem:[%s628 + $0xf8] sm:$0xff]
        %v661 = vld [vmem:[%s628 + $0x100] sm:$0xff]
        %v662 = vld [vmem:[%s628 + $0x108] sm:$0xff]
        %v663 = vld [vmem:[%s628 + $0x110] sm:$0xff]
        %v664 = vld [vmem:[%s628 + $0x118] sm:$0xff]
        %v665 = vld [vmem:[%s628 + $0x120] sm:$0xff]
        %v666 = vld [vmem:[%s628 + $0x128] sm:$0xff]
        %v667 = vld [vmem:[%s628 + $0x130] sm:$0xff]
        %v668 = vld [vmem:[%s628 + $0x138] sm:$0xff]
        %v669 = vld [vmem:[%s628 + $0x140] sm:$0xff]
        %v670 = vld [vmem:[%s628 + $0x148] sm:$0xff]
        %v671 = vld [vmem:[%s628 + $0x150] sm:$0xff]
        %v672 = vld [vmem:[%s628 + $0x158] sm:$0xff]
        %v673 = vld [vmem:[%s628 + $0x160] sm:$0xff]
        %v674 = vld [vmem:[%s628 + $0x168] sm:$0xff]
        %v675 = vld [vmem:[%s628 + $0x170] sm:$0xff]
        %v676 = vld [vmem:[%s628 + $0x178] sm:$0xff]
        %v677 = vld [vmem:[%s628 + $0x180] sm:$0xff]
        %v678 = vld [vmem:[%s628 + $0x188] sm:$0xff]
        %v679 = vld [vmem:[%s628 + $0x190] sm:$0xff]
        %v680 = vld [vmem:[%s628 + $0x198] sm:$0xff]
        %v681 = vld [vmem:[%s628 + $0x1a0] sm:$0xff]
        %v682 = vld [vmem:[%s628 + $0x1a8] sm:$0xff]
        %v683 = vld [vmem:[%s628 + $0x1b0] sm:$0xff]
        %v684 = vld [vmem:[%s628 + $0x1b8] sm:$0xff]
        %v685 = vld [vmem:[%s628 + $0x1c0] sm:$0xff]
        %v686 = vld [vmem:[%s628 + $0x1c8] sm:$0xff]
        %v687 = vld [vmem:[%s628 + $0x1d0] sm:$0xff]
        %v688 = vld [vmem:[%s628 + $0x1d8] sm:$0xff]
        %v689 = vld [vmem:[%s628 + $0x1e0] sm:$0xff]
        %v690 = vld [vmem:[%s628 + $0x1e8] sm:$0xff]
        %v691 = vld [vmem:[%s628 + $0x1f0] sm:$0xff]
        %v692 = vld [vmem:[%s628 + $0x1f8] sm:$0xff]
        %s693 = scalar_lea.vmem [#allocation3], 1024
        %v694 = vld [vmem:[%s693] sm:$0xff]
        %v695 = vld [vmem:[%s693 + $0x8] sm:$0xff]
        %v696 = vld [vmem:[%s693 + $0x10] sm:$0xff]
        %v697 = vld [vmem:[%s693 + $0x18] sm:$0xff]
        %v698 = vld [vmem:[%s693 + $0x20] sm:$0xff]
        %v699 = vld [vmem:[%s693 + $0x28] sm:$0xff]
        %v700 = vld [vmem:[%s693 + $0x30] sm:$0xff]
        %v701 = vld [vmem:[%s693 + $0x38] sm:$0xff]
        %v702 = vld [vmem:[%s693 + $0x40] sm:$0xff]
        %v703 = vld [vmem:[%s693 + $0x48] sm:$0xff]
        %v704 = vld [vmem:[%s693 + $0x50] sm:$0xff]
        %v705 = vld [vmem:[%s693 + $0x58] sm:$0xff]
        %v706 = vld [vmem:[%s693 + $0x60] sm:$0xff]
        %v707 = vld [vmem:[%s693 + $0x68] sm:$0xff]
        %v708 = vld [vmem:[%s693 + $0x70] sm:$0xff]
        %v709 = vld [vmem:[%s693 + $0x78] sm:$0xff]
        %v710 = vld [vmem:[%s693 + $0x80] sm:$0xff]
        %v711 = vld [vmem:[%s693 + $0x88] sm:$0xff]
        %v712 = vld [vmem:[%s693 + $0x90] sm:$0xff]
        %v713 = vld [vmem:[%s693 + $0x98] sm:$0xff]
        %v714 = vld [vmem:[%s693 + $0xa0] sm:$0xff]
        %v715 = vld [vmem:[%s693 + $0xa8] sm:$0xff]
        %v716 = vld [vmem:[%s693 + $0xb0] sm:$0xff]
        %v717 = vld [vmem:[%s693 + $0xb8] sm:$0xff]
        %v718 = vld [vmem:[%s693 + $0xc0] sm:$0xff]
        %v719 = vld [vmem:[%s693 + $0xc8] sm:$0xff]
        %v720 = vld [vmem:[%s693 + $0xd0] sm:$0xff]
        %v721 = vld [vmem:[%s693 + $0xd8] sm:$0xff]
        %v722 = vld [vmem:[%s693 + $0xe0] sm:$0xff]
        %v723 = vld [vmem:[%s693 + $0xe8] sm:$0xff]
        %v724 = vld [vmem:[%s693 + $0xf0] sm:$0xff]
        %v725 = vld [vmem:[%s693 + $0xf8] sm:$0xff]
        %v726 = vld [vmem:[%s693 + $0x100] sm:$0xff]
        %v727 = vld [vmem:[%s693 + $0x108] sm:$0xff]
        %v728 = vld [vmem:[%s693 + $0x110] sm:$0xff]
        %v729 = vld [vmem:[%s693 + $0x118] sm:$0xff]
        %v730 = vld [vmem:[%s693 + $0x120] sm:$0xff]
        %v731 = vld [vmem:[%s693 + $0x128] sm:$0xff]
        %v732 = vld [vmem:[%s693 + $0x130] sm:$0xff]
        %v733 = vld [vmem:[%s693 + $0x138] sm:$0xff]
        %v734 = vld [vmem:[%s693 + $0x140] sm:$0xff]
        %v735 = vld [vmem:[%s693 + $0x148] sm:$0xff]
        %v736 = vld [vmem:[%s693 + $0x150] sm:$0xff]
        %v737 = vld [vmem:[%s693 + $0x158] sm:$0xff]
        %v738 = vld [vmem:[%s693 + $0x160] sm:$0xff]
        %v739 = vld [vmem:[%s693 + $0x168] sm:$0xff]
        %v740 = vld [vmem:[%s693 + $0x170] sm:$0xff]
        %v741 = vld [vmem:[%s693 + $0x178] sm:$0xff]
        %v742 = vld [vmem:[%s693 + $0x180] sm:$0xff]
        %v743 = vld [vmem:[%s693 + $0x188] sm:$0xff]
        %v744 = vld [vmem:[%s693 + $0x190] sm:$0xff]
        %v745 = vld [vmem:[%s693 + $0x198] sm:$0xff]
        %v746 = vld [vmem:[%s693 + $0x1a0] sm:$0xff]
        %v747 = vld [vmem:[%s693 + $0x1a8] sm:$0xff]
        %v748 = vld [vmem:[%s693 + $0x1b0] sm:$0xff]
        %v749 = vld [vmem:[%s693 + $0x1b8] sm:$0xff]
        %v750 = vld [vmem:[%s693 + $0x1c0] sm:$0xff]
        %v751 = vld [vmem:[%s693 + $0x1c8] sm:$0xff]
        %v752 = vld [vmem:[%s693 + $0x1d0] sm:$0xff]
        %v753 = vld [vmem:[%s693 + $0x1d8] sm:$0xff]
        %v754 = vld [vmem:[%s693 + $0x1e0] sm:$0xff]
        %v755 = vld [vmem:[%s693 + $0x1e8] sm:$0xff]
        %v756 = vld [vmem:[%s693 + $0x1f0] sm:$0xff]
        %v757 = vld [vmem:[%s693 + $0x1f8] sm:$0xff]
        %v758 = vld [vmem:[%s4] sm:$0x3]
        %v759 = vld [vmem:[#allocation2] sm:$0x80]
        %v760 = vld [vmem:[#allocation2 + $0x8] sm:$0x80]
        %v761 = vld [vmem:[#allocation2 + $0x10] sm:$0x7f]
        %v762 = vld [vmem:[#allocation2 + $0x18] sm:$0x7f]
        %vm767 = vcmask 1040384
        %v768 = vrot.slane %v759, 7
        %v769 = vrot.slane %v761, 7
        %v770 = vsel %vm767, %v768, %v769
        %v771 = vrot.slane %v760, 7
        %v772 = vrot.slane %v762, 7
        %v773 = vsel %vm767, %v771, %v772
        %776 = vmatprep.subr.mxu0 %v565
        %777 = vmatpush1.msra.mxu0 %v564
        %778 = vmatprep.subr.mxu0 %v567
        %779 = vmatpush1.msra.mxu0 %v566
        %780 = vmatprep.subr.mxu0 %v569
        %781 = vmatpush1.msra.mxu0 %v568
        %782 = vmatprep.subr.mxu0 %v571
        %783 = vmatpush1.msra.mxu0 %v570
        %784 = vmatprep.subr.mxu0 %v573
        %785 = vmatpush1.msra.mxu0 %v572
        %786 = vmatprep.subr.mxu0 %v575
        %787 = vmatpush1.msra.mxu0 %v574
        %788 = vmatprep.subr.mxu0 %v577
        %789 = vmatpush1.msra.mxu0 %v576
        %790 = vmatprep.subr.mxu0 %v579
        %791 = vmatpush1.msra.mxu0 %v578
        %792 = vmatprep.subr.mxu0 %v581
        %793 = vmatpush1.msra.mxu0 %v580
        %794 = vmatprep.subr.mxu0 %v583
        %795 = vmatpush1.msra.mxu0 %v582
        %796 = vmatprep.subr.mxu0 %v585
        %797 = vmatpush1.msra.mxu0 %v584
        %798 = vmatprep.subr.mxu0 %v587
        %799 = vmatpush1.msra.mxu0 %v586
        %800 = vmatprep.subr.mxu0 %v589
        %801 = vmatpush1.msra.mxu0 %v588
        %802 = vmatprep.subr.mxu0 %v591
        %803 = vmatpush1.msra.mxu0 %v590
        %804 = vmatprep.subr.mxu0 %v593
        %805 = vmatpush1.msra.mxu0 %v592
        %806 = vmatprep.subr.mxu0 %v595
        %807 = vmatpush1.msra.mxu0 %v594
        %808 = vmatprep.subr.mxu0 %v597
        %809 = vmatpush1.msra.mxu0 %v596
        %810 = vmatprep.subr.mxu0 %v599
        %811 = vmatpush1.msra.mxu0 %v598
        %812 = vmatprep.subr.mxu0 %v601
        %813 = vmatpush1.msra.mxu0 %v600
        %814 = vmatprep.subr.mxu0 %v603
        %815 = vmatpush1.msra.mxu0 %v602
        %816 = vmatprep.subr.mxu0 %v605
        %817 = vmatpush1.msra.mxu0 %v604
        %818 = vmatprep.subr.mxu0 %v607
        %819 = vmatpush1.msra.mxu0 %v606
        %820 = vmatprep.subr.mxu0 %v609
        %821 = vmatpush1.msra.mxu0 %v608
        %822 = vmatprep.subr.mxu0 %v611
        %823 = vmatpush1.msra.mxu0 %v610
        %824 = vmatprep.subr.mxu0 %v613
        %825 = vmatpush1.msra.mxu0 %v612
        %826 = vmatprep.subr.mxu0 %v615
        %827 = vmatpush1.msra.mxu0 %v614
        %828 = vmatprep.subr.mxu0 %v617
        %829 = vmatpush1.msra.mxu0 %v616
        %830 = vmatprep.subr.mxu0 %v619
        %831 = vmatpush1.msra.mxu0 %v618
        %832 = vmatprep.subr.mxu0 %v621
        %833 = vmatpush1.msra.mxu0 %v620
        %834 = vmatprep.subr.mxu0 %v623
        %835 = vmatpush1.msra.mxu0 %v622
        %836 = vmatprep.subr.mxu0 %v625
        %837 = vmatpush1.msra.mxu0 %v624
        %838 = vmatprep.subr.mxu0 %v627
        %839 = vmatpush1.msra.mxu0 %v626
        %840 = vmatprep.mubr.f32.mxu0 %v773
        %841 = vmatmul.mubr.f32.gmra.mrb[0].mxu0 %v770
        %v842 = vpop.f32.mrb[0].mxu0
        %v843 = vadd.f32 0.0, %v842
        %v844 = vpop.f32.mrb[0].mxu0
        %v845 = vadd.f32 0.0, %v844
        %846 = vdwg.mxu0
        %v848 = vlaneseq
        %v849 = vshrl.u32 %v848, 7
        %v850 = vsub.s32 0, %v849
        %v851 = vrot.slane %v758, %v850
        %v852 = vlaneseq
        %v853 = vshrl.u32 %v852, 7
        %v854 = vsub.s32 1, %v853
        %v855 = vrot.slane %v758, %v854
        %v858 = vadd.f32 %v851, %v843
        %v859 = vadd.f32 %v855, %v845
        %v860 = vld [vmem:[#allocation2 + $0x10] sm:$0xff]
        %v861 = vld [vmem:[#allocation2 + $0x18] sm:$0xff]
        %862 = vmatprep.subr.mxu0 %v630
        %863 = vmatpush1.msra.mxu0 %v629
        %864 = vmatprep.subr.mxu0 %v632
        %865 = vmatpush1.msra.mxu0 %v631
        %866 = vmatprep.subr.mxu0 %v634
        %867 = vmatpush1.msra.mxu0 %v633
        %868 = vmatprep.subr.mxu0 %v636
        %869 = vmatpush1.msra.mxu0 %v635
        %870 = vmatprep.subr.mxu0 %v638
        %871 = vmatpush1.msra.mxu0 %v637
        %872 = vmatprep.subr.mxu0 %v640
        %873 = vmatpush1.msra.mxu0 %v639
        %874 = vmatprep.subr.mxu0 %v642
        %875 = vmatpush1.msra.mxu0 %v641
        %876 = vmatprep.subr.mxu0 %v644
        %877 = vmatpush1.msra.mxu0 %v643
        %878 = vmatprep.subr.mxu0 %v646
        %879 = vmatpush1.msra.mxu0 %v645
        %880 = vmatprep.subr.mxu0 %v648
        %881 = vmatpush1.msra.mxu0 %v647
        %882 = vmatprep.subr.mxu0 %v650
        %883 = vmatpush1.msra.mxu0 %v649
        %884 = vmatprep.subr.mxu0 %v652
        %885 = vmatpush1.msra.mxu0 %v651
        %886 = vmatprep.subr.mxu0 %v654
        %887 = vmatpush1.msra.mxu0 %v653
        %888 = vmatprep.subr.mxu0 %v656
        %889 = vmatpush1.msra.mxu0 %v655
        %890 = vmatprep.subr.mxu0 %v658
        %891 = vmatpush1.msra.mxu0 %v657
        %892 = vmatprep.subr.mxu0 %v660
        %893 = vmatpush1.msra.mxu0 %v659
        %894 = vmatprep.subr.mxu0 %v662
        %895 = vmatpush1.msra.mxu0 %v661
        %896 = vmatprep.subr.mxu0 %v664
        %897 = vmatpush1.msra.mxu0 %v663
        %898 = vmatprep.subr.mxu0 %v666
        %899 = vmatpush1.msra.mxu0 %v665
        %900 = vmatprep.subr.mxu0 %v668
        %901 = vmatpush1.msra.mxu0 %v667
        %902 = vmatprep.subr.mxu0 %v670
        %903 = vmatpush1.msra.mxu0 %v669
        %904 = vmatprep.subr.mxu0 %v672
        %905 = vmatpush1.msra.mxu0 %v671
        %906 = vmatprep.subr.mxu0 %v674
        %907 = vmatpush1.msra.mxu0 %v673
        %908 = vmatprep.subr.mxu0 %v676
        %909 = vmatpush1.msra.mxu0 %v675
        %910 = vmatprep.subr.mxu0 %v678
        %911 = vmatpush1.msra.mxu0 %v677
        %912 = vmatprep.subr.mxu0 %v680
        %913 = vmatpush1.msra.mxu0 %v679
        %914 = vmatprep.subr.mxu0 %v682
        %915 = vmatpush1.msra.mxu0 %v681
        %916 = vmatprep.subr.mxu0 %v684
        %917 = vmatpush1.msra.mxu0 %v683
        %918 = vmatprep.subr.mxu0 %v686
        %919 = vmatpush1.msra.mxu0 %v685
        %920 = vmatprep.subr.mxu0 %v688
        %921 = vmatpush1.msra.mxu0 %v687
        %922 = vmatprep.subr.mxu0 %v690
        %923 = vmatpush1.msra.mxu0 %v689
        %924 = vmatprep.subr.mxu0 %v692
        %925 = vmatpush1.msra.mxu0 %v691
        %926 = vmatprep.mubr.f32.mxu0 %v861
        %927 = vmatmul.mubr.f32.gmra.mrb[0].mxu0 %v860
        %v928 = vpop.f32.mrb[0].mxu0
        %v929 = vadd.f32 0.0, %v928
        %v930 = vpop.f32.mrb[0].mxu0
        %v931 = vadd.f32 0.0, %v930
        %932 = vdwg.mxu0
        %v933 = vadd.f32 %v858, %v929
        %v934 = vadd.f32 %v859, %v931
        %v935 = vld [vmem:[#allocation2 + $0x10] sm:$0xfe]
        %v936 = vld [vmem:[#allocation2 + $0x18] sm:$0xfe]
        %v937 = vld [vmem:[#allocation2 + $0x20] sm:$0x1]
        %v938 = vld [vmem:[#allocation2 + $0x28] sm:$0x1]
        %vm943 = vcmask 1046528
        %v944 = vrot.slane %v935, 1
        %v945 = vrot.slane %v937, 1
        %v946 = vsel %vm943, %v944, %v945
        %v947 = vrot.slane %v936, 1
        %v948 = vrot.slane %v938, 1
        %v949 = vsel %vm943, %v947, %v948
        %952 = vmatprep.subr.mxu0 %v695
        %953 = vmatpush1.msra.mxu0 %v694
        %954 = vmatprep.subr.mxu0 %v697
        %955 = vmatpush1.msra.mxu0 %v696
        %956 = vmatprep.subr.mxu0 %v699
        %957 = vmatpush1.msra.mxu0 %v698
        %958 = vmatprep.subr.mxu0 %v701
        %959 = vmatpush1.msra.mxu0 %v700
        %960 = vmatprep.subr.mxu0 %v703
        %961 = vmatpush1.msra.mxu0 %v702
        %962 = vmatprep.subr.mxu0 %v705
        %963 = vmatpush1.msra.mxu0 %v704
        %964 = vmatprep.subr.mxu0 %v707
        %965 = vmatpush1.msra.mxu0 %v706
        %966 = vmatprep.subr.mxu0 %v709
        %967 = vmatpush1.msra.mxu0 %v708
        %968 = vmatprep.subr.mxu0 %v711
        %969 = vmatpush1.msra.mxu0 %v710
        %970 = vmatprep.subr.mxu0 %v713
        %971 = vmatpush1.msra.mxu0 %v712
        %972 = vmatprep.subr.mxu0 %v715
        %973 = vmatpush1.msra.mxu0 %v714
        %974 = vmatprep.subr.mxu0 %v717
        %975 = vmatpush1.msra.mxu0 %v716
        %976 = vmatprep.subr.mxu0 %v719
        %977 = vmatpush1.msra.mxu0 %v718
        %978 = vmatprep.subr.mxu0 %v721
        %979 = vmatpush1.msra.mxu0 %v720
        %980 = vmatprep.subr.mxu0 %v723
        %981 = vmatpush1.msra.mxu0 %v722
        %982 = vmatprep.subr.mxu0 %v725
        %983 = vmatpush1.msra.mxu0 %v724
        %984 = vmatprep.subr.mxu0 %v727
        %985 = vmatpush1.msra.mxu0 %v726
        %986 = vmatprep.subr.mxu0 %v729
        %987 = vmatpush1.msra.mxu0 %v728
        %988 = vmatprep.subr.mxu0 %v731
        %989 = vmatpush1.msra.mxu0 %v730
        %990 = vmatprep.subr.mxu0 %v733
        %991 = vmatpush1.msra.mxu0 %v732
        %992 = vmatprep.subr.mxu0 %v735
        %993 = vmatpush1.msra.mxu0 %v734
        %994 = vmatprep.subr.mxu0 %v737
        %995 = vmatpush1.msra.mxu0 %v736
        %996 = vmatprep.subr.mxu0 %v739
        %997 = vmatpush1.msra.mxu0 %v738
        %998 = vmatprep.subr.mxu0 %v741
        %999 = vmatpush1.msra.mxu0 %v740
        %1000 = vmatprep.subr.mxu0 %v743
        %1001 = vmatpush1.msra.mxu0 %v742
        %1002 = vmatprep.subr.mxu0 %v745
        %1003 = vmatpush1.msra.mxu0 %v744
        %1004 = vmatprep.subr.mxu0 %v747
        %1005 = vmatpush1.msra.mxu0 %v746
        %1006 = vmatprep.subr.mxu0 %v749
        %1007 = vmatpush1.msra.mxu0 %v748
        %1008 = vmatprep.subr.mxu0 %v751
        %1009 = vmatpush1.msra.mxu0 %v750
        %1010 = vmatprep.subr.mxu0 %v753
        %1011 = vmatpush1.msra.mxu0 %v752
        %1012 = vmatprep.subr.mxu0 %v755
        %1013 = vmatpush1.msra.mxu0 %v754
        %1014 = vmatprep.subr.mxu0 %v757
        %1015 = vmatpush1.msra.mxu0 %v756
        %1016 = vmatprep.mubr.f32.mxu0 %v949
        %1017 = vmatmul.mubr.f32.gmra.mrb[0].mxu0 %v946
        %v1018 = vpop.f32.mrb[0].mxu0
        %v1019 = vadd.f32 0.0, %v1018
        %v1020 = vpop.f32.mrb[0].mxu0
        %v1021 = vadd.f32 0.0, %v1020
        %1022 = vdwg.mxu0
        %v1023 = vadd.f32 %v933, %v1019
        %v1024 = vadd.f32 %v934, %v1021
        %s1025 = scalar_lea.vmem [#allocation2], 16
        %v1026 = vld [vmem:[%s1025] ss:$8 sm:$0x3]
        %s1027 = scalar_lea.vmem [#allocation2], 23
        %v1028 = vld [vmem:[%s1027] ss:$8 sm:$0x3]
        %v1030 = vlaneseq
        %v1031 = vshrl.u32 %v1030, 7
        %v1032 = vsub.s32 0, %v1031
        %v1033 = vrot.slane %v1026, %v1032
        %v1034 = vlaneseq
        %v1035 = vshrl.u32 %v1034, 7
        %v1036 = vsub.s32 1, %v1035
        %v1037 = vrot.slane %v1026, %v1036
        %1040 = vmatprep.subr.mxu0 %v565
        %1041 = vmatpush1.msra.mxu0 %v564
        %1042 = vmatprep.subr.mxu0 %v567
        %1043 = vmatpush1.msra.mxu0 %v566
        %1044 = vmatprep.subr.mxu0 %v569
        %1045 = vmatpush1.msra.mxu0 %v568
        %1046 = vmatprep.subr.mxu0 %v571
        %1047 = vmatpush1.msra.mxu0 %v570
        %1048 = vmatprep.subr.mxu0 %v573
        %1049 = vmatpush1.msra.mxu0 %v572
        %1050 = vmatprep.subr.mxu0 %v575
        %1051 = vmatpush1.msra.mxu0 %v574
        %1052 = vmatprep.subr.mxu0 %v577
        %1053 = vmatpush1.msra.mxu0 %v576
        %1054 = vmatprep.subr.mxu0 %v579
        %1055 = vmatpush1.msra.mxu0 %v578
        %1056 = vmatprep.subr.mxu0 %v581
        %1057 = vmatpush1.msra.mxu0 %v580
        %1058 = vmatprep.subr.mxu0 %v583
        %1059 = vmatpush1.msra.mxu0 %v582
        %1060 = vmatprep.subr.mxu0 %v585
        %1061 = vmatpush1.msra.mxu0 %v584
        %1062 = vmatprep.subr.mxu0 %v587
        %1063 = vmatpush1.msra.mxu0 %v586
        %1064 = vmatprep.subr.mxu0 %v589
        %1065 = vmatpush1.msra.mxu0 %v588
        %1066 = vmatprep.subr.mxu0 %v591
        %1067 = vmatpush1.msra.mxu0 %v590
        %1068 = vmatprep.subr.mxu0 %v593
        %1069 = vmatpush1.msra.mxu0 %v592
        %1070 = vmatprep.subr.mxu0 %v595
        %1071 = vmatpush1.msra.mxu0 %v594
        %1072 = vmatprep.subr.mxu0 %v597
        %1073 = vmatpush1.msra.mxu0 %v596
        %1074 = vmatprep.subr.mxu0 %v599
        %1075 = vmatpush1.msra.mxu0 %v598
        %1076 = vmatprep.subr.mxu0 %v601
        %1077 = vmatpush1.msra.mxu0 %v600
        %1078 = vmatprep.subr.mxu0 %v603
        %1079 = vmatpush1.msra.mxu0 %v602
        %1080 = vmatprep.subr.mxu0 %v605
        %1081 = vmatpush1.msra.mxu0 %v604
        %1082 = vmatprep.subr.mxu0 %v607
        %1083 = vmatpush1.msra.mxu0 %v606
        %1084 = vmatprep.subr.mxu0 %v609
        %1085 = vmatpush1.msra.mxu0 %v608
        %1086 = vmatprep.subr.mxu0 %v611
        %1087 = vmatpush1.msra.mxu0 %v610
        %1088 = vmatprep.subr.mxu0 %v613
        %1089 = vmatpush1.msra.mxu0 %v612
        %1090 = vmatprep.subr.mxu0 %v615
        %1091 = vmatpush1.msra.mxu0 %v614
        %1092 = vmatprep.subr.mxu0 %v617
        %1093 = vmatpush1.msra.mxu0 %v616
        %1094 = vmatprep.subr.mxu0 %v619
        %1095 = vmatpush1.msra.mxu0 %v618
        %1096 = vmatprep.subr.mxu0 %v621
        %1097 = vmatpush1.msra.mxu0 %v620
        %1098 = vmatprep.subr.mxu0 %v623
        %1099 = vmatpush1.msra.mxu0 %v622
        %1100 = vmatprep.subr.mxu0 %v625
        %1101 = vmatpush1.msra.mxu0 %v624
        %1102 = vmatprep.subr.mxu0 %v627
        %1103 = vmatpush1.msra.mxu0 %v626
        %1104 = vmatprep.mubr.f32.mxu0 %v1037
        %1105 = vmatmul.mubr.f32.gmra.mrb[0].mxu0 %v1033
        %v1106 = vpop.f32.mrb[0].mxu0
        %v1107 = vadd.f32 0.0, %v1106
        %v1108 = vpop.f32.mrb[0].mxu0
        %v1109 = vadd.f32 0.0, %v1108
        %1110 = vdwg.mxu0
        %v1111 = vlaneseq
        %v1112 = vshrl.u32 %v1111, 7
        %v1113 = vsub.s32 0, %v1112
        %v1114 = vrot.slane %v1107, %v1113
        %v1115 = vlaneseq
        %v1116 = vshrl.u32 %v1115, 7
        %v1117 = vsub.s32 0, %v1116
        %v1118 = vrot.slane %v1109, %v1117
        %v1120 = vlaneseq
        %v1121 = vshrl.u32 %v1120, 7
        %v1122 = vsub.s32 0, %v1121
        %v1123 = vrot.slane %v1028, %v1122
        %v1124 = vlaneseq
        %v1125 = vshrl.u32 %v1124, 7
        %v1126 = vsub.s32 1, %v1125
        %v1127 = vrot.slane %v1028, %v1126
        %1130 = vmatprep.subr.mxu0 %v695
        %1131 = vmatpush1.msra.mxu0 %v694
        %1132 = vmatprep.subr.mxu0 %v697
        %1133 = vmatpush1.msra.mxu0 %v696
        %1134 = vmatprep.subr.mxu0 %v699
        %1135 = vmatpush1.msra.mxu0 %v698
        %1136 = vmatprep.subr.mxu0 %v701
        %1137 = vmatpush1.msra.mxu0 %v700
        %1138 = vmatprep.subr.mxu0 %v703
        %1139 = vmatpush1.msra.mxu0 %v702
        %1140 = vmatprep.subr.mxu0 %v705
        %1141 = vmatpush1.msra.mxu0 %v704
        %1142 = vmatprep.subr.mxu0 %v707
        %1143 = vmatpush1.msra.mxu0 %v706
        %1144 = vmatprep.subr.mxu0 %v709
        %1145 = vmatpush1.msra.mxu0 %v708
        %1146 = vmatprep.subr.mxu0 %v711
        %1147 = vmatpush1.msra.mxu0 %v710
        %1148 = vmatprep.subr.mxu0 %v713
        %1149 = vmatpush1.msra.mxu0 %v712
        %1150 = vmatprep.subr.mxu0 %v715
        %1151 = vmatpush1.msra.mxu0 %v714
        %1152 = vmatprep.subr.mxu0 %v717
        %1153 = vmatpush1.msra.mxu0 %v716
        %1154 = vmatprep.subr.mxu0 %v719
        %1155 = vmatpush1.msra.mxu0 %v718
        %1156 = vmatprep.subr.mxu0 %v721
        %1157 = vmatpush1.msra.mxu0 %v720
        %1158 = vmatprep.subr.mxu0 %v723
        %1159 = vmatpush1.msra.mxu0 %v722
        %1160 = vmatprep.subr.mxu0 %v725
        %1161 = vmatpush1.msra.mxu0 %v724
        %1162 = vmatprep.subr.mxu0 %v727
        %1163 = vmatpush1.msra.mxu0 %v726
        %1164 = vmatprep.subr.mxu0 %v729
        %1165 = vmatpush1.msra.mxu0 %v728
        %1166 = vmatprep.subr.mxu0 %v731
        %1167 = vmatpush1.msra.mxu0 %v730
        %1168 = vmatprep.subr.mxu0 %v733
        %1169 = vmatpush1.msra.mxu0 %v732
        %1170 = vmatprep.subr.mxu0 %v735
        %1171 = vmatpush1.msra.mxu0 %v734
        %1172 = vmatprep.subr.mxu0 %v737
        %1173 = vmatpush1.msra.mxu0 %v736
        %1174 = vmatprep.subr.mxu0 %v739
        %1175 = vmatpush1.msra.mxu0 %v738
        %1176 = vmatprep.subr.mxu0 %v741
        %1177 = vmatpush1.msra.mxu0 %v740
        %1178 = vmatprep.subr.mxu0 %v743
        %1179 = vmatpush1.msra.mxu0 %v742
        %1180 = vmatprep.subr.mxu0 %v745
        %1181 = vmatpush1.msra.mxu0 %v744
        %1182 = vmatprep.subr.mxu0 %v747
        %1183 = vmatpush1.msra.mxu0 %v746
        %1184 = vmatprep.subr.mxu0 %v749
        %1185 = vmatpush1.msra.mxu0 %v748
        %1186 = vmatprep.subr.mxu0 %v751
        %1187 = vmatpush1.msra.mxu0 %v750
        %1188 = vmatprep.subr.mxu0 %v753
        %1189 = vmatpush1.msra.mxu0 %v752
        %1190 = vmatprep.subr.mxu0 %v755
        %1191 = vmatpush1.msra.mxu0 %v754
        %1192 = vmatprep.subr.mxu0 %v757
        %1193 = vmatpush1.msra.mxu0 %v756
        %1194 = vmatprep.mubr.f32.mxu0 %v1127
        %1195 = vmatmul.mubr.f32.gmra.mrb[0].mxu0 %v1123
        %v1196 = vpop.f32.mrb[0].mxu0
        %v1197 = vadd.f32 0.0, %v1196
        %v1198 = vpop.f32.mrb[0].mxu0
        %v1199 = vadd.f32 0.0, %v1198
        %1200 = vdwg.mxu0
        %v1201 = vlaneseq
        %v1202 = vshrl.u32 %v1201, 7
        %v1203 = vsub.s32 0, %v1202
        %v1204 = vrot.slane %v1197, %v1203
        %v1205 = vlaneseq
        %v1206 = vshrl.u32 %v1205, 7
        %v1207 = vsub.s32 0, %v1206
        %v1208 = vrot.slane %v1199, %v1207
        %v1209 = vlaneseq
        %v1210 = vshrl.u32 %v1209, 7
        %vm1211 = vcmp.eq.s32.totalorder %v1210, 0
        %v1212 = vsel %vm1211, %v1114, 0.0
        %v1213 = vsel %vm1211, %v1118, 0.0
        %v1214 = vadd.f32 %v1023, %v1212
        %v1215 = vadd.f32 %v1024, %v1213
        %vm1216 = vcmp.eq.s32.totalorder %v1210, 7
        %v1217 = vsel %vm1216, %v1204, 0.0
        %v1218 = vsel %vm1216, %v1208, 0.0
        %v1219 = vadd.f32 %v1214, %v1217
        %v1220 = vadd.f32 %v1215, %v1218
        %v1221 = vld [vmem:[%s5] sm:$0xff]
        %v1222 = vld [vmem:[%s5 + $0x8] sm:$0xff]
        %v1223 = vld [vmem:[%s5 + $0x10] sm:$0xff]
        %v1224 = vld [vmem:[%s5 + $0x18] sm:$0xff]
        %v1225 = vld [vmem:[%s5 + $0x20] sm:$0xff]
        %v1226 = vld [vmem:[%s5 + $0x28] sm:$0xff]
        %v1227 = vld [vmem:[%s5 + $0x30] sm:$0xff]
        %v1228 = vld [vmem:[%s5 + $0x38] sm:$0xff]
        %v1229 = vld [vmem:[%s5 + $0x40] sm:$0xff]
        %v1230 = vld [vmem:[%s5 + $0x48] sm:$0xff]
        %v1231 = vld [vmem:[%s5 + $0x50] sm:$0xff]
        %v1232 = vld [vmem:[%s5 + $0x58] sm:$0xff]
        %v1233 = vld [vmem:[%s5 + $0x60] sm:$0xff]
        %v1234 = vld [vmem:[%s5 + $0x68] sm:$0xff]
        %v1235 = vld [vmem:[%s5 + $0x70] sm:$0xff]
        %v1236 = vld [vmem:[%s5 + $0x78] sm:$0xff]
        %v1237 = vld [vmem:[%s5 + $0x80] sm:$0xff]
        %v1238 = vld [vmem:[%s5 + $0x88] sm:$0xff]
        %v1239 = vld [vmem:[%s5 + $0x90] sm:$0xff]
        %v1240 = vld [vmem:[%s5 + $0x98] sm:$0xff]
        %v1241 = vld [vmem:[%s5 + $0xa0] sm:$0xff]
        %v1242 = vld [vmem:[%s5 + $0xa8] sm:$0xff]
        %v1243 = vld [vmem:[%s5 + $0xb0] sm:$0xff]
        %v1244 = vld [vmem:[%s5 + $0xb8] sm:$0xff]
        %v1245 = vld [vmem:[%s5 + $0xc0] sm:$0xff]
        %v1246 = vld [vmem:[%s5 + $0xc8] sm:$0xff]
        %v1247 = vld [vmem:[%s5 + $0xd0] sm:$0xff]
        %v1248 = vld [vmem:[%s5 + $0xd8] sm:$0xff]
        %v1249 = vld [vmem:[%s5 + $0xe0] sm:$0xff]
        %v1250 = vld [vmem:[%s5 + $0xe8] sm:$0xff]
        %v1251 = vld [vmem:[%s5 + $0xf0] sm:$0xff]
        %v1252 = vld [vmem:[%s5 + $0xf8] sm:$0xff]
        %v1253 = vld [vmem:[%s6] sm:$0x1]
        %v1255 = vlaneseq
        %v1256 = vshrl.u32 %v1255, 7
        %v1257 = vsub.s32 0, %v1256
        %v1258 = vrot.slane %v1253, %v1257
        %1260 = vmatprep.subr.mxu0 0.0
        %1261 = vmatpush1.msra.mxu0 %v1221
        %1262 = vmatprep.subr.mxu0 0.0
        %1263 = vmatpush1.msra.mxu0 %v1222
        %1264 = vmatprep.subr.mxu0 0.0
        %1265 = vmatpush1.msra.mxu0 %v1223
        %1266 = vmatprep.subr.mxu0 0.0
        %1267 = vmatpush1.msra.mxu0 %v1224
        %1268 = vmatprep.subr.mxu0 0.0
        %1269 = vmatpush1.msra.mxu0 %v1225
        %1270 = vmatprep.subr.mxu0 0.0
        %1271 = vmatpush1.msra.mxu0 %v1226
        %1272 = vmatprep.subr.mxu0 0.0
        %1273 = vmatpush1.msra.mxu0 %v1227
        %1274 = vmatprep.subr.mxu0 0.0
        %1275 = vmatpush1.msra.mxu0 %v1228
        %1276 = vmatprep.subr.mxu0 0.0
        %1277 = vmatpush1.msra.mxu0 %v1229
        %1278 = vmatprep.subr.mxu0 0.0
        %1279 = vmatpush1.msra.mxu0 %v1230
        %1280 = vmatprep.subr.mxu0 0.0
        %1281 = vmatpush1.msra.mxu0 %v1231
        %1282 = vmatprep.subr.mxu0 0.0
        %1283 = vmatpush1.msra.mxu0 %v1232
        %1284 = vmatprep.subr.mxu0 0.0
        %1285 = vmatpush1.msra.mxu0 %v1233
        %1286 = vmatprep.subr.mxu0 0.0
        %1287 = vmatpush1.msra.mxu0 %v1234
        %1288 = vmatprep.subr.mxu0 0.0
        %1289 = vmatpush1.msra.mxu0 %v1235
        %1290 = vmatprep.subr.mxu0 0.0
        %1291 = vmatpush1.msra.mxu0 %v1236
        %1292 = vmatprep.subr.mxu0 0.0
        %1293 = vmatpush1.msra.mxu0 %v1237
        %1294 = vmatprep.subr.mxu0 0.0
        %1295 = vmatpush1.msra.mxu0 %v1238
        %1296 = vmatprep.subr.mxu0 0.0
        %1297 = vmatpush1.msra.mxu0 %v1239
        %1298 = vmatprep.subr.mxu0 0.0
        %1299 = vmatpush1.msra.mxu0 %v1240
        %1300 = vmatprep.subr.mxu0 0.0
        %1301 = vmatpush1.msra.mxu0 %v1241
        %1302 = vmatprep.subr.mxu0 0.0
        %1303 = vmatpush1.msra.mxu0 %v1242
        %1304 = vmatprep.subr.mxu0 0.0
        %1305 = vmatpush1.msra.mxu0 %v1243
        %1306 = vmatprep.subr.mxu0 0.0
        %1307 = vmatpush1.msra.mxu0 %v1244
        %1308 = vmatprep.subr.mxu0 0.0
        %1309 = vmatpush1.msra.mxu0 %v1245
        %1310 = vmatprep.subr.mxu0 0.0
        %1311 = vmatpush1.msra.mxu0 %v1246
        %1312 = vmatprep.subr.mxu0 0.0
        %1313 = vmatpush1.msra.mxu0 %v1247
        %1314 = vmatprep.subr.mxu0 0.0
        %1315 = vmatpush1.msra.mxu0 %v1248
        %1316 = vmatprep.subr.mxu0 0.0
        %1317 = vmatpush1.msra.mxu0 %v1249
        %1318 = vmatprep.subr.mxu0 0.0
        %1319 = vmatpush1.msra.mxu0 %v1250
        %1320 = vmatprep.subr.mxu0 0.0
        %1321 = vmatpush1.msra.mxu0 %v1251
        %1322 = vmatprep.subr.mxu0 0.0
        %1323 = vmatpush1.msra.mxu0 %v1252
        %1324 = vmatprep.mubr.f32.mxu0 %v1220
        %1325 = vmatmul.mubr.f32.gmra.mrb[0].mxu0 %v1219
        %v1326 = vpop.f32.mrb[0].mxu0
        %v1327 = vadd.f32 %v1258, %v1326
        %v1328 = vpop.f32.mrb[0].mxu0
        %1329 = vdwg.mxu0
        %v1330 = vadd.f32 %v293, %v1327
        %vm1331 = vcmask 64512
        %1332 = vst.msk [vmem:[%s291] sm:$0xff] %vm1331, %v1330
        %p1333 = scmp.lt.s32.totalorder %s19, 1
        %s1334 = scalar_select %p1333, %s19, 1
        %s1335 = smul.addr %s1334, 8
        %s1336 = scalar_lea.vmem %s7, %s1335
        // Predicated region
        $region53: #{waveglow_forward.5} parent=47 // pred_check
          %p1337 = pneg %p189
        $region54: #{waveglow_forward.5} parent=47 // pred_check_branch
          %1339 = sbr.rel (%p1337) target = $region56
        $region55: #{waveglow_forward.5} parent=47 // pred_region
          _
        $region56: #{waveglow_forward.5} parent=47 // pred_fallthru
          _
      $region48: #{waveglow_forward.5} parent=5 // pred_fallthru
        _
      %p1340 = scmp.le.s32.totalorder 2, %s14
      // Predicated region
      $region57: #{waveglow_forward.5} parent=5 // pred_check
        %p1341 = pneg %p1340
      $region58: #{waveglow_forward.5} parent=5 // pred_check_branch
        %1343 = sbr.rel (%p1341) target = $region60
      $region59: #{waveglow_forward.5} parent=5 // pred_region
        %s1344 = ssub.s32 %s14, 2
        // Predicated region
        $region61: #{waveglow_forward.5} parent=59 // pred_check
          %p1345 = pneg %p195
        $region62: #{waveglow_forward.5} parent=59 // pred_check_branch
          %1347 = sbr.rel (%p1345) target = $region64
        $region63: #{waveglow_forward.5} parent=59 // pred_region
          %p1348 = scmp.lt.s32.totalorder %s20, 1
          %s1349 = scalar_select %p1348, %s20, 1
          %s1350 = smul.addr %s1349, 8
          %s1351 = scalar_lea.vmem %s7, %s1350
        $region64: #{waveglow_forward.5} parent=59 // pred_fallthru
          _
      $region60: #{waveglow_forward.5} parent=5 // pred_fallthru
        _
    $region6: #{waveglow_forward.5} parent=1 // loop_footer
      %s18 = sadd.s32 1, %s14
    $region7: #{waveglow_forward.5} parent=1 // loop_footer_branch
      %13 = sbr.rel target = $region3
    $region8: #{waveglow_forward.5} parent=1 // loop_exit
      _
    %1352 = vsyncpa [#allocation4], 1
    %s1353 = scalar_lea.sflag [#allocation4], 1
    %1354 = vsyncpa %s1353, 1

// kernel: waveglow_forward.6
$region0: #{waveglow_forward.6}
  #allocation0 [shape = 'u32[]', space=smem, size = 0x4, offset = 0x4, fixed_abs, tag = 'smem constant byte address 0x4 - core index']
  #allocation1 [shape = 'u32[144,128]{1,0:T(1,128)}', space=vmem, size = 0x12000, scoped, tag = 'internal scratch']
  #allocation2 [shape = 'f32[32,32]{1,0:T(8,128)}', space=vmem, size = 0x4000, scoped, tag = 'scratch operand']
  %s0 = inlined_call_operand.vmem [shape: f32[2,16,8], index: 0, kind: input, shape index: {}]
  %s1 = inlined_call_operand.vmem [shape: f32[2,16,8], index: 1, kind: input, shape index: {}]
  %s2 = inlined_call_operand.vmem [shape: f32[8,4], index: 2, kind: input, shape index: {}]
  %s3 = inlined_call_operand.vmem [shape: f32[8,4], index: 3, kind: input, shape index: {}]
  %s4 = inlined_call_operand.vmem [shape: f32[4,32], index: 4, kind: input, shape index: {}]
  %s5 = inlined_call_operand.vmem [shape: f32[1,32], index: 5, kind: input, shape index: {}]
  %s6 = inlined_call_operand.vmem [shape: f32[8,128], index: 6, kind: input, shape index: {}]
  %s7 = inlined_call_operand.vmem [shape: f32[1,128], index: 7, kind: input, shape index: {}]
  %s8 = inlined_call_operand.vmem [shape: f32[3,32,64], index: 8, kind: input, shape index: {}]
  %s9 = inlined_call_operand.vmem [shape: f32[1,64], index: 9, kind: input, shape index: {}]
  %s10 = inlined_call_operand.vmem [shape: f32[32,64], index: 10, kind: input, shape index: {}]
  %s11 = inlined_call_operand.vmem [shape: f32[1,64], index: 11, kind: input, shape index: {}]
  %s12 = inlined_call_operand.vmem [shape: f32[3,32,64], index: 12, kind: input, shape index: {}]
  %s13 = inlined_call_operand.vmem [shape: f32[1,64], index: 13, kind: input, shape index: {}]
  %s14 = inlined_call_operand.vmem [shape: f32[32,32], index: 14, kind: input, shape index: {}]
  %s15 = inlined_call_operand.vmem [shape: f32[1,32], index: 15, kind: input, shape index: {}]
  %s16 = inlined_call_operand.vmem [shape: f32[32,4], index: 16, kind: input, shape index: {}]
  %s17 = inlined_call_operand.vmem [shape: f32[32,4], index: 17, kind: input, shape index: {}]
  %s18 = inlined_call_operand.vmem [shape: f32[1,4], index: 18, kind: input, shape index: {}]
  %s19 = inlined_call_operand.vmem [shape: f32[1,4], index: 19, kind: input, shape index: {}]
  %s20 = inlined_call_operand.vmem [shape: f32[2,16,4], index: 20, kind: output, shape index: {0}]
  %s21 = inlined_call_operand.vmem [shape: f32[2,16,4], index: 21, kind: output, shape index: {1}]
  %s22 = inlined_call_operand.vmem [shape: f32[2,1,1], index: 22, kind: output, shape index: {2}]
  %23 = xla_tuple %s20, %s21, %s22
  %s24 = sld [smem:[#allocation0]]
  $region129: #{waveglow_forward.6} parent=0
    _
  %s26 = ssub.s32 1, %s24
  %s27 = scalar_select 0, %s26, %s24
  loop: start=0, step=1, limit=4
  $region2: #{waveglow_forward.6} parent=0 // loop_pre_header
    _
  $region3: #{waveglow_forward.6} parent=0 // loop_header
    %s29 = sphi 0, %s33
    %p30 = scmp.ge.s32.totalorder %s29, 4
    %s39 = sphi 0, %s41
    %s42 = sphi 0, %s39
    %s43 = sphi 0, %s42
    %s59 = sphi 0, %s43
    %s65 = sphi 0, %s67
    %s68 = sphi 0, %s65
    %s69 = sphi 0, %s68
    %s85 = sphi 0, %s69
    %s89 = sphi 0, %s89
    %s91 = sphi 0, %s89
    %s92 = sphi 0, %s91
    %s106 = sphi 0, %s92
    %s110 = sphi 0, %s110
    %s112 = sphi 0, %s110
    %s113 = sphi 0, %s112
    %s127 = sphi 0, %s113
    %s131 = sphi 0, %s131
    %s133 = sphi 0, %s131
    %s134 = sphi 0, %s133
    %s148 = sphi 0, %s134
    %s152 = sphi 0, %s152
    %s154 = sphi 0, %s152
    %s155 = sphi 0, %s154
    %s169 = sphi 0, %s155
    %s173 = sphi 0, %s173
    %s175 = sphi 0, %s173
    %s176 = sphi 0, %s175
    %s190 = sphi 0, %s176
    %s194 = sphi 0, %s194
    %s196 = sphi 0, %s194
    %s197 = sphi 0, %s196
    %s211 = sphi 0, %s197
    %s215 = sphi 0, %s215
    %s217 = sphi 0, %s215
    %s218 = sphi 0, %s217
    %s232 = sphi 0, %s218
    %s236 = sphi 0, %s236
    %s238 = sphi 0, %s236
    %s239 = sphi 0, %s238
    %s253 = sphi 0, %s239
    %s257 = sphi 0, %s257
    %s259 = sphi 0, %s257
    %s260 = sphi 0, %s259
    %s274 = sphi 0, %s260
    %s278 = sphi 0, %s278
    %s280 = sphi 0, %s278
    %s281 = sphi 0, %s280
    %s295 = sphi 0, %s281
    %s299 = sphi 0, %s299
    %s301 = sphi 0, %s299
    %s302 = sphi 0, %s301
    %s316 = sphi 0, %s302
    %s320 = sphi 0, %s320
    %s322 = sphi 0, %s320
    %s323 = sphi 0, %s322
    %s337 = sphi 0, %s323
    %s341 = sphi 0, %s341
    %s343 = sphi 0, %s341
    %s344 = sphi 0, %s343
    %s358 = sphi 0, %s344
    %s362 = sphi 0, %s362
    %s364 = sphi 0, %s362
    %s365 = sphi 0, %s364
    %s379 = sphi 0, %s365
    %s383 = sphi 0, %s383
    %s385 = sphi 0, %s383
    %s386 = sphi 0, %s385
    %s400 = sphi 0, %s386
    %s404 = sphi 0, %s404
    %s406 = sphi 0, %s404
    %s407 = sphi 0, %s406
    %s421 = sphi 0, %s407
    %s425 = sphi 0, %s425
    %s427 = sphi 0, %s425
    %s428 = sphi 0, %s427
    %s442 = sphi 0, %s428
    %s446 = sphi 0, %s446
    %s448 = sphi 0, %s446
    %s449 = sphi 0, %s448
    %s463 = sphi 0, %s449
    %s469 = sphi 0, %s471
    %s472 = sphi 0, %s469
    %s473 = sphi 0, %s472
    %s489 = sphi 0, %s473
    %s495 = sphi 0, %s497
    %s498 = sphi 0, %s495
    %s499 = sphi 0, %s498
    %s515 = sphi 0, %s499
    %s521 = sphi 0, %s523
    %s524 = sphi 0, %s521
    %s525 = sphi 0, %s524
    %s541 = sphi 0, %s525
  $region4: #{waveglow_forward.6} parent=0 // loop_header_branch
    %32 = sbr.rel (%p30) target = $region8
  $region5: #{waveglow_forward.6} parent=0 // loop_body
    %s34 = ssub.s32 %s29, 1
    %s35 = ssub.s32 %s29, 2
    %s36 = sadd.s32 %s29, 1
    %s37 = ssub.s32 %s29, %s36
    %p38 = scmp.eq.s32.totalorder %s37, 0
    %s40 = sadd.s32 %s39, 1
    %s41 = scalar_select %p38, %s39, %s40
    %p44 = pneg %p38
    %p45 = scmp.eq.s32.totalorder %s29, 1
    %p46 = por %p44, %p45
    %p47 = scmp.ne.s32.totalorder %s39, %s42
    %p48 = scmp.eq.s32.totalorder %s29, 0
    %p49 = por %p47, %p48
    %p50 = scmp.ne.s32.totalorder %s39, %s42
    %p51 = scmp.eq.s32.totalorder %s34, 1
    %p52 = por %p50, %p51
    %p53 = scmp.ne.s32.totalorder %s42, %s43
    %p54 = scmp.eq.s32.totalorder %s34, 0
    %p55 = por %p53, %p54
    %p56 = scmp.ne.s32.totalorder %s42, %s43
    %p57 = scmp.eq.s32.totalorder %s35, 1
    %p58 = por %p56, %p57
    %p60 = scmp.ne.s32.totalorder %s43, %s59
    %p61 = scmp.eq.s32.totalorder %s35, 0
    %p62 = por %p60, %p61
    %s63 = ssub.s32 %s29, %s36
    %p64 = scmp.eq.s32.totalorder %s63, 0
    %s66 = sadd.s32 %s65, 1
    %s67 = scalar_select %p64, %s65, %s66
    %p70 = pneg %p64
    %p71 = scmp.eq.s32.totalorder %s29, 1
    %p72 = por %p70, %p71
    %p73 = scmp.ne.s32.totalorder %s65, %s68
    %p74 = scmp.eq.s32.totalorder %s29, 0
    %p75 = por %p73, %p74
    %p76 = scmp.ne.s32.totalorder %s65, %s68
    %p77 = scmp.eq.s32.totalorder %s34, 1
    %p78 = por %p76, %p77
    %p79 = scmp.ne.s32.totalorder %s68, %s69
    %p80 = scmp.eq.s32.totalorder %s34, 0
    %p81 = por %p79, %p80
    %p82 = scmp.ne.s32.totalorder %s68, %s69
    %p83 = scmp.eq.s32.totalorder %s35, 1
    %p84 = por %p82, %p83
    %p86 = scmp.ne.s32.totalorder %s69, %s85
    %p87 = scmp.eq.s32.totalorder %s35, 0
    %p88 = por %p86, %p87
    %s90 = sadd.s32 %s89, 1
    %p93 = scmp.eq.s32.totalorder %s29, 1
    %p94 = scmp.ne.s32.totalorder %s89, %s91
    %p95 = scmp.eq.s32.totalorder %s29, 0
    %p96 = por %p94, %p95
    %p97 = scmp.ne.s32.totalorder %s89, %s91
    %p98 = scmp.eq.s32.totalorder %s34, 1
    %p99 = por %p97, %p98
    %p100 = scmp.ne.s32.totalorder %s91, %s92
    %p101 = scmp.eq.s32.totalorder %s34, 0
    %p102 = por %p100, %p101
    %p103 = scmp.ne.s32.totalorder %s91, %s92
    %p104 = scmp.eq.s32.totalorder %s35, 1
    %p105 = por %p103, %p104
    %p107 = scmp.ne.s32.totalorder %s92, %s106
    %p108 = scmp.eq.s32.totalorder %s35, 0
    %p109 = por %p107, %p108
    %s111 = sadd.s32 %s110, 1
    %p114 = scmp.eq.s32.totalorder %s29, 1
    %p115 = scmp.ne.s32.totalorder %s110, %s112
    %p116 = scmp.eq.s32.totalorder %s29, 0
    %p117 = por %p115, %p116
    %p118 = scmp.ne.s32.totalorder %s110, %s112
    %p119 = scmp.eq.s32.totalorder %s34, 1
    %p120 = por %p118, %p119
    %p121 = scmp.ne.s32.totalorder %s112, %s113
    %p122 = scmp.eq.s32.totalorder %s34, 0
    %p123 = por %p121, %p122
    %p124 = scmp.ne.s32.totalorder %s112, %s113
    %p125 = scmp.eq.s32.totalorder %s35, 1
    %p126 = por %p124, %p125
    %p128 = scmp.ne.s32.totalorder %s113, %s127
    %p129 = scmp.eq.s32.totalorder %s35, 0
    %p130 = por %p128, %p129
    %s132 = sadd.s32 %s131, 1
    %p135 = scmp.eq.s32.totalorder %s29, 1
    %p136 = scmp.ne.s32.totalorder %s131, %s133
    %p137 = scmp.eq.s32.totalorder %s29, 0
    %p138 = por %p136, %p137
    %p139 = scmp.ne.s32.totalorder %s131, %s133
    %p140 = scmp.eq.s32.totalorder %s34, 1
    %p141 = por %p139, %p140
    %p142 = scmp.ne.s32.totalorder %s133, %s134
    %p143 = scmp.eq.s32.totalorder %s34, 0
    %p144 = por %p142, %p143
    %p145 = scmp.ne.s32.totalorder %s133, %s134
    %p146 = scmp.eq.s32.totalorder %s35, 1
    %p147 = por %p145, %p146
    %p149 = scmp.ne.s32.totalorder %s134, %s148
    %p150 = scmp.eq.s32.totalorder %s35, 0
    %p151 = por %p149, %p150
    %s153 = sadd.s32 %s152, 1
    %p156 = scmp.eq.s32.totalorder %s29, 1
    %p157 = scmp.ne.s32.totalorder %s152, %s154
    %p158 = scmp.eq.s32.totalorder %s29, 0
    %p159 = por %p157, %p158
    %p160 = scmp.ne.s32.totalorder %s152, %s154
    %p161 = scmp.eq.s32.totalorder %s34, 1
    %p162 = por %p160, %p161
    %p163 = scmp.ne.s32.totalorder %s154, %s155
    %p164 = scmp.eq.s32.totalorder %s34, 0
    %p165 = por %p163, %p164
    %p166 = scmp.ne.s32.totalorder %s154, %s155
    %p167 = scmp.eq.s32.totalorder %s35, 1
    %p168 = por %p166, %p167
    %p170 = scmp.ne.s32.totalorder %s155, %s169
    %p171 = scmp.eq.s32.totalorder %s35, 0
    %p172 = por %p170, %p171
    %s174 = sadd.s32 %s173, 1
    %p177 = scmp.eq.s32.totalorder %s29, 1
    %p178 = scmp.ne.s32.totalorder %s173, %s175
    %p179 = scmp.eq.s32.totalorder %s29, 0
    %p180 = por %p178, %p179
    %p181 = scmp.ne.s32.totalorder %s173, %s175
    %p182 = scmp.eq.s32.totalorder %s34, 1
    %p183 = por %p181, %p182
    %p184 = scmp.ne.s32.totalorder %s175, %s176
    %p185 = scmp.eq.s32.totalorder %s34, 0
    %p186 = por %p184, %p185
    %p187 = scmp.ne.s32.totalorder %s175, %s176
    %p188 = scmp.eq.s32.totalorder %s35, 1
    %p189 = por %p187, %p188
    %p191 = scmp.ne.s32.totalorder %s176, %s190
    %p192 = scmp.eq.s32.totalorder %s35, 0
    %p193 = por %p191, %p192
    %s195 = sadd.s32 %s194, 1
    %p198 = scmp.eq.s32.totalorder %s29, 1
    %p199 = scmp.ne.s32.totalorder %s194, %s196
    %p200 = scmp.eq.s32.totalorder %s29, 0
    %p201 = por %p199, %p200
    %p202 = scmp.ne.s32.totalorder %s194, %s196
    %p203 = scmp.eq.s32.totalorder %s34, 1
    %p204 = por %p202, %p203
    %p205 = scmp.ne.s32.totalorder %s196, %s197
    %p206 = scmp.eq.s32.totalorder %s34, 0
    %p207 = por %p205, %p206
    %p208 = scmp.ne.s32.totalorder %s196, %s197
    %p209 = scmp.eq.s32.totalorder %s35, 1
    %p210 = por %p208, %p209
    %p212 = scmp.ne.s32.totalorder %s197, %s211
    %p213 = scmp.eq.s32.totalorder %s35, 0
    %p214 = por %p212, %p213
    %s216 = sadd.s32 %s215, 1
    %p219 = scmp.eq.s32.totalorder %s29, 1
    %p220 = scmp.ne.s32.totalorder %s215, %s217
    %p221 = scmp.eq.s32.totalorder %s29, 0
    %p222 = por %p220, %p221
    %p223 = scmp.ne.s32.totalorder %s215, %s217
    %p224 = scmp.eq.s32.totalorder %s34, 1
    %p225 = por %p223, %p224
    %p226 = scmp.ne.s32.totalorder %s217, %s218
    %p227 = scmp.eq.s32.totalorder %s34, 0
    %p228 = por %p226, %p227
    %p229 = scmp.ne.s32.totalorder %s217, %s218
    %p230 = scmp.eq.s32.totalorder %s35, 1
    %p231 = por %p229, %p230
    %p233 = scmp.ne.s32.totalorder %s218, %s232
    %p234 = scmp.eq.s32.totalorder %s35, 0
    %p235 = por %p233, %p234
    %s237 = sadd.s32 %s236, 1
    %p240 = scmp.eq.s32.totalorder %s29, 1
    %p241 = scmp.ne.s32.totalorder %s236, %s238
    %p242 = scmp.eq.s32.totalorder %s29, 0
    %p243 = por %p241, %p242
    %p244 = scmp.ne.s32.totalorder %s236, %s238
    %p245 = scmp.eq.s32.totalorder %s34, 1
    %p246 = por %p244, %p245
    %p247 = scmp.ne.s32.totalorder %s238, %s239
    %p248 = scmp.eq.s32.totalorder %s34, 0
    %p249 = por %p247, %p248
    %p250 = scmp.ne.s32.totalorder %s238, %s239
    %p251 = scmp.eq.s32.totalorder %s35, 1
    %p252 = por %p250, %p251
    %p254 = scmp.ne.s32.totalorder %s239, %s253
    %p255 = scmp.eq.s32.totalorder %s35, 0
    %p256 = por %p254, %p255
    %s258 = sadd.s32 %s257, 1
    %p261 = scmp.eq.s32.totalorder %s29, 1
    %p262 = scmp.ne.s32.totalorder %s257, %s259
    %p263 = scmp.eq.s32.totalorder %s29, 0
    %p264 = por %p262, %p263
    %p265 = scmp.ne.s32.totalorder %s257, %s259
    %p266 = scmp.eq.s32.totalorder %s34, 1
    %p267 = por %p265, %p266
    %p268 = scmp.ne.s32.totalorder %s259, %s260
    %p269 = scmp.eq.s32.totalorder %s34, 0
    %p270 = por %p268, %p269
    %p271 = scmp.ne.s32.totalorder %s259, %s260
    %p272 = scmp.eq.s32.totalorder %s35, 1
    %p273 = por %p271, %p272
    %p275 = scmp.ne.s32.totalorder %s260, %s274
    %p276 = scmp.eq.s32.totalorder %s35, 0
    %p277 = por %p275, %p276
    %s279 = sadd.s32 %s278, 1
    %p282 = scmp.eq.s32.totalorder %s29, 1
    %p283 = scmp.ne.s32.totalorder %s278, %s280
    %p284 = scmp.eq.s32.totalorder %s29, 0
    %p285 = por %p283, %p284
    %p286 = scmp.ne.s32.totalorder %s278, %s280
    %p287 = scmp.eq.s32.totalorder %s34, 1
    %p288 = por %p286, %p287
    %p289 = scmp.ne.s32.totalorder %s280, %s281
    %p290 = scmp.eq.s32.totalorder %s34, 0
    %p291 = por %p289, %p290
    %p292 = scmp.ne.s32.totalorder %s280, %s281
    %p293 = scmp.eq.s32.totalorder %s35, 1
    %p294 = por %p292, %p293
    %p296 = scmp.ne.s32.totalorder %s281, %s295
    %p297 = scmp.eq.s32.totalorder %s35, 0
    %p298 = por %p296, %p297
    %s300 = sadd.s32 %s299, 1
    %p303 = scmp.eq.s32.totalorder %s29, 1
    %p304 = scmp.ne.s32.totalorder %s299, %s301
    %p305 = scmp.eq.s32.totalorder %s29, 0
    %p306 = por %p304, %p305
    %p307 = scmp.ne.s32.totalorder %s299, %s301
    %p308 = scmp.eq.s32.totalorder %s34, 1
    %p309 = por %p307, %p308
    %p310 = scmp.ne.s32.totalorder %s301, %s302
    %p311 = scmp.eq.s32.totalorder %s34, 0
    %p312 = por %p310, %p311
    %p313 = scmp.ne.s32.totalorder %s301, %s302
    %p314 = scmp.eq.s32.totalorder %s35, 1
    %p315 = por %p313, %p314
    %p317 = scmp.ne.s32.totalorder %s302, %s316
    %p318 = scmp.eq.s32.totalorder %s35, 0
    %p319 = por %p317, %p318
    %s321 = sadd.s32 %s320, 1
    %p324 = scmp.eq.s32.totalorder %s29, 1
    %p325 = scmp.ne.s32.totalorder %s320, %s322
    %p326 = scmp.eq.s32.totalorder %s29, 0
    %p327 = por %p325, %p326
    %p328 = scmp.ne.s32.totalorder %s320, %s322
    %p329 = scmp.eq.s32.totalorder %s34, 1
    %p330 = por %p328, %p329
    %p331 = scmp.ne.s32.totalorder %s322, %s323
    %p332 = scmp.eq.s32.totalorder %s34, 0
    %p333 = por %p331, %p332
    %p334 = scmp.ne.s32.totalorder %s322, %s323
    %p335 = scmp.eq.s32.totalorder %s35, 1
    %p336 = por %p334, %p335
    %p338 = scmp.ne.s32.totalorder %s323, %s337
    %p339 = scmp.eq.s32.totalorder %s35, 0
    %p340 = por %p338, %p339
    %s342 = sadd.s32 %s341, 1
    %p345 = scmp.eq.s32.totalorder %s29, 1
    %p346 = scmp.ne.s32.totalorder %s341, %s343
    %p347 = scmp.eq.s32.totalorder %s29, 0
    %p348 = por %p346, %p347
    %p349 = scmp.ne.s32.totalorder %s341, %s343
    %p350 = scmp.eq.s32.totalorder %s34, 1
    %p351 = por %p349, %p350
    %p352 = scmp.ne.s32.totalorder %s343, %s344
    %p353 = scmp.eq.s32.totalorder %s34, 0
    %p354 = por %p352, %p353
    %p355 = scmp.ne.s32.totalorder %s343, %s344
    %p356 = scmp.eq.s32.totalorder %s35, 1
    %p357 = por %p355, %p356
    %p359 = scmp.ne.s32.totalorder %s344, %s358
    %p360 = scmp.eq.s32.totalorder %s35, 0
    %p361 = por %p359, %p360
    %s363 = sadd.s32 %s362, 1
    %p366 = scmp.eq.s32.totalorder %s29, 1
    %p367 = scmp.ne.s32.totalorder %s362, %s364
    %p368 = scmp.eq.s32.totalorder %s29, 0
    %p369 = por %p367, %p368
    %p370 = scmp.ne.s32.totalorder %s362, %s364
    %p371 = scmp.eq.s32.totalorder %s34, 1
    %p372 = por %p370, %p371
    %p373 = scmp.ne.s32.totalorder %s364, %s365
    %p374 = scmp.eq.s32.totalorder %s34, 0
    %p375 = por %p373, %p374
    %p376 = scmp.ne.s32.totalorder %s364, %s365
    %p377 = scmp.eq.s32.totalorder %s35, 1
    %p378 = por %p376, %p377
    %p380 = scmp.ne.s32.totalorder %s365, %s379
    %p381 = scmp.eq.s32.totalorder %s35, 0
    %p382 = por %p380, %p381
    %s384 = sadd.s32 %s383, 1
    %p387 = scmp.eq.s32.totalorder %s29, 1
    %p388 = scmp.ne.s32.totalorder %s383, %s385
    %p389 = scmp.eq.s32.totalorder %s29, 0
    %p390 = por %p388, %p389
    %p391 = scmp.ne.s32.totalorder %s383, %s385
    %p392 = scmp.eq.s32.totalorder %s34, 1
    %p393 = por %p391, %p392
    %p394 = scmp.ne.s32.totalorder %s385, %s386
    %p395 = scmp.eq.s32.totalorder %s34, 0
    %p396 = por %p394, %p395
    %p397 = scmp.ne.s32.totalorder %s385, %s386
    %p398 = scmp.eq.s32.totalorder %s35, 1
    %p399 = por %p397, %p398
    %p401 = scmp.ne.s32.totalorder %s386, %s400
    %p402 = scmp.eq.s32.totalorder %s35, 0
    %p403 = por %p401, %p402
    %s405 = sadd.s32 %s404, 1
    %p408 = scmp.eq.s32.totalorder %s29, 1
    %p409 = scmp.ne.s32.totalorder %s404, %s406
    %p410 = scmp.eq.s32.totalorder %s29, 0
    %p411 = por %p409, %p410
    %p412 = scmp.ne.s32.totalorder %s404, %s406
    %p413 = scmp.eq.s32.totalorder %s34, 1
    %p414 = por %p412, %p413
    %p415 = scmp.ne.s32.totalorder %s406, %s407
    %p416 = scmp.eq.s32.totalorder %s34, 0
    %p417 = por %p415, %p416
    %p418 = scmp.ne.s32.totalorder %s406, %s407
    %p419 = scmp.eq.s32.totalorder %s35, 1
    %p420 = por %p418, %p419
    %p422 = scmp.ne.s32.totalorder %s407, %s421
    %p423 = scmp.eq.s32.totalorder %s35, 0
    %p424 = por %p422, %p423
    %s426 = sadd.s32 %s425, 1
    %p429 = scmp.eq.s32.totalorder %s29, 1
    %p430 = scmp.ne.s32.totalorder %s425, %s427
    %p431 = scmp.eq.s32.totalorder %s29, 0
    %p432 = por %p430, %p431
    %p433 = scmp.ne.s32.totalorder %s425, %s427
    %p434 = scmp.eq.s32.totalorder %s34, 1
    %p435 = por %p433, %p434
    %p436 = scmp.ne.s32.totalorder %s427, %s428
    %p437 = scmp.eq.s32.totalorder %s34, 0
    %p438 = por %p436, %p437
    %p439 = scmp.ne.s32.totalorder %s427, %s428
    %p440 = scmp.eq.s32.totalorder %s35, 1
    %p441 = por %p439, %p440
    %p443 = scmp.ne.s32.totalorder %s428, %s442
    %p444 = scmp.eq.s32.totalorder %s35, 0
    %p445 = por %p443, %p444
    %s447 = sadd.s32 %s446, 1
    %p450 = scmp.eq.s32.totalorder %s29, 1
    %p451 = scmp.ne.s32.totalorder %s446, %s448
    %p452 = scmp.eq.s32.totalorder %s29, 0
    %p453 = por %p451, %p452
    %p454 = scmp.ne.s32.totalorder %s446, %s448
    %p455 = scmp.eq.s32.totalorder %s34, 1
    %p456 = por %p454, %p455
    %p457 = scmp.ne.s32.totalorder %s448, %s449
    %p458 = scmp.eq.s32.totalorder %s34, 0
    %p459 = por %p457, %p458
    %p460 = scmp.ne.s32.totalorder %s448, %s449
    %p461 = scmp.eq.s32.totalorder %s35, 1
    %p462 = por %p460, %p461
    %p464 = scmp.ne.s32.totalorder %s449, %s463
    %p465 = scmp.eq.s32.totalorder %s35, 0
    %p466 = por %p464, %p465
    %s467 = ssub.s32 %s29, %s36
    %p468 = scmp.eq.s32.totalorder %s467, 0
    %s470 = sadd.s32 %s469, 1
    %s471 = scalar_select %p468, %s469, %s470
    %p474 = pneg %p468
    %p475 = scmp.eq.s32.totalorder %s29, 1
    %p476 = por %p474, %p475
    %p477 = scmp.ne.s32.totalorder %s469, %s472
    %p478 = scmp.eq.s32.totalorder %s29, 0
    %p479 = por %p477, %p478
    %p480 = scmp.ne.s32.totalorder %s469, %s472
    %p481 = scmp.eq.s32.totalorder %s34, 1
    %p482 = por %p480, %p481
    %p483 = scmp.ne.s32.totalorder %s472, %s473
    %p484 = scmp.eq.s32.totalorder %s34, 0
    %p485 = por %p483, %p484
    %p486 = scmp.ne.s32.totalorder %s472, %s473
    %p487 = scmp.eq.s32.totalorder %s35, 1
    %p488 = por %p486, %p487
    %p490 = scmp.ne.s32.totalorder %s473, %s489
    %p491 = scmp.eq.s32.totalorder %s35, 0
    %p492 = por %p490, %p491
    %s493 = ssub.s32 %s29, %s36
    %p494 = scmp.eq.s32.totalorder %s493, 0
    %s496 = sadd.s32 %s495, 1
    %s497 = scalar_select %p494, %s495, %s496
    %p500 = pneg %p494
    %p501 = scmp.eq.s32.totalorder %s29, 1
    %p502 = por %p500, %p501
    %p503 = scmp.ne.s32.totalorder %s495, %s498
    %p504 = scmp.eq.s32.totalorder %s29, 0
    %p505 = por %p503, %p504
    %p506 = scmp.ne.s32.totalorder %s495, %s498
    %p507 = scmp.eq.s32.totalorder %s34, 1
    %p508 = por %p506, %p507
    %p509 = scmp.ne.s32.totalorder %s498, %s499
    %p510 = scmp.eq.s32.totalorder %s34, 0
    %p511 = por %p509, %p510
    %p512 = scmp.ne.s32.totalorder %s498, %s499
    %p513 = scmp.eq.s32.totalorder %s35, 1
    %p514 = por %p512, %p513
    %p516 = scmp.ne.s32.totalorder %s499, %s515
    %p517 = scmp.eq.s32.totalorder %s35, 0
    %p518 = por %p516, %p517
    %s519 = ssub.s32 %s29, %s36
    %p520 = scmp.eq.s32.totalorder %s519, 0
    %s522 = sadd.s32 %s521, 1
    %s523 = scalar_select %p520, %s521, %s522
    %p526 = pneg %p520
    %p527 = scmp.eq.s32.totalorder %s29, 1
    %p528 = por %p526, %p527
    %p529 = scmp.ne.s32.totalorder %s521, %s524
    %p530 = scmp.eq.s32.totalorder %s29, 0
    %p531 = por %p529, %p530
    %p532 = scmp.ne.s32.totalorder %s521, %s524
    %p533 = scmp.eq.s32.totalorder %s34, 1
    %p534 = por %p532, %p533
    %p535 = scmp.ne.s32.totalorder %s524, %s525
    %p536 = scmp.eq.s32.totalorder %s34, 0
    %p537 = por %p535, %p536
    %p538 = scmp.ne.s32.totalorder %s524, %s525
    %p539 = scmp.eq.s32.totalorder %s35, 1
    %p540 = por %p538, %p539
    %p542 = scmp.ne.s32.totalorder %s525, %s541
    %p543 = scmp.eq.s32.totalorder %s35, 0
    %p544 = por %p542, %p543
    %p545 = scmp.le.s32.totalorder 1, %s29
    %p546 = scmp.lt.s32.totalorder %s29, 3
    %p547 = pnand %p545, %p546
    %p548 = pneg %p547
    // Predicated region
    $region9: #{waveglow_forward.6} parent=5 // pred_check
      _
    $region10: #{waveglow_forward.6} parent=5 // pred_check_branch
      %550 = sbr.rel (%p547) target = $region12
    $region11: #{waveglow_forward.6} parent=5 // pred_region
      %s551 = ssub.s32 %s29, 1
      // Predicated region
      $region13: #{waveglow_forward.6} parent=11 // pred_check
        %p552 = pneg %p102
      $region14: #{waveglow_forward.6} parent=11 // pred_check_branch
        %554 = sbr.rel (%p552) target = $region16
      $region15: #{waveglow_forward.6} parent=11 // pred_region
        _
      $region16: #{waveglow_forward.6} parent=11 // pred_fallthru
        _
      // Predicated region
      $region17: #{waveglow_forward.6} parent=11 // pred_check
        %p555 = pneg %p123
      $region18: #{waveglow_forward.6} parent=11 // pred_check_branch
        %557 = sbr.rel (%p555) target = $region20
      $region19: #{waveglow_forward.6} parent=11 // pred_region
        _
      $region20: #{waveglow_forward.6} parent=11 // pred_fallthru
        _
      // Predicated region
      $region21: #{waveglow_forward.6} parent=11 // pred_check
        %p558 = pneg %p144
      $region22: #{waveglow_forward.6} parent=11 // pred_check_branch
        %560 = sbr.rel (%p558) target = $region24
      $region23: #{waveglow_forward.6} parent=11 // pred_region
        _
      $region24: #{waveglow_forward.6} parent=11 // pred_fallthru
        _
      // Predicated region
      $region25: #{waveglow_forward.6} parent=11 // pred_check
        %p561 = pneg %p165
      $region26: #{waveglow_forward.6} parent=11 // pred_check_branch
        %563 = sbr.rel (%p561) target = $region28
      $region27: #{waveglow_forward.6} parent=11 // pred_region
        _
      $region28: #{waveglow_forward.6} parent=11 // pred_fallthru
        _
      // Predicated region
      $region29: #{waveglow_forward.6} parent=11 // pred_check
        %p564 = pneg %p186
      $region30: #{waveglow_forward.6} parent=11 // pred_check_branch
        %566 = sbr.rel (%p564) target = $region32
      $region31: #{waveglow_forward.6} parent=11 // pred_region
        _
      $region32: #{waveglow_forward.6} parent=11 // pred_fallthru
        _
      // Predicated region
      $region33: #{waveglow_forward.6} parent=11 // pred_check
        %p567 = pneg %p207
      $region34: #{waveglow_forward.6} parent=11 // pred_check_branch
        %569 = sbr.rel (%p567) target = $region36
      $region35: #{waveglow_forward.6} parent=11 // pred_region
        _
      $region36: #{waveglow_forward.6} parent=11 // pred_fallthru
        _
      // Predicated region
      $region37: #{waveglow_forward.6} parent=11 // pred_check
        %p570 = pneg %p228
      $region38: #{waveglow_forward.6} parent=11 // pred_check_branch
        %572 = sbr.rel (%p570) target = $region40
      $region39: #{waveglow_forward.6} parent=11 // pred_region
        _
      $region40: #{waveglow_forward.6} parent=11 // pred_fallthru
        _
      // Predicated region
      $region41: #{waveglow_forward.6} parent=11 // pred_check
        %p573 = pneg %p249
      $region42: #{waveglow_forward.6} parent=11 // pred_check_branch
        %575 = sbr.rel (%p573) target = $region44
      $region43: #{waveglow_forward.6} parent=11 // pred_region
        _
      $region44: #{waveglow_forward.6} parent=11 // pred_fallthru
        _
      // Predicated region
      $region45: #{waveglow_forward.6} parent=11 // pred_check
        %p576 = pneg %p270
      $region46: #{waveglow_forward.6} parent=11 // pred_check_branch
        %578 = sbr.rel (%p576) target = $region48
      $region47: #{waveglow_forward.6} parent=11 // pred_region
        _
      $region48: #{waveglow_forward.6} parent=11 // pred_fallthru
        _
      // Predicated region
      $region49: #{waveglow_forward.6} parent=11 // pred_check
        %p579 = pneg %p291
      $region50: #{waveglow_forward.6} parent=11 // pred_check_branch
        %581 = sbr.rel (%p579) target = $region52
      $region51: #{waveglow_forward.6} parent=11 // pred_region
        _
      $region52: #{waveglow_forward.6} parent=11 // pred_fallthru
        _
      // Predicated region
      $region53: #{waveglow_forward.6} parent=11 // pred_check
        %p582 = pneg %p312
      $region54: #{waveglow_forward.6} parent=11 // pred_check_branch
        %584 = sbr.rel (%p582) target = $region56
      $region55: #{waveglow_forward.6} parent=11 // pred_region
        _
      $region56: #{waveglow_forward.6} parent=11 // pred_fallthru
        _
      // Predicated region
      $region57: #{waveglow_forward.6} parent=11 // pred_check
        %p585 = pneg %p333
      $region58: #{waveglow_forward.6} parent=11 // pred_check_branch
        %587 = sbr.rel (%p585) target = $region60
      $region59: #{waveglow_forward.6} parent=11 // pred_region
        _
      $region60: #{waveglow_forward.6} parent=11 // pred_fallthru
        _
      // Predicated region
      $region61: #{waveglow_forward.6} parent=11 // pred_check
        %p588 = pneg %p354
      $region62: #{waveglow_forward.6} parent=11 // pred_check_branch
        %590 = sbr.rel (%p588) target = $region64
      $region63: #{waveglow_forward.6} parent=11 // pred_region
        _
      $region64: #{waveglow_forward.6} parent=11 // pred_fallthru
        _
      // Predicated region
      $region65: #{waveglow_forward.6} parent=11 // pred_check
        %p591 = pneg %p375
      $region66: #{waveglow_forward.6} parent=11 // pred_check_branch
        %593 = sbr.rel (%p591) target = $region68
      $region67: #{waveglow_forward.6} parent=11 // pred_region
        _
      $region68: #{waveglow_forward.6} parent=11 // pred_fallthru
        _
      // Predicated region
      $region69: #{waveglow_forward.6} parent=11 // pred_check
        %p594 = pneg %p396
      $region70: #{waveglow_forward.6} parent=11 // pred_check_branch
        %596 = sbr.rel (%p594) target = $region72
      $region71: #{waveglow_forward.6} parent=11 // pred_region
        _
      $region72: #{waveglow_forward.6} parent=11 // pred_fallthru
        _
      // Predicated region
      $region73: #{waveglow_forward.6} parent=11 // pred_check
        %p597 = pneg %p417
      $region74: #{waveglow_forward.6} parent=11 // pred_check_branch
        %599 = sbr.rel (%p597) target = $region76
      $region75: #{waveglow_forward.6} parent=11 // pred_region
        _
      $region76: #{waveglow_forward.6} parent=11 // pred_fallthru
        _
      // Predicated region
      $region77: #{waveglow_forward.6} parent=11 // pred_check
        %p600 = pneg %p438
      $region78: #{waveglow_forward.6} parent=11 // pred_check_branch
        %602 = sbr.rel (%p600) target = $region80
      $region79: #{waveglow_forward.6} parent=11 // pred_region
        _
      $region80: #{waveglow_forward.6} parent=11 // pred_fallthru
        _
      // Predicated region
      $region81: #{waveglow_forward.6} parent=11 // pred_check
        %p603 = pneg %p459
      $region82: #{waveglow_forward.6} parent=11 // pred_check_branch
        %605 = sbr.rel (%p603) target = $region84
      $region83: #{waveglow_forward.6} parent=11 // pred_region
        _
      $region84: #{waveglow_forward.6} parent=11 // pred_fallthru
        _
    $region12: #{waveglow_forward.6} parent=5 // pred_fallthru
      _
    %p606 = scmp.lt.s32.totalorder %s29, 2
    // Predicated region
    $region85: #{waveglow_forward.6} parent=5 // pred_check
      %p607 = pneg %p606
    $region86: #{waveglow_forward.6} parent=5 // pred_check_branch
      %609 = sbr.rel (%p607) target = $region88
    $region87: #{waveglow_forward.6} parent=5 // pred_region
      // Predicated region
      $region89: #{waveglow_forward.6} parent=87 // pred_check
        %p610 = pneg %p49
      $region90: #{waveglow_forward.6} parent=87 // pred_check_branch
        %612 = sbr.rel (%p610) target = $region92
      $region91: #{waveglow_forward.6} parent=87 // pred_region
        %p613 = scmp.lt.s32.totalorder %s29, 1
        %s614 = scalar_select %p613, %s29, 1
        %s615 = smul.addr %s614, 2
        %s616 = smul.addr %s615, 8
        %s617 = scalar_lea.vmem %s0, %s616
      $region92: #{waveglow_forward.6} parent=87 // pred_fallthru
        _
      // Predicated region
      $region93: #{waveglow_forward.6} parent=87 // pred_check
        %p618 = pneg %p75
      $region94: #{waveglow_forward.6} parent=87 // pred_check_branch
        %620 = sbr.rel (%p618) target = $region96
      $region95: #{waveglow_forward.6} parent=87 // pred_region
        %p621 = scmp.lt.s32.totalorder %s29, 1
        %s622 = scalar_select %p621, %s29, 1
        %s623 = smul.addr %s622, 2
        %s624 = smul.addr %s623, 8
        %s625 = scalar_lea.vmem %s1, %s624
      $region96: #{waveglow_forward.6} parent=87 // pred_fallthru
        _
    $region88: #{waveglow_forward.6} parent=5 // pred_fallthru
      _
    %p626 = scmp.le.s32.totalorder 1, %s29
    %p627 = scmp.lt.s32.totalorder %s29, 3
    %p628 = pnand %p626, %p627
    %p629 = pneg %p628
    // Predicated region
    $region97: #{waveglow_forward.6} parent=5 // pred_check
      _
    $region98: #{waveglow_forward.6} parent=5 // pred_check_branch
      %631 = sbr.rel (%p628) target = $region100
    $region99: #{waveglow_forward.6} parent=5 // pred_region
      %s632 = ssub.s32 %s29, 1
      %p633 = scmp.lt.s32.totalorder %s34, 1
      %s634 = scalar_select %p633, %s34, 1
      %s635 = smul.addr %s634, 2
      %s636 = smul.addr %s635, 8
      %s637 = scalar_lea.vmem %s0, %s636
      %p638 = pneg %p55
      %p639 = pneg %p52
      %p640 = scmp.lt.s32.totalorder %s34, 1
      %s641 = scalar_select %p640, %s34, 1
      %s642 = smul.addr %s641, 2
      %s643 = smul.addr %s642, 8
      %s644 = scalar_lea.vmem %s1, %s643
      %p645 = pneg %p81
      %p646 = pneg %p78
      %p647 = pneg %p102
      %p648 = pneg %p99
      %p649 = pneg %p123
      %p650 = pneg %p120
      %p651 = pneg %p144
      %p652 = pneg %p141
      %p653 = pneg %p165
      %p654 = pneg %p162
      %p655 = pneg %p186
      %p656 = pneg %p183
      %p657 = pneg %p207
      %p658 = pneg %p204
      %p659 = pneg %p228
      %p660 = pneg %p225
      %p661 = pneg %p249
      %p662 = pneg %p246
      %p663 = pneg %p270
      %p664 = pneg %p267
      %p665 = pneg %p291
      %p666 = pneg %p288
      %p667 = pneg %p312
      %p668 = pneg %p309
      %p669 = pneg %p333
      %p670 = pneg %p330
      %p671 = pneg %p354
      %p672 = pneg %p351
      %p673 = pneg %p375
      %p674 = pneg %p372
      %p675 = pneg %p396
      %p676 = pneg %p393
      %p677 = pneg %p417
      %p678 = pneg %p414
      %p679 = pneg %p438
      %p680 = pneg %p435
      %p681 = pneg %p459
      %p682 = pneg %p456
      %p683 = pneg %p485
      %p684 = pneg %p482
      %p685 = scmp.lt.s32.totalorder %s34, 1
      %s686 = scalar_select %p685, %s34, 1
      %s687 = smul.addr %s686, 2
      %s688 = smul.addr %s687, 8
      %s689 = scalar_lea.vmem %s20, %s688
      %p690 = pneg %p511
      %p691 = pneg %p508
      %p692 = scmp.lt.s32.totalorder %s34, 1
      %s693 = scalar_select %p692, %s34, 1
      %s694 = smul.addr %s693, 2
      %s695 = smul.addr %s694, 8
      %s696 = scalar_lea.vmem %s21, %s695
      %p697 = pneg %p537
      %p698 = pneg %p534
      %p699 = scmp.lt.s32.totalorder %s34, 1
      %s700 = scalar_select %p699, %s34, 1
      %s701 = scalar_lea.vmem %s22, %s700
      %p702 = scmp.lt.s32.totalorder %s34, 1
      %s703 = scalar_select %p702, %s34, 1
      %s704 = smul.addr %s703, 2
      %s705 = smul.addr %s704, 8
      %s706 = scalar_lea.vmem %s0, %s705
      %p707 = scmp.lt.s32.totalorder %s34, 1
      %s708 = scalar_select %p707, %s34, 1
      %s709 = smul.addr %s708, 2
      %s710 = smul.addr %s709, 8
      %s711 = scalar_lea.vmem %s1, %s710
      %p712 = scmp.lt.s32.totalorder %s34, 1
      %s713 = scalar_select %p712, %s34, 1
      %s714 = smul.addr %s713, 2
      %s715 = smul.addr %s714, 8
      %s716 = scalar_lea.vmem %s20, %s715
      %p717 = scmp.lt.s32.totalorder %s34, 1
      %s718 = scalar_select %p717, %s34, 1
      %s719 = smul.addr %s718, 2
      %s720 = smul.addr %s719, 8
      %s721 = scalar_lea.vmem %s21, %s720
      %p722 = scmp.lt.s32.totalorder %s34, 1
      %s723 = scalar_select %p722, %s34, 1
      %s724 = scalar_lea.vmem %s22, %s723
      %v725 = vld [vmem:[%s706] sm:$0xff]
      %v726 = vld [vmem:[%s706 + $0x8] sm:$0xff]
      %v727 = vld [vmem:[%s2] sm:$0xff]
      %vm728 = vcmask 64512
      %v730 = vsel %vm728, %v725, 0
      %v733 = vsel %vm728, %v726, 0
      %735 = vmatprep.subr.mxu0 0.0
      %736 = vmatpush1.msra.mxu0 %v727
      %737 = vmatprep.subr.mxu0 0.0
      %738 = vmatpush1.msra.mxu0 0.0
      %739 = vmatprep.subr.mxu0 0.0
      %740 = vmatpush1.msra.mxu0 0.0
      %741 = vmatprep.subr.mxu0 0.0
      %742 = vmatpush1.msra.mxu0 0.0
      %743 = vmatprep.subr.mxu0 0.0
      %744 = vmatpush1.msra.mxu0 0.0
      %745 = vmatprep.subr.mxu0 0.0
      %746 = vmatpush1.msra.mxu0 0.0
      %747 = vmatprep.subr.mxu0 0.0
      %748 = vmatpush1.msra.mxu0 0.0
      %749 = vmatprep.subr.mxu0 0.0
      %750 = vmatpush1.msra.mxu0 0.0
      %751 = vmatprep.subr.mxu0 0.0
      %752 = vmatpush1.msra.mxu0 0.0
      %753 = vmatprep.subr.mxu0 0.0
      %754 = vmatpush1.msra.mxu0 0.0
      %755 = vmatprep.subr.mxu0 0.0
      %756 = vmatpush1.msra.mxu0 0.0
      %757 = vmatprep.subr.mxu0 0.0
      %758 = vmatpush1.msra.mxu0 0.0
      %759 = vmatprep.subr.mxu0 0.0
      %760 = vmatpush1.msra.mxu0 0.0
      %761 = vmatprep.subr.mxu0 0.0
      %762 = vmatpush1.msra.mxu0 0.0
      %763 = vmatprep.subr.mxu0 0.0
      %764 = vmatpush1.msra.mxu0 0.0
      %765 = vmatprep.subr.mxu0 0.0
      %766 = vmatpush1.msra.mxu0 0.0
      %767 = vmatprep.subr.mxu0 0.0
      %768 = vmatpush1.msra.mxu0 0.0
      %769 = vmatprep.subr.mxu0 0.0
      %770 = vmatpush1.msra.mxu0 0.0
      %771 = vmatprep.subr.mxu0 0.0
      %772 = vmatpush1.msra.mxu0 0.0
      %773 = vmatprep.subr.mxu0 0.0
      %774 = vmatpush1.msra.mxu0 0.0
      %775 = vmatprep.subr.mxu0 0.0
      %776 = vmatpush1.msra.mxu0 0.0
      %777 = vmatprep.subr.mxu0 0.0
      %778 = vmatpush1.msra.mxu0 0.0
      %779 = vmatprep.subr.mxu0 0.0
      %780 = vmatpush1.msra.mxu0 0.0
      %781 = vmatprep.subr.mxu0 0.0
      %782 = vmatpush1.msra.mxu0 0.0
      %783 = vmatprep.subr.mxu0 0.0
      %784 = vmatpush1.msra.mxu0 0.0
      %785 = vmatprep.subr.mxu0 0.0
      %786 = vmatpush1.msra.mxu0 0.0
      %787 = vmatprep.subr.mxu0 0.0
      %788 = vmatpush1.msra.mxu0 0.0
      %789 = vmatprep.subr.mxu0 0.0
      %790 = vmatpush1.msra.mxu0 0.0
      %791 = vmatprep.subr.mxu0 0.0
      %792 = vmatpush1.msra.mxu0 0.0
      %793 = vmatprep.subr.mxu0 0.0
      %794 = vmatpush1.msra.mxu0 0.0
      %795 = vmatprep.subr.mxu0 0.0
      %796 = vmatpush1.msra.mxu0 0.0
      %797 = vmatprep.subr.mxu0 0.0
      %798 = vmatpush1.msra.mxu0 0.0
      %799 = vmatprep.mubr.f32.mxu0 0.0
      %800 = vmatmul.mubr.f32.gmra.mrb[0].mxu0 %v730
      %v801 = vpop.f32.mrb[0].mxu0
      %v802 = vadd.f32 0.0, %v801
      %v803 = vpop.f32.mrb[0].mxu0
      %804 = vmatprep.mubr.f32.mxu0 0.0
      %805 = vmatmul.mubr.f32.gmra.mrb[0].mxu0 %v733
      %v806 = vpop.f32.mrb[0].mxu0
      %v807 = vadd.f32 0.0, %v806
      %v808 = vpop.f32.mrb[0].mxu0
      %809 = vdwg.mxu0
      %v810 = vld [vmem:[%s3] sm:$0xff]
      %811 = vmatprep.subr.mxu0 0.0
      %812 = vmatpush1.msra.mxu0 %v810
      %813 = vmatprep.subr.mxu0 0.0
      %814 = vmatpush1.msra.mxu0 0.0
      %815 = vmatprep.subr.mxu0 0.0
      %816 = vmatpush1.msra.mxu0 0.0
      %817 = vmatprep.subr.mxu0 0.0
      %818 = vmatpush1.msra.mxu0 0.0
      %819 = vmatprep.subr.mxu0 0.0
      %820 = vmatpush1.msra.mxu0 0.0
      %821 = vmatprep.subr.mxu0 0.0
      %822 = vmatpush1.msra.mxu0 0.0
      %823 = vmatprep.subr.mxu0 0.0
      %824 = vmatpush1.msra.mxu0 0.0
      %825 = vmatprep.subr.mxu0 0.0
      %826 = vmatpush1.msra.mxu0 0.0
      %827 = vmatprep.subr.mxu0 0.0
      %828 = vmatpush1.msra.mxu0 0.0
      %829 = vmatprep.subr.mxu0 0.0
      %830 = vmatpush1.msra.mxu0 0.0
      %831 = vmatprep.subr.mxu0 0.0
      %832 = vmatpush1.msra.mxu0 0.0
      %833 = vmatprep.subr.mxu0 0.0
      %834 = vmatpush1.msra.mxu0 0.0
      %835 = vmatprep.subr.mxu0 0.0
      %836 = vmatpush1.msra.mxu0 0.0
      %837 = vmatprep.subr.mxu0 0.0
      %838 = vmatpush1.msra.mxu0 0.0
      %839 = vmatprep.subr.mxu0 0.0
      %840 = vmatpush1.msra.mxu0 0.0
      %841 = vmatprep.subr.mxu0 0.0
      %842 = vmatpush1.msra.mxu0 0.0
      %843 = vmatprep.subr.mxu0 0.0
      %844 = vmatpush1.msra.mxu0 0.0
      %845 = vmatprep.subr.mxu0 0.0
      %846 = vmatpush1.msra.mxu0 0.0
      %847 = vmatprep.subr.mxu0 0.0
      %848 = vmatpush1.msra.mxu0 0.0
      %849 = vmatprep.subr.mxu0 0.0
      %850 = vmatpush1.msra.mxu0 0.0
      %851 = vmatprep.subr.mxu0 0.0
      %852 = vmatpush1.msra.mxu0 0.0
      %853 = vmatprep.subr.mxu0 0.0
      %854 = vmatpush1.msra.mxu0 0.0
      %855 = vmatprep.subr.mxu0 0.0
      %856 = vmatpush1.msra.mxu0 0.0
      %857 = vmatprep.subr.mxu0 0.0
      %858 = vmatpush1.msra.mxu0 0.0
      %859 = vmatprep.subr.mxu0 0.0
      %860 = vmatpush1.msra.mxu0 0.0
      %861 = vmatprep.subr.mxu0 0.0
      %862 = vmatpush1.msra.mxu0 0.0
      %863 = vmatprep.subr.mxu0 0.0
      %864 = vmatpush1.msra.mxu0 0.0
      %865 = vmatprep.subr.mxu0 0.0
      %866 = vmatpush1.msra.mxu0 0.0
      %867 = vmatprep.subr.mxu0 0.0
      %868 = vmatpush1.msra.mxu0 0.0
      %869 = vmatprep.subr.mxu0 0.0
      %870 = vmatpush1.msra.mxu0 0.0
      %871 = vmatprep.subr.mxu0 0.0
      %872 = vmatpush1.msra.mxu0 0.0
      %873 = vmatprep.subr.mxu0 0.0
      %874 = vmatpush1.msra.mxu0 0.0
      %875 = vmatprep.mubr.f32.mxu0 0.0
      %876 = vmatmul.mubr.f32.gmra.mrb[0].mxu0 %v730
      %v877 = vpop.f32.mrb[0].mxu0
      %v878 = vadd.f32 0.0, %v877
      %v879 = vpop.f32.mrb[0].mxu0
      %880 = vmatprep.mubr.f32.mxu0 0.0
      %881 = vmatmul.mubr.f32.gmra.mrb[0].mxu0 %v733
      %v882 = vpop.f32.mrb[0].mxu0
      %v883 = vadd.f32 0.0, %v882
      %v884 = vpop.f32.mrb[0].mxu0
      %885 = vdwg.mxu0
      %v886 = vld [vmem:[%s711] sm:$0xff]
      %v887 = vld [vmem:[%s711 + $0x8] sm:$0xff]
      %v888 = vld [vmem:[%s6] sm:$0xff]
      %v889 = vld [vmem:[%s7] sm:$0x1]
      %v891 = vlaneseq
      %v892 = vshrl.u32 %v891, 7
      %v893 = vsub.s32 0, %v892
      %v894 = vrot.slane %v889, %v893
      %v897 = vsel %vm728, %v886, 0
      %v900 = vsel %vm728, %v887, 0
      %902 = vmatprep.subr.mxu0 0.0
      %903 = vmatpush1.msra.mxu0 %v888
      %904 = vmatprep.subr.mxu0 0.0
      %905 = vmatpush1.msra.mxu0 0.0
      %906 = vmatprep.subr.mxu0 0.0
      %907 = vmatpush1.msra.mxu0 0.0
      %908 = vmatprep.subr.mxu0 0.0
      %909 = vmatpush1.msra.mxu0 0.0
      %910 = vmatprep.subr.mxu0 0.0
      %911 = vmatpush1.msra.mxu0 0.0
      %912 = vmatprep.subr.mxu0 0.0
      %913 = vmatpush1.msra.mxu0 0.0
      %914 = vmatprep.subr.mxu0 0.0
      %915 = vmatpush1.msra.mxu0 0.0
      %916 = vmatprep.subr.mxu0 0.0
      %917 = vmatpush1.msra.mxu0 0.0
      %918 = vmatprep.subr.mxu0 0.0
      %919 = vmatpush1.msra.mxu0 0.0
      %920 = vmatprep.subr.mxu0 0.0
      %921 = vmatpush1.msra.mxu0 0.0
      %922 = vmatprep.subr.mxu0 0.0
      %923 = vmatpush1.msra.mxu0 0.0
      %924 = vmatprep.subr.mxu0 0.0
      %925 = vmatpush1.msra.mxu0 0.0
      %926 = vmatprep.subr.mxu0 0.0
      %927 = vmatpush1.msra.mxu0 0.0
      %928 = vmatprep.subr.mxu0 0.0
      %929 = vmatpush1.msra.mxu0 0.0
      %930 = vmatprep.subr.mxu0 0.0
      %931 = vmatpush1.msra.mxu0 0.0
      %932 = vmatprep.subr.mxu0 0.0
      %933 = vmatpush1.msra.mxu0 0.0
      %934 = vmatprep.subr.mxu0 0.0
      %935 = vmatpush1.msra.mxu0 0.0
      %936 = vmatprep.subr.mxu0 0.0
      %937 = vmatpush1.msra.mxu0 0.0
      %938 = vmatprep.subr.mxu0 0.0
      %939 = vmatpush1.msra.mxu0 0.0
      %940 = vmatprep.subr.mxu0 0.0
      %941 = vmatpush1.msra.mxu0 0.0
      %942 = vmatprep.subr.mxu0 0.0
      %943 = vmatpush1.msra.mxu0 0.0
      %944 = vmatprep.subr.mxu0 0.0
      %945 = vmatpush1.msra.mxu0 0.0
      %946 = vmatprep.subr.mxu0 0.0
      %947 = vmatpush1.msra.mxu0 0.0
      %948 = vmatprep.subr.mxu0 0.0
      %949 = vmatpush1.msra.mxu0 0.0
      %950 = vmatprep.subr.mxu0 0.0
      %951 = vmatpush1.msra.mxu0 0.0
      %952 = vmatprep.subr.mxu0 0.0
      %953 = vmatpush1.msra.mxu0 0.0
      %954 = vmatprep.subr.mxu0 0.0
      %955 = vmatpush1.msra.mxu0 0.0
      %956 = vmatprep.subr.mxu0 0.0
      %957 = vmatpush1.msra.mxu0 0.0
      %958 = vmatprep.subr.mxu0 0.0
      %959 = vmatpush1.msra.mxu0 0.0
      %960 = vmatprep.subr.mxu0 0.0
      %961 = vmatpush1.msra.mxu0 0.0
      %962 = vmatprep.subr.mxu0 0.0
      %963 = vmatpush1.msra.mxu0 0.0
      %964 = vmatprep.subr.mxu0 0.0
      %965 = vmatpush1.msra.mxu0 0.0
      %966 = vmatprep.mubr.f32.mxu0 0.0
      %967 = vmatmul.mubr.f32.gmra.mrb[0].mxu0 %v897
      %v968 = vpop.f32.mrb[0].mxu0
      %v969 = vadd.f32 %v894, %v968
      %v970 = vpop.f32.mrb[0].mxu0
      %971 = vmatprep.mubr.f32.mxu0 0.0
      %972 = vmatmul.mubr.f32.gmra.mrb[0].mxu0 %v900
      %v973 = vpop.f32.mrb[0].mxu0
      %v974 = vadd.f32 %v894, %v973
      %v975 = vpop.f32.mrb[0].mxu0
      %976 = vdwg.mxu0
      %v977 = vld [vmem:[%s4] sm:$0xf]
      %v978 = vld [vmem:[%s5] sm:$0x1]
      %v980 = vlaneseq
      %v981 = vshrl.u32 %v980, 7
      %v982 = vsub.s32 0, %v981
      %v983 = vrot.slane %v978, %v982
      %vm985 = vcmask 31744
      %v987 = vsel %vm985, %v802, 0
      %v990 = vsel %vm985, %v807, 0
      %vm992 = vcmask 1043456
      %v994 = vsel %vm992, %v977, 0
      %996 = vmatprep.subr.mxu0 0.0
      %997 = vmatpush1.msra.mxu0 %v994
      %998 = vmatprep.subr.mxu0 0.0
      %999 = vmatpush1.msra.mxu0 0.0
      %1000 = vmatprep.subr.mxu0 0.0
      %1001 = vmatpush1.msra.mxu0 0.0
      %1002 = vmatprep.subr.mxu0 0.0
      %1003 = vmatpush1.msra.mxu0 0.0
      %1004 = vmatprep.subr.mxu0 0.0
      %1005 = vmatpush1.msra.mxu0 0.0
      %1006 = vmatprep.subr.mxu0 0.0
      %1007 = vmatpush1.msra.mxu0 0.0
      %1008 = vmatprep.subr.mxu0 0.0
      %1009 = vmatpush1.msra.mxu0 0.0
      %1010 = vmatprep.subr.mxu0 0.0
      %1011 = vmatpush1.msra.mxu0 0.0
      %1012 = vmatprep.subr.mxu0 0.0
      %1013 = vmatpush1.msra.mxu0 0.0
      %1014 = vmatprep.subr.mxu0 0.0
      %1015 = vmatpush1.msra.mxu0 0.0
      %1016 = vmatprep.subr.mxu0 0.0
      %1017 = vmatpush1.msra.mxu0 0.0
      %1018 = vmatprep.subr.mxu0 0.0
      %1019 = vmatpush1.msra.mxu0 0.0
      %1020 = vmatprep.subr.mxu0 0.0
      %1021 = vmatpush1.msra.mxu0 0.0
      %1022 = vmatprep.subr.mxu0 0.0
      %1023 = vmatpush1.msra.mxu0 0.0
      %1024 = vmatprep.subr.mxu0 0.0
      %1025 = vmatpush1.msra.mxu0 0.0
      %1026 = vmatprep.subr.mxu0 0.0
      %1027 = vmatpush1.msra.mxu0 0.0
      %1028 = vmatprep.subr.mxu0 0.0
      %1029 = vmatpush1.msra.mxu0 0.0
      %1030 = vmatprep.subr.mxu0 0.0
      %1031 = vmatpush1.msra.mxu0 0.0
      %1032 = vmatprep.subr.mxu0 0.0
      %1033 = vmatpush1.msra.mxu0 0.0
      %1034 = vmatprep.subr.mxu0 0.0
      %1035 = vmatpush1.msra.mxu0 0.0
      %1036 = vmatprep.subr.mxu0 0.0
      %1037 = vmatpush1.msra.mxu0 0.0
      %1038 = vmatprep.subr.mxu0 0.0
      %1039 = vmatpush1.msra.mxu0 0.0
      %1040 = vmatprep.subr.mxu0 0.0
      %1041 = vmatpush1.msra.mxu0 0.0
      %1042 = vmatprep.subr.mxu0 0.0
      %1043 = vmatpush1.msra.mxu0 0.0
      %1044 = vmatprep.subr.mxu0 0.0
      %1045 = vmatpush1.msra.mxu0 0.0
      %1046 = vmatprep.subr.mxu0 0.0
      %1047 = vmatpush1.msra.mxu0 0.0
      %1048 = vmatprep.subr.mxu0 0.0
      %1049 = vmatpush1.msra.mxu0 0.0
      %1050 = vmatprep.subr.mxu0 0.0
      %1051 = vmatpush1.msra.mxu0 0.0
      %1052 = vmatprep.subr.mxu0 0.0
      %1053 = vmatpush1.msra.mxu0 0.0
      %1054 = vmatprep.subr.mxu0 0.0
      %1055 = vmatpush1.msra.mxu0 0.0
      %1056 = vmatprep.subr.mxu0 0.0
      %1057 = vmatpush1.msra.mxu0 0.0
      %1058 = vmatprep.subr.mxu0 0.0
      %1059 = vmatpush1.msra.mxu0 0.0
      %1060 = vmatprep.mubr.f32.mxu0 0.0
      %1061 = vmatmul.mubr.f32.gmra.mrb[0].mxu0 %v987
      %v1062 = vpop.f32.mrb[0].mxu0
      %v1063 = vadd.f32 %v983, %v1062
      %v1064 = vpop.f32.mrb[0].mxu0
      %1065 = vmatprep.mubr.f32.mxu0 0.0
      %1066 = vmatmul.mubr.f32.gmra.mrb[0].mxu0 %v990
      %v1067 = vpop.f32.mrb[0].mxu0
      %v1068 = vadd.f32 %v983, %v1067
      %v1069 = vpop.f32.mrb[0].mxu0
      %1070 = vdwg.mxu0
      %vm1071 = vcmask 261120
      %1072 = vst.msk [vmem:[#allocation2] sm:$0xff] %vm1071, 0.0
      %1073 = vst.msk [vmem:[#allocation2 + $0x8] sm:$0xff] %vm1071, 0.0
      %1074 = vst.msk [vmem:[#allocation2 + $0x10] sm:$0xff] %vm1071, 0.0
      %1075 = vst.msk [vmem:[#allocation2 + $0x18] sm:$0xff] %vm1071, 0.0
      %1076 = vst.msk [vmem:[#allocation2 + $0x8] sm:$0xff] %vm1071, %v1063
      %1077 = vst.msk [vmem:[#allocation2 + $0x10] sm:$0xff] %vm1071, %v1068
      %v1078 = vld [vmem:[#allocation2 + $0x7] sm:$0xff]
      %v1079 = vld [vmem:[#allocation2 + $0xf] sm:$0xff]
      %v1080 = vld [vmem:[%s8] sm:$0xff]
      %v1081 = vld [vmem:[%s8 + $0x8] sm:$0xff]
      %v1082 = vld [vmem:[%s8 + $0x10] sm:$0xff]
      %v1083 = vld [vmem:[%s8 + $0x18] sm:$0xff]
      %v1084 = vld [vmem:[#allocation2 + $0x8] sm:$0xff]
      %v1085 = vld [vmem:[#allocation2 + $0x10] sm:$0xff]
      %s1086 = scalar_lea.vmem %s8, 32
      %v1087 = vld [vmem:[%s1086] sm:$0xff]
      %v1088 = vld [vmem:[%s1086 + $0x8] sm:$0xff]
      %v1089 = vld [vmem:[%s1086 + $0x10] sm:$0xff]
      %v1090 = vld [vmem:[%s1086 + $0x18] sm:$0xff]
      %v1092 = vsel %vm1071, %v1084, 0
      %v1095 = vsel %vm1071, %v1085, 0
      %1097 = vmatprep.subr.mxu0 0.0
      %1098 = vmatpush1.msra.mxu0 %v1087
      %1099 = vmatprep.subr.mxu0 0.0
      %1100 = vmatpush1.msra.mxu0 %v1088
      %1101 = vmatprep.subr.mxu0 0.0
      %1102 = vmatpush1.msra.mxu0 %v1089
      %1103 = vmatprep.subr.mxu0 0.0
      %1104 = vmatpush1.msra.mxu0 %v1090
      %1105 = vmatprep.subr.mxu0 0.0
      %1106 = vmatpush1.msra.mxu0 0.0
      %1107 = vmatprep.subr.mxu0 0.0
      %1108 = vmatpush1.msra.mxu0 0.0
      %1109 = vmatprep.subr.mxu0 0.0
      %1110 = vmatpush1.msra.mxu0 0.0
      %1111 = vmatprep.subr.mxu0 0.0
      %1112 = vmatpush1.msra.mxu0 0.0
      %1113 = vmatprep.subr.mxu0 0.0
      %1114 = vmatpush1.msra.mxu0 0.0
      %1115 = vmatprep.subr.mxu0 0.0
      %1116 = vmatpush1.msra.mxu0 0.0
      %1117 = vmatprep.subr.mxu0 0.0
      %1118 = vmatpush1.msra.mxu0 0.0
      %1119 = vmatprep.subr.mxu0 0.0
      %1120 = vmatpush1.msra.mxu0 0.0
      %1121 = vmatprep.subr.mxu0 0.0
      %1122 = vmatpush1.msra.mxu0 0.0
      %1123 = vmatprep.subr.mxu0 0.0
      %1124 = vmatpush1.msra.mxu0 0.0
      %1125 = vmatprep.subr.mxu0 0.0
      %1126 = vmatpush1.msra.mxu0 0.0
      %1127 = vmatprep.subr.mxu0 0.0
      %1128 = vmatpush1.msra.mxu0 0.0
      %1129 = vmatprep.subr.mxu0 0.0
      %1130 = vmatpush1.msra.mxu0 0.0
      %1131 = vmatprep.subr.mxu0 0.0
      %1132 = vmatpush1.msra.mxu0 0.0
      %1133 = vmatprep.subr.mxu0 0.0
      %1134 = vmatpush1.msra.mxu0 0.0
      %1135 = vmatprep.subr.mxu0 0.0
      %1136 = vmatpush1.msra.mxu0 0.0
      %1137 = vmatprep.subr.mxu0 0.0
      %1138 = vmatpush1.msra.mxu0 0.0
      %1139 = vmatprep.subr.mxu0 0.0
      %1140 = vmatpush1.msra.mxu0 0.0
      %1141 = vmatprep.subr.mxu0 0.0
      %1142 = vmatpush1.msra.mxu0 0.0
      %1143 = vmatprep.subr.mxu0 0.0
      %1144 = vmatpush1.msra.mxu0 0.0
      %1145 = vmatprep.subr.mxu0 0.0
      %1146 = vmatpush1.msra.mxu0 0.0
      %1147 = vmatprep.subr.mxu0 0.0
      %1148 = vmatpush1.msra.mxu0 0.0
      %1149 = vmatprep.subr.mxu0 0.0
      %1150 = vmatpush1.msra.mxu0 0.0
      %1151 = vmatprep.subr.mxu0 0.0
      %1152 = vmatpush1.msra.mxu0 0.0
      %1153 = vmatprep.subr.mxu0 0.0
      %1154 = vmatpush1.msra.mxu0 0.0
      %1155 = vmatprep.subr.mxu0 0.0
      %1156 = vmatpush1.msra.mxu0 0.0
      %1157 = vmatprep.subr.mxu0 0.0
      %1158 = vmatpush1.msra.mxu0 0.0
      %1159 = vmatprep.subr.mxu0 0.0
      %1160 = vmatpush1.msra.mxu0 0.0
      %1161 = vmatprep.mubr.f32.mxu0 0.0
      %1162 = vmatmul.mubr.f32.gmra.mrb[0].mxu0 %v1092
      %v1163 = vpop.f32.mrb[0].mxu0
      %v1164 = vadd.f32 0.0, %v1163
      %v1165 = vpop.f32.mrb[0].mxu0
      %1166 = vmatprep.mubr.f32.mxu0 0.0
      %1167 = vmatmul.mubr.f32.gmra.mrb[0].mxu0 %v1095
      %v1168 = vpop.f32.mrb[0].mxu0
      %v1169 = vadd.f32 0.0, %v1168
      %v1170 = vpop.f32.mrb[0].mxu0
      %1171 = vdwg.mxu0
      %v1173 = vsel %vm1071, %v1078, 0
      %v1176 = vsel %vm1071, %v1079, 0
      %1178 = vmatprep.subr.mxu0 0.0
      %1179 = vmatpush1.msra.mxu0 %v1080
      %1180 = vmatprep.subr.mxu0 0.0
      %1181 = vmatpush1.msra.mxu0 %v1081
      %1182 = vmatprep.subr.mxu0 0.0
      %1183 = vmatpush1.msra.mxu0 %v1082
      %1184 = vmatprep.subr.mxu0 0.0
      %1185 = vmatpush1.msra.mxu0 %v1083
      %1186 = vmatprep.subr.mxu0 0.0
      %1187 = vmatpush1.msra.mxu0 0.0
      %1188 = vmatprep.subr.mxu0 0.0
      %1189 = vmatpush1.msra.mxu0 0.0
      %1190 = vmatprep.subr.mxu0 0.0
      %1191 = vmatpush1.msra.mxu0 0.0
      %1192 = vmatprep.subr.mxu0 0.0
      %1193 = vmatpush1.msra.mxu0 0.0
      %1194 = vmatprep.subr.mxu0 0.0
      %1195 = vmatpush1.msra.mxu0 0.0
      %1196 = vmatprep.subr.mxu0 0.0
      %1197 = vmatpush1.msra.mxu0 0.0
      %1198 = vmatprep.subr.mxu0 0.0
      %1199 = vmatpush1.msra.mxu0 0.0
      %1200 = vmatprep.subr.mxu0 0.0
      %1201 = vmatpush1.msra.mxu0 0.0
      %1202 = vmatprep.subr.mxu0 0.0
      %1203 = vmatpush1.msra.mxu0 0.0
      %1204 = vmatprep.subr.mxu0 0.0
      %1205 = vmatpush1.msra.mxu0 0.0
      %1206 = vmatprep.subr.mxu0 0.0
      %1207 = vmatpush1.msra.mxu0 0.0
      %1208 = vmatprep.subr.mxu0 0.0
      %1209 = vmatpush1.msra.mxu0 0.0
      %1210 = vmatprep.subr.mxu0 0.0
      %1211 = vmatpush1.msra.mxu0 0.0
      %1212 = vmatprep.subr.mxu0 0.0
      %1213 = vmatpush1.msra.mxu0 0.0
      %1214 = vmatprep.subr.mxu0 0.0
      %1215 = vmatpush1.msra.mxu0 0.0
      %1216 = vmatprep.subr.mxu0 0.0
      %1217 = vmatpush1.msra.mxu0 0.0
      %1218 = vmatprep.subr.mxu0 0.0
      %1219 = vmatpush1.msra.mxu0 0.0
      %1220 = vmatprep.subr.mxu0 0.0
      %1221 = vmatpush1.msra.mxu0 0.0
      %1222 = vmatprep.subr.mxu0 0.0
      %1223 = vmatpush1.msra.mxu0 0.0
      %1224 = vmatprep.subr.mxu0 0.0
      %1225 = vmatpush1.msra.mxu0 0.0
      %1226 = vmatprep.subr.mxu0 0.0
      %1227 = vmatpush1.msra.mxu0 0.0
      %1228 = vmatprep.subr.mxu0 0.0
      %1229 = vmatpush1.msra.mxu0 0.0
      %1230 = vmatprep.subr.mxu0 0.0
      %1231 = vmatpush1.msra.mxu0 0.0
      %1232 = vmatprep.subr.mxu0 0.0
      %1233 = vmatpush1.msra.mxu0 0.0
      %1234 = vmatprep.subr.mxu0 0.0
      %1235 = vmatpush1.msra.mxu0 0.0
      %1236 = vmatprep.subr.mxu0 0.0
      %1237 = vmatpush1.msra.mxu0 0.0
      %1238 = vmatprep.subr.mxu0 0.0
      %1239 = vmatpush1.msra.mxu0 0.0
      %1240 = vmatprep.subr.mxu0 0.0
      %1241 = vmatpush1.msra.mxu0 0.0
      %1242 = vmatprep.mubr.f32.mxu0 0.0
      %1243 = vmatmul.mubr.f32.gmra.mrb[0].mxu0 %v1173
      %v1244 = vpop.f32.mrb[0].mxu0
      %v1245 = vadd.f32 %v1164, %v1244
      %v1246 = vpop.f32.mrb[0].mxu0
      %1247 = vmatprep.mubr.f32.mxu0 0.0
      %1248 = vmatmul.mubr.f32.gmra.mrb[0].mxu0 %v1176
      %v1249 = vpop.f32.mrb[0].mxu0
      %v1250 = vadd.f32 %v1169, %v1249
      %v1251 = vpop.f32.mrb[0].mxu0
      %1252 = vdwg.mxu0
      %v1253 = vld [vmem:[#allocation2 + $0x9] sm:$0xff]
      %v1254 = vld [vmem:[#allocation2 + $0x11] sm:$0xff]
      %s1255 = scalar_lea.vmem %s8, 64
      %v1256 = vld [vmem:[%s1255] sm:$0xff]
      %v1257 = vld [vmem:[%s1255 + $0x8] sm:$0xff]
      %v1258 = vld [vmem:[%s1255 + $0x10] sm:$0xff]
      %v1259 = vld [vmem:[%s1255 + $0x18] sm:$0xff]
      %v1261 = vsel %vm1071, %v1253, 0
      %v1264 = vsel %vm1071, %v1254, 0
      %1266 = vmatprep.subr.mxu0 0.0
      %1267 = vmatpush1.msra.mxu0 %v1256
      %1268 = vmatprep.subr.mxu0 0.0
      %1269 = vmatpush1.msra.mxu0 %v1257
      %1270 = vmatprep.subr.mxu0 0.0
      %1271 = vmatpush1.msra.mxu0 %v1258
      %1272 = vmatprep.subr.mxu0 0.0
      %1273 = vmatpush1.msra.mxu0 %v1259
      %1274 = vmatprep.subr.mxu0 0.0
      %1275 = vmatpush1.msra.mxu0 0.0
      %1276 = vmatprep.subr.mxu0 0.0
      %1277 = vmatpush1.msra.mxu0 0.0
      %1278 = vmatprep.subr.mxu0 0.0
      %1279 = vmatpush1.msra.mxu0 0.0
      %1280 = vmatprep.subr.mxu0 0.0
      %1281 = vmatpush1.msra.mxu0 0.0
      %1282 = vmatprep.subr.mxu0 0.0
      %1283 = vmatpush1.msra.mxu0 0.0
      %1284 = vmatprep.subr.mxu0 0.0
      %1285 = vmatpush1.msra.mxu0 0.0
      %1286 = vmatprep.subr.mxu0 0.0
      %1287 = vmatpush1.msra.mxu0 0.0
      %1288 = vmatprep.subr.mxu0 0.0
      %1289 = vmatpush1.msra.mxu0 0.0
      %1290 = vmatprep.subr.mxu0 0.0
      %1291 = vmatpush1.msra.mxu0 0.0
      %1292 = vmatprep.subr.mxu0 0.0
      %1293 = vmatpush1.msra.mxu0 0.0
      %1294 = vmatprep.subr.mxu0 0.0
      %1295 = vmatpush1.msra.mxu0 0.0
      %1296 = vmatprep.subr.mxu0 0.0
      %1297 = vmatpush1.msra.mxu0 0.0
      %1298 = vmatprep.subr.mxu0 0.0
      %1299 = vmatpush1.msra.mxu0 0.0
      %1300 = vmatprep.subr.mxu0 0.0
      %1301 = vmatpush1.msra.mxu0 0.0
      %1302 = vmatprep.subr.mxu0 0.0
      %1303 = vmatpush1.msra.mxu0 0.0
      %1304 = vmatprep.subr.mxu0 0.0
      %1305 = vmatpush1.msra.mxu0 0.0
      %1306 = vmatprep.subr.mxu0 0.0
      %1307 = vmatpush1.msra.mxu0 0.0
      %1308 = vmatprep.subr.mxu0 0.0
      %1309 = vmatpush1.msra.mxu0 0.0
      %1310 = vmatprep.subr.mxu0 0.0
      %1311 = vmatpush1.msra.mxu0 0.0
      %1312 = vmatprep.subr.mxu0 0.0
      %1313 = vmatpush1.msra.mxu0 0.0
      %1314 = vmatprep.subr.mxu0 0.0
      %1315 = vmatpush1.msra.mxu0 0.0
      %1316 = vmatprep.subr.mxu0 0.0
      %1317 = vmatpush1.msra.mxu0 0.0
      %1318 = vmatprep.subr.mxu0 0.0
      %1319 = vmatpush1.msra.mxu0 0.0
      %1320 = vmatprep.subr.mxu0 0.0
      %1321 = vmatpush1.msra.mxu0 0.0
      %1322 = vmatprep.subr.mxu0 0.0
      %1323 = vmatpush1.msra.mxu0 0.0
      %1324 = vmatprep.subr.mxu0 0.0
      %1325 = vmatpush1.msra.mxu0 0.0
      %1326 = vmatprep.subr.mxu0 0.0
      %1327 = vmatpush1.msra.mxu0 0.0
      %1328 = vmatprep.subr.mxu0 0.0
      %1329 = vmatpush1.msra.mxu0 0.0
      %1330 = vmatprep.mubr.f32.mxu0 0.0
      %1331 = vmatmul.mubr.f32.gmra.mrb[0].mxu0 %v1261
      %v1332 = vpop.f32.mrb[0].mxu0
      %v1333 = vadd.f32 0.0, %v1332
      %v1334 = vpop.f32.mrb[0].mxu0
      %1335 = vmatprep.mubr.f32.mxu0 0.0
      %1336 = vmatmul.mubr.f32.gmra.mrb[0].mxu0 %v1264
      %v1337 = vpop.f32.mrb[0].mxu0
      %v1338 = vadd.f32 0.0, %v1337
      %v1339 = vpop.f32.mrb[0].mxu0
      %1340 = vdwg.mxu0
      %v1341 = vadd.f32 %v1245, %v1333
      %v1342 = vadd.f32 %v1250, %v1338
      %v1343 = vld [vmem:[%s9] sm:$0x1]
      %v1345 = vlaneseq
      %v1346 = vshrl.u32 %v1345, 7
      %v1347 = vsub.s32 0, %v1346
      %v1348 = vrot.slane %v1343, %v1347
      %v1350 = vadd.f32 %v1341, %v1348
      %v1351 = vadd.f32 %v1342, %v1348
      %v1352 = vadd.f32 %v1350, %v969
      %v1353 = vadd.f32 %v1351, %v974
      %v1354 = vtanh.pop %v1352
      %v1355 = vtanh.pop %v1353
      %v1356 = vxor.u32 %v1352, 2147483648
      %v1357 = vxor.u32 %v1353, 2147483648
      %v1358 = vmul.f32 %v1356, 1.442695
      %v1359 = vpow.pop %v1358
      %v1360 = vmul.f32 %v1357, 1.442695
      %v1361 = vpow.pop %v1360
      %v1362 = vadd.f32 %v1359, 1.0
      %v1363 = vadd.f32 %v1361, 1.0
      %v1364 = vrcp.pop %v1362
      %v1365 = vmul.f32 1.0, %v1364
      %v1366 = vrcp.pop %v1363
      %v1367 = vmul.f32 1.0, %v1366
      %1370 = vrot.lane.b32.xlu0 %v1365, 96
      %v1371 = vpop.permute.xlu0 %1370
      %1372 = vrot.lane.b32.xlu0 %v1367, 96
      %v1373 = vpop.permute.xlu0 %1372
      %v1376 = vmul.f32 %v1354, %v1371
      %v1377 = vmul.f32 %v1355, %v1373
      %v1378 = vld [vmem:[%s10] sm:$0xff]
      %v1379 = vld [vmem:[%s10 + $0x8] sm:$0xff]
      %v1380 = vld [vmem:[%s10 + $0x10] sm:$0xff]
      %v1381 = vld [vmem:[%s10 + $0x18] sm:$0xff]
      %v1382 = vld [vmem:[%s11] sm:$0x1]
      %v1384 = vlaneseq
      %v1385 = vshrl.u32 %v1384, 7
      %v1386 = vsub.s32 0, %v1385
      %v1387 = vrot.slane %v1382, %v1386
      %v1390 = vsel %vm1071, %v1376, 0
      %v1393 = vsel %vm1071, %v1377, 0
      %1395 = vmatprep.subr.mxu0 0.0
      %1396 = vmatpush1.msra.mxu0 %v1378
      %1397 = vmatprep.subr.mxu0 0.0
      %1398 = vmatpush1.msra.mxu0 %v1379
      %1399 = vmatprep.subr.mxu0 0.0
      %1400 = vmatpush1.msra.mxu0 %v1380
      %1401 = vmatprep.subr.mxu0 0.0
      %1402 = vmatpush1.msra.mxu0 %v1381
      %1403 = vmatprep.subr.mxu0 0.0
      %1404 = vmatpush1.msra.mxu0 0.0
      %1405 = vmatprep.subr.mxu0 0.0
      %1406 = vmatpush1.msra.mxu0 0.0
      %1407 = vmatprep.subr.mxu0 0.0
      %1408 = vmatpush1.msra.mxu0 0.0
      %1409 = vmatprep.subr.mxu0 0.0
      %1410 = vmatpush1.msra.mxu0 0.0
      %1411 = vmatprep.subr.mxu0 0.0
      %1412 = vmatpush1.msra.mxu0 0.0
      %1413 = vmatprep.subr.mxu0 0.0
      %1414 = vmatpush1.msra.mxu0 0.0
      %1415 = vmatprep.subr.mxu0 0.0
      %1416 = vmatpush1.msra.mxu0 0.0
      %1417 = vmatprep.subr.mxu0 0.0
      %1418 = vmatpush1.msra.mxu0 0.0
      %1419 = vmatprep.subr.mxu0 0.0
      %1420 = vmatpush1.msra.mxu0 0.0
      %1421 = vmatprep.subr.mxu0 0.0
      %1422 = vmatpush1.msra.mxu0 0.0
      %1423 = vmatprep.subr.mxu0 0.0
      %1424 = vmatpush1.msra.mxu0 0.0
      %1425 = vmatprep.subr.mxu0 0.0
      %1426 = vmatpush1.msra.mxu0 0.0
      %1427 = vmatprep.subr.mxu0 0.0
      %1428 = vmatpush1.msra.mxu0 0.0
      %1429 = vmatprep.subr.mxu0 0.0
      %1430 = vmatpush1.msra.mxu0 0.0
      %1431 = vmatprep.subr.mxu0 0.0
      %1432 = vmatpush1.msra.mxu0 0.0
      %1433 = vmatprep.subr.mxu0 0.0
      %1434 = vmatpush1.msra.mxu0 0.0
      %1435 = vmatprep.subr.mxu0 0.0
      %1436 = vmatpush1.msra.mxu0 0.0
      %1437 = vmatprep.subr.mxu0 0.0
      %1438 = vmatpush1.msra.mxu0 0.0
      %1439 = vmatprep.subr.mxu0 0.0
      %1440 = vmatpush1.msra.mxu0 0.0
      %1441 = vmatprep.subr.mxu0 0.0
      %1442 = vmatpush1.msra.mxu0 0.0
      %1443 = vmatprep.subr.mxu0 0.0
      %1444 = vmatpush1.msra.mxu0 0.0
      %1445 = vmatprep.subr.mxu0 0.0
      %1446 = vmatpush1.msra.mxu0 0.0
      %1447 = vmatprep.subr.mxu0 0.0
      %1448 = vmatpush1.msra.mxu0 0.0
      %1449 = vmatprep.subr.mxu0 0.0
      %1450 = vmatpush1.msra.mxu0 0.0
      %1451 = vmatprep.subr.mxu0 0.0
      %1452 = vmatpush1.msra.mxu0 0.0
      %1453 = vmatprep.subr.mxu0 0.0
      %1454 = vmatpush1.msra.mxu0 0.0
      %1455 = vmatprep.subr.mxu0 0.0
      %1456 = vmatpush1.msra.mxu0 0.0
      %1457 = vmatprep.subr.mxu0 0.0
      %1458 = vmatpush1.msra.mxu0 0.0
      %1459 = vmatprep.mubr.f32.mxu0 0.0
      %1460 = vmatmul.mubr.f32.gmra.mrb[0].mxu0 %v1390
      %v1461 = vpop.f32.mrb[0].mxu0
      %v1462 = vadd.f32 %v1387, %v1461
      %v1463 = vpop.f32.mrb[0].mxu0
      %1464 = vmatprep.mubr.f32.mxu0 0.0
      %1465 = vmatmul.mubr.f32.gmra.mrb[0].mxu0 %v1393
      %v1466 = vpop.f32.mrb[0].mxu0
      %v1467 = vadd.f32 %v1387, %v1466
      %v1468 = vpop.f32.mrb[0].mxu0
      %1469 = vdwg.mxu0
      %v1470 = vadd.f32 %v1063, %v1462
      %v1471 = vadd.f32 %v1068, %v1467
      %1472 = vst.msk [vmem:[#allocation2 + $0x8] sm:$0xff] %vm1071, %v1470
      %1473 = vst.msk [vmem:[#allocation2 + $0x10] sm:$0xff] %vm1071, %v1471
      %v1474 = vadd.f32 %v1462, 0.0
      %v1475 = vadd.f32 %v1467, 0.0
      %v1476 = vld [vmem:[#allocation2 + $0x6] sm:$0xff]
      %v1477 = vld [vmem:[#allocation2 + $0xe] sm:$0xff]
      %v1478 = vld [vmem:[%s12] sm:$0xff]
      %v1479 = vld [vmem:[%s12 + $0x8] sm:$0xff]
      %v1480 = vld [vmem:[%s12 + $0x10] sm:$0xff]
      %v1481 = vld [vmem:[%s12 + $0x18] sm:$0xff]
      %v1482 = vld [vmem:[#allocation2 + $0x8] sm:$0xff]
      %v1483 = vld [vmem:[#allocation2 + $0x10] sm:$0xff]
      %s1484 = scalar_lea.vmem %s12, 32
      %v1485 = vld [vmem:[%s1484] sm:$0xff]
      %v1486 = vld [vmem:[%s1484 + $0x8] sm:$0xff]
      %v1487 = vld [vmem:[%s1484 + $0x10] sm:$0xff]
      %v1488 = vld [vmem:[%s1484 + $0x18] sm:$0xff]
      %v1490 = vsel %vm1071, %v1482, 0
      %v1493 = vsel %vm1071, %v1483, 0
      %1495 = vmatprep.subr.mxu0 0.0
      %1496 = vmatpush1.msra.mxu0 %v1485
      %1497 = vmatprep.subr.mxu0 0.0
      %1498 = vmatpush1.msra.mxu0 %v1486
      %1499 = vmatprep.subr.mxu0 0.0
      %1500 = vmatpush1.msra.mxu0 %v1487
      %1501 = vmatprep.subr.mxu0 0.0
      %1502 = vmatpush1.msra.mxu0 %v1488
      %1503 = vmatprep.subr.mxu0 0.0
      %1504 = vmatpush1.msra.mxu0 0.0
      %1505 = vmatprep.subr.mxu0 0.0
      %1506 = vmatpush1.msra.mxu0 0.0
      %1507 = vmatprep.subr.mxu0 0.0
      %1508 = vmatpush1.msra.mxu0 0.0
      %1509 = vmatprep.subr.mxu0 0.0
      %1510 = vmatpush1.msra.mxu0 0.0
      %1511 = vmatprep.subr.mxu0 0.0
      %1512 = vmatpush1.msra.mxu0 0.0
      %1513 = vmatprep.subr.mxu0 0.0
      %1514 = vmatpush1.msra.mxu0 0.0
      %1515 = vmatprep.subr.mxu0 0.0
      %1516 = vmatpush1.msra.mxu0 0.0
      %1517 = vmatprep.subr.mxu0 0.0
      %1518 = vmatpush1.msra.mxu0 0.0
      %1519 = vmatprep.subr.mxu0 0.0
      %1520 = vmatpush1.msra.mxu0 0.0
      %1521 = vmatprep.subr.mxu0 0.0
      %1522 = vmatpush1.msra.mxu0 0.0
      %1523 = vmatprep.subr.mxu0 0.0
      %1524 = vmatpush1.msra.mxu0 0.0
      %1525 = vmatprep.subr.mxu0 0.0
      %1526 = vmatpush1.msra.mxu0 0.0
      %1527 = vmatprep.subr.mxu0 0.0
      %1528 = vmatpush1.msra.mxu0 0.0
      %1529 = vmatprep.subr.mxu0 0.0
      %1530 = vmatpush1.msra.mxu0 0.0
      %1531 = vmatprep.subr.mxu0 0.0
      %1532 = vmatpush1.msra.mxu0 0.0
      %1533 = vmatprep.subr.mxu0 0.0
      %1534 = vmatpush1.msra.mxu0 0.0
      %1535 = vmatprep.subr.mxu0 0.0
      %1536 = vmatpush1.msra.mxu0 0.0
      %1537 = vmatprep.subr.mxu0 0.0
      %1538 = vmatpush1.msra.mxu0 0.0
      %1539 = vmatprep.subr.mxu0 0.0
      %1540 = vmatpush1.msra.mxu0 0.0
      %1541 = vmatprep.subr.mxu0 0.0
      %1542 = vmatpush1.msra.mxu0 0.0
      %1543 = vmatprep.subr.mxu0 0.0
      %1544 = vmatpush1.msra.mxu0 0.0
      %1545 = vmatprep.subr.mxu0 0.0
      %1546 = vmatpush1.msra.mxu0 0.0
      %1547 = vmatprep.subr.mxu0 0.0
      %1548 = vmatpush1.msra.mxu0 0.0
      %1549 = vmatprep.subr.mxu0 0.0
      %1550 = vmatpush1.msra.mxu0 0.0
      %1551 = vmatprep.subr.mxu0 0.0
      %1552 = vmatpush1.msra.mxu0 0.0
      %1553 = vmatprep.subr.mxu0 0.0
      %1554 = vmatpush1.msra.mxu0 0.0
      %1555 = vmatprep.subr.mxu0 0.0
      %1556 = vmatpush1.msra.mxu0 0.0
      %1557 = vmatprep.subr.mxu0 0.0
      %1558 = vmatpush1.msra.mxu0 0.0
      %1559 = vmatprep.mubr.f32.mxu0 0.0
      %1560 = vmatmul.mubr.f32.gmra.mrb[0].mxu0 %v1490
      %v1561 = vpop.f32.mrb[0].mxu0
      %v1562 = vadd.f32 0.0, %v1561
      %v1563 = vpop.f32.mrb[0].mxu0
      %1564 = vmatprep.mubr.f32.mxu0 0.0
      %1565 = vmatmul.mubr.f32.gmra.mrb[0].mxu0 %v1493
      %v1566 = vpop.f32.mrb[0].mxu0
      %v1567 = vadd.f32 0.0, %v1566
      %v1568 = vpop.f32.mrb[0].mxu0
      %1569 = vdwg.mxu0
      %v1571 = vsel %vm1071, %v1476, 0
      %v1574 = vsel %vm1071, %v1477, 0
      %1576 = vmatprep.subr.mxu0 0.0
      %1577 = vmatpush1.msra.mxu0 %v1478
      %1578 = vmatprep.subr.mxu0 0.0
      %1579 = vmatpush1.msra.mxu0 %v1479
      %1580 = vmatprep.subr.mxu0 0.0
      %1581 = vmatpush1.msra.mxu0 %v1480
      %1582 = vmatprep.subr.mxu0 0.0
      %1583 = vmatpush1.msra.mxu0 %v1481
      %1584 = vmatprep.subr.mxu0 0.0
      %1585 = vmatpush1.msra.mxu0 0.0
      %1586 = vmatprep.subr.mxu0 0.0
      %1587 = vmatpush1.msra.mxu0 0.0
      %1588 = vmatprep.subr.mxu0 0.0
      %1589 = vmatpush1.msra.mxu0 0.0
      %1590 = vmatprep.subr.mxu0 0.0
      %1591 = vmatpush1.msra.mxu0 0.0
      %1592 = vmatprep.subr.mxu0 0.0
      %1593 = vmatpush1.msra.mxu0 0.0
      %1594 = vmatprep.subr.mxu0 0.0
      %1595 = vmatpush1.msra.mxu0 0.0
      %1596 = vmatprep.subr.mxu0 0.0
      %1597 = vmatpush1.msra.mxu0 0.0
      %1598 = vmatprep.subr.mxu0 0.0
      %1599 = vmatpush1.msra.mxu0 0.0
      %1600 = vmatprep.subr.mxu0 0.0
      %1601 = vmatpush1.msra.mxu0 0.0
      %1602 = vmatprep.subr.mxu0 0.0
      %1603 = vmatpush1.msra.mxu0 0.0
      %1604 = vmatprep.subr.mxu0 0.0
      %1605 = vmatpush1.msra.mxu0 0.0
      %1606 = vmatprep.subr.mxu0 0.0
      %1607 = vmatpush1.msra.mxu0 0.0
      %1608 = vmatprep.subr.mxu0 0.0
      %1609 = vmatpush1.msra.mxu0 0.0
      %1610 = vmatprep.subr.mxu0 0.0
      %1611 = vmatpush1.msra.mxu0 0.0
      %1612 = vmatprep.subr.mxu0 0.0
      %1613 = vmatpush1.msra.mxu0 0.0
      %1614 = vmatprep.subr.mxu0 0.0
      %1615 = vmatpush1.msra.mxu0 0.0
      %1616 = vmatprep.subr.mxu0 0.0
      %1617 = vmatpush1.msra.mxu0 0.0
      %1618 = vmatprep.subr.mxu0 0.0
      %1619 = vmatpush1.msra.mxu0 0.0
      %1620 = vmatprep.subr.mxu0 0.0
      %1621 = vmatpush1.msra.mxu0 0.0
      %1622 = vmatprep.subr.mxu0 0.0
      %1623 = vmatpush1.msra.mxu0 0.0
      %1624 = vmatprep.subr.mxu0 0.0
      %1625 = vmatpush1.msra.mxu0 0.0
      %1626 = vmatprep.subr.mxu0 0.0
      %1627 = vmatpush1.msra.mxu0 0.0
      %1628 = vmatprep.subr.mxu0 0.0
      %1629 = vmatpush1.msra.mxu0 0.0
      %1630 = vmatprep.subr.mxu0 0.0
      %1631 = vmatpush1.msra.mxu0 0.0
      %1632 = vmatprep.subr.mxu0 0.0
      %1633 = vmatpush1.msra.mxu0 0.0
      %1634 = vmatprep.subr.mxu0 0.0
      %1635 = vmatpush1.msra.mxu0 0.0
      %1636 = vmatprep.subr.mxu0 0.0
      %1637 = vmatpush1.msra.mxu0 0.0
      %1638 = vmatprep.subr.mxu0 0.0
      %1639 = vmatpush1.msra.mxu0 0.0
      %1640 = vmatprep.mubr.f32.mxu0 0.0
      %1641 = vmatmul.mubr.f32.gmra.mrb[0].mxu0 %v1571
      %v1642 = vpop.f32.mrb[0].mxu0
      %v1643 = vadd.f32 %v1562, %v1642
      %v1644 = vpop.f32.mrb[0].mxu0
      %1645 = vmatprep.mubr.f32.mxu0 0.0
      %1646 = vmatmul.mubr.f32.gmra.mrb[0].mxu0 %v1574
      %v1647 = vpop.f32.mrb[0].mxu0
      %v1648 = vadd.f32 %v1567, %v1647
      %v1649 = vpop.f32.mrb[0].mxu0
      %1650 = vdwg.mxu0
      %v1651 = vld [vmem:[#allocation2 + $0xa] sm:$0xff]
      %v1652 = vld [vmem:[#allocation2 + $0x12] sm:$0xff]
      %s1653 = scalar_lea.vmem %s12, 64
      %v1654 = vld [vmem:[%s1653] sm:$0xff]
      %v1655 = vld [vmem:[%s1653 + $0x8] sm:$0xff]
      %v1656 = vld [vmem:[%s1653 + $0x10] sm:$0xff]
      %v1657 = vld [vmem:[%s1653 + $0x18] sm:$0xff]
      %v1659 = vsel %vm1071, %v1651, 0
      %v1662 = vsel %vm1071, %v1652, 0
      %1664 = vmatprep.subr.mxu0 0.0
      %1665 = vmatpush1.msra.mxu0 %v1654
      %1666 = vmatprep.subr.mxu0 0.0
      %1667 = vmatpush1.msra.mxu0 %v1655
      %1668 = vmatprep.subr.mxu0 0.0
      %1669 = vmatpush1.msra.mxu0 %v1656
      %1670 = vmatprep.subr.mxu0 0.0
      %1671 = vmatpush1.msra.mxu0 %v1657
      %1672 = vmatprep.subr.mxu0 0.0
      %1673 = vmatpush1.msra.mxu0 0.0
      %1674 = vmatprep.subr.mxu0 0.0
      %1675 = vmatpush1.msra.mxu0 0.0
      %1676 = vmatprep.subr.mxu0 0.0
      %1677 = vmatpush1.msra.mxu0 0.0
      %1678 = vmatprep.subr.mxu0 0.0
      %1679 = vmatpush1.msra.mxu0 0.0
      %1680 = vmatprep.subr.mxu0 0.0
      %1681 = vmatpush1.msra.mxu0 0.0
      %1682 = vmatprep.subr.mxu0 0.0
      %1683 = vmatpush1.msra.mxu0 0.0
      %1684 = vmatprep.subr.mxu0 0.0
      %1685 = vmatpush1.msra.mxu0 0.0
      %1686 = vmatprep.subr.mxu0 0.0
      %1687 = vmatpush1.msra.mxu0 0.0
      %1688 = vmatprep.subr.mxu0 0.0
      %1689 = vmatpush1.msra.mxu0 0.0
      %1690 = vmatprep.subr.mxu0 0.0
      %1691 = vmatpush1.msra.mxu0 0.0
      %1692 = vmatprep.subr.mxu0 0.0
      %1693 = vmatpush1.msra.mxu0 0.0
      %1694 = vmatprep.subr.mxu0 0.0
      %1695 = vmatpush1.msra.mxu0 0.0
      %1696 = vmatprep.subr.mxu0 0.0
      %1697 = vmatpush1.msra.mxu0 0.0
      %1698 = vmatprep.subr.mxu0 0.0
      %1699 = vmatpush1.msra.mxu0 0.0
      %1700 = vmatprep.subr.mxu0 0.0
      %1701 = vmatpush1.msra.mxu0 0.0
      %1702 = vmatprep.subr.mxu0 0.0
      %1703 = vmatpush1.msra.mxu0 0.0
      %1704 = vmatprep.subr.mxu0 0.0
      %1705 = vmatpush1.msra.mxu0 0.0
      %1706 = vmatprep.subr.mxu0 0.0
      %1707 = vmatpush1.msra.mxu0 0.0
      %1708 = vmatprep.subr.mxu0 0.0
      %1709 = vmatpush1.msra.mxu0 0.0
      %1710 = vmatprep.subr.mxu0 0.0
      %1711 = vmatpush1.msra.mxu0 0.0
      %1712 = vmatprep.subr.mxu0 0.0
      %1713 = vmatpush1.msra.mxu0 0.0
      %1714 = vmatprep.subr.mxu0 0.0
      %1715 = vmatpush1.msra.mxu0 0.0
      %1716 = vmatprep.subr.mxu0 0.0
      %1717 = vmatpush1.msra.mxu0 0.0
      %1718 = vmatprep.subr.mxu0 0.0
      %1719 = vmatpush1.msra.mxu0 0.0
      %1720 = vmatprep.subr.mxu0 0.0
      %1721 = vmatpush1.msra.mxu0 0.0
      %1722 = vmatprep.subr.mxu0 0.0
      %1723 = vmatpush1.msra.mxu0 0.0
      %1724 = vmatprep.subr.mxu0 0.0
      %1725 = vmatpush1.msra.mxu0 0.0
      %1726 = vmatprep.subr.mxu0 0.0
      %1727 = vmatpush1.msra.mxu0 0.0
      %1728 = vmatprep.mubr.f32.mxu0 0.0
      %1729 = vmatmul.mubr.f32.gmra.mrb[0].mxu0 %v1659
      %v1730 = vpop.f32.mrb[0].mxu0
      %v1731 = vadd.f32 0.0, %v1730
      %v1732 = vpop.f32.mrb[0].mxu0
      %1733 = vmatprep.mubr.f32.mxu0 0.0
      %1734 = vmatmul.mubr.f32.gmra.mrb[0].mxu0 %v1662
      %v1735 = vpop.f32.mrb[0].mxu0
      %v1736 = vadd.f32 0.0, %v1735
      %v1737 = vpop.f32.mrb[0].mxu0
      %1738 = vdwg.mxu0
      %v1739 = vadd.f32 %v1643, %v1731
      %v1740 = vadd.f32 %v1648, %v1736
      %v1741 = vld [vmem:[%s13] sm:$0x1]
      %v1743 = vlaneseq
      %v1744 = vshrl.u32 %v1743, 7
      %v1745 = vsub.s32 0, %v1744
      %v1746 = vrot.slane %v1741, %v1745
      %v1748 = vadd.f32 %v1739, %v1746
      %v1749 = vadd.f32 %v1740, %v1746
      %1752 = vrot.lane.b32.xlu0 %v969, 64
      %v1753 = vpop.permute.xlu0 %1752
      %1754 = vrot.lane.b32.xlu0 %v974, 64
      %v1755 = vpop.permute.xlu0 %1754
      %v1758 = vadd.f32 %v1748, %v1753
      %v1759 = vadd.f32 %v1749, %v1755
      %v1760 = vtanh.pop %v1758
      %v1761 = vtanh.pop %v1759
      %v1762 = vxor.u32 %v1758, 2147483648
      %v1763 = vxor.u32 %v1759, 2147483648
      %v1764 = vmul.f32 %v1762, 1.442695
      %v1765 = vpow.pop %v1764
      %v1766 = vmul.f32 %v1763, 1.442695
      %v1767 = vpow.pop %v1766
      %v1768 = vadd.f32 %v1765, 1.0
      %v1769 = vadd.f32 %v1767, 1.0
      %v1770 = vrcp.pop %v1768
      %v1771 = vmul.f32 1.0, %v1770
      %v1772 = vrcp.pop %v1769
      %v1773 = vmul.f32 1.0, %v1772
      %1776 = vrot.lane.b32.xlu0 %v1771, 96
      %v1777 = vpop.permute.xlu0 %1776
      %1778 = vrot.lane.b32.xlu0 %v1773, 96
      %v1779 = vpop.permute.xlu0 %1778
      %v1782 = vmul.f32 %v1760, %v1777
      %v1783 = vmul.f32 %v1761, %v1779
      %v1784 = vld [vmem:[%s14] sm:$0xff]
      %v1785 = vld [vmem:[%s14 + $0x8] sm:$0xff]
      %v1786 = vld [vmem:[%s14 + $0x10] sm:$0xff]
      %v1787 = vld [vmem:[%s14 + $0x18] sm:$0xff]
      %v1788 = vld [vmem:[%s15] sm:$0x1]
      %v1790 = vlaneseq
      %v1791 = vshrl.u32 %v1790, 7
      %v1792 = vsub.s32 0, %v1791
      %v1793 = vrot.slane %v1788, %v1792
      %v1796 = vsel %vm1071, %v1782, 0
      %v1799 = vsel %vm1071, %v1783, 0
      %1801 = vmatprep.subr.mxu0 0.0
      %1802 = vmatpush1.msra.mxu0 %v1784
      %1803 = vmatprep.subr.mxu0 0.0
      %1804 = vmatpush1.msra.mxu0 %v1785
      %1805 = vmatprep.subr.mxu0 0.0
      %1806 = vmatpush1.msra.mxu0 %v1786
      %1807 = vmatprep.subr.mxu0 0.0
      %1808 = vmatpush1.msra.mxu0 %v1787
      %1809 = vmatprep.subr.mxu0 0.0
      %1810 = vmatpush1.msra.mxu0 0.0
      %1811 = vmatprep.subr.mxu0 0.0
      %1812 = vmatpush1.msra.mxu0 0.0
      %1813 = vmatprep.subr.mxu0 0.0
      %1814 = vmatpush1.msra.mxu0 0.0
      %1815 = vmatprep.subr.mxu0 0.0
      %1816 = vmatpush1.msra.mxu0 0.0
      %1817 = vmatprep.subr.mxu0 0.0
      %1818 = vmatpush1.msra.mxu0 0.0
      %1819 = vmatprep.subr.mxu0 0.0
      %1820 = vmatpush1.msra.mxu0 0.0
      %1821 = vmatprep.subr.mxu0 0.0
      %1822 = vmatpush1.msra.mxu0 0.0
      %1823 = vmatprep.subr.mxu0 0.0
      %1824 = vmatpush1.msra.mxu0 0.0
      %1825 = vmatprep.subr.mxu0 0.0
      %1826 = vmatpush1.msra.mxu0 0.0
      %1827 = vmatprep.subr.mxu0 0.0
      %1828 = vmatpush1.msra.mxu0 0.0
      %1829 = vmatprep.subr.mxu0 0.0
      %1830 = vmatpush1.msra.mxu0 0.0
      %1831 = vmatprep.subr.mxu0 0.0
      %1832 = vmatpush1.msra.mxu0 0.0
      %1833 = vmatprep.subr.mxu0 0.0
      %1834 = vmatpush1.msra.mxu0 0.0
      %1835 = vmatprep.subr.mxu0 0.0
      %1836 = vmatpush1.msra.mxu0 0.0
      %1837 = vmatprep.subr.mxu0 0.0
      %1838 = vmatpush1.msra.mxu0 0.0
      %1839 = vmatprep.subr.mxu0 0.0
      %1840 = vmatpush1.msra.mxu0 0.0
      %1841 = vmatprep.subr.mxu0 0.0
      %1842 = vmatpush1.msra.mxu0 0.0
      %1843 = vmatprep.subr.mxu0 0.0
      %1844 = vmatpush1.msra.mxu0 0.0
      %1845 = vmatprep.subr.mxu0 0.0
      %1846 = vmatpush1.msra.mxu0 0.0
      %1847 = vmatprep.subr.mxu0 0.0
      %1848 = vmatpush1.msra.mxu0 0.0
      %1849 = vmatprep.subr.mxu0 0.0
      %1850 = vmatpush1.msra.mxu0 0.0
      %1851 = vmatprep.subr.mxu0 0.0
      %1852 = vmatpush1.msra.mxu0 0.0
      %1853 = vmatprep.subr.mxu0 0.0
      %1854 = vmatpush1.msra.mxu0 0.0
      %1855 = vmatprep.subr.mxu0 0.0
      %1856 = vmatpush1.msra.mxu0 0.0
      %1857 = vmatprep.subr.mxu0 0.0
      %1858 = vmatpush1.msra.mxu0 0.0
      %1859 = vmatprep.subr.mxu0 0.0
      %1860 = vmatpush1.msra.mxu0 0.0
      %1861 = vmatprep.subr.mxu0 0.0
      %1862 = vmatpush1.msra.mxu0 0.0
      %1863 = vmatprep.subr.mxu0 0.0
      %1864 = vmatpush1.msra.mxu0 0.0
      %1865 = vmatprep.mubr.f32.mxu0 0.0
      %1866 = vmatmul.mubr.f32.gmra.mrb[0].mxu0 %v1796
      %v1867 = vpop.f32.mrb[0].mxu0
      %v1868 = vadd.f32 %v1793, %v1867
      %v1869 = vpop.f32.mrb[0].mxu0
      %1870 = vmatprep.mubr.f32.mxu0 0.0
      %1871 = vmatmul.mubr.f32.gmra.mrb[0].mxu0 %v1799
      %v1872 = vpop.f32.mrb[0].mxu0
      %v1873 = vadd.f32 %v1793, %v1872
      %v1874 = vpop.f32.mrb[0].mxu0
      %1875 = vdwg.mxu0
      %1878 = vrot.lane.b32.xlu0 %v1868, 32
      %v1879 = vpop.permute.xlu0 %1878
      %1880 = vrot.lane.b32.xlu0 %v1873, 32
      %v1881 = vpop.permute.xlu0 %1880
      %v1884 = vadd.f32 %v1474, %v1879
      %v1885 = vadd.f32 %v1475, %v1881
      %v1886 = vld [vmem:[%s16] sm:$0xff]
      %v1887 = vld [vmem:[%s16 + $0x8] sm:$0xff]
      %v1888 = vld [vmem:[%s16 + $0x10] sm:$0xff]
      %v1889 = vld [vmem:[%s16 + $0x18] sm:$0xff]
      %v1890 = vld [vmem:[%s18] sm:$0x1]
      %v1892 = vlaneseq
      %v1893 = vshrl.u32 %v1892, 7
      %v1894 = vsub.s32 0, %v1893
      %v1895 = vrot.slane %v1890, %v1894
      %1899 = vrot.lane.b32.xlu0 %v1884, 96
      %v1900 = vpop.permute.xlu0 %1899
      %1901 = vrot.lane.b32.xlu0 %v1885, 96
      %v1902 = vpop.permute.xlu0 %1901
      %v1903 = vsel %vm1071, %v1900, 0
      %v1905 = vsel %vm1071, %v1902, 0
      %1907 = vmatprep.subr.mxu0 0.0
      %1908 = vmatpush1.msra.mxu0 %v1886
      %1909 = vmatprep.subr.mxu0 0.0
      %1910 = vmatpush1.msra.mxu0 %v1887
      %1911 = vmatprep.subr.mxu0 0.0
      %1912 = vmatpush1.msra.mxu0 %v1888
      %1913 = vmatprep.subr.mxu0 0.0
      %1914 = vmatpush1.msra.mxu0 %v1889
      %1915 = vmatprep.subr.mxu0 0.0
      %1916 = vmatpush1.msra.mxu0 0.0
      %1917 = vmatprep.subr.mxu0 0.0
      %1918 = vmatpush1.msra.mxu0 0.0
      %1919 = vmatprep.subr.mxu0 0.0
      %1920 = vmatpush1.msra.mxu0 0.0
      %1921 = vmatprep.subr.mxu0 0.0
      %1922 = vmatpush1.msra.mxu0 0.0
      %1923 = vmatprep.subr.mxu0 0.0
      %1924 = vmatpush1.msra.mxu0 0.0
      %1925 = vmatprep.subr.mxu0 0.0
      %1926 = vmatpush1.msra.mxu0 0.0
      %1927 = vmatprep.subr.mxu0 0.0
      %1928 = vmatpush1.msra.mxu0 0.0
      %1929 = vmatprep.subr.mxu0 0.0
      %1930 = vmatpush1.msra.mxu0 0.0
      %1931 = vmatprep.subr.mxu0 0.0
      %1932 = vmatpush1.msra.mxu0 0.0
      %1933 = vmatprep.subr.mxu0 0.0
      %1934 = vmatpush1.msra.mxu0 0.0
      %1935 = vmatprep.subr.mxu0 0.0
      %1936 = vmatpush1.msra.mxu0 0.0
      %1937 = vmatprep.subr.mxu0 0.0
      %1938 = vmatpush1.msra.mxu0 0.0
      %1939 = vmatprep.subr.mxu0 0.0
      %1940 = vmatpush1.msra.mxu0 0.0
      %1941 = vmatprep.subr.mxu0 0.0
      %1942 = vmatpush1.msra.mxu0 0.0
      %1943 = vmatprep.subr.mxu0 0.0
      %1944 = vmatpush1.msra.mxu0 0.0
      %1945 = vmatprep.subr.mxu0 0.0
      %1946 = vmatpush1.msra.mxu0 0.0
      %1947 = vmatprep.subr.mxu0 0.0
      %1948 = vmatpush1.msra.mxu0 0.0
      %1949 = vmatprep.subr.mxu0 0.0
      %1950 = vmatpush1.msra.mxu0 0.0
      %1951 = vmatprep.subr.mxu0 0.0
      %1952 = vmatpush1.msra.mxu0 0.0
      %1953 = vmatprep.subr.mxu0 0.0
      %1954 = vmatpush1.msra.mxu0 0.0
      %1955 = vmatprep.subr.mxu0 0.0
      %1956 = vmatpush1.msra.mxu0 0.0
      %1957 = vmatprep.subr.mxu0 0.0
      %1958 = vmatpush1.msra.mxu0 0.0
      %1959 = vmatprep.subr.mxu0 0.0
      %1960 = vmatpush1.msra.mxu0 0.0
      %1961 = vmatprep.subr.mxu0 0.0
      %1962 = vmatpush1.msra.mxu0 0.0
      %1963 = vmatprep.subr.mxu0 0.0
      %1964 = vmatpush1.msra.mxu0 0.0
      %1965 = vmatprep.subr.mxu0 0.0
      %1966 = vmatpush1.msra.mxu0 0.0
      %1967 = vmatprep.subr.mxu0 0.0
      %1968 = vmatpush1.msra.mxu0 0.0
      %1969 = vmatprep.subr.mxu0 0.0
      %1970 = vmatpush1.msra.mxu0 0.0
      %1971 = vmatprep.mubr.f32.mxu0 0.0
      %1972 = vmatmul.mubr.f32.gmra.mrb[0].mxu0 %v1903
      %v1973 = vpop.f32.mrb[0].mxu0
      %v1974 = vadd.f32 %v1895, %v1973
      %v1975 = vpop.f32.mrb[0].mxu0
      %1976 = vmatprep.mubr.f32.mxu0 0.0
      %1977 = vmatmul.mubr.f32.gmra.mrb[0].mxu0 %v1905
      %v1978 = vpop.f32.mrb[0].mxu0
      %v1979 = vadd.f32 %v1895, %v1978
      %v1980 = vpop.f32.mrb[0].mxu0
      %1981 = vdwg.mxu0
      %v1982 = vld [vmem:[%s17] sm:$0xff]
      %v1983 = vld [vmem:[%s17 + $0x8] sm:$0xff]
      %v1984 = vld [vmem:[%s17 + $0x10] sm:$0xff]
      %v1985 = vld [vmem:[%s17 + $0x18] sm:$0xff]
      %v1986 = vld [vmem:[%s19] sm:$0x1]
      %v1988 = vlaneseq
      %v1989 = vshrl.u32 %v1988, 7
      %v1990 = vsub.s32 0, %v1989
      %v1991 = vrot.slane %v1986, %v1990
      %1993 = vmatprep.subr.mxu0 0.0
      %1994 = vmatpush1.msra.mxu0 %v1982
      %1995 = vmatprep.subr.mxu0 0.0
      %1996 = vmatpush1.msra.mxu0 %v1983
      %1997 = vmatprep.subr.mxu0 0.0
      %1998 = vmatpush1.msra.mxu0 %v1984
      %1999 = vmatprep.subr.mxu0 0.0
      %2000 = vmatpush1.msra.mxu0 %v1985
      %2001 = vmatprep.subr.mxu0 0.0
      %2002 = vmatpush1.msra.mxu0 0.0
      %2003 = vmatprep.subr.mxu0 0.0
      %2004 = vmatpush1.msra.mxu0 0.0
      %2005 = vmatprep.subr.mxu0 0.0
      %2006 = vmatpush1.msra.mxu0 0.0
      %2007 = vmatprep.subr.mxu0 0.0
      %2008 = vmatpush1.msra.mxu0 0.0
      %2009 = vmatprep.subr.mxu0 0.0
      %2010 = vmatpush1.msra.mxu0 0.0
      %2011 = vmatprep.subr.mxu0 0.0
      %2012 = vmatpush1.msra.mxu0 0.0
      %2013 = vmatprep.subr.mxu0 0.0
      %2014 = vmatpush1.msra.mxu0 0.0
      %2015 = vmatprep.subr.mxu0 0.0
      %2016 = vmatpush1.msra.mxu0 0.0
      %2017 = vmatprep.subr.mxu0 0.0
      %2018 = vmatpush1.msra.mxu0 0.0
      %2019 = vmatprep.subr.mxu0 0.0
      %2020 = vmatpush1.msra.mxu0 0.0
      %2021 = vmatprep.subr.mxu0 0.0
      %2022 = vmatpush1.msra.mxu0 0.0
      %2023 = vmatprep.subr.mxu0 0.0
      %2024 = vmatpush1.msra.mxu0 0.0
      %2025 = vmatprep.subr.mxu0 0.0
      %2026 = vmatpush1.msra.mxu0 0.0
      %2027 = vmatprep.subr.mxu0 0.0
      %2028 = vmatpush1.msra.mxu0 0.0
      %2029 = vmatprep.subr.mxu0 0.0
      %2030 = vmatpush1.msra.mxu0 0.0
      %2031 = vmatprep.subr.mxu0 0.0
      %2032 = vmatpush1.msra.mxu0 0.0
      %2033 = vmatprep.subr.mxu0 0.0
      %2034 = vmatpush1.msra.mxu0 0.0
      %2035 = vmatprep.subr.mxu0 0.0
      %2036 = vmatpush1.msra.mxu0 0.0
      %2037 = vmatprep.subr.mxu0 0.0
      %2038 = vmatpush1.msra.mxu0 0.0
      %2039 = vmatprep.subr.mxu0 0.0
      %2040 = vmatpush1.msra.mxu0 0.0
      %2041 = vmatprep.subr.mxu0 0.0
      %2042 = vmatpush1.msra.mxu0 0.0
      %2043 = vmatprep.subr.mxu0 0.0
      %2044 = vmatpush1.msra.mxu0 0.0
      %2045 = vmatprep.subr.mxu0 0.0
      %2046 = vmatpush1.msra.mxu0 0.0
      %2047 = vmatprep.subr.mxu0 0.0
      %2048 = vmatpush1.msra.mxu0 0.0
      %2049 = vmatprep.subr.mxu0 0.0
      %2050 = vmatpush1.msra.mxu0 0.0
      %2051 = vmatprep.subr.mxu0 0.0
      %2052 = vmatpush1.msra.mxu0 0.0
      %2053 = vmatprep.subr.mxu0 0.0
      %2054 = vmatpush1.msra.mxu0 0.0
      %2055 = vmatprep.subr.mxu0 0.0
      %2056 = vmatpush1.msra.mxu0 0.0
      %2057 = vmatprep.mubr.f32.mxu0 0.0
      %2058 = vmatmul.mubr.f32.gmra.mrb[0].mxu0 %v1903
      %v2059 = vpop.f32.mrb[0].mxu0
      %v2060 = vadd.f32 %v1991, %v2059
      %v2061 = vpop.f32.mrb[0].mxu0
      %2062 = vmatprep.mubr.f32.mxu0 0.0
      %2063 = vmatmul.mubr.f32.gmra.mrb[0].mxu0 %v1905
      %v2064 = vpop.f32.mrb[0].mxu0
      %v2065 = vadd.f32 %v1991, %v2064
      %v2066 = vpop.f32.mrb[0].mxu0
      %2067 = vdwg.mxu0
      %v2068 = vmul.f32 %v2060, 1.442695
      %v2069 = vpow.pop %v2068
      %v2070 = vmul.f32 %v2065, 1.442695
      %v2071 = vpow.pop %v2070
      %v2072 = vmul.f32 %v878, %v2069
      %v2073 = vmul.f32 %v883, %v2071
      %v2074 = vadd.f32 %v2072, %v1974
      %v2075 = vadd.f32 %v2073, %v1979
      %2076 = vst.msk [vmem:[%s716] sm:$0xff] %vm985, %v802
      %2077 = vst.msk [vmem:[%s716 + $0x8] sm:$0xff] %vm985, %v807
      %2078 = vst.msk [vmem:[%s721] sm:$0xff] %vm985, %v2074
      %2079 = vst.msk [vmem:[%s721 + $0x8] sm:$0xff] %vm985, %v2075
      %v2080 = vsel %vm985, %v2060, 0.0
      %2081 = vadd.xlane.f32.xlu0 %v2080
      %v2082 = vpop.xlane.xlu0 %2081
      %v2083 = vsel %vm985, %v2065, 0.0
      %2084 = vadd.xlane.f32.xlu0 %v2083
      %v2085 = vpop.xlane.xlu0 %2084
      %v2086 = vadd.f32 %v2082, %v2085
      %v2087 = vrot.slane %v2086, 4
      %v2088 = vadd.f32 %v2086, %v2087
      %v2089 = vrot.slane %v2088, 2
      %v2090 = vadd.f32 %v2088, %v2089
      %v2091 = vrot.slane %v2090, 1
      %v2092 = vadd.f32 %v2090, %v2091
      %vm2093 = vcmask 0
      %2094 = vst.msk [vmem:[%s724] sm:$0x1] %vm2093, %v2092
      %p2095 = scmp.lt.s32.totalorder %s34, 1
      %s2096 = scalar_select %p2095, %s34, 1
      %s2097 = smul.addr %s2096, 2
      %s2098 = smul.addr %s2097, 8
      %s2099 = scalar_lea.vmem %s20, %s2098
      %p2100 = scmp.lt.s32.totalorder %s34, 1
      %s2101 = scalar_select %p2100, %s34, 1
      %s2102 = smul.addr %s2101, 2
      %s2103 = smul.addr %s2102, 8
      %s2104 = scalar_lea.vmem %s21, %s2103
      %p2105 = scmp.lt.s32.totalorder %s34, 1
      %s2106 = scalar_select %p2105, %s34, 1
      %s2107 = scalar_lea.vmem %s22, %s2106
      // Predicated region
      $region101: #{waveglow_forward.6} parent=99 // pred_check
        %p2108 = pneg %p482
      $region102: #{waveglow_forward.6} parent=99 // pred_check_branch
        %2110 = sbr.rel (%p2108) target = $region104
      $region103: #{waveglow_forward.6} parent=99 // pred_region
        _
      $region104: #{waveglow_forward.6} parent=99 // pred_fallthru
        _
      // Predicated region
      $region105: #{waveglow_forward.6} parent=99 // pred_check
        %p2111 = pneg %p508
      $region106: #{waveglow_forward.6} parent=99 // pred_check_branch
        %2113 = sbr.rel (%p2111) target = $region108
      $region107: #{waveglow_forward.6} parent=99 // pred_region
        _
      $region108: #{waveglow_forward.6} parent=99 // pred_fallthru
        _
      // Predicated region
      $region109: #{waveglow_forward.6} parent=99 // pred_check
        %p2114 = pneg %p534
      $region110: #{waveglow_forward.6} parent=99 // pred_check_branch
        %2116 = sbr.rel (%p2114) target = $region112
      $region111: #{waveglow_forward.6} parent=99 // pred_region
        _
      $region112: #{waveglow_forward.6} parent=99 // pred_fallthru
        _
    $region100: #{waveglow_forward.6} parent=5 // pred_fallthru
      _
    %p2117 = scmp.le.s32.totalorder 2, %s29
    // Predicated region
    $region113: #{waveglow_forward.6} parent=5 // pred_check
      %p2118 = pneg %p2117
    $region114: #{waveglow_forward.6} parent=5 // pred_check_branch
      %2120 = sbr.rel (%p2118) target = $region116
    $region115: #{waveglow_forward.6} parent=5 // pred_region
      %s2121 = ssub.s32 %s29, 2
      // Predicated region
      $region117: #{waveglow_forward.6} parent=115 // pred_check
        %p2122 = pneg %p488
      $region118: #{waveglow_forward.6} parent=115 // pred_check_branch
        %2124 = sbr.rel (%p2122) target = $region120
      $region119: #{waveglow_forward.6} parent=115 // pred_region
        %p2125 = scmp.lt.s32.totalorder %s35, 1
        %s2126 = scalar_select %p2125, %s35, 1
        %s2127 = smul.addr %s2126, 2
        %s2128 = smul.addr %s2127, 8
        %s2129 = scalar_lea.vmem %s20, %s2128
      $region120: #{waveglow_forward.6} parent=115 // pred_fallthru
        _
      // Predicated region
      $region121: #{waveglow_forward.6} parent=115 // pred_check
        %p2130 = pneg %p514
      $region122: #{waveglow_forward.6} parent=115 // pred_check_branch
        %2132 = sbr.rel (%p2130) target = $region124
      $region123: #{waveglow_forward.6} parent=115 // pred_region
        %p2133 = scmp.lt.s32.totalorder %s35, 1
        %s2134 = scalar_select %p2133, %s35, 1
        %s2135 = smul.addr %s2134, 2
        %s2136 = smul.addr %s2135, 8
        %s2137 = scalar_lea.vmem %s21, %s2136
      $region124: #{waveglow_forward.6} parent=115 // pred_fallthru
        _
      // Predicated region
      $region125: #{waveglow_forward.6} parent=115 // pred_check
        %p2138 = pneg %p540
      $region126: #{waveglow_forward.6} parent=115 // pred_check_branch
        %2140 = sbr.rel (%p2138) target = $region128
      $region127: #{waveglow_forward.6} parent=115 // pred_region
        %p2141 = scmp.lt.s32.totalorder %s35, 1
        %s2142 = scalar_select %p2141, %s35, 1
        %s2143 = scalar_lea.vmem %s22, %s2142
      $region128: #{waveglow_forward.6} parent=115 // pred_fallthru
        _
    $region116: #{waveglow_forward.6} parent=5 // pred_fallthru
      _
  $region6: #{waveglow_forward.6} parent=0 // loop_footer
    %s33 = sadd.s32 1, %s29
  $region7: #{waveglow_forward.6} parent=0 // loop_footer_branch
    %28 = sbr.rel target = $region3
  $region8: #{waveglow_forward.6} parent=0 // loop_exit
    _

// kernel: waveglow_forward.7
$region0: #{waveglow_forward.7}
  #allocation0 [shape = 'u32[]', space=smem, size = 0x4, offset = 0x4, fixed_abs, tag = 'smem constant byte address 0x4 - core index']
  #allocation1 [shape = 'u32[144,128]{1,0:T(1,128)}', space=vmem, size = 0x12000, scoped, tag = 'internal scratch']
  #allocation2 [shape = 'f32[32,32]{1,0:T(8,128)}', space=vmem, size = 0x4000, scoped, tag = 'scratch operand']
  %s0 = inlined_call_operand.vmem [shape: f32[2,16,8], index: 0, kind: input, shape index: {}]
  %s1 = inlined_call_operand.vmem [shape: f32[2,16,8], index: 1, kind: input, shape index: {}]
  %s2 = inlined_call_operand.vmem [shape: f32[8,4], index: 2, kind: input, shape index: {}]
  %s3 = inlined_call_operand.vmem [shape: f32[8,4], index: 3, kind: input, shape index: {}]
  %s4 = inlined_call_operand.vmem [shape: f32[4,32], index: 4, kind: input, shape index: {}]
  %s5 = inlined_call_operand.vmem [shape: f32[1,32], index: 5, kind: input, shape index: {}]
  %s6 = inlined_call_operand.vmem [shape: f32[8,128], index: 6, kind: input, shape index: {}]
  %s7 = inlined_call_operand.vmem [shape: f32[1,128], index: 7, kind: input, shape index: {}]
  %s8 = inlined_call_operand.vmem [shape: f32[3,32,64], index: 8, kind: input, shape index: {}]
  %s9 = inlined_call_operand.vmem [shape: f32[1,64], index: 9, kind: input, shape index: {}]
  %s10 = inlined_call_operand.vmem [shape: f32[32,64], index: 10, kind: input, shape index: {}]
  %s11 = inlined_call_operand.vmem [shape: f32[1,64], index: 11, kind: input, shape index: {}]
  %s12 = inlined_call_operand.vmem [shape: f32[3,32,64], index: 12, kind: input, shape index: {}]
  %s13 = inlined_call_operand.vmem [shape: f32[1,64], index: 13, kind: input, shape index: {}]
  %s14 = inlined_call_operand.vmem [shape: f32[32,32], index: 14, kind: input, shape index: {}]
  %s15 = inlined_call_operand.vmem [shape: f32[1,32], index: 15, kind: input, shape index: {}]
  %s16 = inlined_call_operand.vmem [shape: f32[32,4], index: 16, kind: input, shape index: {}]
  %s17 = inlined_call_operand.vmem [shape: f32[32,4], index: 17, kind: input, shape index: {}]
  %s18 = inlined_call_operand.vmem [shape: f32[1,4], index: 18, kind: input, shape index: {}]
  %s19 = inlined_call_operand.hbm [shape: f32[1,4], index: 19, kind: input, shape index: {}]
  %s20 = inlined_call_operand.vmem [shape: f32[2,16,4], index: 20, kind: output, shape index: {0}]
  %s21 = inlined_call_operand.vmem [shape: f32[2,16,4], index: 21, kind: output, shape index: {1}]
  %s22 = inlined_call_operand.vmem [shape: f32[2,1,1], index: 22, kind: output, shape index: {2}]
  %23 = xla_tuple %s20, %s21, %s22
  %s24 = sld [smem:[#allocation0]]
  $region133: #{waveglow_forward.7} parent=0
    _
  %s26 = ssub.s32 1, %s24
  %s27 = scalar_select 0, %s26, %s24
  $region1: #{waveglow_forward.7} parent=0
    #allocation3 [shape = 'u8[512]{0}', space=vmem, size = 0x400, scoped, tag = 'input window, operand 19, single buffered']
    #allocation4 [shape = 's32[2]{0}', space=sflag, size = 0x8, scoped, tag = 'scoped memory for waveglow_forward.7']
    %28 = vsyncpa [#allocation4], 0
    loop: start=0, step=1, limit=4
    $region2: #{waveglow_forward.7} parent=1 // loop_pre_header
      _
    $region3: #{waveglow_forward.7} parent=1 // loop_header
      %s30 = sphi 0, %s34
      %p31 = scmp.ge.s32.totalorder %s30, 4
      %s40 = sphi 0, %s42
      %s43 = sphi 0, %s40
      %s44 = sphi 0, %s43
      %s60 = sphi 0, %s44
      %s66 = sphi 0, %s68
      %s69 = sphi 0, %s66
      %s70 = sphi 0, %s69
      %s86 = sphi 0, %s70
      %s90 = sphi 0, %s90
      %s92 = sphi 0, %s90
      %s93 = sphi 0, %s92
      %s107 = sphi 0, %s93
      %s111 = sphi 0, %s111
      %s113 = sphi 0, %s111
      %s114 = sphi 0, %s113
      %s128 = sphi 0, %s114
      %s132 = sphi 0, %s132
      %s134 = sphi 0, %s132
      %s135 = sphi 0, %s134
      %s149 = sphi 0, %s135
      %s153 = sphi 0, %s153
      %s155 = sphi 0, %s153
      %s156 = sphi 0, %s155
      %s170 = sphi 0, %s156
      %s174 = sphi 0, %s174
      %s176 = sphi 0, %s174
      %s177 = sphi 0, %s176
      %s191 = sphi 0, %s177
      %s195 = sphi 0, %s195
      %s197 = sphi 0, %s195
      %s198 = sphi 0, %s197
      %s212 = sphi 0, %s198
      %s216 = sphi 0, %s216
      %s218 = sphi 0, %s216
      %s219 = sphi 0, %s218
      %s233 = sphi 0, %s219
      %s237 = sphi 0, %s237
      %s239 = sphi 0, %s237
      %s240 = sphi 0, %s239
      %s254 = sphi 0, %s240
      %s258 = sphi 0, %s258
      %s260 = sphi 0, %s258
      %s261 = sphi 0, %s260
      %s275 = sphi 0, %s261
      %s279 = sphi 0, %s279
      %s281 = sphi 0, %s279
      %s282 = sphi 0, %s281
      %s296 = sphi 0, %s282
      %s300 = sphi 0, %s300
      %s302 = sphi 0, %s300
      %s303 = sphi 0, %s302
      %s317 = sphi 0, %s303
      %s321 = sphi 0, %s321
      %s323 = sphi 0, %s321
      %s324 = sphi 0, %s323
      %s338 = sphi 0, %s324
      %s342 = sphi 0, %s342
      %s344 = sphi 0, %s342
      %s345 = sphi 0, %s344
      %s359 = sphi 0, %s345
      %s363 = sphi 0, %s363
      %s365 = sphi 0, %s363
      %s366 = sphi 0, %s365
      %s380 = sphi 0, %s366
      %s384 = sphi 0, %s384
      %s386 = sphi 0, %s384
      %s387 = sphi 0, %s386
      %s401 = sphi 0, %s387
      %s405 = sphi 0, %s405
      %s407 = sphi 0, %s405
      %s408 = sphi 0, %s407
      %s422 = sphi 0, %s408
      %s426 = sphi 0, %s426
      %s428 = sphi 0, %s426
      %s429 = sphi 0, %s428
      %s443 = sphi 0, %s429
      %s447 = sphi 0, %s447
      %s449 = sphi 0, %s447
      %s450 = sphi 0, %s449
      %s464 = sphi 0, %s450
      %s470 = sphi 0, %s472
      %s473 = sphi 0, %s470
      %s474 = sphi 0, %s473
      %s490 = sphi 0, %s474
      %s496 = sphi 0, %s498
      %s499 = sphi 0, %s496
      %s500 = sphi 0, %s499
      %s516 = sphi 0, %s500
      %s522 = sphi 0, %s524
      %s525 = sphi 0, %s522
      %s526 = sphi 0, %s525
      %s542 = sphi 0, %s526
    $region4: #{waveglow_forward.7} parent=1 // loop_header_branch
      %33 = sbr.rel (%p31) target = $region8
    $region5: #{waveglow_forward.7} parent=1 // loop_body
      %s35 = ssub.s32 %s30, 1
      %s36 = ssub.s32 %s30, 2
      %s37 = sadd.s32 %s30, 1
      %s38 = ssub.s32 %s30, %s37
      %p39 = scmp.eq.s32.totalorder %s38, 0
      %s41 = sadd.s32 %s40, 1
      %s42 = scalar_select %p39, %s40, %s41
      %p45 = pneg %p39
      %p46 = scmp.eq.s32.totalorder %s30, 1
      %p47 = por %p45, %p46
      %p48 = scmp.ne.s32.totalorder %s40, %s43
      %p49 = scmp.eq.s32.totalorder %s30, 0
      %p50 = por %p48, %p49
      %p51 = scmp.ne.s32.totalorder %s40, %s43
      %p52 = scmp.eq.s32.totalorder %s35, 1
      %p53 = por %p51, %p52
      %p54 = scmp.ne.s32.totalorder %s43, %s44
      %p55 = scmp.eq.s32.totalorder %s35, 0
      %p56 = por %p54, %p55
      %p57 = scmp.ne.s32.totalorder %s43, %s44
      %p58 = scmp.eq.s32.totalorder %s36, 1
      %p59 = por %p57, %p58
      %p61 = scmp.ne.s32.totalorder %s44, %s60
      %p62 = scmp.eq.s32.totalorder %s36, 0
      %p63 = por %p61, %p62
      %s64 = ssub.s32 %s30, %s37
      %p65 = scmp.eq.s32.totalorder %s64, 0
      %s67 = sadd.s32 %s66, 1
      %s68 = scalar_select %p65, %s66, %s67
      %p71 = pneg %p65
      %p72 = scmp.eq.s32.totalorder %s30, 1
      %p73 = por %p71, %p72
      %p74 = scmp.ne.s32.totalorder %s66, %s69
      %p75 = scmp.eq.s32.totalorder %s30, 0
      %p76 = por %p74, %p75
      %p77 = scmp.ne.s32.totalorder %s66, %s69
      %p78 = scmp.eq.s32.totalorder %s35, 1
      %p79 = por %p77, %p78
      %p80 = scmp.ne.s32.totalorder %s69, %s70
      %p81 = scmp.eq.s32.totalorder %s35, 0
      %p82 = por %p80, %p81
      %p83 = scmp.ne.s32.totalorder %s69, %s70
      %p84 = scmp.eq.s32.totalorder %s36, 1
      %p85 = por %p83, %p84
      %p87 = scmp.ne.s32.totalorder %s70, %s86
      %p88 = scmp.eq.s32.totalorder %s36, 0
      %p89 = por %p87, %p88
      %s91 = sadd.s32 %s90, 1
      %p94 = scmp.eq.s32.totalorder %s30, 1
      %p95 = scmp.ne.s32.totalorder %s90, %s92
      %p96 = scmp.eq.s32.totalorder %s30, 0
      %p97 = por %p95, %p96
      %p98 = scmp.ne.s32.totalorder %s90, %s92
      %p99 = scmp.eq.s32.totalorder %s35, 1
      %p100 = por %p98, %p99
      %p101 = scmp.ne.s32.totalorder %s92, %s93
      %p102 = scmp.eq.s32.totalorder %s35, 0
      %p103 = por %p101, %p102
      %p104 = scmp.ne.s32.totalorder %s92, %s93
      %p105 = scmp.eq.s32.totalorder %s36, 1
      %p106 = por %p104, %p105
      %p108 = scmp.ne.s32.totalorder %s93, %s107
      %p109 = scmp.eq.s32.totalorder %s36, 0
      %p110 = por %p108, %p109
      %s112 = sadd.s32 %s111, 1
      %p115 = scmp.eq.s32.totalorder %s30, 1
      %p116 = scmp.ne.s32.totalorder %s111, %s113
      %p117 = scmp.eq.s32.totalorder %s30, 0
      %p118 = por %p116, %p117
      %p119 = scmp.ne.s32.totalorder %s111, %s113
      %p120 = scmp.eq.s32.totalorder %s35, 1
      %p121 = por %p119, %p120
      %p122 = scmp.ne.s32.totalorder %s113, %s114
      %p123 = scmp.eq.s32.totalorder %s35, 0
      %p124 = por %p122, %p123
      %p125 = scmp.ne.s32.totalorder %s113, %s114
      %p126 = scmp.eq.s32.totalorder %s36, 1
      %p127 = por %p125, %p126
      %p129 = scmp.ne.s32.totalorder %s114, %s128
      %p130 = scmp.eq.s32.totalorder %s36, 0
      %p131 = por %p129, %p130
      %s133 = sadd.s32 %s132, 1
      %p136 = scmp.eq.s32.totalorder %s30, 1
      %p137 = scmp.ne.s32.totalorder %s132, %s134
      %p138 = scmp.eq.s32.totalorder %s30, 0
      %p139 = por %p137, %p138
      %p140 = scmp.ne.s32.totalorder %s132, %s134
      %p141 = scmp.eq.s32.totalorder %s35, 1
      %p142 = por %p140, %p141
      %p143 = scmp.ne.s32.totalorder %s134, %s135
      %p144 = scmp.eq.s32.totalorder %s35, 0
      %p145 = por %p143, %p144
      %p146 = scmp.ne.s32.totalorder %s134, %s135
      %p147 = scmp.eq.s32.totalorder %s36, 1
      %p148 = por %p146, %p147
      %p150 = scmp.ne.s32.totalorder %s135, %s149
      %p151 = scmp.eq.s32.totalorder %s36, 0
      %p152 = por %p150, %p151
      %s154 = sadd.s32 %s153, 1
      %p157 = scmp.eq.s32.totalorder %s30, 1
      %p158 = scmp.ne.s32.totalorder %s153, %s155
      %p159 = scmp.eq.s32.totalorder %s30, 0
      %p160 = por %p158, %p159
      %p161 = scmp.ne.s32.totalorder %s153, %s155
      %p162 = scmp.eq.s32.totalorder %s35, 1
      %p163 = por %p161, %p162
      %p164 = scmp.ne.s32.totalorder %s155, %s156
      %p165 = scmp.eq.s32.totalorder %s35, 0
      %p166 = por %p164, %p165
      %p167 = scmp.ne.s32.totalorder %s155, %s156
      %p168 = scmp.eq.s32.totalorder %s36, 1
      %p169 = por %p167, %p168
      %p171 = scmp.ne.s32.totalorder %s156, %s170
      %p172 = scmp.eq.s32.totalorder %s36, 0
      %p173 = por %p171, %p172
      %s175 = sadd.s32 %s174, 1
      %p178 = scmp.eq.s32.totalorder %s30, 1
      %p179 = scmp.ne.s32.totalorder %s174, %s176
      %p180 = scmp.eq.s32.totalorder %s30, 0
      %p181 = por %p179, %p180
      %p182 = scmp.ne.s32.totalorder %s174, %s176
      %p183 = scmp.eq.s32.totalorder %s35, 1
      %p184 = por %p182, %p183
      %p185 = scmp.ne.s32.totalorder %s176, %s177
      %p186 = scmp.eq.s32.totalorder %s35, 0
      %p187 = por %p185, %p186
      %p188 = scmp.ne.s32.totalorder %s176, %s177
      %p189 = scmp.eq.s32.totalorder %s36, 1
      %p190 = por %p188, %p189
      %p192 = scmp.ne.s32.totalorder %s177, %s191
      %p193 = scmp.eq.s32.totalorder %s36, 0
      %p194 = por %p192, %p193
      %s196 = sadd.s32 %s195, 1
      %p199 = scmp.eq.s32.totalorder %s30, 1
      %p200 = scmp.ne.s32.totalorder %s195, %s197
      %p201 = scmp.eq.s32.totalorder %s30, 0
      %p202 = por %p200, %p201
      %p203 = scmp.ne.s32.totalorder %s195, %s197
      %p204 = scmp.eq.s32.totalorder %s35, 1
      %p205 = por %p203, %p204
      %p206 = scmp.ne.s32.totalorder %s197, %s198
      %p207 = scmp.eq.s32.totalorder %s35, 0
      %p208 = por %p206, %p207
      %p209 = scmp.ne.s32.totalorder %s197, %s198
      %p210 = scmp.eq.s32.totalorder %s36, 1
      %p211 = por %p209, %p210
      %p213 = scmp.ne.s32.totalorder %s198, %s212
      %p214 = scmp.eq.s32.totalorder %s36, 0
      %p215 = por %p213, %p214
      %s217 = sadd.s32 %s216, 1
      %p220 = scmp.eq.s32.totalorder %s30, 1
      %p221 = scmp.ne.s32.totalorder %s216, %s218
      %p222 = scmp.eq.s32.totalorder %s30, 0
      %p223 = por %p221, %p222
      %p224 = scmp.ne.s32.totalorder %s216, %s218
      %p225 = scmp.eq.s32.totalorder %s35, 1
      %p226 = por %p224, %p225
      %p227 = scmp.ne.s32.totalorder %s218, %s219
      %p228 = scmp.eq.s32.totalorder %s35, 0
      %p229 = por %p227, %p228
      %p230 = scmp.ne.s32.totalorder %s218, %s219
      %p231 = scmp.eq.s32.totalorder %s36, 1
      %p232 = por %p230, %p231
      %p234 = scmp.ne.s32.totalorder %s219, %s233
      %p235 = scmp.eq.s32.totalorder %s36, 0
      %p236 = por %p234, %p235
      %s238 = sadd.s32 %s237, 1
      %p241 = scmp.eq.s32.totalorder %s30, 1
      %p242 = scmp.ne.s32.totalorder %s237, %s239
      %p243 = scmp.eq.s32.totalorder %s30, 0
      %p244 = por %p242, %p243
      %p245 = scmp.ne.s32.totalorder %s237, %s239
      %p246 = scmp.eq.s32.totalorder %s35, 1
      %p247 = por %p245, %p246
      %p248 = scmp.ne.s32.totalorder %s239, %s240
      %p249 = scmp.eq.s32.totalorder %s35, 0
      %p250 = por %p248, %p249
      %p251 = scmp.ne.s32.totalorder %s239, %s240
      %p252 = scmp.eq.s32.totalorder %s36, 1
      %p253 = por %p251, %p252
      %p255 = scmp.ne.s32.totalorder %s240, %s254
      %p256 = scmp.eq.s32.totalorder %s36, 0
      %p257 = por %p255, %p256
      %s259 = sadd.s32 %s258, 1
      %p262 = scmp.eq.s32.totalorder %s30, 1
      %p263 = scmp.ne.s32.totalorder %s258, %s260
      %p264 = scmp.eq.s32.totalorder %s30, 0
      %p265 = por %p263, %p264
      %p266 = scmp.ne.s32.totalorder %s258, %s260
      %p267 = scmp.eq.s32.totalorder %s35, 1
      %p268 = por %p266, %p267
      %p269 = scmp.ne.s32.totalorder %s260, %s261
      %p270 = scmp.eq.s32.totalorder %s35, 0
      %p271 = por %p269, %p270
      %p272 = scmp.ne.s32.totalorder %s260, %s261
      %p273 = scmp.eq.s32.totalorder %s36, 1
      %p274 = por %p272, %p273
      %p276 = scmp.ne.s32.totalorder %s261, %s275
      %p277 = scmp.eq.s32.totalorder %s36, 0
      %p278 = por %p276, %p277
      %s280 = sadd.s32 %s279, 1
      %p283 = scmp.eq.s32.totalorder %s30, 1
      %p284 = scmp.ne.s32.totalorder %s279, %s281
      %p285 = scmp.eq.s32.totalorder %s30, 0
      %p286 = por %p284, %p285
      %p287 = scmp.ne.s32.totalorder %s279, %s281
      %p288 = scmp.eq.s32.totalorder %s35, 1
      %p289 = por %p287, %p288
      %p290 = scmp.ne.s32.totalorder %s281, %s282
      %p291 = scmp.eq.s32.totalorder %s35, 0
      %p292 = por %p290, %p291
      %p293 = scmp.ne.s32.totalorder %s281, %s282
      %p294 = scmp.eq.s32.totalorder %s36, 1
      %p295 = por %p293, %p294
      %p297 = scmp.ne.s32.totalorder %s282, %s296
      %p298 = scmp.eq.s32.totalorder %s36, 0
      %p299 = por %p297, %p298
      %s301 = sadd.s32 %s300, 1
      %p304 = scmp.eq.s32.totalorder %s30, 1
      %p305 = scmp.ne.s32.totalorder %s300, %s302
      %p306 = scmp.eq.s32.totalorder %s30, 0
      %p307 = por %p305, %p306
      %p308 = scmp.ne.s32.totalorder %s300, %s302
      %p309 = scmp.eq.s32.totalorder %s35, 1
      %p310 = por %p308, %p309
      %p311 = scmp.ne.s32.totalorder %s302, %s303
      %p312 = scmp.eq.s32.totalorder %s35, 0
      %p313 = por %p311, %p312
      %p314 = scmp.ne.s32.totalorder %s302, %s303
      %p315 = scmp.eq.s32.totalorder %s36, 1
      %p316 = por %p314, %p315
      %p318 = scmp.ne.s32.totalorder %s303, %s317
      %p319 = scmp.eq.s32.totalorder %s36, 0
      %p320 = por %p318, %p319
      %s322 = sadd.s32 %s321, 1
      %p325 = scmp.eq.s32.totalorder %s30, 1
      %p326 = scmp.ne.s32.totalorder %s321, %s323
      %p327 = scmp.eq.s32.totalorder %s30, 0
      %p328 = por %p326, %p327
      %p329 = scmp.ne.s32.totalorder %s321, %s323
      %p330 = scmp.eq.s32.totalorder %s35, 1
      %p331 = por %p329, %p330
      %p332 = scmp.ne.s32.totalorder %s323, %s324
      %p333 = scmp.eq.s32.totalorder %s35, 0
      %p334 = por %p332, %p333
      %p335 = scmp.ne.s32.totalorder %s323, %s324
      %p336 = scmp.eq.s32.totalorder %s36, 1
      %p337 = por %p335, %p336
      %p339 = scmp.ne.s32.totalorder %s324, %s338
      %p340 = scmp.eq.s32.totalorder %s36, 0
      %p341 = por %p339, %p340
      %s343 = sadd.s32 %s342, 1
      %p346 = scmp.eq.s32.totalorder %s30, 1
      %p347 = scmp.ne.s32.totalorder %s342, %s344
      %p348 = scmp.eq.s32.totalorder %s30, 0
      %p349 = por %p347, %p348
      %p350 = scmp.ne.s32.totalorder %s342, %s344
      %p351 = scmp.eq.s32.totalorder %s35, 1
      %p352 = por %p350, %p351
      %p353 = scmp.ne.s32.totalorder %s344, %s345
      %p354 = scmp.eq.s32.totalorder %s35, 0
      %p355 = por %p353, %p354
      %p356 = scmp.ne.s32.totalorder %s344, %s345
      %p357 = scmp.eq.s32.totalorder %s36, 1
      %p358 = por %p356, %p357
      %p360 = scmp.ne.s32.totalorder %s345, %s359
      %p361 = scmp.eq.s32.totalorder %s36, 0
      %p362 = por %p360, %p361
      %s364 = sadd.s32 %s363, 1
      %p367 = scmp.eq.s32.totalorder %s30, 1
      %p368 = scmp.ne.s32.totalorder %s363, %s365
      %p369 = scmp.eq.s32.totalorder %s30, 0
      %p370 = por %p368, %p369
      %p371 = scmp.ne.s32.totalorder %s363, %s365
      %p372 = scmp.eq.s32.totalorder %s35, 1
      %p373 = por %p371, %p372
      %p374 = scmp.ne.s32.totalorder %s365, %s366
      %p375 = scmp.eq.s32.totalorder %s35, 0
      %p376 = por %p374, %p375
      %p377 = scmp.ne.s32.totalorder %s365, %s366
      %p378 = scmp.eq.s32.totalorder %s36, 1
      %p379 = por %p377, %p378
      %p381 = scmp.ne.s32.totalorder %s366, %s380
      %p382 = scmp.eq.s32.totalorder %s36, 0
      %p383 = por %p381, %p382
      %s385 = sadd.s32 %s384, 1
      %p388 = scmp.eq.s32.totalorder %s30, 1
      %p389 = scmp.ne.s32.totalorder %s384, %s386
      %p390 = scmp.eq.s32.totalorder %s30, 0
      %p391 = por %p389, %p390
      %p392 = scmp.ne.s32.totalorder %s384, %s386
      %p393 = scmp.eq.s32.totalorder %s35, 1
      %p394 = por %p392, %p393
      %p395 = scmp.ne.s32.totalorder %s386, %s387
      %p396 = scmp.eq.s32.totalorder %s35, 0
      %p397 = por %p395, %p396
      %p398 = scmp.ne.s32.totalorder %s386, %s387
      %p399 = scmp.eq.s32.totalorder %s36, 1
      %p400 = por %p398, %p399
      %p402 = scmp.ne.s32.totalorder %s387, %s401
      %p403 = scmp.eq.s32.totalorder %s36, 0
      %p404 = por %p402, %p403
      %s406 = sadd.s32 %s405, 1
      %p409 = scmp.eq.s32.totalorder %s30, 1
      %p410 = scmp.ne.s32.totalorder %s405, %s407
      %p411 = scmp.eq.s32.totalorder %s30, 0
      %p412 = por %p410, %p411
      %p413 = scmp.ne.s32.totalorder %s405, %s407
      %p414 = scmp.eq.s32.totalorder %s35, 1
      %p415 = por %p413, %p414
      %p416 = scmp.ne.s32.totalorder %s407, %s408
      %p417 = scmp.eq.s32.totalorder %s35, 0
      %p418 = por %p416, %p417
      %p419 = scmp.ne.s32.totalorder %s407, %s408
      %p420 = scmp.eq.s32.totalorder %s36, 1
      %p421 = por %p419, %p420
      %p423 = scmp.ne.s32.totalorder %s408, %s422
      %p424 = scmp.eq.s32.totalorder %s36, 0
      %p425 = por %p423, %p424
      %s427 = sadd.s32 %s426, 1
      %p430 = scmp.eq.s32.totalorder %s30, 1
      %p431 = scmp.ne.s32.totalorder %s426, %s428
      %p432 = scmp.eq.s32.totalorder %s30, 0
      %p433 = por %p431, %p432
      %p434 = scmp.ne.s32.totalorder %s426, %s428
      %p435 = scmp.eq.s32.totalorder %s35, 1
      %p436 = por %p434, %p435
      %p437 = scmp.ne.s32.totalorder %s428, %s429
      %p438 = scmp.eq.s32.totalorder %s35, 0
      %p439 = por %p437, %p438
      %p440 = scmp.ne.s32.totalorder %s428, %s429
      %p441 = scmp.eq.s32.totalorder %s36, 1
      %p442 = por %p440, %p441
      %p444 = scmp.ne.s32.totalorder %s429, %s443
      %p445 = scmp.eq.s32.totalorder %s36, 0
      %p446 = por %p444, %p445
      %s448 = sadd.s32 %s447, 1
      %p451 = scmp.eq.s32.totalorder %s30, 1
      %p452 = scmp.ne.s32.totalorder %s447, %s449
      %p453 = scmp.eq.s32.totalorder %s30, 0
      %p454 = por %p452, %p453
      %p455 = scmp.ne.s32.totalorder %s447, %s449
      %p456 = scmp.eq.s32.totalorder %s35, 1
      %p457 = por %p455, %p456
      %p458 = scmp.ne.s32.totalorder %s449, %s450
      %p459 = scmp.eq.s32.totalorder %s35, 0
      %p460 = por %p458, %p459
      %p461 = scmp.ne.s32.totalorder %s449, %s450
      %p462 = scmp.eq.s32.totalorder %s36, 1
      %p463 = por %p461, %p462
      %p465 = scmp.ne.s32.totalorder %s450, %s464
      %p466 = scmp.eq.s32.totalorder %s36, 0
      %p467 = por %p465, %p466
      %s468 = ssub.s32 %s30, %s37
      %p469 = scmp.eq.s32.totalorder %s468, 0
      %s471 = sadd.s32 %s470, 1
      %s472 = scalar_select %p469, %s470, %s471
      %p475 = pneg %p469
      %p476 = scmp.eq.s32.totalorder %s30, 1
      %p477 = por %p475, %p476
      %p478 = scmp.ne.s32.totalorder %s470, %s473
      %p479 = scmp.eq.s32.totalorder %s30, 0
      %p480 = por %p478, %p479
      %p481 = scmp.ne.s32.totalorder %s470, %s473
      %p482 = scmp.eq.s32.totalorder %s35, 1
      %p483 = por %p481, %p482
      %p484 = scmp.ne.s32.totalorder %s473, %s474
      %p485 = scmp.eq.s32.totalorder %s35, 0
      %p486 = por %p484, %p485
      %p487 = scmp.ne.s32.totalorder %s473, %s474
      %p488 = scmp.eq.s32.totalorder %s36, 1
      %p489 = por %p487, %p488
      %p491 = scmp.ne.s32.totalorder %s474, %s490
      %p492 = scmp.eq.s32.totalorder %s36, 0
      %p493 = por %p491, %p492
      %s494 = ssub.s32 %s30, %s37
      %p495 = scmp.eq.s32.totalorder %s494, 0
      %s497 = sadd.s32 %s496, 1
      %s498 = scalar_select %p495, %s496, %s497
      %p501 = pneg %p495
      %p502 = scmp.eq.s32.totalorder %s30, 1
      %p503 = por %p501, %p502
      %p504 = scmp.ne.s32.totalorder %s496, %s499
      %p505 = scmp.eq.s32.totalorder %s30, 0
      %p506 = por %p504, %p505
      %p507 = scmp.ne.s32.totalorder %s496, %s499
      %p508 = scmp.eq.s32.totalorder %s35, 1
      %p509 = por %p507, %p508
      %p510 = scmp.ne.s32.totalorder %s499, %s500
      %p511 = scmp.eq.s32.totalorder %s35, 0
      %p512 = por %p510, %p511
      %p513 = scmp.ne.s32.totalorder %s499, %s500
      %p514 = scmp.eq.s32.totalorder %s36, 1
      %p515 = por %p513, %p514
      %p517 = scmp.ne.s32.totalorder %s500, %s516
      %p518 = scmp.eq.s32.totalorder %s36, 0
      %p519 = por %p517, %p518
      %s520 = ssub.s32 %s30, %s37
      %p521 = scmp.eq.s32.totalorder %s520, 0
      %s523 = sadd.s32 %s522, 1
      %s524 = scalar_select %p521, %s522, %s523
      %p527 = pneg %p521
      %p528 = scmp.eq.s32.totalorder %s30, 1
      %p529 = por %p527, %p528
      %p530 = scmp.ne.s32.totalorder %s522, %s525
      %p531 = scmp.eq.s32.totalorder %s30, 0
      %p532 = por %p530, %p531
      %p533 = scmp.ne.s32.totalorder %s522, %s525
      %p534 = scmp.eq.s32.totalorder %s35, 1
      %p535 = por %p533, %p534
      %p536 = scmp.ne.s32.totalorder %s525, %s526
      %p537 = scmp.eq.s32.totalorder %s35, 0
      %p538 = por %p536, %p537
      %p539 = scmp.ne.s32.totalorder %s525, %s526
      %p540 = scmp.eq.s32.totalorder %s36, 1
      %p541 = por %p539, %p540
      %p543 = scmp.ne.s32.totalorder %s526, %s542
      %p544 = scmp.eq.s32.totalorder %s36, 0
      %p545 = por %p543, %p544
      %p546 = scmp.le.s32.totalorder 1, %s30
      %p547 = scmp.lt.s32.totalorder %s30, 3
      %p548 = pnand %p546, %p547
      %p549 = pneg %p548
      // Predicated region
      $region9: #{waveglow_forward.7} parent=5 // pred_check
        _
      $region10: #{waveglow_forward.7} parent=5 // pred_check_branch
        %551 = sbr.rel (%p548) target = $region12
      $region11: #{waveglow_forward.7} parent=5 // pred_region
        %s552 = ssub.s32 %s30, 1
        // Predicated region
        $region13: #{waveglow_forward.7} parent=11 // pred_check
          %p553 = pneg %p103
        $region14: #{waveglow_forward.7} parent=11 // pred_check_branch
          %555 = sbr.rel (%p553) target = $region16
        $region15: #{waveglow_forward.7} parent=11 // pred_region
          _
        $region16: #{waveglow_forward.7} parent=11 // pred_fallthru
          _
        // Predicated region
        $region17: #{waveglow_forward.7} parent=11 // pred_check
          %p556 = pneg %p124
        $region18: #{waveglow_forward.7} parent=11 // pred_check_branch
          %558 = sbr.rel (%p556) target = $region20
        $region19: #{waveglow_forward.7} parent=11 // pred_region
          _
        $region20: #{waveglow_forward.7} parent=11 // pred_fallthru
          _
        // Predicated region
        $region21: #{waveglow_forward.7} parent=11 // pred_check
          %p559 = pneg %p145
        $region22: #{waveglow_forward.7} parent=11 // pred_check_branch
          %561 = sbr.rel (%p559) target = $region24
        $region23: #{waveglow_forward.7} parent=11 // pred_region
          _
        $region24: #{waveglow_forward.7} parent=11 // pred_fallthru
          _
        // Predicated region
        $region25: #{waveglow_forward.7} parent=11 // pred_check
          %p562 = pneg %p166
        $region26: #{waveglow_forward.7} parent=11 // pred_check_branch
          %564 = sbr.rel (%p562) target = $region28
        $region27: #{waveglow_forward.7} parent=11 // pred_region
          _
        $region28: #{waveglow_forward.7} parent=11 // pred_fallthru
          _
        // Predicated region
        $region29: #{waveglow_forward.7} parent=11 // pred_check
          %p565 = pneg %p187
        $region30: #{waveglow_forward.7} parent=11 // pred_check_branch
          %567 = sbr.rel (%p565) target = $region32
        $region31: #{waveglow_forward.7} parent=11 // pred_region
          _
        $region32: #{waveglow_forward.7} parent=11 // pred_fallthru
          _
        // Predicated region
        $region33: #{waveglow_forward.7} parent=11 // pred_check
          %p568 = pneg %p208
        $region34: #{waveglow_forward.7} parent=11 // pred_check_branch
          %570 = sbr.rel (%p568) target = $region36
        $region35: #{waveglow_forward.7} parent=11 // pred_region
          _
        $region36: #{waveglow_forward.7} parent=11 // pred_fallthru
          _
        // Predicated region
        $region37: #{waveglow_forward.7} parent=11 // pred_check
          %p571 = pneg %p229
        $region38: #{waveglow_forward.7} parent=11 // pred_check_branch
          %573 = sbr.rel (%p571) target = $region40
        $region39: #{waveglow_forward.7} parent=11 // pred_region
          _
        $region40: #{waveglow_forward.7} parent=11 // pred_fallthru
          _
        // Predicated region
        $region41: #{waveglow_forward.7} parent=11 // pred_check
          %p574 = pneg %p250
        $region42: #{waveglow_forward.7} parent=11 // pred_check_branch
          %576 = sbr.rel (%p574) target = $region44
        $region43: #{waveglow_forward.7} parent=11 // pred_region
          _
        $region44: #{waveglow_forward.7} parent=11 // pred_fallthru
          _
        // Predicated region
        $region45: #{waveglow_forward.7} parent=11 // pred_check
          %p577 = pneg %p271
        $region46: #{waveglow_forward.7} parent=11 // pred_check_branch
          %579 = sbr.rel (%p577) target = $region48
        $region47: #{waveglow_forward.7} parent=11 // pred_region
          _
        $region48: #{waveglow_forward.7} parent=11 // pred_fallthru
          _
        // Predicated region
        $region49: #{waveglow_forward.7} parent=11 // pred_check
          %p580 = pneg %p292
        $region50: #{waveglow_forward.7} parent=11 // pred_check_branch
          %582 = sbr.rel (%p580) target = $region52
        $region51: #{waveglow_forward.7} parent=11 // pred_region
          _
        $region52: #{waveglow_forward.7} parent=11 // pred_fallthru
          _
        // Predicated region
        $region53: #{waveglow_forward.7} parent=11 // pred_check
          %p583 = pneg %p313
        $region54: #{waveglow_forward.7} parent=11 // pred_check_branch
          %585 = sbr.rel (%p583) target = $region56
        $region55: #{waveglow_forward.7} parent=11 // pred_region
          _
        $region56: #{waveglow_forward.7} parent=11 // pred_fallthru
          _
        // Predicated region
        $region57: #{waveglow_forward.7} parent=11 // pred_check
          %p586 = pneg %p334
        $region58: #{waveglow_forward.7} parent=11 // pred_check_branch
          %588 = sbr.rel (%p586) target = $region60
        $region59: #{waveglow_forward.7} parent=11 // pred_region
          _
        $region60: #{waveglow_forward.7} parent=11 // pred_fallthru
          _
        // Predicated region
        $region61: #{waveglow_forward.7} parent=11 // pred_check
          %p589 = pneg %p355
        $region62: #{waveglow_forward.7} parent=11 // pred_check_branch
          %591 = sbr.rel (%p589) target = $region64
        $region63: #{waveglow_forward.7} parent=11 // pred_region
          _
        $region64: #{waveglow_forward.7} parent=11 // pred_fallthru
          _
        // Predicated region
        $region65: #{waveglow_forward.7} parent=11 // pred_check
          %p592 = pneg %p376
        $region66: #{waveglow_forward.7} parent=11 // pred_check_branch
          %594 = sbr.rel (%p592) target = $region68
        $region67: #{waveglow_forward.7} parent=11 // pred_region
          _
        $region68: #{waveglow_forward.7} parent=11 // pred_fallthru
          _
        // Predicated region
        $region69: #{waveglow_forward.7} parent=11 // pred_check
          %p595 = pneg %p397
        $region70: #{waveglow_forward.7} parent=11 // pred_check_branch
          %597 = sbr.rel (%p595) target = $region72
        $region71: #{waveglow_forward.7} parent=11 // pred_region
          _
        $region72: #{waveglow_forward.7} parent=11 // pred_fallthru
          _
        // Predicated region
        $region73: #{waveglow_forward.7} parent=11 // pred_check
          %p598 = pneg %p418
        $region74: #{waveglow_forward.7} parent=11 // pred_check_branch
          %600 = sbr.rel (%p598) target = $region76
        $region75: #{waveglow_forward.7} parent=11 // pred_region
          _
        $region76: #{waveglow_forward.7} parent=11 // pred_fallthru
          _
        // Predicated region
        $region77: #{waveglow_forward.7} parent=11 // pred_check
          %p601 = pneg %p439
        $region78: #{waveglow_forward.7} parent=11 // pred_check_branch
          %603 = sbr.rel (%p601) target = $region80
        $region79: #{waveglow_forward.7} parent=11 // pred_region
          _
        $region80: #{waveglow_forward.7} parent=11 // pred_fallthru
          _
        // Predicated region
        $region81: #{waveglow_forward.7} parent=11 // pred_check
          %p604 = pneg %p460
        $region82: #{waveglow_forward.7} parent=11 // pred_check_branch
          %606 = sbr.rel (%p604) target = $region84
        $region83: #{waveglow_forward.7} parent=11 // pred_region
          %s608 = ssub.s32 16, 16
          %609 = vsyncadd [#allocation4], %s608
          %s611 = sshll.u32 [#allocation3], 4
          %s612 = int_to_ptr.vmem [resolvable:$true] %s611
          %614 = dma.hbm_to_vmem [thread:$0]  %s19, 16, %s612, [#allocation4]
        $region84: #{waveglow_forward.7} parent=11 // pred_fallthru
          _
      $region12: #{waveglow_forward.7} parent=5 // pred_fallthru
        _
      %p615 = scmp.lt.s32.totalorder %s30, 2
      // Predicated region
      $region85: #{waveglow_forward.7} parent=5 // pred_check
        %p616 = pneg %p615
      $region86: #{waveglow_forward.7} parent=5 // pred_check_branch
        %618 = sbr.rel (%p616) target = $region88
      $region87: #{waveglow_forward.7} parent=5 // pred_region
        // Predicated region
        $region89: #{waveglow_forward.7} parent=87 // pred_check
          %p619 = pneg %p50
        $region90: #{waveglow_forward.7} parent=87 // pred_check_branch
          %621 = sbr.rel (%p619) target = $region92
        $region91: #{waveglow_forward.7} parent=87 // pred_region
          %p622 = scmp.lt.s32.totalorder %s30, 1
          %s623 = scalar_select %p622, %s30, 1
          %s624 = smul.addr %s623, 2
          %s625 = smul.addr %s624, 8
          %s626 = scalar_lea.vmem %s0, %s625
        $region92: #{waveglow_forward.7} parent=87 // pred_fallthru
          _
        // Predicated region
        $region93: #{waveglow_forward.7} parent=87 // pred_check
          %p627 = pneg %p76
        $region94: #{waveglow_forward.7} parent=87 // pred_check_branch
          %629 = sbr.rel (%p627) target = $region96
        $region95: #{waveglow_forward.7} parent=87 // pred_region
          %p630 = scmp.lt.s32.totalorder %s30, 1
          %s631 = scalar_select %p630, %s30, 1
          %s632 = smul.addr %s631, 2
          %s633 = smul.addr %s632, 8
          %s634 = scalar_lea.vmem %s1, %s633
        $region96: #{waveglow_forward.7} parent=87 // pred_fallthru
          _
      $region88: #{waveglow_forward.7} parent=5 // pred_fallthru
        _
      %p635 = scmp.le.s32.totalorder 1, %s30
      %p636 = scmp.lt.s32.totalorder %s30, 3
      %p637 = pnand %p635, %p636
      %p638 = pneg %p637
      // Predicated region
      $region97: #{waveglow_forward.7} parent=5 // pred_check
        _
      $region98: #{waveglow_forward.7} parent=5 // pred_check_branch
        %640 = sbr.rel (%p637) target = $region100
      $region99: #{waveglow_forward.7} parent=5 // pred_region
        %s641 = ssub.s32 %s30, 1
        // Predicated region
        $region101: #{waveglow_forward.7} parent=99 // pred_check
          %p642 = pneg %p460
        $region102: #{waveglow_forward.7} parent=99 // pred_check_branch
          %644 = sbr.rel (%p642) target = $region104
        $region103: #{waveglow_forward.7} parent=99 // pred_region
          %645 = dma.done [#allocation4], 16
        $region104: #{waveglow_forward.7} parent=99 // pred_fallthru
          _
        %p646 = scmp.lt.s32.totalorder %s35, 1
        %s647 = scalar_select %p646, %s35, 1
        %s648 = smul.addr %s647, 2
        %s649 = smul.addr %s648, 8
        %s650 = scalar_lea.vmem %s0, %s649
        %p651 = pneg %p56
        %p652 = pneg %p53
        %p653 = scmp.lt.s32.totalorder %s35, 1
        %s654 = scalar_select %p653, %s35, 1
        %s655 = smul.addr %s654, 2
        %s656 = smul.addr %s655, 8
        %s657 = scalar_lea.vmem %s1, %s656
        %p658 = pneg %p82
        %p659 = pneg %p79
        %p660 = pneg %p103
        %p661 = pneg %p100
        %p662 = pneg %p124
        %p663 = pneg %p121
        %p664 = pneg %p145
        %p665 = pneg %p142
        %p666 = pneg %p166
        %p667 = pneg %p163
        %p668 = pneg %p187
        %p669 = pneg %p184
        %p670 = pneg %p208
        %p671 = pneg %p205
        %p672 = pneg %p229
        %p673 = pneg %p226
        %p674 = pneg %p250
        %p675 = pneg %p247
        %p676 = pneg %p271
        %p677 = pneg %p268
        %p678 = pneg %p292
        %p679 = pneg %p289
        %p680 = pneg %p313
        %p681 = pneg %p310
        %p682 = pneg %p334
        %p683 = pneg %p331
        %p684 = pneg %p355
        %p685 = pneg %p352
        %p686 = pneg %p376
        %p687 = pneg %p373
        %p688 = pneg %p397
        %p689 = pneg %p394
        %p690 = pneg %p418
        %p691 = pneg %p415
        %p692 = pneg %p439
        %p693 = pneg %p436
        %p694 = pneg %p460
        %p695 = pneg %p457
        %p696 = pneg %p486
        %p697 = pneg %p483
        %p698 = scmp.lt.s32.totalorder %s35, 1
        %s699 = scalar_select %p698, %s35, 1
        %s700 = smul.addr %s699, 2
        %s701 = smul.addr %s700, 8
        %s702 = scalar_lea.vmem %s20, %s701
        %p703 = pneg %p512
        %p704 = pneg %p509
        %p705 = scmp.lt.s32.totalorder %s35, 1
        %s706 = scalar_select %p705, %s35, 1
        %s707 = smul.addr %s706, 2
        %s708 = smul.addr %s707, 8
        %s709 = scalar_lea.vmem %s21, %s708
        %p710 = pneg %p538
        %p711 = pneg %p535
        %p712 = scmp.lt.s32.totalorder %s35, 1
        %s713 = scalar_select %p712, %s35, 1
        %s714 = scalar_lea.vmem %s22, %s713
        %p715 = scmp.lt.s32.totalorder %s35, 1
        %s716 = scalar_select %p715, %s35, 1
        %s717 = smul.addr %s716, 2
        %s718 = smul.addr %s717, 8
        %s719 = scalar_lea.vmem %s0, %s718
        %p720 = scmp.lt.s32.totalorder %s35, 1
        %s721 = scalar_select %p720, %s35, 1
        %s722 = smul.addr %s721, 2
        %s723 = smul.addr %s722, 8
        %s724 = scalar_lea.vmem %s1, %s723
        %p725 = scmp.lt.s32.totalorder %s35, 1
        %s726 = scalar_select %p725, %s35, 1
        %s727 = smul.addr %s726, 2
        %s728 = smul.addr %s727, 8
        %s729 = scalar_lea.vmem %s20, %s728
        %p730 = scmp.lt.s32.totalorder %s35, 1
        %s731 = scalar_select %p730, %s35, 1
        %s732 = smul.addr %s731, 2
        %s733 = smul.addr %s732, 8
        %s734 = scalar_lea.vmem %s21, %s733
        %p735 = scmp.lt.s32.totalorder %s35, 1
        %s736 = scalar_select %p735, %s35, 1
        %s737 = scalar_lea.vmem %s22, %s736
        %v738 = vld [vmem:[%s719] sm:$0xff]
        %v739 = vld [vmem:[%s719 + $0x8] sm:$0xff]
        %v740 = vld [vmem:[%s2] sm:$0xff]
        %vm741 = vcmask 64512
        %v743 = vsel %vm741, %v738, 0
        %v746 = vsel %vm741, %v739, 0
        %748 = vmatprep.subr.mxu0 0.0
        %749 = vmatpush1.msra.mxu0 %v740
        %750 = vmatprep.subr.mxu0 0.0
        %751 = vmatpush1.msra.mxu0 0.0
        %752 = vmatprep.subr.mxu0 0.0
        %753 = vmatpush1.msra.mxu0 0.0
        %754 = vmatprep.subr.mxu0 0.0
        %755 = vmatpush1.msra.mxu0 0.0
        %756 = vmatprep.subr.mxu0 0.0
        %757 = vmatpush1.msra.mxu0 0.0
        %758 = vmatprep.subr.mxu0 0.0
        %759 = vmatpush1.msra.mxu0 0.0
        %760 = vmatprep.subr.mxu0 0.0
        %761 = vmatpush1.msra.mxu0 0.0
        %762 = vmatprep.subr.mxu0 0.0
        %763 = vmatpush1.msra.mxu0 0.0
        %764 = vmatprep.subr.mxu0 0.0
        %765 = vmatpush1.msra.mxu0 0.0
        %766 = vmatprep.subr.mxu0 0.0
        %767 = vmatpush1.msra.mxu0 0.0
        %768 = vmatprep.subr.mxu0 0.0
        %769 = vmatpush1.msra.mxu0 0.0
        %770 = vmatprep.subr.mxu0 0.0
        %771 = vmatpush1.msra.mxu0 0.0
        %772 = vmatprep.subr.mxu0 0.0
        %773 = vmatpush1.msra.mxu0 0.0
        %774 = vmatprep.subr.mxu0 0.0
        %775 = vmatpush1.msra.mxu0 0.0
        %776 = vmatprep.subr.mxu0 0.0
        %777 = vmatpush1.msra.mxu0 0.0
        %778 = vmatprep.subr.mxu0 0.0
        %779 = vmatpush1.msra.mxu0 0.0
        %780 = vmatprep.subr.mxu0 0.0
        %781 = vmatpush1.msra.mxu0 0.0
        %782 = vmatprep.subr.mxu0 0.0
        %783 = vmatpush1.msra.mxu0 0.0
        %784 = vmatprep.subr.mxu0 0.0
        %785 = vmatpush1.msra.mxu0 0.0
        %786 = vmatprep.subr.mxu0 0.0
        %787 = vmatpush1.msra.mxu0 0.0
        %788 = vmatprep.subr.mxu0 0.0
        %789 = vmatpush1.msra.mxu0 0.0
        %790 = vmatprep.subr.mxu0 0.0
        %791 = vmatpush1.msra.mxu0 0.0
        %792 = vmatprep.subr.mxu0 0.0
        %793 = vmatpush1.msra.mxu0 0.0
        %794 = vmatprep.subr.mxu0 0.0
        %795 = vmatpush1.msra.mxu0 0.0
        %796 = vmatprep.subr.mxu0 0.0
        %797 = vmatpush1.msra.mxu0 0.0
        %798 = vmatprep.subr.mxu0 0.0
        %799 = vmatpush1.msra.mxu0 0.0
        %800 = vmatprep.subr.mxu0 0.0
        %801 = vmatpush1.msra.mxu0 0.0
        %802 = vmatprep.subr.mxu0 0.0
        %803 = vmatpush1.msra.mxu0 0.0
        %804 = vmatprep.subr.mxu0 0.0
        %805 = vmatpush1.msra.mxu0 0.0
        %806 = vmatprep.subr.mxu0 0.0
        %807 = vmatpush1.msra.mxu0 0.0
        %808 = vmatprep.subr.mxu0 0.0
        %809 = vmatpush1.msra.mxu0 0.0
        %810 = vmatprep.subr.mxu0 0.0
        %811 = vmatpush1.msra.mxu0 0.0
        %812 = vmatprep.mubr.f32.mxu0 0.0
        %813 = vmatmul.mubr.f32.gmra.mrb[0].mxu0 %v743
        %v814 = vpop.f32.mrb[0].mxu0
        %v815 = vadd.f32 0.0, %v814
        %v816 = vpop.f32.mrb[0].mxu0
        %817 = vmatprep.mubr.f32.mxu0 0.0
        %818 = vmatmul.mubr.f32.gmra.mrb[0].mxu0 %v746
        %v819 = vpop.f32.mrb[0].mxu0
        %v820 = vadd.f32 0.0, %v819
        %v821 = vpop.f32.mrb[0].mxu0
        %822 = vdwg.mxu0
        %v823 = vld [vmem:[%s3] sm:$0xff]
        %824 = vmatprep.subr.mxu0 0.0
        %825 = vmatpush1.msra.mxu0 %v823
        %826 = vmatprep.subr.mxu0 0.0
        %827 = vmatpush1.msra.mxu0 0.0
        %828 = vmatprep.subr.mxu0 0.0
        %829 = vmatpush1.msra.mxu0 0.0
        %830 = vmatprep.subr.mxu0 0.0
        %831 = vmatpush1.msra.mxu0 0.0
        %832 = vmatprep.subr.mxu0 0.0
        %833 = vmatpush1.msra.mxu0 0.0
        %834 = vmatprep.subr.mxu0 0.0
        %835 = vmatpush1.msra.mxu0 0.0
        %836 = vmatprep.subr.mxu0 0.0
        %837 = vmatpush1.msra.mxu0 0.0
        %838 = vmatprep.subr.mxu0 0.0
        %839 = vmatpush1.msra.mxu0 0.0
        %840 = vmatprep.subr.mxu0 0.0
        %841 = vmatpush1.msra.mxu0 0.0
        %842 = vmatprep.subr.mxu0 0.0
        %843 = vmatpush1.msra.mxu0 0.0
        %844 = vmatprep.subr.mxu0 0.0
        %845 = vmatpush1.msra.mxu0 0.0
        %846 = vmatprep.subr.mxu0 0.0
        %847 = vmatpush1.msra.mxu0 0.0
        %848 = vmatprep.subr.mxu0 0.0
        %849 = vmatpush1.msra.mxu0 0.0
        %850 = vmatprep.subr.mxu0 0.0
        %851 = vmatpush1.msra.mxu0 0.0
        %852 = vmatprep.subr.mxu0 0.0
        %853 = vmatpush1.msra.mxu0 0.0
        %854 = vmatprep.subr.mxu0 0.0
        %855 = vmatpush1.msra.mxu0 0.0
        %856 = vmatprep.subr.mxu0 0.0
        %857 = vmatpush1.msra.mxu0 0.0
        %858 = vmatprep.subr.mxu0 0.0
        %859 = vmatpush1.msra.mxu0 0.0
        %860 = vmatprep.subr.mxu0 0.0
        %861 = vmatpush1.msra.mxu0 0.0
        %862 = vmatprep.subr.mxu0 0.0
        %863 = vmatpush1.msra.mxu0 0.0
        %864 = vmatprep.subr.mxu0 0.0
        %865 = vmatpush1.msra.mxu0 0.0
        %866 = vmatprep.subr.mxu0 0.0
        %867 = vmatpush1.msra.mxu0 0.0
        %868 = vmatprep.subr.mxu0 0.0
        %869 = vmatpush1.msra.mxu0 0.0
        %870 = vmatprep.subr.mxu0 0.0
        %871 = vmatpush1.msra.mxu0 0.0
        %872 = vmatprep.subr.mxu0 0.0
        %873 = vmatpush1.msra.mxu0 0.0
        %874 = vmatprep.subr.mxu0 0.0
        %875 = vmatpush1.msra.mxu0 0.0
        %876 = vmatprep.subr.mxu0 0.0
        %877 = vmatpush1.msra.mxu0 0.0
        %878 = vmatprep.subr.mxu0 0.0
        %879 = vmatpush1.msra.mxu0 0.0
        %880 = vmatprep.subr.mxu0 0.0
        %881 = vmatpush1.msra.mxu0 0.0
        %882 = vmatprep.subr.mxu0 0.0
        %883 = vmatpush1.msra.mxu0 0.0
        %884 = vmatprep.subr.mxu0 0.0
        %885 = vmatpush1.msra.mxu0 0.0
        %886 = vmatprep.subr.mxu0 0.0
        %887 = vmatpush1.msra.mxu0 0.0
        %888 = vmatprep.mubr.f32.mxu0 0.0
        %889 = vmatmul.mubr.f32.gmra.mrb[0].mxu0 %v743
        %v890 = vpop.f32.mrb[0].mxu0
        %v891 = vadd.f32 0.0, %v890
        %v892 = vpop.f32.mrb[0].mxu0
        %893 = vmatprep.mubr.f32.mxu0 0.0
        %894 = vmatmul.mubr.f32.gmra.mrb[0].mxu0 %v746
        %v895 = vpop.f32.mrb[0].mxu0
        %v896 = vadd.f32 0.0, %v895
        %v897 = vpop.f32.mrb[0].mxu0
        %898 = vdwg.mxu0
        %v899 = vld [vmem:[%s724] sm:$0xff]
        %v900 = vld [vmem:[%s724 + $0x8] sm:$0xff]
        %v901 = vld [vmem:[%s6] sm:$0xff]
        %v902 = vld [vmem:[%s7] sm:$0x1]
        %v904 = vlaneseq
        %v905 = vshrl.u32 %v904, 7
        %v906 = vsub.s32 0, %v905
        %v907 = vrot.slane %v902, %v906
        %v910 = vsel %vm741, %v899, 0
        %v913 = vsel %vm741, %v900, 0
        %915 = vmatprep.subr.mxu0 0.0
        %916 = vmatpush1.msra.mxu0 %v901
        %917 = vmatprep.subr.mxu0 0.0
        %918 = vmatpush1.msra.mxu0 0.0
        %919 = vmatprep.subr.mxu0 0.0
        %920 = vmatpush1.msra.mxu0 0.0
        %921 = vmatprep.subr.mxu0 0.0
        %922 = vmatpush1.msra.mxu0 0.0
        %923 = vmatprep.subr.mxu0 0.0
        %924 = vmatpush1.msra.mxu0 0.0
        %925 = vmatprep.subr.mxu0 0.0
        %926 = vmatpush1.msra.mxu0 0.0
        %927 = vmatprep.subr.mxu0 0.0
        %928 = vmatpush1.msra.mxu0 0.0
        %929 = vmatprep.subr.mxu0 0.0
        %930 = vmatpush1.msra.mxu0 0.0
        %931 = vmatprep.subr.mxu0 0.0
        %932 = vmatpush1.msra.mxu0 0.0
        %933 = vmatprep.subr.mxu0 0.0
        %934 = vmatpush1.msra.mxu0 0.0
        %935 = vmatprep.subr.mxu0 0.0
        %936 = vmatpush1.msra.mxu0 0.0
        %937 = vmatprep.subr.mxu0 0.0
        %938 = vmatpush1.msra.mxu0 0.0
        %939 = vmatprep.subr.mxu0 0.0
        %940 = vmatpush1.msra.mxu0 0.0
        %941 = vmatprep.subr.mxu0 0.0
        %942 = vmatpush1.msra.mxu0 0.0
        %943 = vmatprep.subr.mxu0 0.0
        %944 = vmatpush1.msra.mxu0 0.0
        %945 = vmatprep.subr.mxu0 0.0
        %946 = vmatpush1.msra.mxu0 0.0
        %947 = vmatprep.subr.mxu0 0.0
        %948 = vmatpush1.msra.mxu0 0.0
        %949 = vmatprep.subr.mxu0 0.0
        %950 = vmatpush1.msra.mxu0 0.0
        %951 = vmatprep.subr.mxu0 0.0
        %952 = vmatpush1.msra.mxu0 0.0
        %953 = vmatprep.subr.mxu0 0.0
        %954 = vmatpush1.msra.mxu0 0.0
        %955 = vmatprep.subr.mxu0 0.0
        %956 = vmatpush1.msra.mxu0 0.0
        %957 = vmatprep.subr.mxu0 0.0
        %958 = vmatpush1.msra.mxu0 0.0
        %959 = vmatprep.subr.mxu0 0.0
        %960 = vmatpush1.msra.mxu0 0.0
        %961 = vmatprep.subr.mxu0 0.0
        %962 = vmatpush1.msra.mxu0 0.0
        %963 = vmatprep.subr.mxu0 0.0
        %964 = vmatpush1.msra.mxu0 0.0
        %965 = vmatprep.subr.mxu0 0.0
        %966 = vmatpush1.msra.mxu0 0.0
        %967 = vmatprep.subr.mxu0 0.0
        %968 = vmatpush1.msra.mxu0 0.0
        %969 = vmatprep.subr.mxu0 0.0
        %970 = vmatpush1.msra.mxu0 0.0
        %971 = vmatprep.subr.mxu0 0.0
        %972 = vmatpush1.msra.mxu0 0.0
        %973 = vmatprep.subr.mxu0 0.0
        %974 = vmatpush1.msra.mxu0 0.0
        %975 = vmatprep.subr.mxu0 0.0
        %976 = vmatpush1.msra.mxu0 0.0
        %977 = vmatprep.subr.mxu0 0.0
        %978 = vmatpush1.msra.mxu0 0.0
        %979 = vmatprep.mubr.f32.mxu0 0.0
        %980 = vmatmul.mubr.f32.gmra.mrb[0].mxu0 %v910
        %v981 = vpop.f32.mrb[0].mxu0
        %v982 = vadd.f32 %v907, %v981
        %v983 = vpop.f32.mrb[0].mxu0
        %984 = vmatprep.mubr.f32.mxu0 0.0
        %985 = vmatmul.mubr.f32.gmra.mrb[0].mxu0 %v913
        %v986 = vpop.f32.mrb[0].mxu0
        %v987 = vadd.f32 %v907, %v986
        %v988 = vpop.f32.mrb[0].mxu0
        %989 = vdwg.mxu0
        %v990 = vld [vmem:[%s4] sm:$0xf]
        %v991 = vld [vmem:[%s5] sm:$0x1]
        %v993 = vlaneseq
        %v994 = vshrl.u32 %v993, 7
        %v995 = vsub.s32 0, %v994
        %v996 = vrot.slane %v991, %v995
        %vm998 = vcmask 31744
        %v1000 = vsel %vm998, %v815, 0
        %v1003 = vsel %vm998, %v820, 0
        %vm1005 = vcmask 1043456
        %v1007 = vsel %vm1005, %v990, 0
        %1009 = vmatprep.subr.mxu0 0.0
        %1010 = vmatpush1.msra.mxu0 %v1007
        %1011 = vmatprep.subr.mxu0 0.0
        %1012 = vmatpush1.msra.mxu0 0.0
        %1013 = vmatprep.subr.mxu0 0.0
        %1014 = vmatpush1.msra.mxu0 0.0
        %1015 = vmatprep.subr.mxu0 0.0
        %1016 = vmatpush1.msra.mxu0 0.0
        %1017 = vmatprep.subr.mxu0 0.0
        %1018 = vmatpush1.msra.mxu0 0.0
        %1019 = vmatprep.subr.mxu0 0.0
        %1020 = vmatpush1.msra.mxu0 0.0
        %1021 = vmatprep.subr.mxu0 0.0
        %1022 = vmatpush1.msra.mxu0 0.0
        %1023 = vmatprep.subr.mxu0 0.0
        %1024 = vmatpush1.msra.mxu0 0.0
        %1025 = vmatprep.subr.mxu0 0.0
        %1026 = vmatpush1.msra.mxu0 0.0
        %1027 = vmatprep.subr.mxu0 0.0
        %1028 = vmatpush1.msra.mxu0 0.0
        %1029 = vmatprep.subr.mxu0 0.0
        %1030 = vmatpush1.msra.mxu0 0.0
        %1031 = vmatprep.subr.mxu0 0.0
        %1032 = vmatpush1.msra.mxu0 0.0
        %1033 = vmatprep.subr.mxu0 0.0
        %1034 = vmatpush1.msra.mxu0 0.0
        %1035 = vmatprep.subr.mxu0 0.0
        %1036 = vmatpush1.msra.mxu0 0.0
        %1037 = vmatprep.subr.mxu0 0.0
        %1038 = vmatpush1.msra.mxu0 0.0
        %1039 = vmatprep.subr.mxu0 0.0
        %1040 = vmatpush1.msra.mxu0 0.0
        %1041 = vmatprep.subr.mxu0 0.0
        %1042 = vmatpush1.msra.mxu0 0.0
        %1043 = vmatprep.subr.mxu0 0.0
        %1044 = vmatpush1.msra.mxu0 0.0
        %1045 = vmatprep.subr.mxu0 0.0
        %1046 = vmatpush1.msra.mxu0 0.0
        %1047 = vmatprep.subr.mxu0 0.0
        %1048 = vmatpush1.msra.mxu0 0.0
        %1049 = vmatprep.subr.mxu0 0.0
        %1050 = vmatpush1.msra.mxu0 0.0
        %1051 = vmatprep.subr.mxu0 0.0
        %1052 = vmatpush1.msra.mxu0 0.0
        %1053 = vmatprep.subr.mxu0 0.0
        %1054 = vmatpush1.msra.mxu0 0.0
        %1055 = vmatprep.subr.mxu0 0.0
        %1056 = vmatpush1.msra.mxu0 0.0
        %1057 = vmatprep.subr.mxu0 0.0
        %1058 = vmatpush1.msra.mxu0 0.0
        %1059 = vmatprep.subr.mxu0 0.0
        %1060 = vmatpush1.msra.mxu0 0.0
        %1061 = vmatprep.subr.mxu0 0.0
        %1062 = vmatpush1.msra.mxu0 0.0
        %1063 = vmatprep.subr.mxu0 0.0
        %1064 = vmatpush1.msra.mxu0 0.0
        %1065 = vmatprep.subr.mxu0 0.0
        %1066 = vmatpush1.msra.mxu0 0.0
        %1067 = vmatprep.subr.mxu0 0.0
        %1068 = vmatpush1.msra.mxu0 0.0
        %1069 = vmatprep.subr.mxu0 0.0
        %1070 = vmatpush1.msra.mxu0 0.0
        %1071 = vmatprep.subr.mxu0 0.0
        %1072 = vmatpush1.msra.mxu0 0.0
        %1073 = vmatprep.mubr.f32.mxu0 0.0
        %1074 = vmatmul.mubr.f32.gmra.mrb[0].mxu0 %v1000
        %v1075 = vpop.f32.mrb[0].mxu0
        %v1076 = vadd.f32 %v996, %v1075
        %v1077 = vpop.f32.mrb[0].mxu0
        %1078 = vmatprep.mubr.f32.mxu0 0.0
        %1079 = vmatmul.mubr.f32.gmra.mrb[0].mxu0 %v1003
        %v1080 = vpop.f32.mrb[0].mxu0
        %v1081 = vadd.f32 %v996, %v1080
        %v1082 = vpop.f32.mrb[0].mxu0
        %1083 = vdwg.mxu0
        %vm1084 = vcmask 261120
        %1085 = vst.msk [vmem:[#allocation2] sm:$0xff] %vm1084, 0.0
        %1086 = vst.msk [vmem:[#allocation2 + $0x8] sm:$0xff] %vm1084, 0.0
        %1087 = vst.msk [vmem:[#allocation2 + $0x10] sm:$0xff] %vm1084, 0.0
        %1088 = vst.msk [vmem:[#allocation2 + $0x18] sm:$0xff] %vm1084, 0.0
        %1089 = vst.msk [vmem:[#allocation2 + $0x8] sm:$0xff] %vm1084, %v1076
        %1090 = vst.msk [vmem:[#allocation2 + $0x10] sm:$0xff] %vm1084, %v1081
        %v1091 = vld [vmem:[#allocation2 + $0x7] sm:$0xff]
        %v1092 = vld [vmem:[#allocation2 + $0xf] sm:$0xff]
        %v1093 = vld [vmem:[%s8] sm:$0xff]
        %v1094 = vld [vmem:[%s8 + $0x8] sm:$0xff]
        %v1095 = vld [vmem:[%s8 + $0x10] sm:$0xff]
        %v1096 = vld [vmem:[%s8 + $0x18] sm:$0xff]
        %v1097 = vld [vmem:[#allocation2 + $0x8] sm:$0xff]
        %v1098 = vld [vmem:[#allocation2 + $0x10] sm:$0xff]
        %s1099 = scalar_lea.vmem %s8, 32
        %v1100 = vld [vmem:[%s1099] sm:$0xff]
        %v1101 = vld [vmem:[%s1099 + $0x8] sm:$0xff]
        %v1102 = vld [vmem:[%s1099 + $0x10] sm:$0xff]
        %v1103 = vld [vmem:[%s1099 + $0x18] sm:$0xff]
        %v1105 = vsel %vm1084, %v1097, 0
        %v1108 = vsel %vm1084, %v1098, 0
        %1110 = vmatprep.subr.mxu0 0.0
        %1111 = vmatpush1.msra.mxu0 %v1100
        %1112 = vmatprep.subr.mxu0 0.0
        %1113 = vmatpush1.msra.mxu0 %v1101
        %1114 = vmatprep.subr.mxu0 0.0
        %1115 = vmatpush1.msra.mxu0 %v1102
        %1116 = vmatprep.subr.mxu0 0.0
        %1117 = vmatpush1.msra.mxu0 %v1103
        %1118 = vmatprep.subr.mxu0 0.0
        %1119 = vmatpush1.msra.mxu0 0.0
        %1120 = vmatprep.subr.mxu0 0.0
        %1121 = vmatpush1.msra.mxu0 0.0
        %1122 = vmatprep.subr.mxu0 0.0
        %1123 = vmatpush1.msra.mxu0 0.0
        %1124 = vmatprep.subr.mxu0 0.0
        %1125 = vmatpush1.msra.mxu0 0.0
        %1126 = vmatprep.subr.mxu0 0.0
        %1127 = vmatpush1.msra.mxu0 0.0
        %1128 = vmatprep.subr.mxu0 0.0
        %1129 = vmatpush1.msra.mxu0 0.0
        %1130 = vmatprep.subr.mxu0 0.0
        %1131 = vmatpush1.msra.mxu0 0.0
        %1132 = vmatprep.subr.mxu0 0.0
        %1133 = vmatpush1.msra.mxu0 0.0
        %1134 = vmatprep.subr.mxu0 0.0
        %1135 = vmatpush1.msra.mxu0 0.0
        %1136 = vmatprep.subr.mxu0 0.0
        %1137 = vmatpush1.msra.mxu0 0.0
        %1138 = vmatprep.subr.mxu0 0.0
        %1139 = vmatpush1.msra.mxu0 0.0
        %1140 = vmatprep.subr.mxu0 0.0
        %1141 = vmatpush1.msra.mxu0 0.0
        %1142 = vmatprep.subr.mxu0 0.0
        %1143 = vmatpush1.msra.mxu0 0.0
        %1144 = vmatprep.subr.mxu0 0.0
        %1145 = vmatpush1.msra.mxu0 0.0
        %1146 = vmatprep.subr.mxu0 0.0
        %1147 = vmatpush1.msra.mxu0 0.0
        %1148 = vmatprep.subr.mxu0 0.0
        %1149 = vmatpush1.msra.mxu0 0.0
        %1150 = vmatprep.subr.mxu0 0.0
        %1151 = vmatpush1.msra.mxu0 0.0
        %1152 = vmatprep.subr.mxu0 0.0
        %1153 = vmatpush1.msra.mxu0 0.0
        %1154 = vmatprep.subr.mxu0 0.0
        %1155 = vmatpush1.msra.mxu0 0.0
        %1156 = vmatprep.subr.mxu0 0.0
        %1157 = vmatpush1.msra.mxu0 0.0
        %1158 = vmatprep.subr.mxu0 0.0
        %1159 = vmatpush1.msra.mxu0 0.0
        %1160 = vmatprep.subr.mxu0 0.0
        %1161 = vmatpush1.msra.mxu0 0.0
        %1162 = vmatprep.subr.mxu0 0.0
        %1163 = vmatpush1.msra.mxu0 0.0
        %1164 = vmatprep.subr.mxu0 0.0
        %1165 = vmatpush1.msra.mxu0 0.0
        %1166 = vmatprep.subr.mxu0 0.0
        %1167 = vmatpush1.msra.mxu0 0.0
        %1168 = vmatprep.subr.mxu0 0.0
        %1169 = vmatpush1.msra.mxu0 0.0
        %1170 = vmatprep.subr.mxu0 0.0
        %1171 = vmatpush1.msra.mxu0 0.0
        %1172 = vmatprep.subr.mxu0 0.0
        %1173 = vmatpush1.msra.mxu0 0.0
        %1174 = vmatprep.mubr.f32.mxu0 0.0
        %1175 = vmatmul.mubr.f32.gmra.mrb[0].mxu0 %v1105
        %v1176 = vpop.f32.mrb[0].mxu0
        %v1177 = vadd.f32 0.0, %v1176
        %v1178 = vpop.f32.mrb[0].mxu0
        %1179 = vmatprep.mubr.f32.mxu0 0.0
        %1180 = vmatmul.mubr.f32.gmra.mrb[0].mxu0 %v1108
        %v1181 = vpop.f32.mrb[0].mxu0
        %v1182 = vadd.f32 0.0, %v1181
        %v1183 = vpop.f32.mrb[0].mxu0
        %1184 = vdwg.mxu0
        %v1186 = vsel %vm1084, %v1091, 0
        %v1189 = vsel %vm1084, %v1092, 0
        %1191 = vmatprep.subr.mxu0 0.0
        %1192 = vmatpush1.msra.mxu0 %v1093
        %1193 = vmatprep.subr.mxu0 0.0
        %1194 = vmatpush1.msra.mxu0 %v1094
        %1195 = vmatprep.subr.mxu0 0.0
        %1196 = vmatpush1.msra.mxu0 %v1095
        %1197 = vmatprep.subr.mxu0 0.0
        %1198 = vmatpush1.msra.mxu0 %v1096
        %1199 = vmatprep.subr.mxu0 0.0
        %1200 = vmatpush1.msra.mxu0 0.0
        %1201 = vmatprep.subr.mxu0 0.0
        %1202 = vmatpush1.msra.mxu0 0.0
        %1203 = vmatprep.subr.mxu0 0.0
        %1204 = vmatpush1.msra.mxu0 0.0
        %1205 = vmatprep.subr.mxu0 0.0
        %1206 = vmatpush1.msra.mxu0 0.0
        %1207 = vmatprep.subr.mxu0 0.0
        %1208 = vmatpush1.msra.mxu0 0.0
        %1209 = vmatprep.subr.mxu0 0.0
        %1210 = vmatpush1.msra.mxu0 0.0
        %1211 = vmatprep.subr.mxu0 0.0
        %1212 = vmatpush1.msra.mxu0 0.0
        %1213 = vmatprep.subr.mxu0 0.0
        %1214 = vmatpush1.msra.mxu0 0.0
        %1215 = vmatprep.subr.mxu0 0.0
        %1216 = vmatpush1.msra.mxu0 0.0
        %1217 = vmatprep.subr.mxu0 0.0
        %1218 = vmatpush1.msra.mxu0 0.0
        %1219 = vmatprep.subr.mxu0 0.0
        %1220 = vmatpush1.msra.mxu0 0.0
        %1221 = vmatprep.subr.mxu0 0.0
        %1222 = vmatpush1.msra.mxu0 0.0
        %1223 = vmatprep.subr.mxu0 0.0
        %1224 = vmatpush1.msra.mxu0 0.0
        %1225 = vmatprep.subr.mxu0 0.0
        %1226 = vmatpush1.msra.mxu0 0.0
        %1227 = vmatprep.subr.mxu0 0.0
        %1228 = vmatpush1.msra.mxu0 0.0
        %1229 = vmatprep.subr.mxu0 0.0
        %1230 = vmatpush1.msra.mxu0 0.0
        %1231 = vmatprep.subr.mxu0 0.0
        %1232 = vmatpush1.msra.mxu0 0.0
        %1233 = vmatprep.subr.mxu0 0.0
        %1234 = vmatpush1.msra.mxu0 0.0
        %1235 = vmatprep.subr.mxu0 0.0
        %1236 = vmatpush1.msra.mxu0 0.0
        %1237 = vmatprep.subr.mxu0 0.0
        %1238 = vmatpush1.msra.mxu0 0.0
        %1239 = vmatprep.subr.mxu0 0.0
        %1240 = vmatpush1.msra.mxu0 0.0
        %1241 = vmatprep.subr.mxu0 0.0
        %1242 = vmatpush1.msra.mxu0 0.0
        %1243 = vmatprep.subr.mxu0 0.0
        %1244 = vmatpush1.msra.mxu0 0.0
        %1245 = vmatprep.subr.mxu0 0.0
        %1246 = vmatpush1.msra.mxu0 0.0
        %1247 = vmatprep.subr.mxu0 0.0
        %1248 = vmatpush1.msra.mxu0 0.0
        %1249 = vmatprep.subr.mxu0 0.0
        %1250 = vmatpush1.msra.mxu0 0.0
        %1251 = vmatprep.subr.mxu0 0.0
        %1252 = vmatpush1.msra.mxu0 0.0
        %1253 = vmatprep.subr.mxu0 0.0
        %1254 = vmatpush1.msra.mxu0 0.0
        %1255 = vmatprep.mubr.f32.mxu0 0.0
        %1256 = vmatmul.mubr.f32.gmra.mrb[0].mxu0 %v1186
        %v1257 = vpop.f32.mrb[0].mxu0
        %v1258 = vadd.f32 %v1177, %v1257
        %v1259 = vpop.f32.mrb[0].mxu0
        %1260 = vmatprep.mubr.f32.mxu0 0.0
        %1261 = vmatmul.mubr.f32.gmra.mrb[0].mxu0 %v1189
        %v1262 = vpop.f32.mrb[0].mxu0
        %v1263 = vadd.f32 %v1182, %v1262
        %v1264 = vpop.f32.mrb[0].mxu0
        %1265 = vdwg.mxu0
        %v1266 = vld [vmem:[#allocation2 + $0x9] sm:$0xff]
        %v1267 = vld [vmem:[#allocation2 + $0x11] sm:$0xff]
        %s1268 = scalar_lea.vmem %s8, 64
        %v1269 = vld [vmem:[%s1268] sm:$0xff]
        %v1270 = vld [vmem:[%s1268 + $0x8] sm:$0xff]
        %v1271 = vld [vmem:[%s1268 + $0x10] sm:$0xff]
        %v1272 = vld [vmem:[%s1268 + $0x18] sm:$0xff]
        %v1274 = vsel %vm1084, %v1266, 0
        %v1277 = vsel %vm1084, %v1267, 0
        %1279 = vmatprep.subr.mxu0 0.0
        %1280 = vmatpush1.msra.mxu0 %v1269
        %1281 = vmatprep.subr.mxu0 0.0
        %1282 = vmatpush1.msra.mxu0 %v1270
        %1283 = vmatprep.subr.mxu0 0.0
        %1284 = vmatpush1.msra.mxu0 %v1271
        %1285 = vmatprep.subr.mxu0 0.0
        %1286 = vmatpush1.msra.mxu0 %v1272
        %1287 = vmatprep.subr.mxu0 0.0
        %1288 = vmatpush1.msra.mxu0 0.0
        %1289 = vmatprep.subr.mxu0 0.0
        %1290 = vmatpush1.msra.mxu0 0.0
        %1291 = vmatprep.subr.mxu0 0.0
        %1292 = vmatpush1.msra.mxu0 0.0
        %1293 = vmatprep.subr.mxu0 0.0
        %1294 = vmatpush1.msra.mxu0 0.0
        %1295 = vmatprep.subr.mxu0 0.0
        %1296 = vmatpush1.msra.mxu0 0.0
        %1297 = vmatprep.subr.mxu0 0.0
        %1298 = vmatpush1.msra.mxu0 0.0
        %1299 = vmatprep.subr.mxu0 0.0
        %1300 = vmatpush1.msra.mxu0 0.0
        %1301 = vmatprep.subr.mxu0 0.0
        %1302 = vmatpush1.msra.mxu0 0.0
        %1303 = vmatprep.subr.mxu0 0.0
        %1304 = vmatpush1.msra.mxu0 0.0
        %1305 = vmatprep.subr.mxu0 0.0
        %1306 = vmatpush1.msra.mxu0 0.0
        %1307 = vmatprep.subr.mxu0 0.0
        %1308 = vmatpush1.msra.mxu0 0.0
        %1309 = vmatprep.subr.mxu0 0.0
        %1310 = vmatpush1.msra.mxu0 0.0
        %1311 = vmatprep.subr.mxu0 0.0
        %1312 = vmatpush1.msra.mxu0 0.0
        %1313 = vmatprep.subr.mxu0 0.0
        %1314 = vmatpush1.msra.mxu0 0.0
        %1315 = vmatprep.subr.mxu0 0.0
        %1316 = vmatpush1.msra.mxu0 0.0
        %1317 = vmatprep.subr.mxu0 0.0
        %1318 = vmatpush1.msra.mxu0 0.0
        %1319 = vmatprep.subr.mxu0 0.0
        %1320 = vmatpush1.msra.mxu0 0.0
        %1321 = vmatprep.subr.mxu0 0.0
        %1322 = vmatpush1.msra.mxu0 0.0
        %1323 = vmatprep.subr.mxu0 0.0
        %1324 = vmatpush1.msra.mxu0 0.0
        %1325 = vmatprep.subr.mxu0 0.0
        %1326 = vmatpush1.msra.mxu0 0.0
        %1327 = vmatprep.subr.mxu0 0.0
        %1328 = vmatpush1.msra.mxu0 0.0
        %1329 = vmatprep.subr.mxu0 0.0
        %1330 = vmatpush1.msra.mxu0 0.0
        %1331 = vmatprep.subr.mxu0 0.0
        %1332 = vmatpush1.msra.mxu0 0.0
        %1333 = vmatprep.subr.mxu0 0.0
        %1334 = vmatpush1.msra.mxu0 0.0
        %1335 = vmatprep.subr.mxu0 0.0
        %1336 = vmatpush1.msra.mxu0 0.0
        %1337 = vmatprep.subr.mxu0 0.0
        %1338 = vmatpush1.msra.mxu0 0.0
        %1339 = vmatprep.subr.mxu0 0.0
        %1340 = vmatpush1.msra.mxu0 0.0
        %1341 = vmatprep.subr.mxu0 0.0
        %1342 = vmatpush1.msra.mxu0 0.0
        %1343 = vmatprep.mubr.f32.mxu0 0.0
        %1344 = vmatmul.mubr.f32.gmra.mrb[0].mxu0 %v1274
        %v1345 = vpop.f32.mrb[0].mxu0
        %v1346 = vadd.f32 0.0, %v1345
        %v1347 = vpop.f32.mrb[0].mxu0
        %1348 = vmatprep.mubr.f32.mxu0 0.0
        %1349 = vmatmul.mubr.f32.gmra.mrb[0].mxu0 %v1277
        %v1350 = vpop.f32.mrb[0].mxu0
        %v1351 = vadd.f32 0.0, %v1350
        %v1352 = vpop.f32.mrb[0].mxu0
        %1353 = vdwg.mxu0
        %v1354 = vadd.f32 %v1258, %v1346
        %v1355 = vadd.f32 %v1263, %v1351
        %v1356 = vld [vmem:[%s9] sm:$0x1]
        %v1358 = vlaneseq
        %v1359 = vshrl.u32 %v1358, 7
        %v1360 = vsub.s32 0, %v1359
        %v1361 = vrot.slane %v1356, %v1360
        %v1363 = vadd.f32 %v1354, %v1361
        %v1364 = vadd.f32 %v1355, %v1361
        %v1365 = vadd.f32 %v1363, %v982
        %v1366 = vadd.f32 %v1364, %v987
        %v1367 = vtanh.pop %v1365
        %v1368 = vtanh.pop %v1366
        %v1369 = vxor.u32 %v1365, 2147483648
        %v1370 = vxor.u32 %v1366, 2147483648
        %v1371 = vmul.f32 %v1369, 1.442695
        %v1372 = vpow.pop %v1371
        %v1373 = vmul.f32 %v1370, 1.442695
        %v1374 = vpow.pop %v1373
        %v1375 = vadd.f32 %v1372, 1.0
        %v1376 = vadd.f32 %v1374, 1.0
        %v1377 = vrcp.pop %v1375
        %v1378 = vmul.f32 1.0, %v1377
        %v1379 = vrcp.pop %v1376
        %v1380 = vmul.f32 1.0, %v1379
        %1383 = vrot.lane.b32.xlu0 %v1378, 96
        %v1384 = vpop.permute.xlu0 %1383
        %1385 = vrot.lane.b32.xlu0 %v1380, 96
        %v1386 = vpop.permute.xlu0 %1385
        %v1389 = vmul.f32 %v1367, %v1384
        %v1390 = vmul.f32 %v1368, %v1386
        %v1391 = vld [vmem:[%s10] sm:$0xff]
        %v1392 = vld [vmem:[%s10 + $0x8] sm:$0xff]
        %v1393 = vld [vmem:[%s10 + $0x10] sm:$0xff]
        %v1394 = vld [vmem:[%s10 + $0x18] sm:$0xff]
        %v1395 = vld [vmem:[%s11] sm:$0x1]
        %v1397 = vlaneseq
        %v1398 = vshrl.u32 %v1397, 7
        %v1399 = vsub.s32 0, %v1398
        %v1400 = vrot.slane %v1395, %v1399
        %v1403 = vsel %vm1084, %v1389, 0
        %v1406 = vsel %vm1084, %v1390, 0
        %1408 = vmatprep.subr.mxu0 0.0
        %1409 = vmatpush1.msra.mxu0 %v1391
        %1410 = vmatprep.subr.mxu0 0.0
        %1411 = vmatpush1.msra.mxu0 %v1392
        %1412 = vmatprep.subr.mxu0 0.0
        %1413 = vmatpush1.msra.mxu0 %v1393
        %1414 = vmatprep.subr.mxu0 0.0
        %1415 = vmatpush1.msra.mxu0 %v1394
        %1416 = vmatprep.subr.mxu0 0.0
        %1417 = vmatpush1.msra.mxu0 0.0
        %1418 = vmatprep.subr.mxu0 0.0
        %1419 = vmatpush1.msra.mxu0 0.0
        %1420 = vmatprep.subr.mxu0 0.0
        %1421 = vmatpush1.msra.mxu0 0.0
        %1422 = vmatprep.subr.mxu0 0.0
        %1423 = vmatpush1.msra.mxu0 0.0
        %1424 = vmatprep.subr.mxu0 0.0
        %1425 = vmatpush1.msra.mxu0 0.0
        %1426 = vmatprep.subr.mxu0 0.0
        %1427 = vmatpush1.msra.mxu0 0.0
        %1428 = vmatprep.subr.mxu0 0.0
        %1429 = vmatpush1.msra.mxu0 0.0
        %1430 = vmatprep.subr.mxu0 0.0
        %1431 = vmatpush1.msra.mxu0 0.0
        %1432 = vmatprep.subr.mxu0 0.0
        %1433 = vmatpush1.msra.mxu0 0.0
        %1434 = vmatprep.subr.mxu0 0.0
        %1435 = vmatpush1.msra.mxu0 0.0
        %1436 = vmatprep.subr.mxu0 0.0
        %1437 = vmatpush1.msra.mxu0 0.0
        %1438 = vmatprep.subr.mxu0 0.0
        %1439 = vmatpush1.msra.mxu0 0.0
        %1440 = vmatprep.subr.mxu0 0.0
        %1441 = vmatpush1.msra.mxu0 0.0
        %1442 = vmatprep.subr.mxu0 0.0
        %1443 = vmatpush1.msra.mxu0 0.0
        %1444 = vmatprep.subr.mxu0 0.0
        %1445 = vmatpush1.msra.mxu0 0.0
        %1446 = vmatprep.subr.mxu0 0.0
        %1447 = vmatpush1.msra.mxu0 0.0
        %1448 = vmatprep.subr.mxu0 0.0
        %1449 = vmatpush1.msra.mxu0 0.0
        %1450 = vmatprep.subr.mxu0 0.0
        %1451 = vmatpush1.msra.mxu0 0.0
        %1452 = vmatprep.subr.mxu0 0.0
        %1453 = vmatpush1.msra.mxu0 0.0
        %1454 = vmatprep.subr.mxu0 0.0
        %1455 = vmatpush1.msra.mxu0 0.0
        %1456 = vmatprep.subr.mxu0 0.0
        %1457 = vmatpush1.msra.mxu0 0.0
        %1458 = vmatprep.subr.mxu0 0.0
        %1459 = vmatpush1.msra.mxu0 0.0
        %1460 = vmatprep.subr.mxu0 0.0
        %1461 = vmatpush1.msra.mxu0 0.0
        %1462 = vmatprep.subr.mxu0 0.0
        %1463 = vmatpush1.msra.mxu0 0.0
        %1464 = vmatprep.subr.mxu0 0.0
        %1465 = vmatpush1.msra.mxu0 0.0
        %1466 = vmatprep.subr.mxu0 0.0
        %1467 = vmatpush1.msra.mxu0 0.0
        %1468 = vmatprep.subr.mxu0 0.0
        %1469 = vmatpush1.msra.mxu0 0.0
        %1470 = vmatprep.subr.mxu0 0.0
        %1471 = vmatpush1.msra.mxu0 0.0
        %1472 = vmatprep.mubr.f32.mxu0 0.0
        %1473 = vmatmul.mubr.f32.gmra.mrb[0].mxu0 %v1403
        %v1474 = vpop.f32.mrb[0].mxu0
        %v1475 = vadd.f32 %v1400, %v1474
        %v1476 = vpop.f32.mrb[0].mxu0
        %1477 = vmatprep.mubr.f32.mxu0 0.0
        %1478 = vmatmul.mubr.f32.gmra.mrb[0].mxu0 %v1406
        %v1479 = vpop.f32.mrb[0].mxu0
        %v1480 = vadd.f32 %v1400, %v1479
        %v1481 = vpop.f32.mrb[0].mxu0
        %1482 = vdwg.mxu0
        %v1483 = vadd.f32 %v1076, %v1475
        %v1484 = vadd.f32 %v1081, %v1480
        %1485 = vst.msk [vmem:[#allocation2 + $0x8] sm:$0xff] %vm1084, %v1483
        %1486 = vst.msk [vmem:[#allocation2 + $0x10] sm:$0xff] %vm1084, %v1484
        %v1487 = vadd.f32 %v1475, 0.0
        %v1488 = vadd.f32 %v1480, 0.0
        %v1489 = vld [vmem:[#allocation2 + $0x6] sm:$0xff]
        %v1490 = vld [vmem:[#allocation2 + $0xe] sm:$0xff]
        %v1491 = vld [vmem:[%s12] sm:$0xff]
        %v1492 = vld [vmem:[%s12 + $0x8] sm:$0xff]
        %v1493 = vld [vmem:[%s12 + $0x10] sm:$0xff]
        %v1494 = vld [vmem:[%s12 + $0x18] sm:$0xff]
        %v1495 = vld [vmem:[#allocation2 + $0x8] sm:$0xff]
        %v1496 = vld [vmem:[#allocation2 + $0x10] sm:$0xff]
        %s1497 = scalar_lea.vmem %s12, 32
        %v1498 = vld [vmem:[%s1497] sm:$0xff]
        %v1499 = vld [vmem:[%s1497 + $0x8] sm:$0xff]
        %v1500 = vld [vmem:[%s1497 + $0x10] sm:$0xff]
        %v1501 = vld [vmem:[%s1497 + $0x18] sm:$0xff]
        %v1503 = vsel %vm1084, %v1495, 0
        %v1506 = vsel %vm1084, %v1496, 0
        %1508 = vmatprep.subr.mxu0 0.0
        %1509 = vmatpush1.msra.mxu0 %v1498
        %1510 = vmatprep.subr.mxu0 0.0
        %1511 = vmatpush1.msra.mxu0 %v1499
        %1512 = vmatprep.subr.mxu0 0.0
        %1513 = vmatpush1.msra.mxu0 %v1500
        %1514 = vmatprep.subr.mxu0 0.0
        %1515 = vmatpush1.msra.mxu0 %v1501
        %1516 = vmatprep.subr.mxu0 0.0
        %1517 = vmatpush1.msra.mxu0 0.0
        %1518 = vmatprep.subr.mxu0 0.0
        %1519 = vmatpush1.msra.mxu0 0.0
        %1520 = vmatprep.subr.mxu0 0.0
        %1521 = vmatpush1.msra.mxu0 0.0
        %1522 = vmatprep.subr.mxu0 0.0
        %1523 = vmatpush1.msra.mxu0 0.0
        %1524 = vmatprep.subr.mxu0 0.0
        %1525 = vmatpush1.msra.mxu0 0.0
        %1526 = vmatprep.subr.mxu0 0.0
        %1527 = vmatpush1.msra.mxu0 0.0
        %1528 = vmatprep.subr.mxu0 0.0
        %1529 = vmatpush1.msra.mxu0 0.0
        %1530 = vmatprep.subr.mxu0 0.0
        %1531 = vmatpush1.msra.mxu0 0.0
        %1532 = vmatprep.subr.mxu0 0.0
        %1533 = vmatpush1.msra.mxu0 0.0
        %1534 = vmatprep.subr.mxu0 0.0
        %1535 = vmatpush1.msra.mxu0 0.0
        %1536 = vmatprep.subr.mxu0 0.0
        %1537 = vmatpush1.msra.mxu0 0.0
        %1538 = vmatprep.subr.mxu0 0.0
        %1539 = vmatpush1.msra.mxu0 0.0
        %1540 = vmatprep.subr.mxu0 0.0
        %1541 = vmatpush1.msra.mxu0 0.0
        %1542 = vmatprep.subr.mxu0 0.0
        %1543 = vmatpush1.msra.mxu0 0.0
        %1544 = vmatprep.subr.mxu0 0.0
        %1545 = vmatpush1.msra.mxu0 0.0
        %1546 = vmatprep.subr.mxu0 0.0
        %1547 = vmatpush1.msra.mxu0 0.0
        %1548 = vmatprep.subr.mxu0 0.0
        %1549 = vmatpush1.msra.mxu0 0.0
        %1550 = vmatprep.subr.mxu0 0.0
        %1551 = vmatpush1.msra.mxu0 0.0
        %1552 = vmatprep.subr.mxu0 0.0
        %1553 = vmatpush1.msra.mxu0 0.0
        %1554 = vmatprep.subr.mxu0 0.0
        %1555 = vmatpush1.msra.mxu0 0.0
        %1556 = vmatprep.subr.mxu0 0.0
        %1557 = vmatpush1.msra.mxu0 0.0
        %1558 = vmatprep.subr.mxu0 0.0
        %1559 = vmatpush1.msra.mxu0 0.0
        %1560 = vmatprep.subr.mxu0 0.0
        %1561 = vmatpush1.msra.mxu0 0.0
        %1562 = vmatprep.subr.mxu0 0.0
        %1563 = vmatpush1.msra.mxu0 0.0
        %1564 = vmatprep.subr.mxu0 0.0
        %1565 = vmatpush1.msra.mxu0 0.0
        %1566 = vmatprep.subr.mxu0 0.0
        %1567 = vmatpush1.msra.mxu0 0.0
        %1568 = vmatprep.subr.mxu0 0.0
        %1569 = vmatpush1.msra.mxu0 0.0
        %1570 = vmatprep.subr.mxu0 0.0
        %1571 = vmatpush1.msra.mxu0 0.0
        %1572 = vmatprep.mubr.f32.mxu0 0.0
        %1573 = vmatmul.mubr.f32.gmra.mrb[0].mxu0 %v1503
        %v1574 = vpop.f32.mrb[0].mxu0
        %v1575 = vadd.f32 0.0, %v1574
        %v1576 = vpop.f32.mrb[0].mxu0
        %1577 = vmatprep.mubr.f32.mxu0 0.0
        %1578 = vmatmul.mubr.f32.gmra.mrb[0].mxu0 %v1506
        %v1579 = vpop.f32.mrb[0].mxu0
        %v1580 = vadd.f32 0.0, %v1579
        %v1581 = vpop.f32.mrb[0].mxu0
        %1582 = vdwg.mxu0
        %v1584 = vsel %vm1084, %v1489, 0
        %v1587 = vsel %vm1084, %v1490, 0
        %1589 = vmatprep.subr.mxu0 0.0
        %1590 = vmatpush1.msra.mxu0 %v1491
        %1591 = vmatprep.subr.mxu0 0.0
        %1592 = vmatpush1.msra.mxu0 %v1492
        %1593 = vmatprep.subr.mxu0 0.0
        %1594 = vmatpush1.msra.mxu0 %v1493
        %1595 = vmatprep.subr.mxu0 0.0
        %1596 = vmatpush1.msra.mxu0 %v1494
        %1597 = vmatprep.subr.mxu0 0.0
        %1598 = vmatpush1.msra.mxu0 0.0
        %1599 = vmatprep.subr.mxu0 0.0
        %1600 = vmatpush1.msra.mxu0 0.0
        %1601 = vmatprep.subr.mxu0 0.0
        %1602 = vmatpush1.msra.mxu0 0.0
        %1603 = vmatprep.subr.mxu0 0.0
        %1604 = vmatpush1.msra.mxu0 0.0
        %1605 = vmatprep.subr.mxu0 0.0
        %1606 = vmatpush1.msra.mxu0 0.0
        %1607 = vmatprep.subr.mxu0 0.0
        %1608 = vmatpush1.msra.mxu0 0.0
        %1609 = vmatprep.subr.mxu0 0.0
        %1610 = vmatpush1.msra.mxu0 0.0
        %1611 = vmatprep.subr.mxu0 0.0
        %1612 = vmatpush1.msra.mxu0 0.0
        %1613 = vmatprep.subr.mxu0 0.0
        %1614 = vmatpush1.msra.mxu0 0.0
        %1615 = vmatprep.subr.mxu0 0.0
        %1616 = vmatpush1.msra.mxu0 0.0
        %1617 = vmatprep.subr.mxu0 0.0
        %1618 = vmatpush1.msra.mxu0 0.0
        %1619 = vmatprep.subr.mxu0 0.0
        %1620 = vmatpush1.msra.mxu0 0.0
        %1621 = vmatprep.subr.mxu0 0.0
        %1622 = vmatpush1.msra.mxu0 0.0
        %1623 = vmatprep.subr.mxu0 0.0
        %1624 = vmatpush1.msra.mxu0 0.0
        %1625 = vmatprep.subr.mxu0 0.0
        %1626 = vmatpush1.msra.mxu0 0.0
        %1627 = vmatprep.subr.mxu0 0.0
        %1628 = vmatpush1.msra.mxu0 0.0
        %1629 = vmatprep.subr.mxu0 0.0
        %1630 = vmatpush1.msra.mxu0 0.0
        %1631 = vmatprep.subr.mxu0 0.0
        %1632 = vmatpush1.msra.mxu0 0.0
        %1633 = vmatprep.subr.mxu0 0.0
        %1634 = vmatpush1.msra.mxu0 0.0
        %1635 = vmatprep.subr.mxu0 0.0
        %1636 = vmatpush1.msra.mxu0 0.0
        %1637 = vmatprep.subr.mxu0 0.0
        %1638 = vmatpush1.msra.mxu0 0.0
        %1639 = vmatprep.subr.mxu0 0.0
        %1640 = vmatpush1.msra.mxu0 0.0
        %1641 = vmatprep.subr.mxu0 0.0
        %1642 = vmatpush1.msra.mxu0 0.0
        %1643 = vmatprep.subr.mxu0 0.0
        %1644 = vmatpush1.msra.mxu0 0.0
        %1645 = vmatprep.subr.mxu0 0.0
        %1646 = vmatpush1.msra.mxu0 0.0
        %1647 = vmatprep.subr.mxu0 0.0
        %1648 = vmatpush1.msra.mxu0 0.0
        %1649 = vmatprep.subr.mxu0 0.0
        %1650 = vmatpush1.msra.mxu0 0.0
        %1651 = vmatprep.subr.mxu0 0.0
        %1652 = vmatpush1.msra.mxu0 0.0
        %1653 = vmatprep.mubr.f32.mxu0 0.0
        %1654 = vmatmul.mubr.f32.gmra.mrb[0].mxu0 %v1584
        %v1655 = vpop.f32.mrb[0].mxu0
        %v1656 = vadd.f32 %v1575, %v1655
        %v1657 = vpop.f32.mrb[0].mxu0
        %1658 = vmatprep.mubr.f32.mxu0 0.0
        %1659 = vmatmul.mubr.f32.gmra.mrb[0].mxu0 %v1587
        %v1660 = vpop.f32.mrb[0].mxu0
        %v1661 = vadd.f32 %v1580, %v1660
        %v1662 = vpop.f32.mrb[0].mxu0
        %1663 = vdwg.mxu0
        %v1664 = vld [vmem:[#allocation2 + $0xa] sm:$0xff]
        %v1665 = vld [vmem:[#allocation2 + $0x12] sm:$0xff]
        %s1666 = scalar_lea.vmem %s12, 64
        %v1667 = vld [vmem:[%s1666] sm:$0xff]
        %v1668 = vld [vmem:[%s1666 + $0x8] sm:$0xff]
        %v1669 = vld [vmem:[%s1666 + $0x10] sm:$0xff]
        %v1670 = vld [vmem:[%s1666 + $0x18] sm:$0xff]
        %v1672 = vsel %vm1084, %v1664, 0
        %v1675 = vsel %vm1084, %v1665, 0
        %1677 = vmatprep.subr.mxu0 0.0
        %1678 = vmatpush1.msra.mxu0 %v1667
        %1679 = vmatprep.subr.mxu0 0.0
        %1680 = vmatpush1.msra.mxu0 %v1668
        %1681 = vmatprep.subr.mxu0 0.0
        %1682 = vmatpush1.msra.mxu0 %v1669
        %1683 = vmatprep.subr.mxu0 0.0
        %1684 = vmatpush1.msra.mxu0 %v1670
        %1685 = vmatprep.subr.mxu0 0.0
        %1686 = vmatpush1.msra.mxu0 0.0
        %1687 = vmatprep.subr.mxu0 0.0
        %1688 = vmatpush1.msra.mxu0 0.0
        %1689 = vmatprep.subr.mxu0 0.0
        %1690 = vmatpush1.msra.mxu0 0.0
        %1691 = vmatprep.subr.mxu0 0.0
        %1692 = vmatpush1.msra.mxu0 0.0
        %1693 = vmatprep.subr.mxu0 0.0
        %1694 = vmatpush1.msra.mxu0 0.0
        %1695 = vmatprep.subr.mxu0 0.0
        %1696 = vmatpush1.msra.mxu0 0.0
        %1697 = vmatprep.subr.mxu0 0.0
        %1698 = vmatpush1.msra.mxu0 0.0
        %1699 = vmatprep.subr.mxu0 0.0
        %1700 = vmatpush1.msra.mxu0 0.0
        %1701 = vmatprep.subr.mxu0 0.0
        %1702 = vmatpush1.msra.mxu0 0.0
        %1703 = vmatprep.subr.mxu0 0.0
        %1704 = vmatpush1.msra.mxu0 0.0
        %1705 = vmatprep.subr.mxu0 0.0
        %1706 = vmatpush1.msra.mxu0 0.0
        %1707 = vmatprep.subr.mxu0 0.0
        %1708 = vmatpush1.msra.mxu0 0.0
        %1709 = vmatprep.subr.mxu0 0.0
        %1710 = vmatpush1.msra.mxu0 0.0
        %1711 = vmatprep.subr.mxu0 0.0
        %1712 = vmatpush1.msra.mxu0 0.0
        %1713 = vmatprep.subr.mxu0 0.0
        %1714 = vmatpush1.msra.mxu0 0.0
        %1715 = vmatprep.subr.mxu0 0.0
        %1716 = vmatpush1.msra.mxu0 0.0
        %1717 = vmatprep.subr.mxu0 0.0
        %1718 = vmatpush1.msra.mxu0 0.0
        %1719 = vmatprep.subr.mxu0 0.0
        %1720 = vmatpush1.msra.mxu0 0.0
        %1721 = vmatprep.subr.mxu0 0.0
        %1722 = vmatpush1.msra.mxu0 0.0
        %1723 = vmatprep.subr.mxu0 0.0
        %1724 = vmatpush1.msra.mxu0 0.0
        %1725 = vmatprep.subr.mxu0 0.0
        %1726 = vmatpush1.msra.mxu0 0.0
        %1727 = vmatprep.subr.mxu0 0.0
        %1728 = vmatpush1.msra.mxu0 0.0
        %1729 = vmatprep.subr.mxu0 0.0
        %1730 = vmatpush1.msra.mxu0 0.0
        %1731 = vmatprep.subr.mxu0 0.0
        %1732 = vmatpush1.msra.mxu0 0.0
        %1733 = vmatprep.subr.mxu0 0.0
        %1734 = vmatpush1.msra.mxu0 0.0
        %1735 = vmatprep.subr.mxu0 0.0
        %1736 = vmatpush1.msra.mxu0 0.0
        %1737 = vmatprep.subr.mxu0 0.0
        %1738 = vmatpush1.msra.mxu0 0.0
        %1739 = vmatprep.subr.mxu0 0.0
        %1740 = vmatpush1.msra.mxu0 0.0
        %1741 = vmatprep.mubr.f32.mxu0 0.0
        %1742 = vmatmul.mubr.f32.gmra.mrb[0].mxu0 %v1672
        %v1743 = vpop.f32.mrb[0].mxu0
        %v1744 = vadd.f32 0.0, %v1743
        %v1745 = vpop.f32.mrb[0].mxu0
        %1746 = vmatprep.mubr.f32.mxu0 0.0
        %1747 = vmatmul.mubr.f32.gmra.mrb[0].mxu0 %v1675
        %v1748 = vpop.f32.mrb[0].mxu0
        %v1749 = vadd.f32 0.0, %v1748
        %v1750 = vpop.f32.mrb[0].mxu0
        %1751 = vdwg.mxu0
        %v1752 = vadd.f32 %v1656, %v1744
        %v1753 = vadd.f32 %v1661, %v1749
        %v1754 = vld [vmem:[%s13] sm:$0x1]
        %v1756 = vlaneseq
        %v1757 = vshrl.u32 %v1756, 7
        %v1758 = vsub.s32 0, %v1757
        %v1759 = vrot.slane %v1754, %v1758
        %v1761 = vadd.f32 %v1752, %v1759
        %v1762 = vadd.f32 %v1753, %v1759
        %1765 = vrot.lane.b32.xlu0 %v982, 64
        %v1766 = vpop.permute.xlu0 %1765
        %1767 = vrot.lane.b32.xlu0 %v987, 64
        %v1768 = vpop.permute.xlu0 %1767
        %v1771 = vadd.f32 %v1761, %v1766
        %v1772 = vadd.f32 %v1762, %v1768
        %v1773 = vtanh.pop %v1771
        %v1774 = vtanh.pop %v1772
        %v1775 = vxor.u32 %v1771, 2147483648
        %v1776 = vxor.u32 %v1772, 2147483648
        %v1777 = vmul.f32 %v1775, 1.442695
        %v1778 = vpow.pop %v1777
        %v1779 = vmul.f32 %v1776, 1.442695
        %v1780 = vpow.pop %v1779
        %v1781 = vadd.f32 %v1778, 1.0
        %v1782 = vadd.f32 %v1780, 1.0
        %v1783 = vrcp.pop %v1781
        %v1784 = vmul.f32 1.0, %v1783
        %v1785 = vrcp.pop %v1782
        %v1786 = vmul.f32 1.0, %v1785
        %1789 = vrot.lane.b32.xlu0 %v1784, 96
        %v1790 = vpop.permute.xlu0 %1789
        %1791 = vrot.lane.b32.xlu0 %v1786, 96
        %v1792 = vpop.permute.xlu0 %1791
        %v1795 = vmul.f32 %v1773, %v1790
        %v1796 = vmul.f32 %v1774, %v1792
        %v1797 = vld [vmem:[%s14] sm:$0xff]
        %v1798 = vld [vmem:[%s14 + $0x8] sm:$0xff]
        %v1799 = vld [vmem:[%s14 + $0x10] sm:$0xff]
        %v1800 = vld [vmem:[%s14 + $0x18] sm:$0xff]
        %v1801 = vld [vmem:[%s15] sm:$0x1]
        %v1803 = vlaneseq
        %v1804 = vshrl.u32 %v1803, 7
        %v1805 = vsub.s32 0, %v1804
        %v1806 = vrot.slane %v1801, %v1805
        %v1809 = vsel %vm1084, %v1795, 0
        %v1812 = vsel %vm1084, %v1796, 0
        %1814 = vmatprep.subr.mxu0 0.0
        %1815 = vmatpush1.msra.mxu0 %v1797
        %1816 = vmatprep.subr.mxu0 0.0
        %1817 = vmatpush1.msra.mxu0 %v1798
        %1818 = vmatprep.subr.mxu0 0.0
        %1819 = vmatpush1.msra.mxu0 %v1799
        %1820 = vmatprep.subr.mxu0 0.0
        %1821 = vmatpush1.msra.mxu0 %v1800
        %1822 = vmatprep.subr.mxu0 0.0
        %1823 = vmatpush1.msra.mxu0 0.0
        %1824 = vmatprep.subr.mxu0 0.0
        %1825 = vmatpush1.msra.mxu0 0.0
        %1826 = vmatprep.subr.mxu0 0.0
        %1827 = vmatpush1.msra.mxu0 0.0
        %1828 = vmatprep.subr.mxu0 0.0
        %1829 = vmatpush1.msra.mxu0 0.0
        %1830 = vmatprep.subr.mxu0 0.0
        %1831 = vmatpush1.msra.mxu0 0.0
        %1832 = vmatprep.subr.mxu0 0.0
        %1833 = vmatpush1.msra.mxu0 0.0
        %1834 = vmatprep.subr.mxu0 0.0
        %1835 = vmatpush1.msra.mxu0 0.0
        %1836 = vmatprep.subr.mxu0 0.0
        %1837 = vmatpush1.msra.mxu0 0.0
        %1838 = vmatprep.subr.mxu0 0.0
        %1839 = vmatpush1.msra.mxu0 0.0
        %1840 = vmatprep.subr.mxu0 0.0
        %1841 = vmatpush1.msra.mxu0 0.0
        %1842 = vmatprep.subr.mxu0 0.0
        %1843 = vmatpush1.msra.mxu0 0.0
        %1844 = vmatprep.subr.mxu0 0.0
        %1845 = vmatpush1.msra.mxu0 0.0
        %1846 = vmatprep.subr.mxu0 0.0
        %1847 = vmatpush1.msra.mxu0 0.0
        %1848 = vmatprep.subr.mxu0 0.0
        %1849 = vmatpush1.msra.mxu0 0.0
        %1850 = vmatprep.subr.mxu0 0.0
        %1851 = vmatpush1.msra.mxu0 0.0
        %1852 = vmatprep.subr.mxu0 0.0
        %1853 = vmatpush1.msra.mxu0 0.0
        %1854 = vmatprep.subr.mxu0 0.0
        %1855 = vmatpush1.msra.mxu0 0.0
        %1856 = vmatprep.subr.mxu0 0.0
        %1857 = vmatpush1.msra.mxu0 0.0
        %1858 = vmatprep.subr.mxu0 0.0
        %1859 = vmatpush1.msra.mxu0 0.0
        %1860 = vmatprep.subr.mxu0 0.0
        %1861 = vmatpush1.msra.mxu0 0.0
        %1862 = vmatprep.subr.mxu0 0.0
        %1863 = vmatpush1.msra.mxu0 0.0
        %1864 = vmatprep.subr.mxu0 0.0
        %1865 = vmatpush1.msra.mxu0 0.0
        %1866 = vmatprep.subr.mxu0 0.0
        %1867 = vmatpush1.msra.mxu0 0.0
        %1868 = vmatprep.subr.mxu0 0.0
        %1869 = vmatpush1.msra.mxu0 0.0
        %1870 = vmatprep.subr.mxu0 0.0
        %1871 = vmatpush1.msra.mxu0 0.0
        %1872 = vmatprep.subr.mxu0 0.0
        %1873 = vmatpush1.msra.mxu0 0.0
        %1874 = vmatprep.subr.mxu0 0.0
        %1875 = vmatpush1.msra.mxu0 0.0
        %1876 = vmatprep.subr.mxu0 0.0
        %1877 = vmatpush1.msra.mxu0 0.0
        %1878 = vmatprep.mubr.f32.mxu0 0.0
        %1879 = vmatmul.mubr.f32.gmra.mrb[0].mxu0 %v1809
        %v1880 = vpop.f32.mrb[0].mxu0
        %v1881 = vadd.f32 %v1806, %v1880
        %v1882 = vpop.f32.mrb[0].mxu0
        %1883 = vmatprep.mubr.f32.mxu0 0.0
        %1884 = vmatmul.mubr.f32.gmra.mrb[0].mxu0 %v1812
        %v1885 = vpop.f32.mrb[0].mxu0
        %v1886 = vadd.f32 %v1806, %v1885
        %v1887 = vpop.f32.mrb[0].mxu0
        %1888 = vdwg.mxu0
        %1891 = vrot.lane.b32.xlu0 %v1881, 32
        %v1892 = vpop.permute.xlu0 %1891
        %1893 = vrot.lane.b32.xlu0 %v1886, 32
        %v1894 = vpop.permute.xlu0 %1893
        %v1897 = vadd.f32 %v1487, %v1892
        %v1898 = vadd.f32 %v1488, %v1894
        %v1899 = vld [vmem:[%s16] sm:$0xff]
        %v1900 = vld [vmem:[%s16 + $0x8] sm:$0xff]
        %v1901 = vld [vmem:[%s16 + $0x10] sm:$0xff]
        %v1902 = vld [vmem:[%s16 + $0x18] sm:$0xff]
        %v1903 = vld [vmem:[%s18] sm:$0x1]
        %v1905 = vlaneseq
        %v1906 = vshrl.u32 %v1905, 7
        %v1907 = vsub.s32 0, %v1906
        %v1908 = vrot.slane %v1903, %v1907
        %1912 = vrot.lane.b32.xlu0 %v1897, 96
        %v1913 = vpop.permute.xlu0 %1912
        %1914 = vrot.lane.b32.xlu0 %v1898, 96
        %v1915 = vpop.permute.xlu0 %1914
        %v1916 = vsel %vm1084, %v1913, 0
        %v1918 = vsel %vm1084, %v1915, 0
        %1920 = vmatprep.subr.mxu0 0.0
        %1921 = vmatpush1.msra.mxu0 %v1899
        %1922 = vmatprep.subr.mxu0 0.0
        %1923 = vmatpush1.msra.mxu0 %v1900
        %1924 = vmatprep.subr.mxu0 0.0
        %1925 = vmatpush1.msra.mxu0 %v1901
        %1926 = vmatprep.subr.mxu0 0.0
        %1927 = vmatpush1.msra.mxu0 %v1902
        %1928 = vmatprep.subr.mxu0 0.0
        %1929 = vmatpush1.msra.mxu0 0.0
        %1930 = vmatprep.subr.mxu0 0.0
        %1931 = vmatpush1.msra.mxu0 0.0
        %1932 = vmatprep.subr.mxu0 0.0
        %1933 = vmatpush1.msra.mxu0 0.0
        %1934 = vmatprep.subr.mxu0 0.0
        %1935 = vmatpush1.msra.mxu0 0.0
        %1936 = vmatprep.subr.mxu0 0.0
        %1937 = vmatpush1.msra.mxu0 0.0
        %1938 = vmatprep.subr.mxu0 0.0
        %1939 = vmatpush1.msra.mxu0 0.0
        %1940 = vmatprep.subr.mxu0 0.0
        %1941 = vmatpush1.msra.mxu0 0.0
        %1942 = vmatprep.subr.mxu0 0.0
        %1943 = vmatpush1.msra.mxu0 0.0
        %1944 = vmatprep.subr.mxu0 0.0
        %1945 = vmatpush1.msra.mxu0 0.0
        %1946 = vmatprep.subr.mxu0 0.0
        %1947 = vmatpush1.msra.mxu0 0.0
        %1948 = vmatprep.subr.mxu0 0.0
        %1949 = vmatpush1.msra.mxu0 0.0
        %1950 = vmatprep.subr.mxu0 0.0
        %1951 = vmatpush1.msra.mxu0 0.0
        %1952 = vmatprep.subr.mxu0 0.0
        %1953 = vmatpush1.msra.mxu0 0.0
        %1954 = vmatprep.subr.mxu0 0.0
        %1955 = vmatpush1.msra.mxu0 0.0
        %1956 = vmatprep.subr.mxu0 0.0
        %1957 = vmatpush1.msra.mxu0 0.0
        %1958 = vmatprep.subr.mxu0 0.0
        %1959 = vmatpush1.msra.mxu0 0.0
        %1960 = vmatprep.subr.mxu0 0.0
        %1961 = vmatpush1.msra.mxu0 0.0
        %1962 = vmatprep.subr.mxu0 0.0
        %1963 = vmatpush1.msra.mxu0 0.0
        %1964 = vmatprep.subr.mxu0 0.0
        %1965 = vmatpush1.msra.mxu0 0.0
        %1966 = vmatprep.subr.mxu0 0.0
        %1967 = vmatpush1.msra.mxu0 0.0
        %1968 = vmatprep.subr.mxu0 0.0
        %1969 = vmatpush1.msra.mxu0 0.0
        %1970 = vmatprep.subr.mxu0 0.0
        %1971 = vmatpush1.msra.mxu0 0.0
        %1972 = vmatprep.subr.mxu0 0.0
        %1973 = vmatpush1.msra.mxu0 0.0
        %1974 = vmatprep.subr.mxu0 0.0
        %1975 = vmatpush1.msra.mxu0 0.0
        %1976 = vmatprep.subr.mxu0 0.0
        %1977 = vmatpush1.msra.mxu0 0.0
        %1978 = vmatprep.subr.mxu0 0.0
        %1979 = vmatpush1.msra.mxu0 0.0
        %1980 = vmatprep.subr.mxu0 0.0
        %1981 = vmatpush1.msra.mxu0 0.0
        %1982 = vmatprep.subr.mxu0 0.0
        %1983 = vmatpush1.msra.mxu0 0.0
        %1984 = vmatprep.mubr.f32.mxu0 0.0
        %1985 = vmatmul.mubr.f32.gmra.mrb[0].mxu0 %v1916
        %v1986 = vpop.f32.mrb[0].mxu0
        %v1987 = vadd.f32 %v1908, %v1986
        %v1988 = vpop.f32.mrb[0].mxu0
        %1989 = vmatprep.mubr.f32.mxu0 0.0
        %1990 = vmatmul.mubr.f32.gmra.mrb[0].mxu0 %v1918
        %v1991 = vpop.f32.mrb[0].mxu0
        %v1992 = vadd.f32 %v1908, %v1991
        %v1993 = vpop.f32.mrb[0].mxu0
        %1994 = vdwg.mxu0
        %v1995 = vld [vmem:[%s17] sm:$0xff]
        %v1996 = vld [vmem:[%s17 + $0x8] sm:$0xff]
        %v1997 = vld [vmem:[%s17 + $0x10] sm:$0xff]
        %v1998 = vld [vmem:[%s17 + $0x18] sm:$0xff]
        %v1999 = vld [vmem:[#allocation3] sm:$0x1]
        %v2001 = vlaneseq
        %v2002 = vshrl.u32 %v2001, 7
        %v2003 = vsub.s32 0, %v2002
        %v2004 = vrot.slane %v1999, %v2003
        %2006 = vmatprep.subr.mxu0 0.0
        %2007 = vmatpush1.msra.mxu0 %v1995
        %2008 = vmatprep.subr.mxu0 0.0
        %2009 = vmatpush1.msra.mxu0 %v1996
        %2010 = vmatprep.subr.mxu0 0.0
        %2011 = vmatpush1.msra.mxu0 %v1997
        %2012 = vmatprep.subr.mxu0 0.0
        %2013 = vmatpush1.msra.mxu0 %v1998
        %2014 = vmatprep.subr.mxu0 0.0
        %2015 = vmatpush1.msra.mxu0 0.0
        %2016 = vmatprep.subr.mxu0 0.0
        %2017 = vmatpush1.msra.mxu0 0.0
        %2018 = vmatprep.subr.mxu0 0.0
        %2019 = vmatpush1.msra.mxu0 0.0
        %2020 = vmatprep.subr.mxu0 0.0
        %2021 = vmatpush1.msra.mxu0 0.0
        %2022 = vmatprep.subr.mxu0 0.0
        %2023 = vmatpush1.msra.mxu0 0.0
        %2024 = vmatprep.subr.mxu0 0.0
        %2025 = vmatpush1.msra.mxu0 0.0
        %2026 = vmatprep.subr.mxu0 0.0
        %2027 = vmatpush1.msra.mxu0 0.0
        %2028 = vmatprep.subr.mxu0 0.0
        %2029 = vmatpush1.msra.mxu0 0.0
        %2030 = vmatprep.subr.mxu0 0.0
        %2031 = vmatpush1.msra.mxu0 0.0
        %2032 = vmatprep.subr.mxu0 0.0
        %2033 = vmatpush1.msra.mxu0 0.0
        %2034 = vmatprep.subr.mxu0 0.0
        %2035 = vmatpush1.msra.mxu0 0.0
        %2036 = vmatprep.subr.mxu0 0.0
        %2037 = vmatpush1.msra.mxu0 0.0
        %2038 = vmatprep.subr.mxu0 0.0
        %2039 = vmatpush1.msra.mxu0 0.0
        %2040 = vmatprep.subr.mxu0 0.0
        %2041 = vmatpush1.msra.mxu0 0.0
        %2042 = vmatprep.subr.mxu0 0.0
        %2043 = vmatpush1.msra.mxu0 0.0
        %2044 = vmatprep.subr.mxu0 0.0
        %2045 = vmatpush1.msra.mxu0 0.0
        %2046 = vmatprep.subr.mxu0 0.0
        %2047 = vmatpush1.msra.mxu0 0.0
        %2048 = vmatprep.subr.mxu0 0.0
        %2049 = vmatpush1.msra.mxu0 0.0
        %2050 = vmatprep.subr.mxu0 0.0
        %2051 = vmatpush1.msra.mxu0 0.0
        %2052 = vmatprep.subr.mxu0 0.0
        %2053 = vmatpush1.msra.mxu0 0.0
        %2054 = vmatprep.subr.mxu0 0.0
        %2055 = vmatpush1.msra.mxu0 0.0
        %2056 = vmatprep.subr.mxu0 0.0
        %2057 = vmatpush1.msra.mxu0 0.0
        %2058 = vmatprep.subr.mxu0 0.0
        %2059 = vmatpush1.msra.mxu0 0.0
        %2060 = vmatprep.subr.mxu0 0.0
        %2061 = vmatpush1.msra.mxu0 0.0
        %2062 = vmatprep.subr.mxu0 0.0
        %2063 = vmatpush1.msra.mxu0 0.0
        %2064 = vmatprep.subr.mxu0 0.0
        %2065 = vmatpush1.msra.mxu0 0.0
        %2066 = vmatprep.subr.mxu0 0.0
        %2067 = vmatpush1.msra.mxu0 0.0
        %2068 = vmatprep.subr.mxu0 0.0
        %2069 = vmatpush1.msra.mxu0 0.0
        %2070 = vmatprep.mubr.f32.mxu0 0.0
        %2071 = vmatmul.mubr.f32.gmra.mrb[0].mxu0 %v1916
        %v2072 = vpop.f32.mrb[0].mxu0
        %v2073 = vadd.f32 %v2004, %v2072
        %v2074 = vpop.f32.mrb[0].mxu0
        %2075 = vmatprep.mubr.f32.mxu0 0.0
        %2076 = vmatmul.mubr.f32.gmra.mrb[0].mxu0 %v1918
        %v2077 = vpop.f32.mrb[0].mxu0
        %v2078 = vadd.f32 %v2004, %v2077
        %v2079 = vpop.f32.mrb[0].mxu0
        %2080 = vdwg.mxu0
        %v2081 = vmul.f32 %v2073, 1.442695
        %v2082 = vpow.pop %v2081
        %v2083 = vmul.f32 %v2078, 1.442695
        %v2084 = vpow.pop %v2083
        %v2085 = vmul.f32 %v891, %v2082
        %v2086 = vmul.f32 %v896, %v2084
        %v2087 = vadd.f32 %v2085, %v1987
        %v2088 = vadd.f32 %v2086, %v1992
        %2089 = vst.msk [vmem:[%s729] sm:$0xff] %vm998, %v815
        %2090 = vst.msk [vmem:[%s729 + $0x8] sm:$0xff] %vm998, %v820
        %2091 = vst.msk [vmem:[%s734] sm:$0xff] %vm998, %v2087
        %2092 = vst.msk [vmem:[%s734 + $0x8] sm:$0xff] %vm998, %v2088
        %v2093 = vsel %vm998, %v2073, 0.0
        %2094 = vadd.xlane.f32.xlu0 %v2093
        %v2095 = vpop.xlane.xlu0 %2094
        %v2096 = vsel %vm998, %v2078, 0.0
        %2097 = vadd.xlane.f32.xlu0 %v2096
        %v2098 = vpop.xlane.xlu0 %2097
        %v2099 = vadd.f32 %v2095, %v2098
        %v2100 = vrot.slane %v2099, 4
        %v2101 = vadd.f32 %v2099, %v2100
        %v2102 = vrot.slane %v2101, 2
        %v2103 = vadd.f32 %v2101, %v2102
        %v2104 = vrot.slane %v2103, 1
        %v2105 = vadd.f32 %v2103, %v2104
        %vm2106 = vcmask 0
        %2107 = vst.msk [vmem:[%s737] sm:$0x1] %vm2106, %v2105
        %p2108 = scmp.lt.s32.totalorder %s35, 1
        %s2109 = scalar_select %p2108, %s35, 1
        %s2110 = smul.addr %s2109, 2
        %s2111 = smul.addr %s2110, 8
        %s2112 = scalar_lea.vmem %s20, %s2111
        %p2113 = scmp.lt.s32.totalorder %s35, 1
        %s2114 = scalar_select %p2113, %s35, 1
        %s2115 = smul.addr %s2114, 2
        %s2116 = smul.addr %s2115, 8
        %s2117 = scalar_lea.vmem %s21, %s2116
        %p2118 = scmp.lt.s32.totalorder %s35, 1
        %s2119 = scalar_select %p2118, %s35, 1
        %s2120 = scalar_lea.vmem %s22, %s2119
        // Predicated region
        $region105: #{waveglow_forward.7} parent=99 // pred_check
          %p2121 = pneg %p483
        $region106: #{waveglow_forward.7} parent=99 // pred_check_branch
          %2123 = sbr.rel (%p2121) target = $region108
        $region107: #{waveglow_forward.7} parent=99 // pred_region
          _
        $region108: #{waveglow_forward.7} parent=99 // pred_fallthru
          _
        // Predicated region
        $region109: #{waveglow_forward.7} parent=99 // pred_check
          %p2124 = pneg %p509
        $region110: #{waveglow_forward.7} parent=99 // pred_check_branch
          %2126 = sbr.rel (%p2124) target = $region112
        $region111: #{waveglow_forward.7} parent=99 // pred_region
          _
        $region112: #{waveglow_forward.7} parent=99 // pred_fallthru
          _
        // Predicated region
        $region113: #{waveglow_forward.7} parent=99 // pred_check
          %p2127 = pneg %p535
        $region114: #{waveglow_forward.7} parent=99 // pred_check_branch
          %2129 = sbr.rel (%p2127) target = $region116
        $region115: #{waveglow_forward.7} parent=99 // pred_region
          _
        $region116: #{waveglow_forward.7} parent=99 // pred_fallthru
          _
      $region100: #{waveglow_forward.7} parent=5 // pred_fallthru
        _
      %p2130 = scmp.le.s32.totalorder 2, %s30
      // Predicated region
      $region117: #{waveglow_forward.7} parent=5 // pred_check
        %p2131 = pneg %p2130
      $region118: #{waveglow_forward.7} parent=5 // pred_check_branch
        %2133 = sbr.rel (%p2131) target = $region120
      $region119: #{waveglow_forward.7} parent=5 // pred_region
        %s2134 = ssub.s32 %s30, 2
        // Predicated region
        $region121: #{waveglow_forward.7} parent=119 // pred_check
          %p2135 = pneg %p489
        $region122: #{waveglow_forward.7} parent=119 // pred_check_branch
          %2137 = sbr.rel (%p2135) target = $region124
        $region123: #{waveglow_forward.7} parent=119 // pred_region
          %p2138 = scmp.lt.s32.totalorder %s36, 1
          %s2139 = scalar_select %p2138, %s36, 1
          %s2140 = smul.addr %s2139, 2
          %s2141 = smul.addr %s2140, 8
          %s2142 = scalar_lea.vmem %s20, %s2141
        $region124: #{waveglow_forward.7} parent=119 // pred_fallthru
          _
        // Predicated region
        $region125: #{waveglow_forward.7} parent=119 // pred_check
          %p2143 = pneg %p515
        $region126: #{waveglow_forward.7} parent=119 // pred_check_branch
          %2145 = sbr.rel (%p2143) target = $region128
        $region127: #{waveglow_forward.7} parent=119 // pred_region
          %p2146 = scmp.lt.s32.totalorder %s36, 1
          %s2147 = scalar_select %p2146, %s36, 1
          %s2148 = smul.addr %s2147, 2
          %s2149 = smul.addr %s2148, 8
          %s2150 = scalar_lea.vmem %s21, %s2149
        $region128: #{waveglow_forward.7} parent=119 // pred_fallthru
          _
        // Predicated region
        $region129: #{waveglow_forward.7} parent=119 // pred_check
          %p2151 = pneg %p541
        $region130: #{waveglow_forward.7} parent=119 // pred_check_branch
          %2153 = sbr.rel (%p2151) target = $region132
        $region131: #{waveglow_forward.7} parent=119 // pred_region
          %p2154 = scmp.lt.s32.totalorder %s36, 1
          %s2155 = scalar_select %p2154, %s36, 1
          %s2156 = scalar_lea.vmem %s22, %s2155
        $region132: #{waveglow_forward.7} parent=119 // pred_fallthru
          _
      $region120: #{waveglow_forward.7} parent=5 // pred_fallthru
        _
    $region6: #{waveglow_forward.7} parent=1 // loop_footer
      %s34 = sadd.s32 1, %s30
    $region7: #{waveglow_forward.7} parent=1 // loop_footer_branch
      %29 = sbr.rel target = $region3
    $region8: #{waveglow_forward.7} parent=1 // loop_exit
      _
    %2157 = vsyncpa [#allocation4], 1
    %s2158 = scalar_lea.sflag [#allocation4], 1
    %2159 = vsyncpa %s2158, 1

// kernel: waveglow_forward.8
$region0: #{waveglow_forward.8}
  #allocation0 [shape = 'u32[]', space=smem, size = 0x4, offset = 0x4, fixed_abs, tag = 'smem constant byte address 0x4 - core index']
  #allocation1 [shape = 'u32[144,128]{1,0:T(1,128)}', space=vmem, size = 0x12000, scoped, tag = 'internal scratch']
  #allocation2 [shape = 'f32[32,32]{1,0:T(8,128)}', space=vmem, size = 0x4000, scoped, tag = 'scratch operand']
  %s0 = inlined_call_operand.vmem [shape: f32[2,16,6], index: 0, kind: input, shape index: {}]
  %s1 = inlined_call_operand.vmem [shape: f32[2,16,8], index: 1, kind: input, shape index: {}]
  %s2 = inlined_call_operand.vmem [shape: f32[6,3], index: 2, kind: input, shape index: {}]
  %s3 = inlined_call_operand.vmem [shape: f32[6,3], index: 3, kind: input, shape index: {}]
  %s4 = inlined_call_operand.vmem [shape: f32[3,32], index: 4, kind: input, shape index: {}]
  %s5 = inlined_call_operand.vmem [shape: f32[1,32], index: 5, kind: input, shape index: {}]
  %s6 = inlined_call_operand.vmem [shape: f32[8,128], index: 6, kind: input, shape index: {}]
  %s7 = inlined_call_operand.vmem [shape: f32[1,128], index: 7, kind: input, shape index: {}]
  %s8 = inlined_call_operand.vmem [shape: f32[3,32,64], index: 8, kind: input, shape index: {}]
  %s9 = inlined_call_operand.vmem [shape: f32[1,64], index: 9, kind: input, shape index: {}]
  %s10 = inlined_call_operand.vmem [shape: f32[32,64], index: 10, kind: input, shape index: {}]
  %s11 = inlined_call_operand.vmem [shape: f32[1,64], index: 11, kind: input, shape index: {}]
  %s12 = inlined_call_operand.vmem [shape: f32[3,32,64], index: 12, kind: input, shape index: {}]
  %s13 = inlined_call_operand.vmem [shape: f32[1,64], index: 13, kind: input, shape index: {}]
  %s14 = inlined_call_operand.vmem [shape: f32[32,32], index: 14, kind: input, shape index: {}]
  %s15 = inlined_call_operand.vmem [shape: f32[1,32], index: 15, kind: input, shape index: {}]
  %s16 = inlined_call_operand.vmem [shape: f32[32,3], index: 16, kind: input, shape index: {}]
  %s17 = inlined_call_operand.vmem [shape: f32[32,3], index: 17, kind: input, shape index: {}]
  %s18 = inlined_call_operand.vmem [shape: f32[1,3], index: 18, kind: input, shape index: {}]
  %s19 = inlined_call_operand.vmem [shape: f32[1,3], index: 19, kind: input, shape index: {}]
  %s20 = inlined_call_operand.vmem [shape: f32[2,16,3], index: 20, kind: output, shape index: {0}]
  %s21 = inlined_call_operand.vmem [shape: f32[2,16,3], index: 21, kind: output, shape index: {1}]
  %s22 = inlined_call_operand.vmem [shape: f32[2,1,1], index: 22, kind: output, shape index: {2}]
  %23 = xla_tuple %s20, %s21, %s22
  %s24 = sld [smem:[#allocation0]]
  $region129: #{waveglow_forward.8} parent=0
    _
  %s26 = ssub.s32 1, %s24
  %s27 = scalar_select 0, %s26, %s24
  loop: start=0, step=1, limit=4
  $region2: #{waveglow_forward.8} parent=0 // loop_pre_header
    _
  $region3: #{waveglow_forward.8} parent=0 // loop_header
    %s29 = sphi 0, %s33
    %p30 = scmp.ge.s32.totalorder %s29, 4
    %s39 = sphi 0, %s41
    %s42 = sphi 0, %s39
    %s43 = sphi 0, %s42
    %s59 = sphi 0, %s43
    %s65 = sphi 0, %s67
    %s68 = sphi 0, %s65
    %s69 = sphi 0, %s68
    %s85 = sphi 0, %s69
    %s89 = sphi 0, %s89
    %s91 = sphi 0, %s89
    %s92 = sphi 0, %s91
    %s106 = sphi 0, %s92
    %s110 = sphi 0, %s110
    %s112 = sphi 0, %s110
    %s113 = sphi 0, %s112
    %s127 = sphi 0, %s113
    %s131 = sphi 0, %s131
    %s133 = sphi 0, %s131
    %s134 = sphi 0, %s133
    %s148 = sphi 0, %s134
    %s152 = sphi 0, %s152
    %s154 = sphi 0, %s152
    %s155 = sphi 0, %s154
    %s169 = sphi 0, %s155
    %s173 = sphi 0, %s173
    %s175 = sphi 0, %s173
    %s176 = sphi 0, %s175
    %s190 = sphi 0, %s176
    %s194 = sphi 0, %s194
    %s196 = sphi 0, %s194
    %s197 = sphi 0, %s196
    %s211 = sphi 0, %s197
    %s215 = sphi 0, %s215
    %s217 = sphi 0, %s215
    %s218 = sphi 0, %s217
    %s232 = sphi 0, %s218
    %s236 = sphi 0, %s236
    %s238 = sphi 0, %s236
    %s239 = sphi 0, %s238
    %s253 = sphi 0, %s239
    %s257 = sphi 0, %s257
    %s259 = sphi 0, %s257
    %s260 = sphi 0, %s259
    %s274 = sphi 0, %s260
    %s278 = sphi 0, %s278
    %s280 = sphi 0, %s278
    %s281 = sphi 0, %s280
    %s295 = sphi 0, %s281
    %s299 = sphi 0, %s299
    %s301 = sphi 0, %s299
    %s302 = sphi 0, %s301
    %s316 = sphi 0, %s302
    %s320 = sphi 0, %s320
    %s322 = sphi 0, %s320
    %s323 = sphi 0, %s322
    %s337 = sphi 0, %s323
    %s341 = sphi 0, %s341
    %s343 = sphi 0, %s341
    %s344 = sphi 0, %s343
    %s358 = sphi 0, %s344
    %s362 = sphi 0, %s362
    %s364 = sphi 0, %s362
    %s365 = sphi 0, %s364
    %s379 = sphi 0, %s365
    %s383 = sphi 0, %s383
    %s385 = sphi 0, %s383
    %s386 = sphi 0, %s385
    %s400 = sphi 0, %s386
    %s404 = sphi 0, %s404
    %s406 = sphi 0, %s404
    %s407 = sphi 0, %s406
    %s421 = sphi 0, %s407
    %s425 = sphi 0, %s425
    %s427 = sphi 0, %s425
    %s428 = sphi 0, %s427
    %s442 = sphi 0, %s428
    %s446 = sphi 0, %s446
    %s448 = sphi 0, %s446
    %s449 = sphi 0, %s448
    %s463 = sphi 0, %s449
    %s469 = sphi 0, %s471
    %s472 = sphi 0, %s469
    %s473 = sphi 0, %s472
    %s489 = sphi 0, %s473
    %s495 = sphi 0, %s497
    %s498 = sphi 0, %s495
    %s499 = sphi 0, %s498
    %s515 = sphi 0, %s499
    %s521 = sphi 0, %s523
    %s524 = sphi 0, %s521
    %s525 = sphi 0, %s524
    %s541 = sphi 0, %s525
  $region4: #{waveglow_forward.8} parent=0 // loop_header_branch
    %32 = sbr.rel (%p30) target = $region8
  $region5: #{waveglow_forward.8} parent=0 // loop_body
    %s34 = ssub.s32 %s29, 1
    %s35 = ssub.s32 %s29, 2
    %s36 = sadd.s32 %s29, 1
    %s37 = ssub.s32 %s29, %s36
    %p38 = scmp.eq.s32.totalorder %s37, 0
    %s40 = sadd.s32 %s39, 1
    %s41 = scalar_select %p38, %s39, %s40
    %p44 = pneg %p38
    %p45 = scmp.eq.s32.totalorder %s29, 1
    %p46 = por %p44, %p45
    %p47 = scmp.ne.s32.totalorder %s39, %s42
    %p48 = scmp.eq.s32.totalorder %s29, 0
    %p49 = por %p47, %p48
    %p50 = scmp.ne.s32.totalorder %s39, %s42
    %p51 = scmp.eq.s32.totalorder %s34, 1
    %p52 = por %p50, %p51
    %p53 = scmp.ne.s32.totalorder %s42, %s43
    %p54 = scmp.eq.s32.totalorder %s34, 0
    %p55 = por %p53, %p54
    %p56 = scmp.ne.s32.totalorder %s42, %s43
    %p57 = scmp.eq.s32.totalorder %s35, 1
    %p58 = por %p56, %p57
    %p60 = scmp.ne.s32.totalorder %s43, %s59
    %p61 = scmp.eq.s32.totalorder %s35, 0
    %p62 = por %p60, %p61
    %s63 = ssub.s32 %s29, %s36
    %p64 = scmp.eq.s32.totalorder %s63, 0
    %s66 = sadd.s32 %s65, 1
    %s67 = scalar_select %p64, %s65, %s66
    %p70 = pneg %p64
    %p71 = scmp.eq.s32.totalorder %s29, 1
    %p72 = por %p70, %p71
    %p73 = scmp.ne.s32.totalorder %s65, %s68
    %p74 = scmp.eq.s32.totalorder %s29, 0
    %p75 = por %p73, %p74
    %p76 = scmp.ne.s32.totalorder %s65, %s68
    %p77 = scmp.eq.s32.totalorder %s34, 1
    %p78 = por %p76, %p77
    %p79 = scmp.ne.s32.totalorder %s68, %s69
    %p80 = scmp.eq.s32.totalorder %s34, 0
    %p81 = por %p79, %p80
    %p82 = scmp.ne.s32.totalorder %s68, %s69
    %p83 = scmp.eq.s32.totalorder %s35, 1
    %p84 = por %p82, %p83
    %p86 = scmp.ne.s32.totalorder %s69, %s85
    %p87 = scmp.eq.s32.totalorder %s35, 0
    %p88 = por %p86, %p87
    %s90 = sadd.s32 %s89, 1
    %p93 = scmp.eq.s32.totalorder %s29, 1
    %p94 = scmp.ne.s32.totalorder %s89, %s91
    %p95 = scmp.eq.s32.totalorder %s29, 0
    %p96 = por %p94, %p95
    %p97 = scmp.ne.s32.totalorder %s89, %s91
    %p98 = scmp.eq.s32.totalorder %s34, 1
    %p99 = por %p97, %p98
    %p100 = scmp.ne.s32.totalorder %s91, %s92
    %p101 = scmp.eq.s32.totalorder %s34, 0
    %p102 = por %p100, %p101
    %p103 = scmp.ne.s32.totalorder %s91, %s92
    %p104 = scmp.eq.s32.totalorder %s35, 1
    %p105 = por %p103, %p104
    %p107 = scmp.ne.s32.totalorder %s92, %s106
    %p108 = scmp.eq.s32.totalorder %s35, 0
    %p109 = por %p107, %p108
    %s111 = sadd.s32 %s110, 1
    %p114 = scmp.eq.s32.totalorder %s29, 1
    %p115 = scmp.ne.s32.totalorder %s110, %s112
    %p116 = scmp.eq.s32.totalorder %s29, 0
    %p117 = por %p115, %p116
    %p118 = scmp.ne.s32.totalorder %s110, %s112
    %p119 = scmp.eq.s32.totalorder %s34, 1
    %p120 = por %p118, %p119
    %p121 = scmp.ne.s32.totalorder %s112, %s113
    %p122 = scmp.eq.s32.totalorder %s34, 0
    %p123 = por %p121, %p122
    %p124 = scmp.ne.s32.totalorder %s112, %s113
    %p125 = scmp.eq.s32.totalorder %s35, 1
    %p126 = por %p124, %p125
    %p128 = scmp.ne.s32.totalorder %s113, %s127
    %p129 = scmp.eq.s32.totalorder %s35, 0
    %p130 = por %p128, %p129
    %s132 = sadd.s32 %s131, 1
    %p135 = scmp.eq.s32.totalorder %s29, 1
    %p136 = scmp.ne.s32.totalorder %s131, %s133
    %p137 = scmp.eq.s32.totalorder %s29, 0
    %p138 = por %p136, %p137
    %p139 = scmp.ne.s32.totalorder %s131, %s133
    %p140 = scmp.eq.s32.totalorder %s34, 1
    %p141 = por %p139, %p140
    %p142 = scmp.ne.s32.totalorder %s133, %s134
    %p143 = scmp.eq.s32.totalorder %s34, 0
    %p144 = por %p142, %p143
    %p145 = scmp.ne.s32.totalorder %s133, %s134
    %p146 = scmp.eq.s32.totalorder %s35, 1
    %p147 = por %p145, %p146
    %p149 = scmp.ne.s32.totalorder %s134, %s148
    %p150 = scmp.eq.s32.totalorder %s35, 0
    %p151 = por %p149, %p150
    %s153 = sadd.s32 %s152, 1
    %p156 = scmp.eq.s32.totalorder %s29, 1
    %p157 = scmp.ne.s32.totalorder %s152, %s154
    %p158 = scmp.eq.s32.totalorder %s29, 0
    %p159 = por %p157, %p158
    %p160 = scmp.ne.s32.totalorder %s152, %s154
    %p161 = scmp.eq.s32.totalorder %s34, 1
    %p162 = por %p160, %p161
    %p163 = scmp.ne.s32.totalorder %s154, %s155
    %p164 = scmp.eq.s32.totalorder %s34, 0
    %p165 = por %p163, %p164
    %p166 = scmp.ne.s32.totalorder %s154, %s155
    %p167 = scmp.eq.s32.totalorder %s35, 1
    %p168 = por %p166, %p167
    %p170 = scmp.ne.s32.totalorder %s155, %s169
    %p171 = scmp.eq.s32.totalorder %s35, 0
    %p172 = por %p170, %p171
    %s174 = sadd.s32 %s173, 1
    %p177 = scmp.eq.s32.totalorder %s29, 1
    %p178 = scmp.ne.s32.totalorder %s173, %s175
    %p179 = scmp.eq.s32.totalorder %s29, 0
    %p180 = por %p178, %p179
    %p181 = scmp.ne.s32.totalorder %s173, %s175
    %p182 = scmp.eq.s32.totalorder %s34, 1
    %p183 = por %p181, %p182
    %p184 = scmp.ne.s32.totalorder %s175, %s176
    %p185 = scmp.eq.s32.totalorder %s34, 0
    %p186 = por %p184, %p185
    %p187 = scmp.ne.s32.totalorder %s175, %s176
    %p188 = scmp.eq.s32.totalorder %s35, 1
    %p189 = por %p187, %p188
    %p191 = scmp.ne.s32.totalorder %s176, %s190
    %p192 = scmp.eq.s32.totalorder %s35, 0
    %p193 = por %p191, %p192
    %s195 = sadd.s32 %s194, 1
    %p198 = scmp.eq.s32.totalorder %s29, 1
    %p199 = scmp.ne.s32.totalorder %s194, %s196
    %p200 = scmp.eq.s32.totalorder %s29, 0
    %p201 = por %p199, %p200
    %p202 = scmp.ne.s32.totalorder %s194, %s196
    %p203 = scmp.eq.s32.totalorder %s34, 1
    %p204 = por %p202, %p203
    %p205 = scmp.ne.s32.totalorder %s196, %s197
    %p206 = scmp.eq.s32.totalorder %s34, 0
    %p207 = por %p205, %p206
    %p208 = scmp.ne.s32.totalorder %s196, %s197
    %p209 = scmp.eq.s32.totalorder %s35, 1
    %p210 = por %p208, %p209
    %p212 = scmp.ne.s32.totalorder %s197, %s211
    %p213 = scmp.eq.s32.totalorder %s35, 0
    %p214 = por %p212, %p213
    %s216 = sadd.s32 %s215, 1
    %p219 = scmp.eq.s32.totalorder %s29, 1
    %p220 = scmp.ne.s32.totalorder %s215, %s217
    %p221 = scmp.eq.s32.totalorder %s29, 0
    %p222 = por %p220, %p221
    %p223 = scmp.ne.s32.totalorder %s215, %s217
    %p224 = scmp.eq.s32.totalorder %s34, 1
    %p225 = por %p223, %p224
    %p226 = scmp.ne.s32.totalorder %s217, %s218
    %p227 = scmp.eq.s32.totalorder %s34, 0
    %p228 = por %p226, %p227
    %p229 = scmp.ne.s32.totalorder %s217, %s218
    %p230 = scmp.eq.s32.totalorder %s35, 1
    %p231 = por %p229, %p230
    %p233 = scmp.ne.s32.totalorder %s218, %s232
    %p234 = scmp.eq.s32.totalorder %s35, 0
    %p235 = por %p233, %p234
    %s237 = sadd.s32 %s236, 1
    %p240 = scmp.eq.s32.totalorder %s29, 1
    %p241 = scmp.ne.s32.totalorder %s236, %s238
    %p242 = scmp.eq.s32.totalorder %s29, 0
    %p243 = por %p241, %p242
    %p244 = scmp.ne.s32.totalorder %s236, %s238
    %p245 = scmp.eq.s32.totalorder %s34, 1
    %p246 = por %p244, %p245
    %p247 = scmp.ne.s32.totalorder %s238, %s239
    %p248 = scmp.eq.s32.totalorder %s34, 0
    %p249 = por %p247, %p248
    %p250 = scmp.ne.s32.totalorder %s238, %s239
    %p251 = scmp.eq.s32.totalorder %s35, 1
    %p252 = por %p250, %p251
    %p254 = scmp.ne.s32.totalorder %s239, %s253
    %p255 = scmp.eq.s32.totalorder %s35, 0
    %p256 = por %p254, %p255
    %s258 = sadd.s32 %s257, 1
    %p261 = scmp.eq.s32.totalorder %s29, 1
    %p262 = scmp.ne.s32.totalorder %s257, %s259
    %p263 = scmp.eq.s32.totalorder %s29, 0
    %p264 = por %p262, %p263
    %p265 = scmp.ne.s32.totalorder %s257, %s259
    %p266 = scmp.eq.s32.totalorder %s34, 1
    %p267 = por %p265, %p266
    %p268 = scmp.ne.s32.totalorder %s259, %s260
    %p269 = scmp.eq.s32.totalorder %s34, 0
    %p270 = por %p268, %p269
    %p271 = scmp.ne.s32.totalorder %s259, %s260
    %p272 = scmp.eq.s32.totalorder %s35, 1
    %p273 = por %p271, %p272
    %p275 = scmp.ne.s32.totalorder %s260, %s274
    %p276 = scmp.eq.s32.totalorder %s35, 0
    %p277 = por %p275, %p276
    %s279 = sadd.s32 %s278, 1
    %p282 = scmp.eq.s32.totalorder %s29, 1
    %p283 = scmp.ne.s32.totalorder %s278, %s280
    %p284 = scmp.eq.s32.totalorder %s29, 0
    %p285 = por %p283, %p284
    %p286 = scmp.ne.s32.totalorder %s278, %s280
    %p287 = scmp.eq.s32.totalorder %s34, 1
    %p288 = por %p286, %p287
    %p289 = scmp.ne.s32.totalorder %s280, %s281
    %p290 = scmp.eq.s32.totalorder %s34, 0
    %p291 = por %p289, %p290
    %p292 = scmp.ne.s32.totalorder %s280, %s281
    %p293 = scmp.eq.s32.totalorder %s35, 1
    %p294 = por %p292, %p293
    %p296 = scmp.ne.s32.totalorder %s281, %s295
    %p297 = scmp.eq.s32.totalorder %s35, 0
    %p298 = por %p296, %p297
    %s300 = sadd.s32 %s299, 1
    %p303 = scmp.eq.s32.totalorder %s29, 1
    %p304 = scmp.ne.s32.totalorder %s299, %s301
    %p305 = scmp.eq.s32.totalorder %s29, 0
    %p306 = por %p304, %p305
    %p307 = scmp.ne.s32.totalorder %s299, %s301
    %p308 = scmp.eq.s32.totalorder %s34, 1
    %p309 = por %p307, %p308
    %p310 = scmp.ne.s32.totalorder %s301, %s302
    %p311 = scmp.eq.s32.totalorder %s34, 0
    %p312 = por %p310, %p311
    %p313 = scmp.ne.s32.totalorder %s301, %s302
    %p314 = scmp.eq.s32.totalorder %s35, 1
    %p315 = por %p313, %p314
    %p317 = scmp.ne.s32.totalorder %s302, %s316
    %p318 = scmp.eq.s32.totalorder %s35, 0
    %p319 = por %p317, %p318
    %s321 = sadd.s32 %s320, 1
    %p324 = scmp.eq.s32.totalorder %s29, 1
    %p325 = scmp.ne.s32.totalorder %s320, %s322
    %p326 = scmp.eq.s32.totalorder %s29, 0
    %p327 = por %p325, %p326
    %p328 = scmp.ne.s32.totalorder %s320, %s322
    %p329 = scmp.eq.s32.totalorder %s34, 1
    %p330 = por %p328, %p329
    %p331 = scmp.ne.s32.totalorder %s322, %s323
    %p332 = scmp.eq.s32.totalorder %s34, 0
    %p333 = por %p331, %p332
    %p334 = scmp.ne.s32.totalorder %s322, %s323
    %p335 = scmp.eq.s32.totalorder %s35, 1
    %p336 = por %p334, %p335
    %p338 = scmp.ne.s32.totalorder %s323, %s337
    %p339 = scmp.eq.s32.totalorder %s35, 0
    %p340 = por %p338, %p339
    %s342 = sadd.s32 %s341, 1
    %p345 = scmp.eq.s32.totalorder %s29, 1
    %p346 = scmp.ne.s32.totalorder %s341, %s343
    %p347 = scmp.eq.s32.totalorder %s29, 0
    %p348 = por %p346, %p347
    %p349 = scmp.ne.s32.totalorder %s341, %s343
    %p350 = scmp.eq.s32.totalorder %s34, 1
    %p351 = por %p349, %p350
    %p352 = scmp.ne.s32.totalorder %s343, %s344
    %p353 = scmp.eq.s32.totalorder %s34, 0
    %p354 = por %p352, %p353
    %p355 = scmp.ne.s32.totalorder %s343, %s344
    %p356 = scmp.eq.s32.totalorder %s35, 1
    %p357 = por %p355, %p356
    %p359 = scmp.ne.s32.totalorder %s344, %s358
    %p360 = scmp.eq.s32.totalorder %s35, 0
    %p361 = por %p359, %p360
    %s363 = sadd.s32 %s362, 1
    %p366 = scmp.eq.s32.totalorder %s29, 1
    %p367 = scmp.ne.s32.totalorder %s362, %s364
    %p368 = scmp.eq.s32.totalorder %s29, 0
    %p369 = por %p367, %p368
    %p370 = scmp.ne.s32.totalorder %s362, %s364
    %p371 = scmp.eq.s32.totalorder %s34, 1
    %p372 = por %p370, %p371
    %p373 = scmp.ne.s32.totalorder %s364, %s365
    %p374 = scmp.eq.s32.totalorder %s34, 0
    %p375 = por %p373, %p374
    %p376 = scmp.ne.s32.totalorder %s364, %s365
    %p377 = scmp.eq.s32.totalorder %s35, 1
    %p378 = por %p376, %p377
    %p380 = scmp.ne.s32.totalorder %s365, %s379
    %p381 = scmp.eq.s32.totalorder %s35, 0
    %p382 = por %p380, %p381
    %s384 = sadd.s32 %s383, 1
    %p387 = scmp.eq.s32.totalorder %s29, 1
    %p388 = scmp.ne.s32.totalorder %s383, %s385
    %p389 = scmp.eq.s32.totalorder %s29, 0
    %p390 = por %p388, %p389
    %p391 = scmp.ne.s32.totalorder %s383, %s385
    %p392 = scmp.eq.s32.totalorder %s34, 1
    %p393 = por %p391, %p392
    %p394 = scmp.ne.s32.totalorder %s385, %s386
    %p395 = scmp.eq.s32.totalorder %s34, 0
    %p396 = por %p394, %p395
    %p397 = scmp.ne.s32.totalorder %s385, %s386
    %p398 = scmp.eq.s32.totalorder %s35, 1
    %p399 = por %p397, %p398
    %p401 = scmp.ne.s32.totalorder %s386, %s400
    %p402 = scmp.eq.s32.totalorder %s35, 0
    %p403 = por %p401, %p402
    %s405 = sadd.s32 %s404, 1
    %p408 = scmp.eq.s32.totalorder %s29, 1
    %p409 = scmp.ne.s32.totalorder %s404, %s406
    %p410 = scmp.eq.s32.totalorder %s29, 0
    %p411 = por %p409, %p410
    %p412 = scmp.ne.s32.totalorder %s404, %s406
    %p413 = scmp.eq.s32.totalorder %s34, 1
    %p414 = por %p412, %p413
    %p415 = scmp.ne.s32.totalorder %s406, %s407
    %p416 = scmp.eq.s32.totalorder %s34, 0
    %p417 = por %p415, %p416
    %p418 = scmp.ne.s32.totalorder %s406, %s407
    %p419 = scmp.eq.s32.totalorder %s35, 1
    %p420 = por %p418, %p419
    %p422 = scmp.ne.s32.totalorder %s407, %s421
    %p423 = scmp.eq.s32.totalorder %s35, 0
    %p424 = por %p422, %p423
    %s426 = sadd.s32 %s425, 1
    %p429 = scmp.eq.s32.totalorder %s29, 1
    %p430 = scmp.ne.s32.totalorder %s425, %s427
    %p431 = scmp.eq.s32.totalorder %s29, 0
    %p432 = por %p430, %p431
    %p433 = scmp.ne.s32.totalorder %s425, %s427
    %p434 = scmp.eq.s32.totalorder %s34, 1
    %p435 = por %p433, %p434
    %p436 = scmp.ne.s32.totalorder %s427, %s428
    %p437 = scmp.eq.s32.totalorder %s34, 0
    %p438 = por %p436, %p437
    %p439 = scmp.ne.s32.totalorder %s427, %s428
    %p440 = scmp.eq.s32.totalorder %s35, 1
    %p441 = por %p439, %p440
    %p443 = scmp.ne.s32.totalorder %s428, %s442
    %p444 = scmp.eq.s32.totalorder %s35, 0
    %p445 = por %p443, %p444
    %s447 = sadd.s32 %s446, 1
    %p450 = scmp.eq.s32.totalorder %s29, 1
    %p451 = scmp.ne.s32.totalorder %s446, %s448
    %p452 = scmp.eq.s32.totalorder %s29, 0
    %p453 = por %p451, %p452
    %p454 = scmp.ne.s32.totalorder %s446, %s448
    %p455 = scmp.eq.s32.totalorder %s34, 1
    %p456 = por %p454, %p455
    %p457 = scmp.ne.s32.totalorder %s448, %s449
    %p458 = scmp.eq.s32.totalorder %s34, 0
    %p459 = por %p457, %p458
    %p460 = scmp.ne.s32.totalorder %s448, %s449
    %p461 = scmp.eq.s32.totalorder %s35, 1
    %p462 = por %p460, %p461
    %p464 = scmp.ne.s32.totalorder %s449, %s463
    %p465 = scmp.eq.s32.totalorder %s35, 0
    %p466 = por %p464, %p465
    %s467 = ssub.s32 %s29, %s36
    %p468 = scmp.eq.s32.totalorder %s467, 0
    %s470 = sadd.s32 %s469, 1
    %s471 = scalar_select %p468, %s469, %s470
    %p474 = pneg %p468
    %p475 = scmp.eq.s32.totalorder %s29, 1
    %p476 = por %p474, %p475
    %p477 = scmp.ne.s32.totalorder %s469, %s472
    %p478 = scmp.eq.s32.totalorder %s29, 0
    %p479 = por %p477, %p478
    %p480 = scmp.ne.s32.totalorder %s469, %s472
    %p481 = scmp.eq.s32.totalorder %s34, 1
    %p482 = por %p480, %p481
    %p483 = scmp.ne.s32.totalorder %s472, %s473
    %p484 = scmp.eq.s32.totalorder %s34, 0
    %p485 = por %p483, %p484
    %p486 = scmp.ne.s32.totalorder %s472, %s473
    %p487 = scmp.eq.s32.totalorder %s35, 1
    %p488 = por %p486, %p487
    %p490 = scmp.ne.s32.totalorder %s473, %s489
    %p491 = scmp.eq.s32.totalorder %s35, 0
    %p492 = por %p490, %p491
    %s493 = ssub.s32 %s29, %s36
    %p494 = scmp.eq.s32.totalorder %s493, 0
    %s496 = sadd.s32 %s495, 1
    %s497 = scalar_select %p494, %s495, %s496
    %p500 = pneg %p494
    %p501 = scmp.eq.s32.totalorder %s29, 1
    %p502 = por %p500, %p501
    %p503 = scmp.ne.s32.totalorder %s495, %s498
    %p504 = scmp.eq.s32.totalorder %s29, 0
    %p505 = por %p503, %p504
    %p506 = scmp.ne.s32.totalorder %s495, %s498
    %p507 = scmp.eq.s32.totalorder %s34, 1
    %p508 = por %p506, %p507
    %p509 = scmp.ne.s32.totalorder %s498, %s499
    %p510 = scmp.eq.s32.totalorder %s34, 0
    %p511 = por %p509, %p510
    %p512 = scmp.ne.s32.totalorder %s498, %s499
    %p513 = scmp.eq.s32.totalorder %s35, 1
    %p514 = por %p512, %p513
    %p516 = scmp.ne.s32.totalorder %s499, %s515
    %p517 = scmp.eq.s32.totalorder %s35, 0
    %p518 = por %p516, %p517
    %s519 = ssub.s32 %s29, %s36
    %p520 = scmp.eq.s32.totalorder %s519, 0
    %s522 = sadd.s32 %s521, 1
    %s523 = scalar_select %p520, %s521, %s522
    %p526 = pneg %p520
    %p527 = scmp.eq.s32.totalorder %s29, 1
    %p528 = por %p526, %p527
    %p529 = scmp.ne.s32.totalorder %s521, %s524
    %p530 = scmp.eq.s32.totalorder %s29, 0
    %p531 = por %p529, %p530
    %p532 = scmp.ne.s32.totalorder %s521, %s524
    %p533 = scmp.eq.s32.totalorder %s34, 1
    %p534 = por %p532, %p533
    %p535 = scmp.ne.s32.totalorder %s524, %s525
    %p536 = scmp.eq.s32.totalorder %s34, 0
    %p537 = por %p535, %p536
    %p538 = scmp.ne.s32.totalorder %s524, %s525
    %p539 = scmp.eq.s32.totalorder %s35, 1
    %p540 = por %p538, %p539
    %p542 = scmp.ne.s32.totalorder %s525, %s541
    %p543 = scmp.eq.s32.totalorder %s35, 0
    %p544 = por %p542, %p543
    %p545 = scmp.le.s32.totalorder 1, %s29
    %p546 = scmp.lt.s32.totalorder %s29, 3
    %p547 = pnand %p545, %p546
    %p548 = pneg %p547
    // Predicated region
    $region9: #{waveglow_forward.8} parent=5 // pred_check
      _
    $region10: #{waveglow_forward.8} parent=5 // pred_check_branch
      %550 = sbr.rel (%p547) target = $region12
    $region11: #{waveglow_forward.8} parent=5 // pred_region
      %s551 = ssub.s32 %s29, 1
      // Predicated region
      $region13: #{waveglow_forward.8} parent=11 // pred_check
        %p552 = pneg %p102
      $region14: #{waveglow_forward.8} parent=11 // pred_check_branch
        %554 = sbr.rel (%p552) target = $region16
      $region15: #{waveglow_forward.8} parent=11 // pred_region
        _
      $region16: #{waveglow_forward.8} parent=11 // pred_fallthru
        _
      // Predicated region
      $region17: #{waveglow_forward.8} parent=11 // pred_check
        %p555 = pneg %p123
      $region18: #{waveglow_forward.8} parent=11 // pred_check_branch
        %557 = sbr.rel (%p555) target = $region20
      $region19: #{waveglow_forward.8} parent=11 // pred_region
        _
      $region20: #{waveglow_forward.8} parent=11 // pred_fallthru
        _
      // Predicated region
      $region21: #{waveglow_forward.8} parent=11 // pred_check
        %p558 = pneg %p144
      $region22: #{waveglow_forward.8} parent=11 // pred_check_branch
        %560 = sbr.rel (%p558) target = $region24
      $region23: #{waveglow_forward.8} parent=11 // pred_region
        _
      $region24: #{waveglow_forward.8} parent=11 // pred_fallthru
        _
      // Predicated region
      $region25: #{waveglow_forward.8} parent=11 // pred_check
        %p561 = pneg %p165
      $region26: #{waveglow_forward.8} parent=11 // pred_check_branch
        %563 = sbr.rel (%p561) target = $region28
      $region27: #{waveglow_forward.8} parent=11 // pred_region
        _
      $region28: #{waveglow_forward.8} parent=11 // pred_fallthru
        _
      // Predicated region
      $region29: #{waveglow_forward.8} parent=11 // pred_check
        %p564 = pneg %p186
      $region30: #{waveglow_forward.8} parent=11 // pred_check_branch
        %566 = sbr.rel (%p564) target = $region32
      $region31: #{waveglow_forward.8} parent=11 // pred_region
        _
      $region32: #{waveglow_forward.8} parent=11 // pred_fallthru
        _
      // Predicated region
      $region33: #{waveglow_forward.8} parent=11 // pred_check
        %p567 = pneg %p207
      $region34: #{waveglow_forward.8} parent=11 // pred_check_branch
        %569 = sbr.rel (%p567) target = $region36
      $region35: #{waveglow_forward.8} parent=11 // pred_region
        _
      $region36: #{waveglow_forward.8} parent=11 // pred_fallthru
        _
      // Predicated region
      $region37: #{waveglow_forward.8} parent=11 // pred_check
        %p570 = pneg %p228
      $region38: #{waveglow_forward.8} parent=11 // pred_check_branch
        %572 = sbr.rel (%p570) target = $region40
      $region39: #{waveglow_forward.8} parent=11 // pred_region
        _
      $region40: #{waveglow_forward.8} parent=11 // pred_fallthru
        _
      // Predicated region
      $region41: #{waveglow_forward.8} parent=11 // pred_check
        %p573 = pneg %p249
      $region42: #{waveglow_forward.8} parent=11 // pred_check_branch
        %575 = sbr.rel (%p573) target = $region44
      $region43: #{waveglow_forward.8} parent=11 // pred_region
        _
      $region44: #{waveglow_forward.8} parent=11 // pred_fallthru
        _
      // Predicated region
      $region45: #{waveglow_forward.8} parent=11 // pred_check
        %p576 = pneg %p270
      $region46: #{waveglow_forward.8} parent=11 // pred_check_branch
        %578 = sbr.rel (%p576) target = $region48
      $region47: #{waveglow_forward.8} parent=11 // pred_region
        _
      $region48: #{waveglow_forward.8} parent=11 // pred_fallthru
        _
      // Predicated region
      $region49: #{waveglow_forward.8} parent=11 // pred_check
        %p579 = pneg %p291
      $region50: #{waveglow_forward.8} parent=11 // pred_check_branch
        %581 = sbr.rel (%p579) target = $region52
      $region51: #{waveglow_forward.8} parent=11 // pred_region
        _
      $region52: #{waveglow_forward.8} parent=11 // pred_fallthru
        _
      // Predicated region
      $region53: #{waveglow_forward.8} parent=11 // pred_check
        %p582 = pneg %p312
      $region54: #{waveglow_forward.8} parent=11 // pred_check_branch
        %584 = sbr.rel (%p582) target = $region56
      $region55: #{waveglow_forward.8} parent=11 // pred_region
        _
      $region56: #{waveglow_forward.8} parent=11 // pred_fallthru
        _
      // Predicated region
      $region57: #{waveglow_forward.8} parent=11 // pred_check
        %p585 = pneg %p333
      $region58: #{waveglow_forward.8} parent=11 // pred_check_branch
        %587 = sbr.rel (%p585) target = $region60
      $region59: #{waveglow_forward.8} parent=11 // pred_region
        _
      $region60: #{waveglow_forward.8} parent=11 // pred_fallthru
        _
      // Predicated region
      $region61: #{waveglow_forward.8} parent=11 // pred_check
        %p588 = pneg %p354
      $region62: #{waveglow_forward.8} parent=11 // pred_check_branch
        %590 = sbr.rel (%p588) target = $region64
      $region63: #{waveglow_forward.8} parent=11 // pred_region
        _
      $region64: #{waveglow_forward.8} parent=11 // pred_fallthru
        _
      // Predicated region
      $region65: #{waveglow_forward.8} parent=11 // pred_check
        %p591 = pneg %p375
      $region66: #{waveglow_forward.8} parent=11 // pred_check_branch
        %593 = sbr.rel (%p591) target = $region68
      $region67: #{waveglow_forward.8} parent=11 // pred_region
        _
      $region68: #{waveglow_forward.8} parent=11 // pred_fallthru
        _
      // Predicated region
      $region69: #{waveglow_forward.8} parent=11 // pred_check
        %p594 = pneg %p396
      $region70: #{waveglow_forward.8} parent=11 // pred_check_branch
        %596 = sbr.rel (%p594) target = $region72
      $region71: #{waveglow_forward.8} parent=11 // pred_region
        _
      $region72: #{waveglow_forward.8} parent=11 // pred_fallthru
        _
      // Predicated region
      $region73: #{waveglow_forward.8} parent=11 // pred_check
        %p597 = pneg %p417
      $region74: #{waveglow_forward.8} parent=11 // pred_check_branch
        %599 = sbr.rel (%p597) target = $region76
      $region75: #{waveglow_forward.8} parent=11 // pred_region
        _
      $region76: #{waveglow_forward.8} parent=11 // pred_fallthru
        _
      // Predicated region
      $region77: #{waveglow_forward.8} parent=11 // pred_check
        %p600 = pneg %p438
      $region78: #{waveglow_forward.8} parent=11 // pred_check_branch
        %602 = sbr.rel (%p600) target = $region80
      $region79: #{waveglow_forward.8} parent=11 // pred_region
        _
      $region80: #{waveglow_forward.8} parent=11 // pred_fallthru
        _
      // Predicated region
      $region81: #{waveglow_forward.8} parent=11 // pred_check
        %p603 = pneg %p459
      $region82: #{waveglow_forward.8} parent=11 // pred_check_branch
        %605 = sbr.rel (%p603) target = $region84
      $region83: #{waveglow_forward.8} parent=11 // pred_region
        _
      $region84: #{waveglow_forward.8} parent=11 // pred_fallthru
        _
    $region12: #{waveglow_forward.8} parent=5 // pred_fallthru
      _
    %p606 = scmp.lt.s32.totalorder %s29, 2
    // Predicated region
    $region85: #{waveglow_forward.8} parent=5 // pred_check
      %p607 = pneg %p606
    $region86: #{waveglow_forward.8} parent=5 // pred_check_branch
      %609 = sbr.rel (%p607) target = $region88
    $region87: #{waveglow_forward.8} parent=5 // pred_region
      // Predicated region
      $region89: #{waveglow_forward.8} parent=87 // pred_check
        %p610 = pneg %p49
      $region90: #{waveglow_forward.8} parent=87 // pred_check_branch
        %612 = sbr.rel (%p610) target = $region92
      $region91: #{waveglow_forward.8} parent=87 // pred_region
        %p613 = scmp.lt.s32.totalorder %s29, 1
        %s614 = scalar_select %p613, %s29, 1
        %s615 = smul.addr %s614, 2
        %s616 = smul.addr %s615, 8
        %s617 = scalar_lea.vmem %s0, %s616
      $region92: #{waveglow_forward.8} parent=87 // pred_fallthru
        _
      // Predicated region
      $region93: #{waveglow_forward.8} parent=87 // pred_check
        %p618 = pneg %p75
      $region94: #{waveglow_forward.8} parent=87 // pred_check_branch
        %620 = sbr.rel (%p618) target = $region96
      $region95: #{waveglow_forward.8} parent=87 // pred_region
        %p621 = scmp.lt.s32.totalorder %s29, 1
        %s622 = scalar_select %p621, %s29, 1
        %s623 = smul.addr %s622, 2
        %s624 = smul.addr %s623, 8
        %s625 = scalar_lea.vmem %s1, %s624
      $region96: #{waveglow_forward.8} parent=87 // pred_fallthru
        _
    $region88: #{waveglow_forward.8} parent=5 // pred_fallthru
      _
    %p626 = scmp.le.s32.totalorder 1, %s29
    %p627 = scmp.lt.s32.totalorder %s29, 3
    %p628 = pnand %p626, %p627
    %p629 = pneg %p628
    // Predicated region
    $region97: #{waveglow_forward.8} parent=5 // pred_check
      _
    $region98: #{waveglow_forward.8} parent=5 // pred_check_branch
      %631 = sbr.rel (%p628) target = $region100
    $region99: #{waveglow_forward.8} parent=5 // pred_region
      %s632 = ssub.s32 %s29, 1
      %p633 = scmp.lt.s32.totalorder %s34, 1
      %s634 = scalar_select %p633, %s34, 1
      %s635 = smul.addr %s634, 2
      %s636 = smul.addr %s635, 8
      %s637 = scalar_lea.vmem %s0, %s636
      %p638 = pneg %p55
      %p639 = pneg %p52
      %p640 = scmp.lt.s32.totalorder %s34, 1
      %s641 = scalar_select %p640, %s34, 1
      %s642 = smul.addr %s641, 2
      %s643 = smul.addr %s642, 8
      %s644 = scalar_lea.vmem %s1, %s643
      %p645 = pneg %p81
      %p646 = pneg %p78
      %p647 = pneg %p102
      %p648 = pneg %p99
      %p649 = pneg %p123
      %p650 = pneg %p120
      %p651 = pneg %p144
      %p652 = pneg %p141
      %p653 = pneg %p165
      %p654 = pneg %p162
      %p655 = pneg %p186
      %p656 = pneg %p183
      %p657 = pneg %p207
      %p658 = pneg %p204
      %p659 = pneg %p228
      %p660 = pneg %p225
      %p661 = pneg %p249
      %p662 = pneg %p246
      %p663 = pneg %p270
      %p664 = pneg %p267
      %p665 = pneg %p291
      %p666 = pneg %p288
      %p667 = pneg %p312
      %p668 = pneg %p309
      %p669 = pneg %p333
      %p670 = pneg %p330
      %p671 = pneg %p354
      %p672 = pneg %p351
      %p673 = pneg %p375
      %p674 = pneg %p372
      %p675 = pneg %p396
      %p676 = pneg %p393
      %p677 = pneg %p417
      %p678 = pneg %p414
      %p679 = pneg %p438
      %p680 = pneg %p435
      %p681 = pneg %p459
      %p682 = pneg %p456
      %p683 = pneg %p485
      %p684 = pneg %p482
      %p685 = scmp.lt.s32.totalorder %s34, 1
      %s686 = scalar_select %p685, %s34, 1
      %s687 = smul.addr %s686, 2
      %s688 = smul.addr %s687, 8
      %s689 = scalar_lea.vmem %s20, %s688
      %p690 = pneg %p511
      %p691 = pneg %p508
      %p692 = scmp.lt.s32.totalorder %s34, 1
      %s693 = scalar_select %p692, %s34, 1
      %s694 = smul.addr %s693, 2
      %s695 = smul.addr %s694, 8
      %s696 = scalar_lea.vmem %s21, %s695
      %p697 = pneg %p537
      %p698 = pneg %p534
      %p699 = scmp.lt.s32.totalorder %s34, 1
      %s700 = scalar_select %p699, %s34, 1
      %s701 = scalar_lea.vmem %s22, %s700
      %p702 = scmp.lt.s32.totalorder %s34, 1
      %s703 = scalar_select %p702, %s34, 1
      %s704 = smul.addr %s703, 2
      %s705 = smul.addr %s704, 8
      %s706 = scalar_lea.vmem %s0, %s705
      %p707 = scmp.lt.s32.totalorder %s34, 1
      %s708 = scalar_select %p707, %s34, 1
      %s709 = smul.addr %s708, 2
      %s710 = smul.addr %s709, 8
      %s711 = scalar_lea.vmem %s1, %s710
      %p712 = scmp.lt.s32.totalorder %s34, 1
      %s713 = scalar_select %p712, %s34, 1
      %s714 = smul.addr %s713, 2
      %s715 = smul.addr %s714, 8
      %s716 = scalar_lea.vmem %s20, %s715
      %p717 = scmp.lt.s32.totalorder %s34, 1
      %s718 = scalar_select %p717, %s34, 1
      %s719 = smul.addr %s718, 2
      %s720 = smul.addr %s719, 8
      %s721 = scalar_lea.vmem %s21, %s720
      %p722 = scmp.lt.s32.totalorder %s34, 1
      %s723 = scalar_select %p722, %s34, 1
      %s724 = scalar_lea.vmem %s22, %s723
      %v725 = vld [vmem:[%s706] sm:$0xff]
      %v726 = vld [vmem:[%s706 + $0x8] sm:$0xff]
      %v727 = vld [vmem:[%s2] sm:$0x3f]
      %vm728 = vcmask 48128
      %v730 = vsel %vm728, %v725, 0
      %v733 = vsel %vm728, %v726, 0
      %vm735 = vcmask 1045504
      %v737 = vsel %vm735, %v727, 0
      %739 = vmatprep.subr.mxu0 0.0
      %740 = vmatpush1.msra.mxu0 %v737
      %741 = vmatprep.subr.mxu0 0.0
      %742 = vmatpush1.msra.mxu0 0.0
      %743 = vmatprep.subr.mxu0 0.0
      %744 = vmatpush1.msra.mxu0 0.0
      %745 = vmatprep.subr.mxu0 0.0
      %746 = vmatpush1.msra.mxu0 0.0
      %747 = vmatprep.subr.mxu0 0.0
      %748 = vmatpush1.msra.mxu0 0.0
      %749 = vmatprep.subr.mxu0 0.0
      %750 = vmatpush1.msra.mxu0 0.0
      %751 = vmatprep.subr.mxu0 0.0
      %752 = vmatpush1.msra.mxu0 0.0
      %753 = vmatprep.subr.mxu0 0.0
      %754 = vmatpush1.msra.mxu0 0.0
      %755 = vmatprep.subr.mxu0 0.0
      %756 = vmatpush1.msra.mxu0 0.0
      %757 = vmatprep.subr.mxu0 0.0
      %758 = vmatpush1.msra.mxu0 0.0
      %759 = vmatprep.subr.mxu0 0.0
      %760 = vmatpush1.msra.mxu0 0.0
      %761 = vmatprep.subr.mxu0 0.0
      %762 = vmatpush1.msra.mxu0 0.0
      %763 = vmatprep.subr.mxu0 0.0
      %764 = vmatpush1.msra.mxu0 0.0
      %765 = vmatprep.subr.mxu0 0.0
      %766 = vmatpush1.msra.mxu0 0.0
      %767 = vmatprep.subr.mxu0 0.0
      %768 = vmatpush1.msra.mxu0 0.0
      %769 = vmatprep.subr.mxu0 0.0
      %770 = vmatpush1.msra.mxu0 0.0
      %771 = vmatprep.subr.mxu0 0.0
      %772 = vmatpush1.msra.mxu0 0.0
      %773 = vmatprep.subr.mxu0 0.0
      %774 = vmatpush1.msra.mxu0 0.0
      %775 = vmatprep.subr.mxu0 0.0
      %776 = vmatpush1.msra.mxu0 0.0
      %777 = vmatprep.subr.mxu0 0.0
      %778 = vmatpush1.msra.mxu0 0.0
      %779 = vmatprep.subr.mxu0 0.0
      %780 = vmatpush1.msra.mxu0 0.0
      %781 = vmatprep.subr.mxu0 0.0
      %782 = vmatpush1.msra.mxu0 0.0
      %783 = vmatprep.subr.mxu0 0.0
      %784 = vmatpush1.msra.mxu0 0.0
      %785 = vmatprep.subr.mxu0 0.0
      %786 = vmatpush1.msra.mxu0 0.0
      %787 = vmatprep.subr.mxu0 0.0
      %788 = vmatpush1.msra.mxu0 0.0
      %789 = vmatprep.subr.mxu0 0.0
      %790 = vmatpush1.msra.mxu0 0.0
      %791 = vmatprep.subr.mxu0 0.0
      %792 = vmatpush1.msra.mxu0 0.0
      %793 = vmatprep.subr.mxu0 0.0
      %794 = vmatpush1.msra.mxu0 0.0
      %795 = vmatprep.subr.mxu0 0.0
      %796 = vmatpush1.msra.mxu0 0.0
      %797 = vmatprep.subr.mxu0 0.0
      %798 = vmatpush1.msra.mxu0 0.0
      %799 = vmatprep.subr.mxu0 0.0
      %800 = vmatpush1.msra.mxu0 0.0
      %801 = vmatprep.subr.mxu0 0.0
      %802 = vmatpush1.msra.mxu0 0.0
      %803 = vmatprep.mubr.f32.mxu0 0.0
      %804 = vmatmul.mubr.f32.gmra.mrb[0].mxu0 %v730
      %v805 = vpop.f32.mrb[0].mxu0
      %v806 = vadd.f32 0.0, %v805
      %v807 = vpop.f32.mrb[0].mxu0
      %808 = vmatprep.mubr.f32.mxu0 0.0
      %809 = vmatmul.mubr.f32.gmra.mrb[0].mxu0 %v733
      %v810 = vpop.f32.mrb[0].mxu0
      %v811 = vadd.f32 0.0, %v810
      %v812 = vpop.f32.mrb[0].mxu0
      %813 = vdwg.mxu0
      %v814 = vld [vmem:[%s3] sm:$0x3f]
      %v816 = vsel %vm735, %v814, 0
      %818 = vmatprep.subr.mxu0 0.0
      %819 = vmatpush1.msra.mxu0 %v816
      %820 = vmatprep.subr.mxu0 0.0
      %821 = vmatpush1.msra.mxu0 0.0
      %822 = vmatprep.subr.mxu0 0.0
      %823 = vmatpush1.msra.mxu0 0.0
      %824 = vmatprep.subr.mxu0 0.0
      %825 = vmatpush1.msra.mxu0 0.0
      %826 = vmatprep.subr.mxu0 0.0
      %827 = vmatpush1.msra.mxu0 0.0
      %828 = vmatprep.subr.mxu0 0.0
      %829 = vmatpush1.msra.mxu0 0.0
      %830 = vmatprep.subr.mxu0 0.0
      %831 = vmatpush1.msra.mxu0 0.0
      %832 = vmatprep.subr.mxu0 0.0
      %833 = vmatpush1.msra.mxu0 0.0
      %834 = vmatprep.subr.mxu0 0.0
      %835 = vmatpush1.msra.mxu0 0.0
      %836 = vmatprep.subr.mxu0 0.0
      %837 = vmatpush1.msra.mxu0 0.0
      %838 = vmatprep.subr.mxu0 0.0
      %839 = vmatpush1.msra.mxu0 0.0
      %840 = vmatprep.subr.mxu0 0.0
      %841 = vmatpush1.msra.mxu0 0.0
      %842 = vmatprep.subr.mxu0 0.0
      %843 = vmatpush1.msra.mxu0 0.0
      %844 = vmatprep.subr.mxu0 0.0
      %845 = vmatpush1.msra.mxu0 0.0
      %846 = vmatprep.subr.mxu0 0.0
      %847 = vmatpush1.msra.mxu0 0.0
      %848 = vmatprep.subr.mxu0 0.0
      %849 = vmatpush1.msra.mxu0 0.0
      %850 = vmatprep.subr.mxu0 0.0
      %851 = vmatpush1.msra.mxu0 0.0
      %852 = vmatprep.subr.mxu0 0.0
      %853 = vmatpush1.msra.mxu0 0.0
      %854 = vmatprep.subr.mxu0 0.0
      %855 = vmatpush1.msra.mxu0 0.0
      %856 = vmatprep.subr.mxu0 0.0
      %857 = vmatpush1.msra.mxu0 0.0
      %858 = vmatprep.subr.mxu0 0.0
      %859 = vmatpush1.msra.mxu0 0.0
      %860 = vmatprep.subr.mxu0 0.0
      %861 = vmatpush1.msra.mxu0 0.0
      %862 = vmatprep.subr.mxu0 0.0
      %863 = vmatpush1.msra.mxu0 0.0
      %864 = vmatprep.subr.mxu0 0.0
      %865 = vmatpush1.msra.mxu0 0.0
      %866 = vmatprep.subr.mxu0 0.0
      %867 = vmatpush1.msra.mxu0 0.0
      %868 = vmatprep.subr.mxu0 0.0
      %869 = vmatpush1.msra.mxu0 0.0
      %870 = vmatprep.subr.mxu0 0.0
      %871 = vmatpush1.msra.mxu0 0.0
      %872 = vmatprep.subr.mxu0 0.0
      %873 = vmatpush1.msra.mxu0 0.0
      %874 = vmatprep.subr.mxu0 0.0
      %875 = vmatpush1.msra.mxu0 0.0
      %876 = vmatprep.subr.mxu0 0.0
      %877 = vmatpush1.msra.mxu0 0.0
      %878 = vmatprep.subr.mxu0 0.0
      %879 = vmatpush1.msra.mxu0 0.0
      %880 = vmatprep.subr.mxu0 0.0
      %881 = vmatpush1.msra.mxu0 0.0
      %882 = vmatprep.mubr.f32.mxu0 0.0
      %883 = vmatmul.mubr.f32.gmra.mrb[0].mxu0 %v730
      %v884 = vpop.f32.mrb[0].mxu0
      %v885 = vadd.f32 0.0, %v884
      %v886 = vpop.f32.mrb[0].mxu0
      %887 = vmatprep.mubr.f32.mxu0 0.0
      %888 = vmatmul.mubr.f32.gmra.mrb[0].mxu0 %v733
      %v889 = vpop.f32.mrb[0].mxu0
      %v890 = vadd.f32 0.0, %v889
      %v891 = vpop.f32.mrb[0].mxu0
      %892 = vdwg.mxu0
      %v893 = vld [vmem:[%s711] sm:$0xff]
      %v894 = vld [vmem:[%s711 + $0x8] sm:$0xff]
      %v895 = vld [vmem:[%s6] sm:$0xff]
      %v896 = vld [vmem:[%s7] sm:$0x1]
      %v898 = vlaneseq
      %v899 = vshrl.u32 %v898, 7
      %v900 = vsub.s32 0, %v899
      %v901 = vrot.slane %v896, %v900
      %vm903 = vcmask 64512
      %v905 = vsel %vm903, %v893, 0
      %v908 = vsel %vm903, %v894, 0
      %910 = vmatprep.subr.mxu0 0.0
      %911 = vmatpush1.msra.mxu0 %v895
      %912 = vmatprep.subr.mxu0 0.0
      %913 = vmatpush1.msra.mxu0 0.0
      %914 = vmatprep.subr.mxu0 0.0
      %915 = vmatpush1.msra.mxu0 0.0
      %916 = vmatprep.subr.mxu0 0.0
      %917 = vmatpush1.msra.mxu0 0.0
      %918 = vmatprep.subr.mxu0 0.0
      %919 = vmatpush1.msra.mxu0 0.0
      %920 = vmatprep.subr.mxu0 0.0
      %921 = vmatpush1.msra.mxu0 0.0
      %922 = vmatprep.subr.mxu0 0.0
      %923 = vmatpush1.msra.mxu0 0.0
      %924 = vmatprep.subr.mxu0 0.0
      %925 = vmatpush1.msra.mxu0 0.0
      %926 = vmatprep.subr.mxu0 0.0
      %927 = vmatpush1.msra.mxu0 0.0
      %928 = vmatprep.subr.mxu0 0.0
      %929 = vmatpush1.msra.mxu0 0.0
      %930 = vmatprep.subr.mxu0 0.0
      %931 = vmatpush1.msra.mxu0 0.0
      %932 = vmatprep.subr.mxu0 0.0
      %933 = vmatpush1.msra.mxu0 0.0
      %934 = vmatprep.subr.mxu0 0.0
      %935 = vmatpush1.msra.mxu0 0.0
      %936 = vmatprep.subr.mxu0 0.0
      %937 = vmatpush1.msra.mxu0 0.0
      %938 = vmatprep.subr.mxu0 0.0
      %939 = vmatpush1.msra.mxu0 0.0
      %940 = vmatprep.subr.mxu0 0.0
      %941 = vmatpush1.msra.mxu0 0.0
      %942 = vmatprep.subr.mxu0 0.0
      %943 = vmatpush1.msra.mxu0 0.0
      %944 = vmatprep.subr.mxu0 0.0
      %945 = vmatpush1.msra.mxu0 0.0
      %946 = vmatprep.subr.mxu0 0.0
      %947 = vmatpush1.msra.mxu0 0.0
      %948 = vmatprep.subr.mxu0 0.0
      %949 = vmatpush1.msra.mxu0 0.0
      %950 = vmatprep.subr.mxu0 0.0
      %951 = vmatpush1.msra.mxu0 0.0
      %952 = vmatprep.subr.mxu0 0.0
      %953 = vmatpush1.msra.mxu0 0.0
      %954 = vmatprep.subr.mxu0 0.0
      %955 = vmatpush1.msra.mxu0 0.0
      %956 = vmatprep.subr.mxu0 0.0
      %957 = vmatpush1.msra.mxu0 0.0
      %958 = vmatprep.subr.mxu0 0.0
      %959 = vmatpush1.msra.mxu0 0.0
      %960 = vmatprep.subr.mxu0 0.0
      %961 = vmatpush1.msra.mxu0 0.0
      %962 = vmatprep.subr.mxu0 0.0
      %963 = vmatpush1.msra.mxu0 0.0
      %964 = vmatprep.subr.mxu0 0.0
      %965 = vmatpush1.msra.mxu0 0.0
      %966 = vmatprep.subr.mxu0 0.0
      %967 = vmatpush1.msra.mxu0 0.0
      %968 = vmatprep.subr.mxu0 0.0
      %969 = vmatpush1.msra.mxu0 0.0
      %970 = vmatprep.subr.mxu0 0.0
      %971 = vmatpush1.msra.mxu0 0.0
      %972 = vmatprep.subr.mxu0 0.0
      %973 = vmatpush1.msra.mxu0 0.0
      %974 = vmatprep.mubr.f32.mxu0 0.0
      %975 = vmatmul.mubr.f32.gmra.mrb[0].mxu0 %v905
      %v976 = vpop.f32.mrb[0].mxu0
      %v977 = vadd.f32 %v901, %v976
      %v978 = vpop.f32.mrb[0].mxu0
      %979 = vmatprep.mubr.f32.mxu0 0.0
      %980 = vmatmul.mubr.f32.gmra.mrb[0].mxu0 %v908
      %v981 = vpop.f32.mrb[0].mxu0
      %v982 = vadd.f32 %v901, %v981
      %v983 = vpop.f32.mrb[0].mxu0
      %984 = vdwg.mxu0
      %v985 = vld [vmem:[%s4] sm:$0x7]
      %v986 = vld [vmem:[%s5] sm:$0x1]
      %v988 = vlaneseq
      %v989 = vshrl.u32 %v988, 7
      %v990 = vsub.s32 0, %v989
      %v991 = vrot.slane %v986, %v990
      %vm993 = vcmask 23552
      %v995 = vsel %vm993, %v806, 0
      %v998 = vsel %vm993, %v811, 0
      %vm1000 = vcmask 1042432
      %v1002 = vsel %vm1000, %v985, 0
      %1004 = vmatprep.subr.mxu0 0.0
      %1005 = vmatpush1.msra.mxu0 %v1002
      %1006 = vmatprep.subr.mxu0 0.0
      %1007 = vmatpush1.msra.mxu0 0.0
      %1008 = vmatprep.subr.mxu0 0.0
      %1009 = vmatpush1.msra.mxu0 0.0
      %1010 = vmatprep.subr.mxu0 0.0
      %1011 = vmatpush1.msra.mxu0 0.0
      %1012 = vmatprep.subr.mxu0 0.0
      %1013 = vmatpush1.msra.mxu0 0.0
      %1014 = vmatprep.subr.mxu0 0.0
      %1015 = vmatpush1.msra.mxu0 0.0
      %1016 = vmatprep.subr.mxu0 0.0
      %1017 = vmatpush1.msra.mxu0 0.0
      %1018 = vmatprep.subr.mxu0 0.0
      %1019 = vmatpush1.msra.mxu0 0.0
      %1020 = vmatprep.subr.mxu0 0.0
      %1021 = vmatpush1.msra.mxu0 0.0
      %1022 = vmatprep.subr.mxu0 0.0
      %1023 = vmatpush1.msra.mxu0 0.0
      %1024 = vmatprep.subr.mxu0 0.0
      %1025 = vmatpush1.msra.mxu0 0.0
      %1026 = vmatprep.subr.mxu0 0.0
      %1027 = vmatpush1.msra.mxu0 0.0
      %1028 = vmatprep.subr.mxu0 0.0
      %1029 = vmatpush1.msra.mxu0 0.0
      %1030 = vmatprep.subr.mxu0 0.0
      %1031 = vmatpush1.msra.mxu0 0.0
      %1032 = vmatprep.subr.mxu0 0.0
      %1033 = vmatpush1.msra.mxu0 0.0
      %1034 = vmatprep.subr.mxu0 0.0
      %1035 = vmatpush1.msra.mxu0 0.0
      %1036 = vmatprep.subr.mxu0 0.0
      %1037 = vmatpush1.msra.mxu0 0.0
      %1038 = vmatprep.subr.mxu0 0.0
      %1039 = vmatpush1.msra.mxu0 0.0
      %1040 = vmatprep.subr.mxu0 0.0
      %1041 = vmatpush1.msra.mxu0 0.0
      %1042 = vmatprep.subr.mxu0 0.0
      %1043 = vmatpush1.msra.mxu0 0.0
      %1044 = vmatprep.subr.mxu0 0.0
      %1045 = vmatpush1.msra.mxu0 0.0
      %1046 = vmatprep.subr.mxu0 0.0
      %1047 = vmatpush1.msra.mxu0 0.0
      %1048 = vmatprep.subr.mxu0 0.0
      %1049 = vmatpush1.msra.mxu0 0.0
      %1050 = vmatprep.subr.mxu0 0.0
      %1051 = vmatpush1.msra.mxu0 0.0
      %1052 = vmatprep.subr.mxu0 0.0
      %1053 = vmatpush1.msra.mxu0 0.0
      %1054 = vmatprep.subr.mxu0 0.0
      %1055 = vmatpush1.msra.mxu0 0.0
      %1056 = vmatprep.subr.mxu0 0.0
      %1057 = vmatpush1.msra.mxu0 0.0
      %1058 = vmatprep.subr.mxu0 0.0
      %1059 = vmatpush1.msra.mxu0 0.0
      %1060 = vmatprep.subr.mxu0 0.0
      %1061 = vmatpush1.msra.mxu0 0.0
      %1062 = vmatprep.subr.mxu0 0.0
      %1063 = vmatpush1.msra.mxu0 0.0
      %1064 = vmatprep.subr.mxu0 0.0
      %1065 = vmatpush1.msra.mxu0 0.0
      %1066 = vmatprep.subr.mxu0 0.0
      %1067 = vmatpush1.msra.mxu0 0.0
      %1068 = vmatprep.mubr.f32.mxu0 0.0
      %1069 = vmatmul.mubr.f32.gmra.mrb[0].mxu0 %v995
      %v1070 = vpop.f32.mrb[0].mxu0
      %v1071 = vadd.f32 %v991, %v1070
      %v1072 = vpop.f32.mrb[0].mxu0
      %1073 = vmatprep.mubr.f32.mxu0 0.0
      %1074 = vmatmul.mubr.f32.gmra.mrb[0].mxu0 %v998
      %v1075 = vpop.f32.mrb[0].mxu0
      %v1076 = vadd.f32 %v991, %v1075
      %v1077 = vpop.f32.mrb[0].mxu0
      %1078 = vdwg.mxu0
      %vm1079 = vcmask 261120
      %1080 = vst.msk [vmem:[#allocation2] sm:$0xff] %vm1079, 0.0
      %1081 = vst.msk [vmem:[#allocation2 + $0x8] sm:$0xff] %vm1079, 0.0
      %1082 = vst.msk [vmem:[#allocation2 + $0x10] sm:$0xff] %vm1079, 0.0
      %1083 = vst.msk [vmem:[#allocation2 + $0x18] sm:$0xff] %vm1079, 0.0
      %1084 = vst.msk [vmem:[#allocation2 + $0x8] sm:$0xff] %vm1079, %v1071
      %1085 = vst.msk [vmem:[#allocation2 + $0x10] sm:$0xff] %vm1079, %v1076
      %v1086 = vld [vmem:[#allocation2 + $0x7] sm:$0xff]
      %v1087 = vld [vmem:[#allocation2 + $0xf] sm:$0xff]
      %v1088 = vld [vmem:[%s8] sm:$0xff]
      %v1089 = vld [vmem:[%s8 + $0x8] sm:$0xff]
      %v1090 = vld [vmem:[%s8 + $0x10] sm:$0xff]
      %v1091 = vld [vmem:[%s8 + $0x18] sm:$0xff]
      %v1092 = vld [vmem:[#allocation2 + $0x8] sm:$0xff]
      %v1093 = vld [vmem:[#allocation2 + $0x10] sm:$0xff]
      %s1094 = scalar_lea.vmem %s8, 32
      %v1095 = vld [vmem:[%s1094] sm:$0xff]
      %v1096 = vld [vmem:[%s1094 + $0x8] sm:$0xff]
      %v1097 = vld [vmem:[%s1094 + $0x10] sm:$0xff]
      %v1098 = vld [vmem:[%s1094 + $0x18] sm:$0xff]
      %v1100 = vsel %vm1079, %v1092, 0
      %v1103 = vsel %vm1079, %v1093, 0
      %1105 = vmatprep.subr.mxu0 0.0
      %1106 = vmatpush1.msra.mxu0 %v1095
      %1107 = vmatprep.subr.mxu0 0.0
      %1108 = vmatpush1.msra.mxu0 %v1096
      %1109 = vmatprep.subr.mxu0 0.0
      %1110 = vmatpush1.msra.mxu0 %v1097
      %1111 = vmatprep.subr.mxu0 0.0
      %1112 = vmatpush1.msra.mxu0 %v1098
      %1113 = vmatprep.subr.mxu0 0.0
      %1114 = vmatpush1.msra.mxu0 0.0
      %1115 = vmatprep.subr.mxu0 0.0
      %1116 = vmatpush1.msra.mxu0 0.0
      %1117 = vmatprep.subr.mxu0 0.0
      %1118 = vmatpush1.msra.mxu0 0.0
      %1119 = vmatprep.subr.mxu0 0.0
      %1120 = vmatpush1.msra.mxu0 0.0
      %1121 = vmatprep.subr.mxu0 0.0
      %1122 = vmatpush1.msra.mxu0 0.0
      %1123 = vmatprep.subr.mxu0 0.0
      %1124 = vmatpush1.msra.mxu0 0.0
      %1125 = vmatprep.subr.mxu0 0.0
      %1126 = vmatpush1.msra.mxu0 0.0
      %1127 = vmatprep.subr.mxu0 0.0
      %1128 = vmatpush1.msra.mxu0 0.0
      %1129 = vmatprep.subr.mxu0 0.0
      %1130 = vmatpush1.msra.mxu0 0.0
      %1131 = vmatprep.subr.mxu0 0.0
      %1132 = vmatpush1.msra.mxu0 0.0
      %1133 = vmatprep.subr.mxu0 0.0
      %1134 = vmatpush1.msra.mxu0 0.0
      %1135 = vmatprep.subr.mxu0 0.0
      %1136 = vmatpush1.msra.mxu0 0.0
      %1137 = vmatprep.subr.mxu0 0.0
      %1138 = vmatpush1.msra.mxu0 0.0
      %1139 = vmatprep.subr.mxu0 0.0
      %1140 = vmatpush1.msra.mxu0 0.0
      %1141 = vmatprep.subr.mxu0 0.0
      %1142 = vmatpush1.msra.mxu0 0.0
      %1143 = vmatprep.subr.mxu0 0.0
      %1144 = vmatpush1.msra.mxu0 0.0
      %1145 = vmatprep.subr.mxu0 0.0
      %1146 = vmatpush1.msra.mxu0 0.0
      %1147 = vmatprep.subr.mxu0 0.0
      %1148 = vmatpush1.msra.mxu0 0.0
      %1149 = vmatprep.subr.mxu0 0.0
      %1150 = vmatpush1.msra.mxu0 0.0
      %1151 = vmatprep.subr.mxu0 0.0
      %1152 = vmatpush1.msra.mxu0 0.0
      %1153 = vmatprep.subr.mxu0 0.0
      %1154 = vmatpush1.msra.mxu0 0.0
      %1155 = vmatprep.subr.mxu0 0.0
      %1156 = vmatpush1.msra.mxu0 0.0
      %1157 = vmatprep.subr.mxu0 0.0
      %1158 = vmatpush1.msra.mxu0 0.0
      %1159 = vmatprep.subr.mxu0 0.0
      %1160 = vmatpush1.msra.mxu0 0.0
      %1161 = vmatprep.subr.mxu0 0.0
      %1162 = vmatpush1.msra.mxu0 0.0
      %1163 = vmatprep.subr.mxu0 0.0
      %1164 = vmatpush1.msra.mxu0 0.0
      %1165 = vmatprep.subr.mxu0 0.0
      %1166 = vmatpush1.msra.mxu0 0.0
      %1167 = vmatprep.subr.mxu0 0.0
      %1168 = vmatpush1.msra.mxu0 0.0
      %1169 = vmatprep.mubr.f32.mxu0 0.0
      %1170 = vmatmul.mubr.f32.gmra.mrb[0].mxu0 %v1100
      %v1171 = vpop.f32.mrb[0].mxu0
      %v1172 = vadd.f32 0.0, %v1171
      %v1173 = vpop.f32.mrb[0].mxu0
      %1174 = vmatprep.mubr.f32.mxu0 0.0
      %1175 = vmatmul.mubr.f32.gmra.mrb[0].mxu0 %v1103
      %v1176 = vpop.f32.mrb[0].mxu0
      %v1177 = vadd.f32 0.0, %v1176
      %v1178 = vpop.f32.mrb[0].mxu0
      %1179 = vdwg.mxu0
      %v1181 = vsel %vm1079, %v1086, 0
      %v1184 = vsel %vm1079, %v1087, 0
      %1186 = vmatprep.subr.mxu0 0.0
      %1187 = vmatpush1.msra.mxu0 %v1088
      %1188 = vmatprep.subr.mxu0 0.0
      %1189 = vmatpush1.msra.mxu0 %v1089
      %1190 = vmatprep.subr.mxu0 0.0
      %1191 = vmatpush1.msra.mxu0 %v1090
      %1192 = vmatprep.subr.mxu0 0.0
      %1193 = vmatpush1.msra.mxu0 %v1091
      %1194 = vmatprep.subr.mxu0 0.0
      %1195 = vmatpush1.msra.mxu0 0.0
      %1196 = vmatprep.subr.mxu0 0.0
      %1197 = vmatpush1.msra.mxu0 0.0
      %1198 = vmatprep.subr.mxu0 0.0
      %1199 = vmatpush1.msra.mxu0 0.0
      %1200 = vmatprep.subr.mxu0 0.0
      %1201 = vmatpush1.msra.mxu0 0.0
      %1202 = vmatprep.subr.mxu0 0.0
      %1203 = vmatpush1.msra.mxu0 0.0
      %1204 = vmatprep.subr.mxu0 0.0
      %1205 = vmatpush1.msra.mxu0 0.0
      %1206 = vmatprep.subr.mxu0 0.0
      %1207 = vmatpush1.msra.mxu0 0.0
      %1208 = vmatprep.subr.mxu0 0.0
      %1209 = vmatpush1.msra.mxu0 0.0
      %1210 = vmatprep.subr.mxu0 0.0
      %1211 = vmatpush1.msra.mxu0 0.0
      %1212 = vmatprep.subr.mxu0 0.0
      %1213 = vmatpush1.msra.mxu0 0.0
      %1214 = vmatprep.subr.mxu0 0.0
      %1215 = vmatpush1.msra.mxu0 0.0
      %1216 = vmatprep.subr.mxu0 0.0
      %1217 = vmatpush1.msra.mxu0 0.0
      %1218 = vmatprep.subr.mxu0 0.0
      %1219 = vmatpush1.msra.mxu0 0.0
      %1220 = vmatprep.subr.mxu0 0.0
      %1221 = vmatpush1.msra.mxu0 0.0
      %1222 = vmatprep.subr.mxu0 0.0
      %1223 = vmatpush1.msra.mxu0 0.0
      %1224 = vmatprep.subr.mxu0 0.0
      %1225 = vmatpush1.msra.mxu0 0.0
      %1226 = vmatprep.subr.mxu0 0.0
      %1227 = vmatpush1.msra.mxu0 0.0
      %1228 = vmatprep.subr.mxu0 0.0
      %1229 = vmatpush1.msra.mxu0 0.0
      %1230 = vmatprep.subr.mxu0 0.0
      %1231 = vmatpush1.msra.mxu0 0.0
      %1232 = vmatprep.subr.mxu0 0.0
      %1233 = vmatpush1.msra.mxu0 0.0
      %1234 = vmatprep.subr.mxu0 0.0
      %1235 = vmatpush1.msra.mxu0 0.0
      %1236 = vmatprep.subr.mxu0 0.0
      %1237 = vmatpush1.msra.mxu0 0.0
      %1238 = vmatprep.subr.mxu0 0.0
      %1239 = vmatpush1.msra.mxu0 0.0
      %1240 = vmatprep.subr.mxu0 0.0
      %1241 = vmatpush1.msra.mxu0 0.0
      %1242 = vmatprep.subr.mxu0 0.0
      %1243 = vmatpush1.msra.mxu0 0.0
      %1244 = vmatprep.subr.mxu0 0.0
      %1245 = vmatpush1.msra.mxu0 0.0
      %1246 = vmatprep.subr.mxu0 0.0
      %1247 = vmatpush1.msra.mxu0 0.0
      %1248 = vmatprep.subr.mxu0 0.0
      %1249 = vmatpush1.msra.mxu0 0.0
      %1250 = vmatprep.mubr.f32.mxu0 0.0
      %1251 = vmatmul.mubr.f32.gmra.mrb[0].mxu0 %v1181
      %v1252 = vpop.f32.mrb[0].mxu0
      %v1253 = vadd.f32 %v1172, %v1252
      %v1254 = vpop.f32.mrb[0].mxu0
      %1255 = vmatprep.mubr.f32.mxu0 0.0
      %1256 = vmatmul.mubr.f32.gmra.mrb[0].mxu0 %v1184
      %v1257 = vpop.f32.mrb[0].mxu0
      %v1258 = vadd.f32 %v1177, %v1257
      %v1259 = vpop.f32.mrb[0].mxu0
      %1260 = vdwg.mxu0
      %v1261 = vld [vmem:[#allocation2 + $0x9] sm:$0xff]
      %v1262 = vld [vmem:[#allocation2 + $0x11] sm:$0xff]
      %s1263 = scalar_lea.vmem %s8, 64
      %v1264 = vld [vmem:[%s1263] sm:$0xff]
      %v1265 = vld [vmem:[%s1263 + $0x8] sm:$0xff]
      %v1266 = vld [vmem:[%s1263 + $0x10] sm:$0xff]
      %v1267 = vld [vmem:[%s1263 + $0x18] sm:$0xff]
      %v1269 = vsel %vm1079, %v1261, 0
      %v1272 = vsel %vm1079, %v1262, 0
      %1274 = vmatprep.subr.mxu0 0.0
      %1275 = vmatpush1.msra.mxu0 %v1264
      %1276 = vmatprep.subr.mxu0 0.0
      %1277 = vmatpush1.msra.mxu0 %v1265
      %1278 = vmatprep.subr.mxu0 0.0
      %1279 = vmatpush1.msra.mxu0 %v1266
      %1280 = vmatprep.subr.mxu0 0.0
      %1281 = vmatpush1.msra.mxu0 %v1267
      %1282 = vmatprep.subr.mxu0 0.0
      %1283 = vmatpush1.msra.mxu0 0.0
      %1284 = vmatprep.subr.mxu0 0.0
      %1285 = vmatpush1.msra.mxu0 0.0
      %1286 = vmatprep.subr.mxu0 0.0
      %1287 = vmatpush1.msra.mxu0 0.0
      %1288 = vmatprep.subr.mxu0 0.0
      %1289 = vmatpush1.msra.mxu0 0.0
      %1290 = vmatprep.subr.mxu0 0.0
      %1291 = vmatpush1.msra.mxu0 0.0
      %1292 = vmatprep.subr.mxu0 0.0
      %1293 = vmatpush1.msra.mxu0 0.0
      %1294 = vmatprep.subr.mxu0 0.0
      %1295 = vmatpush1.msra.mxu0 0.0
      %1296 = vmatprep.subr.mxu0 0.0
      %1297 = vmatpush1.msra.mxu0 0.0
      %1298 = vmatprep.subr.mxu0 0.0
      %1299 = vmatpush1.msra.mxu0 0.0
      %1300 = vmatprep.subr.mxu0 0.0
      %1301 = vmatpush1.msra.mxu0 0.0
      %1302 = vmatprep.subr.mxu0 0.0
      %1303 = vmatpush1.msra.mxu0 0.0
      %1304 = vmatprep.subr.mxu0 0.0
      %1305 = vmatpush1.msra.mxu0 0.0
      %1306 = vmatprep.subr.mxu0 0.0
      %1307 = vmatpush1.msra.mxu0 0.0
      %1308 = vmatprep.subr.mxu0 0.0
      %1309 = vmatpush1.msra.mxu0 0.0
      %1310 = vmatprep.subr.mxu0 0.0
      %1311 = vmatpush1.msra.mxu0 0.0
      %1312 = vmatprep.subr.mxu0 0.0
      %1313 = vmatpush1.msra.mxu0 0.0
      %1314 = vmatprep.subr.mxu0 0.0
      %1315 = vmatpush1.msra.mxu0 0.0
      %1316 = vmatprep.subr.mxu0 0.0
      %1317 = vmatpush1.msra.mxu0 0.0
      %1318 = vmatprep.subr.mxu0 0.0
      %1319 = vmatpush1.msra.mxu0 0.0
      %1320 = vmatprep.subr.mxu0 0.0
      %1321 = vmatpush1.msra.mxu0 0.0
      %1322 = vmatprep.subr.mxu0 0.0
      %1323 = vmatpush1.msra.mxu0 0.0
      %1324 = vmatprep.subr.mxu0 0.0
      %1325 = vmatpush1.msra.mxu0 0.0
      %1326 = vmatprep.subr.mxu0 0.0
      %1327 = vmatpush1.msra.mxu0 0.0
      %1328 = vmatprep.subr.mxu0 0.0
      %1329 = vmatpush1.msra.mxu0 0.0
      %1330 = vmatprep.subr.mxu0 0.0
      %1331 = vmatpush1.msra.mxu0 0.0
      %1332 = vmatprep.subr.mxu0 0.0
      %1333 = vmatpush1.msra.mxu0 0.0
      %1334 = vmatprep.subr.mxu0 0.0
      %1335 = vmatpush1.msra.mxu0 0.0
      %1336 = vmatprep.subr.mxu0 0.0
      %1337 = vmatpush1.msra.mxu0 0.0
      %1338 = vmatprep.mubr.f32.mxu0 0.0
      %1339 = vmatmul.mubr.f32.gmra.mrb[0].mxu0 %v1269
      %v1340 = vpop.f32.mrb[0].mxu0
      %v1341 = vadd.f32 0.0, %v1340
      %v1342 = vpop.f32.mrb[0].mxu0
      %1343 = vmatprep.mubr.f32.mxu0 0.0
      %1344 = vmatmul.mubr.f32.gmra.mrb[0].mxu0 %v1272
      %v1345 = vpop.f32.mrb[0].mxu0
      %v1346 = vadd.f32 0.0, %v1345
      %v1347 = vpop.f32.mrb[0].mxu0
      %1348 = vdwg.mxu0
      %v1349 = vadd.f32 %v1253, %v1341
      %v1350 = vadd.f32 %v1258, %v1346
      %v1351 = vld [vmem:[%s9] sm:$0x1]
      %v1353 = vlaneseq
      %v1354 = vshrl.u32 %v1353, 7
      %v1355 = vsub.s32 0, %v1354
      %v1356 = vrot.slane %v1351, %v1355
      %v1358 = vadd.f32 %v1349, %v1356
      %v1359 = vadd.f32 %v1350, %v1356
      %v1360 = vadd.f32 %v1358, %v977
      %v1361 = vadd.f32 %v1359, %v982
      %v1362 = vtanh.pop %v1360
      %v1363 = vtanh.pop %v1361
      %v1364 = vxor.u32 %v1360, 2147483648
      %v1365 = vxor.u32 %v1361, 2147483648
      %v1366 = vmul.f32 %v1364, 1.442695
      %v1367 = vpow.pop %v1366
      %v1368 = vmul.f32 %v1365, 1.442695
      %v1369 = vpow.pop %v1368
      %v1370 = vadd.f32 %v1367, 1.0
      %v1371 = vadd.f32 %v1369, 1.0
      %v1372 = vrcp.pop %v1370
      %v1373 = vmul.f32 1.0, %v1372
      %v1374 = vrcp.pop %v1371
      %v1375 = vmul.f32 1.0, %v1374
      %1378 = vrot.lane.b32.xlu0 %v1373, 96
      %v1379 = vpop.permute.xlu0 %1378
      %1380 = vrot.lane.b32.xlu0 %v1375, 96
      %v1381 = vpop.permute.xlu0 %1380
      %v1384 = vmul.f32 %v1362, %v1379
      %v1385 = vmul.f32 %v1363, %v1381
      %v1386 = vld [vmem:[%s10] sm:$0xff]
      %v1387 = vld [vmem:[%s10 + $0x8] sm:$0xff]
      %v1388 = vld [vmem:[%s10 + $0x10] sm:$0xff]
      %v1389 = vld [vmem:[%s10 + $0x18] sm:$0xff]
      %v1390 = vld [vmem:[%s11] sm:$0x1]
      %v1392 = vlaneseq
      %v1393 = vshrl.u32 %v1392, 7
      %v1394 = vsub.s32 0, %v1393
      %v1395 = vrot.slane %v1390, %v1394
      %v1398 = vsel %vm1079, %v1384, 0
      %v1401 = vsel %vm1079, %v1385, 0
      %1403 = vmatprep.subr.mxu0 0.0
      %1404 = vmatpush1.msra.mxu0 %v1386
      %1405 = vmatprep.subr.mxu0 0.0
      %1406 = vmatpush1.msra.mxu0 %v1387
      %1407 = vmatprep.subr.mxu0 0.0
      %1408 = vmatpush1.msra.mxu0 %v1388
      %1409 = vmatprep.subr.mxu0 0.0
      %1410 = vmatpush1.msra.mxu0 %v1389
      %1411 = vmatprep.subr.mxu0 0.0
      %1412 = vmatpush1.msra.mxu0 0.0
      %1413 = vmatprep.subr.mxu0 0.0
      %1414 = vmatpush1.msra.mxu0 0.0
      %1415 = vmatprep.subr.mxu0 0.0
      %1416 = vmatpush1.msra.mxu0 0.0
      %1417 = vmatprep.subr.mxu0 0.0
      %1418 = vmatpush1.msra.mxu0 0.0
      %1419 = vmatprep.subr.mxu0 0.0
      %1420 = vmatpush1.msra.mxu0 0.0
      %1421 = vmatprep.subr.mxu0 0.0
      %1422 = vmatpush1.msra.mxu0 0.0
      %1423 = vmatprep.subr.mxu0 0.0
      %1424 = vmatpush1.msra.mxu0 0.0
      %1425 = vmatprep.subr.mxu0 0.0
      %1426 = vmatpush1.msra.mxu0 0.0
      %1427 = vmatprep.subr.mxu0 0.0
      %1428 = vmatpush1.msra.mxu0 0.0
      %1429 = vmatprep.subr.mxu0 0.0
      %1430 = vmatpush1.msra.mxu0 0.0
      %1431 = vmatprep.subr.mxu0 0.0
      %1432 = vmatpush1.msra.mxu0 0.0
      %1433 = vmatprep.subr.mxu0 0.0
      %1434 = vmatpush1.msra.mxu0 0.0
      %1435 = vmatprep.subr.mxu0 0.0
      %1436 = vmatpush1.msra.mxu0 0.0
      %1437 = vmatprep.subr.mxu0 0.0
      %1438 = vmatpush1.msra.mxu0 0.0
      %1439 = vmatprep.subr.mxu0 0.0
      %1440 = vmatpush1.msra.mxu0 0.0
      %1441 = vmatprep.subr.mxu0 0.0
      %1442 = vmatpush1.msra.mxu0 0.0
      %1443 = vmatprep.subr.mxu0 0.0
      %1444 = vmatpush1.msra.mxu0 0.0
      %1445 = vmatprep.subr.mxu0 0.0
      %1446 = vmatpush1.msra.mxu0 0.0
      %1447 = vmatprep.subr.mxu0 0.0
      %1448 = vmatpush1.msra.mxu0 0.0
      %1449 = vmatprep.subr.mxu0 0.0
      %1450 = vmatpush1.msra.mxu0 0.0
      %1451 = vmatprep.subr.mxu0 0.0
      %1452 = vmatpush1.msra.mxu0 0.0
      %1453 = vmatprep.subr.mxu0 0.0
      %1454 = vmatpush1.msra.mxu0 0.0
      %1455 = vmatprep.subr.mxu0 0.0
      %1456 = vmatpush1.msra.mxu0 0.0
      %1457 = vmatprep.subr.mxu0 0.0
      %1458 = vmatpush1.msra.mxu0 0.0
      %1459 = vmatprep.subr.mxu0 0.0
      %1460 = vmatpush1.msra.mxu0 0.0
      %1461 = vmatprep.subr.mxu0 0.0
      %1462 = vmatpush1.msra.mxu0 0.0
      %1463 = vmatprep.subr.mxu0 0.0
      %1464 = vmatpush1.msra.mxu0 0.0
      %1465 = vmatprep.subr.mxu0 0.0
      %1466 = vmatpush1.msra.mxu0 0.0
      %1467 = vmatprep.mubr.f32.mxu0 0.0
      %1468 = vmatmul.mubr.f32.gmra.mrb[0].mxu0 %v1398
      %v1469 = vpop.f32.mrb[0].mxu0
      %v1470 = vadd.f32 %v1395, %v1469
      %v1471 = vpop.f32.mrb[0].mxu0
      %1472 = vmatprep.mubr.f32.mxu0 0.0
      %1473 = vmatmul.mubr.f32.gmra.mrb[0].mxu0 %v1401
      %v1474 = vpop.f32.mrb[0].mxu0
      %v1475 = vadd.f32 %v1395, %v1474
      %v1476 = vpop.f32.mrb[0].mxu0
      %1477 = vdwg.mxu0
      %v1478 = vadd.f32 %v1071, %v1470
      %v1479 = vadd.f32 %v1076, %v1475
      %1480 = vst.msk [vmem:[#allocation2 + $0x8] sm:$0xff] %vm1079, %v1478
      %1481 = vst.msk [vmem:[#allocation2 + $0x10] sm:$0xff] %vm1079, %v1479
      %v1482 = vadd.f32 %v1470, 0.0
      %v1483 = vadd.f32 %v1475, 0.0
      %v1484 = vld [vmem:[#allocation2 + $0x6] sm:$0xff]
      %v1485 = vld [vmem:[#allocation2 + $0xe] sm:$0xff]
      %v1486 = vld [vmem:[%s12] sm:$0xff]
      %v1487 = vld [vmem:[%s12 + $0x8] sm:$0xff]
      %v1488 = vld [vmem:[%s12 + $0x10] sm:$0xff]
      %v1489 = vld [vmem:[%s12 + $0x18] sm:$0xff]
      %v1490 = vld [vmem:[#allocation2 + $0x8] sm:$0xff]
      %v1491 = vld [vmem:[#allocation2 + $0x10] sm:$0xff]
      %s1492 = scalar_lea.vmem %s12, 32
      %v1493 = vld [vmem:[%s1492] sm:$0xff]
      %v1494 = vld [vmem:[%s1492 + $0x8] sm:$0xff]
      %v1495 = vld [vmem:[%s1492 + $0x10] sm:$0xff]
      %v1496 = vld [vmem:[%s1492 + $0x18] sm:$0xff]
      %v1498 = vsel %vm1079, %v1490, 0
      %v1501 = vsel %vm1079, %v1491, 0
      %1503 = vmatprep.subr.mxu0 0.0
      %1504 = vmatpush1.msra.mxu0 %v1493
      %1505 = vmatprep.subr.mxu0 0.0
      %1506 = vmatpush1.msra.mxu0 %v1494
      %1507 = vmatprep.subr.mxu0 0.0
      %1508 = vmatpush1.msra.mxu0 %v1495
      %1509 = vmatprep.subr.mxu0 0.0
      %1510 = vmatpush1.msra.mxu0 %v1496
      %1511 = vmatprep.subr.mxu0 0.0
      %1512 = vmatpush1.msra.mxu0 0.0
      %1513 = vmatprep.subr.mxu0 0.0
      %1514 = vmatpush1.msra.mxu0 0.0
      %1515 = vmatprep.subr.mxu0 0.0
      %1516 = vmatpush1.msra.mxu0 0.0
      %1517 = vmatprep.subr.mxu0 0.0
      %1518 = vmatpush1.msra.mxu0 0.0
      %1519 = vmatprep.subr.mxu0 0.0
      %1520 = vmatpush1.msra.mxu0 0.0
      %1521 = vmatprep.subr.mxu0 0.0
      %1522 = vmatpush1.msra.mxu0 0.0
      %1523 = vmatprep.subr.mxu0 0.0
      %1524 = vmatpush1.msra.mxu0 0.0
      %1525 = vmatprep.subr.mxu0 0.0
      %1526 = vmatpush1.msra.mxu0 0.0
      %1527 = vmatprep.subr.mxu0 0.0
      %1528 = vmatpush1.msra.mxu0 0.0
      %1529 = vmatprep.subr.mxu0 0.0
      %1530 = vmatpush1.msra.mxu0 0.0
      %1531 = vmatprep.subr.mxu0 0.0
      %1532 = vmatpush1.msra.mxu0 0.0
      %1533 = vmatprep.subr.mxu0 0.0
      %1534 = vmatpush1.msra.mxu0 0.0
      %1535 = vmatprep.subr.mxu0 0.0
      %1536 = vmatpush1.msra.mxu0 0.0
      %1537 = vmatprep.subr.mxu0 0.0
      %1538 = vmatpush1.msra.mxu0 0.0
      %1539 = vmatprep.subr.mxu0 0.0
      %1540 = vmatpush1.msra.mxu0 0.0
      %1541 = vmatprep.subr.mxu0 0.0
      %1542 = vmatpush1.msra.mxu0 0.0
      %1543 = vmatprep.subr.mxu0 0.0
      %1544 = vmatpush1.msra.mxu0 0.0
      %1545 = vmatprep.subr.mxu0 0.0
      %1546 = vmatpush1.msra.mxu0 0.0
      %1547 = vmatprep.subr.mxu0 0.0
      %1548 = vmatpush1.msra.mxu0 0.0
      %1549 = vmatprep.subr.mxu0 0.0
      %1550 = vmatpush1.msra.mxu0 0.0
      %1551 = vmatprep.subr.mxu0 0.0
      %1552 = vmatpush1.msra.mxu0 0.0
      %1553 = vmatprep.subr.mxu0 0.0
      %1554 = vmatpush1.msra.mxu0 0.0
      %1555 = vmatprep.subr.mxu0 0.0
      %1556 = vmatpush1.msra.mxu0 0.0
      %1557 = vmatprep.subr.mxu0 0.0
      %1558 = vmatpush1.msra.mxu0 0.0
      %1559 = vmatprep.subr.mxu0 0.0
      %1560 = vmatpush1.msra.mxu0 0.0
      %1561 = vmatprep.subr.mxu0 0.0
      %1562 = vmatpush1.msra.mxu0 0.0
      %1563 = vmatprep.subr.mxu0 0.0
      %1564 = vmatpush1.msra.mxu0 0.0
      %1565 = vmatprep.subr.mxu0 0.0
      %1566 = vmatpush1.msra.mxu0 0.0
      %1567 = vmatprep.mubr.f32.mxu0 0.0
      %1568 = vmatmul.mubr.f32.gmra.mrb[0].mxu0 %v1498
      %v1569 = vpop.f32.mrb[0].mxu0
      %v1570 = vadd.f32 0.0, %v1569
      %v1571 = vpop.f32.mrb[0].mxu0
      %1572 = vmatprep.mubr.f32.mxu0 0.0
      %1573 = vmatmul.mubr.f32.gmra.mrb[0].mxu0 %v1501
      %v1574 = vpop.f32.mrb[0].mxu0
      %v1575 = vadd.f32 0.0, %v1574
      %v1576 = vpop.f32.mrb[0].mxu0
      %1577 = vdwg.mxu0
      %v1579 = vsel %vm1079, %v1484, 0
      %v1582 = vsel %vm1079, %v1485, 0
      %1584 = vmatprep.subr.mxu0 0.0
      %1585 = vmatpush1.msra.mxu0 %v1486
      %1586 = vmatprep.subr.mxu0 0.0
      %1587 = vmatpush1.msra.mxu0 %v1487
      %1588 = vmatprep.subr.mxu0 0.0
      %1589 = vmatpush1.msra.mxu0 %v1488
      %1590 = vmatprep.subr.mxu0 0.0
      %1591 = vmatpush1.msra.mxu0 %v1489
      %1592 = vmatprep.subr.mxu0 0.0
      %1593 = vmatpush1.msra.mxu0 0.0
      %1594 = vmatprep.subr.mxu0 0.0
      %1595 = vmatpush1.msra.mxu0 0.0
      %1596 = vmatprep.subr.mxu0 0.0
      %1597 = vmatpush1.msra.mxu0 0.0
      %1598 = vmatprep.subr.mxu0 0.0
      %1599 = vmatpush1.msra.mxu0 0.0
      %1600 = vmatprep.subr.mxu0 0.0
      %1601 = vmatpush1.msra.mxu0 0.0
      %1602 = vmatprep.subr.mxu0 0.0
      %1603 = vmatpush1.msra.mxu0 0.0
      %1604 = vmatprep.subr.mxu0 0.0
      %1605 = vmatpush1.msra.mxu0 0.0
      %1606 = vmatprep.subr.mxu0 0.0
      %1607 = vmatpush1.msra.mxu0 0.0
      %1608 = vmatprep.subr.mxu0 0.0
      %1609 = vmatpush1.msra.mxu0 0.0
      %1610 = vmatprep.subr.mxu0 0.0
      %1611 = vmatpush1.msra.mxu0 0.0
      %1612 = vmatprep.subr.mxu0 0.0
      %1613 = vmatpush1.msra.mxu0 0.0
      %1614 = vmatprep.subr.mxu0 0.0
      %1615 = vmatpush1.msra.mxu0 0.0
      %1616 = vmatprep.subr.mxu0 0.0
      %1617 = vmatpush1.msra.mxu0 0.0
      %1618 = vmatprep.subr.mxu0 0.0
      %1619 = vmatpush1.msra.mxu0 0.0
      %1620 = vmatprep.subr.mxu0 0.0
      %1621 = vmatpush1.msra.mxu0 0.0
      %1622 = vmatprep.subr.mxu0 0.0
      %1623 = vmatpush1.msra.mxu0 0.0
      %1624 = vmatprep.subr.mxu0 0.0
      %1625 = vmatpush1.msra.mxu0 0.0
      %1626 = vmatprep.subr.mxu0 0.0
      %1627 = vmatpush1.msra.mxu0 0.0
      %1628 = vmatprep.subr.mxu0 0.0
      %1629 = vmatpush1.msra.mxu0 0.0
      %1630 = vmatprep.subr.mxu0 0.0
      %1631 = vmatpush1.msra.mxu0 0.0
      %1632 = vmatprep.subr.mxu0 0.0
      %1633 = vmatpush1.msra.mxu0 0.0
      %1634 = vmatprep.subr.mxu0 0.0
      %1635 = vmatpush1.msra.mxu0 0.0
      %1636 = vmatprep.subr.mxu0 0.0
      %1637 = vmatpush1.msra.mxu0 0.0
      %1638 = vmatprep.subr.mxu0 0.0
      %1639 = vmatpush1.msra.mxu0 0.0
      %1640 = vmatprep.subr.mxu0 0.0
      %1641 = vmatpush1.msra.mxu0 0.0
      %1642 = vmatprep.subr.mxu0 0.0
      %1643 = vmatpush1.msra.mxu0 0.0
      %1644 = vmatprep.subr.mxu0 0.0
      %1645 = vmatpush1.msra.mxu0 0.0
      %1646 = vmatprep.subr.mxu0 0.0
      %1647 = vmatpush1.msra.mxu0 0.0
      %1648 = vmatprep.mubr.f32.mxu0 0.0
      %1649 = vmatmul.mubr.f32.gmra.mrb[0].mxu0 %v1579
      %v1650 = vpop.f32.mrb[0].mxu0
      %v1651 = vadd.f32 %v1570, %v1650
      %v1652 = vpop.f32.mrb[0].mxu0
      %1653 = vmatprep.mubr.f32.mxu0 0.0
      %1654 = vmatmul.mubr.f32.gmra.mrb[0].mxu0 %v1582
      %v1655 = vpop.f32.mrb[0].mxu0
      %v1656 = vadd.f32 %v1575, %v1655
      %v1657 = vpop.f32.mrb[0].mxu0
      %1658 = vdwg.mxu0
      %v1659 = vld [vmem:[#allocation2 + $0xa] sm:$0xff]
      %v1660 = vld [vmem:[#allocation2 + $0x12] sm:$0xff]
      %s1661 = scalar_lea.vmem %s12, 64
      %v1662 = vld [vmem:[%s1661] sm:$0xff]
      %v1663 = vld [vmem:[%s1661 + $0x8] sm:$0xff]
      %v1664 = vld [vmem:[%s1661 + $0x10] sm:$0xff]
      %v1665 = vld [vmem:[%s1661 + $0x18] sm:$0xff]
      %v1667 = vsel %vm1079, %v1659, 0
      %v1670 = vsel %vm1079, %v1660, 0
      %1672 = vmatprep.subr.mxu0 0.0
      %1673 = vmatpush1.msra.mxu0 %v1662
      %1674 = vmatprep.subr.mxu0 0.0
      %1675 = vmatpush1.msra.mxu0 %v1663
      %1676 = vmatprep.subr.mxu0 0.0
      %1677 = vmatpush1.msra.mxu0 %v1664
      %1678 = vmatprep.subr.mxu0 0.0
      %1679 = vmatpush1.msra.mxu0 %v1665
      %1680 = vmatprep.subr.mxu0 0.0
      %1681 = vmatpush1.msra.mxu0 0.0
      %1682 = vmatprep.subr.mxu0 0.0
      %1683 = vmatpush1.msra.mxu0 0.0
      %1684 = vmatprep.subr.mxu0 0.0
      %1685 = vmatpush1.msra.mxu0 0.0
      %1686 = vmatprep.subr.mxu0 0.0
      %1687 = vmatpush1.msra.mxu0 0.0
      %1688 = vmatprep.subr.mxu0 0.0
      %1689 = vmatpush1.msra.mxu0 0.0
      %1690 = vmatprep.subr.mxu0 0.0
      %1691 = vmatpush1.msra.mxu0 0.0
      %1692 = vmatprep.subr.mxu0 0.0
      %1693 = vmatpush1.msra.mxu0 0.0
      %1694 = vmatprep.subr.mxu0 0.0
      %1695 = vmatpush1.msra.mxu0 0.0
      %1696 = vmatprep.subr.mxu0 0.0
      %1697 = vmatpush1.msra.mxu0 0.0
      %1698 = vmatprep.subr.mxu0 0.0
      %1699 = vmatpush1.msra.mxu0 0.0
      %1700 = vmatprep.subr.mxu0 0.0
      %1701 = vmatpush1.msra.mxu0 0.0
      %1702 = vmatprep.subr.mxu0 0.0
      %1703 = vmatpush1.msra.mxu0 0.0
      %1704 = vmatprep.subr.mxu0 0.0
      %1705 = vmatpush1.msra.mxu0 0.0
      %1706 = vmatprep.subr.mxu0 0.0
      %1707 = vmatpush1.msra.mxu0 0.0
      %1708 = vmatprep.subr.mxu0 0.0
      %1709 = vmatpush1.msra.mxu0 0.0
      %1710 = vmatprep.subr.mxu0 0.0
      %1711 = vmatpush1.msra.mxu0 0.0
      %1712 = vmatprep.subr.mxu0 0.0
      %1713 = vmatpush1.msra.mxu0 0.0
      %1714 = vmatprep.subr.mxu0 0.0
      %1715 = vmatpush1.msra.mxu0 0.0
      %1716 = vmatprep.subr.mxu0 0.0
      %1717 = vmatpush1.msra.mxu0 0.0
      %1718 = vmatprep.subr.mxu0 0.0
      %1719 = vmatpush1.msra.mxu0 0.0
      %1720 = vmatprep.subr.mxu0 0.0
      %1721 = vmatpush1.msra.mxu0 0.0
      %1722 = vmatprep.subr.mxu0 0.0
      %1723 = vmatpush1.msra.mxu0 0.0
      %1724 = vmatprep.subr.mxu0 0.0
      %1725 = vmatpush1.msra.mxu0 0.0
      %1726 = vmatprep.subr.mxu0 0.0
      %1727 = vmatpush1.msra.mxu0 0.0
      %1728 = vmatprep.subr.mxu0 0.0
      %1729 = vmatpush1.msra.mxu0 0.0
      %1730 = vmatprep.subr.mxu0 0.0
      %1731 = vmatpush1.msra.mxu0 0.0
      %1732 = vmatprep.subr.mxu0 0.0
      %1733 = vmatpush1.msra.mxu0 0.0
      %1734 = vmatprep.subr.mxu0 0.0
      %1735 = vmatpush1.msra.mxu0 0.0
      %1736 = vmatprep.mubr.f32.mxu0 0.0
      %1737 = vmatmul.mubr.f32.gmra.mrb[0].mxu0 %v1667
      %v1738 = vpop.f32.mrb[0].mxu0
      %v1739 = vadd.f32 0.0, %v1738
      %v1740 = vpop.f32.mrb[0].mxu0
      %1741 = vmatprep.mubr.f32.mxu0 0.0
      %1742 = vmatmul.mubr.f32.gmra.mrb[0].mxu0 %v1670
      %v1743 = vpop.f32.mrb[0].mxu0
      %v1744 = vadd.f32 0.0, %v1743
      %v1745 = vpop.f32.mrb[0].mxu0
      %1746 = vdwg.mxu0
      %v1747 = vadd.f32 %v1651, %v1739
      %v1748 = vadd.f32 %v1656, %v1744
      %v1749 = vld [vmem:[%s13] sm:$0x1]
      %v1751 = vlaneseq
      %v1752 = vshrl.u32 %v1751, 7
      %v1753 = vsub.s32 0, %v1752
      %v1754 = vrot.slane %v1749, %v1753
      %v1756 = vadd.f32 %v1747, %v1754
      %v1757 = vadd.f32 %v1748, %v1754
      %1760 = vrot.lane.b32.xlu0 %v977, 64
      %v1761 = vpop.permute.xlu0 %1760
      %1762 = vrot.lane.b32.xlu0 %v982, 64
      %v1763 = vpop.permute.xlu0 %1762
      %v1766 = vadd.f32 %v1756, %v1761
      %v1767 = vadd.f32 %v1757, %v1763
      %v1768 = vtanh.pop %v1766
      %v1769 = vtanh.pop %v1767
      %v1770 = vxor.u32 %v1766, 2147483648
      %v1771 = vxor.u32 %v1767, 2147483648
      %v1772 = vmul.f32 %v1770, 1.442695
      %v1773 = vpow.pop %v1772
      %v1774 = vmul.f32 %v1771, 1.442695
      %v1775 = vpow.pop %v1774
      %v1776 = vadd.f32 %v1773, 1.0
      %v1777 = vadd.f32 %v1775, 1.0
      %v1778 = vrcp.pop %v1776
      %v1779 = vmul.f32 1.0, %v1778
      %v1780 = vrcp.pop %v1777
      %v1781 = vmul.f32 1.0, %v1780
      %1784 = vrot.lane.b32.xlu0 %v1779, 96
      %v1785 = vpop.permute.xlu0 %1784
      %1786 = vrot.lane.b32.xlu0 %v1781, 96
      %v1787 = vpop.permute.xlu0 %1786
      %v1790 = vmul.f32 %v1768, %v1785
      %v1791 = vmul.f32 %v1769, %v1787
      %v1792 = vld [vmem:[%s14] sm:$0xff]
      %v1793 = vld [vmem:[%s14 + $0x8] sm:$0xff]
      %v1794 = vld [vmem:[%s14 + $0x10] sm:$0xff]
      %v1795 = vld [vmem:[%s14 + $0x18] sm:$0xff]
      %v1796 = vld [vmem:[%s15] sm:$0x1]
      %v1798 = vlaneseq
      %v1799 = vshrl.u32 %v1798, 7
      %v1800 = vsub.s32 0, %v1799
      %v1801 = vrot.slane %v1796, %v1800
      %v1804 = vsel %vm1079, %v1790, 0
      %v1807 = vsel %vm1079, %v1791, 0
      %1809 = vmatprep.subr.mxu0 0.0
      %1810 = vmatpush1.msra.mxu0 %v1792
      %1811 = vmatprep.subr.mxu0 0.0
      %1812 = vmatpush1.msra.mxu0 %v1793
      %1813 = vmatprep.subr.mxu0 0.0
      %1814 = vmatpush1.msra.mxu0 %v1794
      %1815 = vmatprep.subr.mxu0 0.0
      %1816 = vmatpush1.msra.mxu0 %v1795
      %1817 = vmatprep.subr.mxu0 0.0
      %1818 = vmatpush1.msra.mxu0 0.0
      %1819 = vmatprep.subr.mxu0 0.0
      %1820 = vmatpush1.msra.mxu0 0.0
      %1821 = vmatprep.subr.mxu0 0.0
      %1822 = vmatpush1.msra.mxu0 0.0
      %1823 = vmatprep.subr.mxu0 0.0
      %1824 = vmatpush1.msra.mxu0 0.0
      %1825 = vmatprep.subr.mxu0 0.0
      %1826 = vmatpush1.msra.mxu0 0.0
      %1827 = vmatprep.subr.mxu0 0.0
      %1828 = vmatpush1.msra.mxu0 0.0
      %1829 = vmatprep.subr.mxu0 0.0
      %1830 = vmatpush1.msra.mxu0 0.0
      %1831 = vmatprep.subr.mxu0 0.0
      %1832 = vmatpush1.msra.mxu0 0.0
      %1833 = vmatprep.subr.mxu0 0.0
      %1834 = vmatpush1.msra.mxu0 0.0
      %1835 = vmatprep.subr.mxu0 0.0
      %1836 = vmatpush1.msra.mxu0 0.0
      %1837 = vmatprep.subr.mxu0 0.0
      %1838 = vmatpush1.msra.mxu0 0.0
      %1839 = vmatprep.subr.mxu0 0.0
      %1840 = vmatpush1.msra.mxu0 0.0
      %1841 = vmatprep.subr.mxu0 0.0
      %1842 = vmatpush1.msra.mxu0 0.0
      %1843 = vmatprep.subr.mxu0 0.0
      %1844 = vmatpush1.msra.mxu0 0.0
      %1845 = vmatprep.subr.mxu0 0.0
      %1846 = vmatpush1.msra.mxu0 0.0
      %1847 = vmatprep.subr.mxu0 0.0
      %1848 = vmatpush1.msra.mxu0 0.0
      %1849 = vmatprep.subr.mxu0 0.0
      %1850 = vmatpush1.msra.mxu0 0.0
      %1851 = vmatprep.subr.mxu0 0.0
      %1852 = vmatpush1.msra.mxu0 0.0
      %1853 = vmatprep.subr.mxu0 0.0
      %1854 = vmatpush1.msra.mxu0 0.0
      %1855 = vmatprep.subr.mxu0 0.0
      %1856 = vmatpush1.msra.mxu0 0.0
      %1857 = vmatprep.subr.mxu0 0.0
      %1858 = vmatpush1.msra.mxu0 0.0
      %1859 = vmatprep.subr.mxu0 0.0
      %1860 = vmatpush1.msra.mxu0 0.0
      %1861 = vmatprep.subr.mxu0 0.0
      %1862 = vmatpush1.msra.mxu0 0.0
      %1863 = vmatprep.subr.mxu0 0.0
      %1864 = vmatpush1.msra.mxu0 0.0
      %1865 = vmatprep.subr.mxu0 0.0
      %1866 = vmatpush1.msra.mxu0 0.0
      %1867 = vmatprep.subr.mxu0 0.0
      %1868 = vmatpush1.msra.mxu0 0.0
      %1869 = vmatprep.subr.mxu0 0.0
      %1870 = vmatpush1.msra.mxu0 0.0
      %1871 = vmatprep.subr.mxu0 0.0
      %1872 = vmatpush1.msra.mxu0 0.0
      %1873 = vmatprep.mubr.f32.mxu0 0.0
      %1874 = vmatmul.mubr.f32.gmra.mrb[0].mxu0 %v1804
      %v1875 = vpop.f32.mrb[0].mxu0
      %v1876 = vadd.f32 %v1801, %v1875
      %v1877 = vpop.f32.mrb[0].mxu0
      %1878 = vmatprep.mubr.f32.mxu0 0.0
      %1879 = vmatmul.mubr.f32.gmra.mrb[0].mxu0 %v1807
      %v1880 = vpop.f32.mrb[0].mxu0
      %v1881 = vadd.f32 %v1801, %v1880
      %v1882 = vpop.f32.mrb[0].mxu0
      %1883 = vdwg.mxu0
      %1886 = vrot.lane.b32.xlu0 %v1876, 32
      %v1887 = vpop.permute.xlu0 %1886
      %1888 = vrot.lane.b32.xlu0 %v1881, 32
      %v1889 = vpop.permute.xlu0 %1888
      %v1892 = vadd.f32 %v1482, %v1887
      %v1893 = vadd.f32 %v1483, %v1889
      %v1894 = vld [vmem:[%s16] sm:$0xff]
      %v1895 = vld [vmem:[%s16 + $0x8] sm:$0xff]
      %v1896 = vld [vmem:[%s16 + $0x10] sm:$0xff]
      %v1897 = vld [vmem:[%s16 + $0x18] sm:$0xff]
      %v1898 = vld [vmem:[%s18] sm:$0x1]
      %v1900 = vlaneseq
      %v1901 = vshrl.u32 %v1900, 7
      %v1902 = vsub.s32 0, %v1901
      %v1903 = vrot.slane %v1898, %v1902
      %1907 = vrot.lane.b32.xlu0 %v1892, 96
      %v1908 = vpop.permute.xlu0 %1907
      %1909 = vrot.lane.b32.xlu0 %v1893, 96
      %v1910 = vpop.permute.xlu0 %1909
      %v1911 = vsel %vm1079, %v1908, 0
      %v1913 = vsel %vm1079, %v1910, 0
      %1915 = vmatprep.subr.mxu0 0.0
      %1916 = vmatpush1.msra.mxu0 %v1894
      %1917 = vmatprep.subr.mxu0 0.0
      %1918 = vmatpush1.msra.mxu0 %v1895
      %1919 = vmatprep.subr.mxu0 0.0
      %1920 = vmatpush1.msra.mxu0 %v1896
      %1921 = vmatprep.subr.mxu0 0.0
      %1922 = vmatpush1.msra.mxu0 %v1897
      %1923 = vmatprep.subr.mxu0 0.0
      %1924 = vmatpush1.msra.mxu0 0.0
      %1925 = vmatprep.subr.mxu0 0.0
      %1926 = vmatpush1.msra.mxu0 0.0
      %1927 = vmatprep.subr.mxu0 0.0
      %1928 = vmatpush1.msra.mxu0 0.0
      %1929 = vmatprep.subr.mxu0 0.0
      %1930 = vmatpush1.msra.mxu0 0.0
      %1931 = vmatprep.subr.mxu0 0.0
      %1932 = vmatpush1.msra.mxu0 0.0
      %1933 = vmatprep.subr.mxu0 0.0
      %1934 = vmatpush1.msra.mxu0 0.0
      %1935 = vmatprep.subr.mxu0 0.0
      %1936 = vmatpush1.msra.mxu0 0.0
      %1937 = vmatprep.subr.mxu0 0.0
      %1938 = vmatpush1.msra.mxu0 0.0
      %1939 = vmatprep.subr.mxu0 0.0
      %1940 = vmatpush1.msra.mxu0 0.0
      %1941 = vmatprep.subr.mxu0 0.0
      %1942 = vmatpush1.msra.mxu0 0.0
      %1943 = vmatprep.subr.mxu0 0.0
      %1944 = vmatpush1.msra.mxu0 0.0
      %1945 = vmatprep.subr.mxu0 0.0
      %1946 = vmatpush1.msra.mxu0 0.0
      %1947 = vmatprep.subr.mxu0 0.0
      %1948 = vmatpush1.msra.mxu0 0.0
      %1949 = vmatprep.subr.mxu0 0.0
      %1950 = vmatpush1.msra.mxu0 0.0
      %1951 = vmatprep.subr.mxu0 0.0
      %1952 = vmatpush1.msra.mxu0 0.0
      %1953 = vmatprep.subr.mxu0 0.0
      %1954 = vmatpush1.msra.mxu0 0.0
      %1955 = vmatprep.subr.mxu0 0.0
      %1956 = vmatpush1.msra.mxu0 0.0
      %1957 = vmatprep.subr.mxu0 0.0
      %1958 = vmatpush1.msra.mxu0 0.0
      %1959 = vmatprep.subr.mxu0 0.0
      %1960 = vmatpush1.msra.mxu0 0.0
      %1961 = vmatprep.subr.mxu0 0.0
      %1962 = vmatpush1.msra.mxu0 0.0
      %1963 = vmatprep.subr.mxu0 0.0
      %1964 = vmatpush1.msra.mxu0 0.0
      %1965 = vmatprep.subr.mxu0 0.0
      %1966 = vmatpush1.msra.mxu0 0.0
      %1967 = vmatprep.subr.mxu0 0.0
      %1968 = vmatpush1.msra.mxu0 0.0
      %1969 = vmatprep.subr.mxu0 0.0
      %1970 = vmatpush1.msra.mxu0 0.0
      %1971 = vmatprep.subr.mxu0 0.0
      %1972 = vmatpush1.msra.mxu0 0.0
      %1973 = vmatprep.subr.mxu0 0.0
      %1974 = vmatpush1.msra.mxu0 0.0
      %1975 = vmatprep.subr.mxu0 0.0
      %1976 = vmatpush1.msra.mxu0 0.0
      %1977 = vmatprep.subr.mxu0 0.0
      %1978 = vmatpush1.msra.mxu0 0.0
      %1979 = vmatprep.mubr.f32.mxu0 0.0
      %1980 = vmatmul.mubr.f32.gmra.mrb[0].mxu0 %v1911
      %v1981 = vpop.f32.mrb[0].mxu0
      %v1982 = vadd.f32 %v1903, %v1981
      %v1983 = vpop.f32.mrb[0].mxu0
      %1984 = vmatprep.mubr.f32.mxu0 0.0
      %1985 = vmatmul.mubr.f32.gmra.mrb[0].mxu0 %v1913
      %v1986 = vpop.f32.mrb[0].mxu0
      %v1987 = vadd.f32 %v1903, %v1986
      %v1988 = vpop.f32.mrb[0].mxu0
      %1989 = vdwg.mxu0
      %v1990 = vld [vmem:[%s17] sm:$0xff]
      %v1991 = vld [vmem:[%s17 + $0x8] sm:$0xff]
      %v1992 = vld [vmem:[%s17 + $0x10] sm:$0xff]
      %v1993 = vld [vmem:[%s17 + $0x18] sm:$0xff]
      %v1994 = vld [vmem:[%s19] sm:$0x1]
      %v1996 = vlaneseq
      %v1997 = vshrl.u32 %v1996, 7
      %v1998 = vsub.s32 0, %v1997
      %v1999 = vrot.slane %v1994, %v1998
      %2001 = vmatprep.subr.mxu0 0.0
      %2002 = vmatpush1.msra.mxu0 %v1990
      %2003 = vmatprep.subr.mxu0 0.0
      %2004 = vmatpush1.msra.mxu0 %v1991
      %2005 = vmatprep.subr.mxu0 0.0
      %2006 = vmatpush1.msra.mxu0 %v1992
      %2007 = vmatprep.subr.mxu0 0.0
      %2008 = vmatpush1.msra.mxu0 %v1993
      %2009 = vmatprep.subr.mxu0 0.0
      %2010 = vmatpush1.msra.mxu0 0.0
      %2011 = vmatprep.subr.mxu0 0.0
      %2012 = vmatpush1.msra.mxu0 0.0
      %2013 = vmatprep.subr.mxu0 0.0
      %2014 = vmatpush1.msra.mxu0 0.0
      %2015 = vmatprep.subr.mxu0 0.0
      %2016 = vmatpush1.msra.mxu0 0.0
      %2017 = vmatprep.subr.mxu0 0.0
      %2018 = vmatpush1.msra.mxu0 0.0
      %2019 = vmatprep.subr.mxu0 0.0
      %2020 = vmatpush1.msra.mxu0 0.0
      %2021 = vmatprep.subr.mxu0 0.0
      %2022 = vmatpush1.msra.mxu0 0.0
      %2023 = vmatprep.subr.mxu0 0.0
      %2024 = vmatpush1.msra.mxu0 0.0
      %2025 = vmatprep.subr.mxu0 0.0
      %2026 = vmatpush1.msra.mxu0 0.0
      %2027 = vmatprep.subr.mxu0 0.0
      %2028 = vmatpush1.msra.mxu0 0.0
      %2029 = vmatprep.subr.mxu0 0.0
      %2030 = vmatpush1.msra.mxu0 0.0
      %2031 = vmatprep.subr.mxu0 0.0
      %2032 = vmatpush1.msra.mxu0 0.0
      %2033 = vmatprep.subr.mxu0 0.0
      %2034 = vmatpush1.msra.mxu0 0.0
      %2035 = vmatprep.subr.mxu0 0.0
      %2036 = vmatpush1.msra.mxu0 0.0
      %2037 = vmatprep.subr.mxu0 0.0
      %2038 = vmatpush1.msra.mxu0 0.0
      %2039 = vmatprep.subr.mxu0 0.0
      %2040 = vmatpush1.msra.mxu0 0.0
      %2041 = vmatprep.subr.mxu0 0.0
      %2042 = vmatpush1.msra.mxu0 0.0
      %2043 = vmatprep.subr.mxu0 0.0
      %2044 = vmatpush1.msra.mxu0 0.0
      %2045 = vmatprep.subr.mxu0 0.0
      %2046 = vmatpush1.msra.mxu0 0.0
      %2047 = vmatprep.subr.mxu0 0.0
      %2048 = vmatpush1.msra.mxu0 0.0
      %2049 = vmatprep.subr.mxu0 0.0
      %2050 = vmatpush1.msra.mxu0 0.0
      %2051 = vmatprep.subr.mxu0 0.0
      %2052 = vmatpush1.msra.mxu0 0.0
      %2053 = vmatprep.subr.mxu0 0.0
      %2054 = vmatpush1.msra.mxu0 0.0
      %2055 = vmatprep.subr.mxu0 0.0
      %2056 = vmatpush1.msra.mxu0 0.0
      %2057 = vmatprep.subr.mxu0 0.0
      %2058 = vmatpush1.msra.mxu0 0.0
      %2059 = vmatprep.subr.mxu0 0.0
      %2060 = vmatpush1.msra.mxu0 0.0
      %2061 = vmatprep.subr.mxu0 0.0
      %2062 = vmatpush1.msra.mxu0 0.0
      %2063 = vmatprep.subr.mxu0 0.0
      %2064 = vmatpush1.msra.mxu0 0.0
      %2065 = vmatprep.mubr.f32.mxu0 0.0
      %2066 = vmatmul.mubr.f32.gmra.mrb[0].mxu0 %v1911
      %v2067 = vpop.f32.mrb[0].mxu0
      %v2068 = vadd.f32 %v1999, %v2067
      %v2069 = vpop.f32.mrb[0].mxu0
      %2070 = vmatprep.mubr.f32.mxu0 0.0
      %2071 = vmatmul.mubr.f32.gmra.mrb[0].mxu0 %v1913
      %v2072 = vpop.f32.mrb[0].mxu0
      %v2073 = vadd.f32 %v1999, %v2072
      %v2074 = vpop.f32.mrb[0].mxu0
      %2075 = vdwg.mxu0
      %v2076 = vmul.f32 %v2068, 1.442695
      %v2077 = vpow.pop %v2076
      %v2078 = vmul.f32 %v2073, 1.442695
      %v2079 = vpow.pop %v2078
      %v2080 = vmul.f32 %v885, %v2077
      %v2081 = vmul.f32 %v890, %v2079
      %v2082 = vadd.f32 %v2080, %v1982
      %v2083 = vadd.f32 %v2081, %v1987
      %2084 = vst.msk [vmem:[%s716] sm:$0xff] %vm993, %v806
      %2085 = vst.msk [vmem:[%s716 + $0x8] sm:$0xff] %vm993, %v811
      %2086 = vst.msk [vmem:[%s721] sm:$0xff] %vm993, %v2082
      %2087 = vst.msk [vmem:[%s721 + $0x8] sm:$0xff] %vm993, %v2083
      %v2088 = vsel %vm993, %v2068, 0.0
      %2089 = vadd.xlane.f32.xlu0 %v2088
      %v2090 = vpop.xlane.xlu0 %2089
      %v2091 = vsel %vm993, %v2073, 0.0
      %2092 = vadd.xlane.f32.xlu0 %v2091
      %v2093 = vpop.xlane.xlu0 %2092
      %v2094 = vadd.f32 %v2090, %v2093
      %v2095 = vrot.slane %v2094, 4
      %v2096 = vadd.f32 %v2094, %v2095
      %v2097 = vrot.slane %v2096, 2
      %v2098 = vadd.f32 %v2096, %v2097
      %v2099 = vrot.slane %v2098, 1
      %v2100 = vadd.f32 %v2098, %v2099
      %vm2101 = vcmask 0
      %2102 = vst.msk [vmem:[%s724] sm:$0x1] %vm2101, %v2100
      %p2103 = scmp.lt.s32.totalorder %s34, 1
      %s2104 = scalar_select %p2103, %s34, 1
      %s2105 = smul.addr %s2104, 2
      %s2106 = smul.addr %s2105, 8
      %s2107 = scalar_lea.vmem %s20, %s2106
      %p2108 = scmp.lt.s32.totalorder %s34, 1
      %s2109 = scalar_select %p2108, %s34, 1
      %s2110 = smul.addr %s2109, 2
      %s2111 = smul.addr %s2110, 8
      %s2112 = scalar_lea.vmem %s21, %s2111
      %p2113 = scmp.lt.s32.totalorder %s34, 1
      %s2114 = scalar_select %p2113, %s34, 1
      %s2115 = scalar_lea.vmem %s22, %s2114
      // Predicated region
      $region101: #{waveglow_forward.8} parent=99 // pred_check
        %p2116 = pneg %p482
      $region102: #{waveglow_forward.8} parent=99 // pred_check_branch
        %2118 = sbr.rel (%p2116) target = $region104
      $region103: #{waveglow_forward.8} parent=99 // pred_region
        _
      $region104: #{waveglow_forward.8} parent=99 // pred_fallthru
        _
      // Predicated region
      $region105: #{waveglow_forward.8} parent=99 // pred_check
        %p2119 = pneg %p508
      $region106: #{waveglow_forward.8} parent=99 // pred_check_branch
        %2121 = sbr.rel (%p2119) target = $region108
      $region107: #{waveglow_forward.8} parent=99 // pred_region
        _
      $region108: #{waveglow_forward.8} parent=99 // pred_fallthru
        _
      // Predicated region
      $region109: #{waveglow_forward.8} parent=99 // pred_check
        %p2122 = pneg %p534
      $region110: #{waveglow_forward.8} parent=99 // pred_check_branch
        %2124 = sbr.rel (%p2122) target = $region112
      $region111: #{waveglow_forward.8} parent=99 // pred_region
        _
      $region112: #{waveglow_forward.8} parent=99 // pred_fallthru
        _
    $region100: #{waveglow_forward.8} parent=5 // pred_fallthru
      _
    %p2125 = scmp.le.s32.totalorder 2, %s29
    // Predicated region
    $region113: #{waveglow_forward.8} parent=5 // pred_check
      %p2126 = pneg %p2125
    $region114: #{waveglow_forward.8} parent=5 // pred_check_branch
      %2128 = sbr.rel (%p2126) target = $region116
    $region115: #{waveglow_forward.8} parent=5 // pred_region
      %s2129 = ssub.s32 %s29, 2
      // Predicated region
      $region117: #{waveglow_forward.8} parent=115 // pred_check
        %p2130 = pneg %p488
      $region118: #{waveglow_forward.8} parent=115 // pred_check_branch
        %2132 = sbr.rel (%p2130) target = $region120
      $region119: #{waveglow_forward.8} parent=115 // pred_region
        %p2133 = scmp.lt.s32.totalorder %s35, 1
        %s2134 = scalar_select %p2133, %s35, 1
        %s2135 = smul.addr %s2134, 2
        %s2136 = smul.addr %s2135, 8
        %s2137 = scalar_lea.vmem %s20, %s2136
      $region120: #{waveglow_forward.8} parent=115 // pred_fallthru
        _
      // Predicated region
      $region121: #{waveglow_forward.8} parent=115 // pred_check
        %p2138 = pneg %p514
      $region122: #{waveglow_forward.8} parent=115 // pred_check_branch
        %2140 = sbr.rel (%p2138) target = $region124
      $region123: #{waveglow_forward.8} parent=115 // pred_region
        %p2141 = scmp.lt.s32.totalorder %s35, 1
        %s2142 = scalar_select %p2141, %s35, 1
        %s2143 = smul.addr %s2142, 2
        %s2144 = smul.addr %s2143, 8
        %s2145 = scalar_lea.vmem %s21, %s2144
      $region124: #{waveglow_forward.8} parent=115 // pred_fallthru
        _
      // Predicated region
      $region125: #{waveglow_forward.8} parent=115 // pred_check
        %p2146 = pneg %p540
      $region126: #{waveglow_forward.8} parent=115 // pred_check_branch
        %2148 = sbr.rel (%p2146) target = $region128
      $region127: #{waveglow_forward.8} parent=115 // pred_region
        %p2149 = scmp.lt.s32.totalorder %s35, 1
        %s2150 = scalar_select %p2149, %s35, 1
        %s2151 = scalar_lea.vmem %s22, %s2150
      $region128: #{waveglow_forward.8} parent=115 // pred_fallthru
        _
    $region116: #{waveglow_forward.8} parent=5 // pred_fallthru
      _
  $region6: #{waveglow_forward.8} parent=0 // loop_footer
    %s33 = sadd.s32 1, %s29
  $region7: #{waveglow_forward.8} parent=0 // loop_footer_branch
    %28 = sbr.rel target = $region3
  $region8: #{waveglow_forward.8} parent=0 // loop_exit
    _

</llo_original>
